<compile_context>
chip_gen: v5e
topology: v5e:2x2
jax: 0.10.0
libtpu: 0.0.40
codegen_flags: <defaults>
</compile_context>

<pallas_src>
import functools
import numpy as np
import jax
import jax.numpy as jnp
from jax.experimental import pallas as pl
from jax.experimental.pallas import tpu as pltpu


# ---------------------------------------------------------------------------
# in-kernel helpers (f32 math)
# ---------------------------------------------------------------------------
def _layernorm(h, w, b, eps=1e-5):
    mean = jnp.mean(h, axis=-1, keepdims=True)
    var = jnp.mean((h - mean) ** 2, axis=-1, keepdims=True)      # biased var, like torch LN
    return (h - mean) * jax.lax.rsqrt(var + eps) * w + b


def _erf(x):
    # Abramowitz & Stegun 7.1.26 polynomial erf (|err| <= 1.5e-7 == f32 noise).
    p = 0.3275911
    a1, a2, a3, a4, a5 = 0.254829592, -0.284496736, 1.421413741, -1.453152027, 1.061405429
    ax = jnp.abs(x)
    t = 1.0 / (1.0 + p * ax)
    poly = ((((a5 * t + a4) * t + a3) * t + a2) * t + a1) * t
    y = 1.0 - poly * jnp.exp(-ax * ax)
    return jnp.where(x >= 0.0, y, -y)


def _gelu_exact(x):
    return 0.5 * x * (1.0 + _erf(x * 0.7071067811865476))


# ---------------------------------------------------------------------------
# fused encoder-stack kernel: grid = (batch_tiles, layers)
# ---------------------------------------------------------------------------
def encoder_stack_kernel(x_ref, tx_ref, wkv_ref, wq_ref, wo_ref,
                         ln1w_ref, ln1b_ref, w1_ref, b1_ref, w2_ref, b2_ref,
                         ln2w_ref, ln2b_ref, o_ref, *, head_num, mlp_chunk, compute_dtype):
    layer = pl.program_id(1)
    B_t, T, E = o_ref.shape
    H = head_num
    dh = E // H
    cd = compute_dtype

    # Layer 0 of each batch tile: seed the resident activation block from x.
    @pl.when(layer == 0)
    def _():
        o_ref[...] = x_ref[...]

    cur = o_ref[...].reshape(B_t * T, E)            # (BT, E) f32 running activation
    txa = tx_ref[...].reshape(B_t * T, E)           # (BT, E), already in compute dtype

    # ---- attention projections: fused K|V matmul from x, pre-scaled Q from tx --------
    kv = jnp.dot(cur.astype(cd), wkv_ref[0], preferred_element_type=jnp.float32)  # (BT, 2E)
    q = jnp.dot(txa, wq_ref[0], preferred_element_type=jnp.float32)               # (BT, E)
    # NOTE: the PyTorch module MULTIPLIES energy by sqrt(head_dim) (self.dk); folded into Wq.
    k_all = kv[:, :E]
    v_all = kv[:, E:]

    # ---- attention: static loop over heads, batched over the batch tile --------------
    ctx_heads = []
    for h in range(H):                              # H is small; static lane slices only
        sl = slice(h * dh, (h + 1) * dh)
        qh = q[:, sl].reshape(B_t, T, dh).astype(cd)
        kh = k_all[:, sl].reshape(B_t, T, dh).astype(cd)
        vh = v_all[:, sl].reshape(B_t, T, dh).astype(cd)
        e = jnp.einsum('bqd,bkd->bqk', qh, kh, preferred_element_type=jnp.float32)
        e = e - jnp.max(e, axis=-1, keepdims=True)
        pexp = jnp.exp(e)
        attn = pexp / jnp.sum(pexp, axis=-1, keepdims=True)      # exact softmax
        ctx_heads.append(jnp.einsum('bqk,bkd->bqd', attn.astype(cd), vh,
                                    preferred_element_type=jnp.float32))
    ctx = jnp.concatenate(ctx_heads, axis=-1)       # (B_t, T, E) in 'b t (h d)' order
    attn_cat = ctx.reshape(B_t * T, E)

    attn_out = jnp.dot(attn_cat.astype(cd), wo_ref[0], preferred_element_type=jnp.float32)
    h1 = _layernorm(cur + attn_out, ln1w_ref[0], ln1b_ref[0])

    # ---- MLP, chunked over mlp_dim to bound the VMEM-live intermediate ---------------
    mlp_dim = w1_ref.shape[-1]
    h1c = h1.astype(cd)
    mlp_out = None
    for lo in range(0, mlp_dim, mlp_chunk):         # static loop
        hi = min(mlp_dim, lo + mlp_chunk)
        m = jnp.dot(h1c, w1_ref[0, :, lo:hi], preferred_element_type=jnp.float32)
        m = _gelu_exact(m + b1_ref[0, :, lo:hi])
        part = jnp.dot(m.astype(cd), w2_ref[0, lo:hi, :], preferred_element_type=jnp.float32)
        mlp_out = part if mlp_out is None else mlp_out + part
    mlp_out = mlp_out + b2_ref[0]

    o_ref[...] = _layernorm(h1 + mlp_out, ln2w_ref[0], ln2b_ref[0]).reshape(B_t, T, E)


# ---------------------------------------------------------------------------
# wrapper
# ---------------------------------------------------------------------------
def _default_vmem_limit():
    # Generation-aware VMEM budget: ~75% of physical (128 MiB v5e/v6e, 64 MiB v7x).
    try:
        cap = pltpu.get_tpu_info().vmem_capacity_bytes
    except Exception:
        cap = 64 * 1024 * 1024
    return int(cap) * 3 // 4


def transformer_encoder_tx(x, tx, params, head_num, *, batch_tile=None,
                           mlp_chunk=None, compute_dtype=jnp.float32):
    B, T, E = x.shape
    H = head_num
    dh = E // H
    L = len(params)
    mlp_dim = params[0]["W1"].shape[0]
    scale = float(dh ** 0.5)
    cd = compute_dtype

    assert E % H == 0
    # TODO(synk): pad T to a multiple of 8 and E / mlp_dim to multiples of 128 for shapes
    # that violate the (8, 128) tiling constraints; the toy test uses aligned shapes.

    if batch_tile is None:
        target_rows = 256                            # fill the 256-row MXU on v6e/v7x
        bt = min(B, max(1, -(-target_rows // T)))
        while B % bt:
            bt -= 1
        # v7x megacore: prefer >=2 parallel batch tiles when that keeps M >= target_rows.
        if B // bt < 2:
            for cand in range(bt - 1, 0, -1):
                if B % cand == 0 and cand * T >= target_rows:
                    bt = cand
                    break
        batch_tile = bt
    assert B % batch_tile == 0

    if mlp_chunk is None:
        mlp_chunk = min(mlp_dim, 2048)               # bounds the (BT, mlp) intermediate

    # column permutation reproducing einops 'b t (d k h) -> k b h t d'
    d = np.arange(dh)[None, None, :]
    k = np.arange(3)[:, None, None]
    h = np.arange(H)[None, :, None]
    idx = (d * 3 + k) * H + h                 # idx[k, h, d] -> column of the (E, 3E) weight.T
    q_cols = idx[0].reshape(-1)               # tquery (taken from the tx projection)
    k_cols = idx[1].reshape(-1)               # key
    v_cols = idx[2].reshape(-1)               # value

    def stack(fn, dtype=None):
        a = jnp.stack([fn(p) for p in params], axis=0)
        return a.astype(dtype) if dtype is not None else a

    wkv = stack(lambda p: jnp.concatenate(
        [p["Wqkv"].T[:, k_cols], p["Wqkv"].T[:, v_cols]], axis=1), cd)   # (L, E, 2E)
    wq = stack(lambda p: p["Wtqkv"].T[:, q_cols] * scale, cd)             # (L, E, E), scale folded
    wo = stack(lambda p: p["Wo"].T, cd)                                   # (L, E, E)
    w1 = stack(lambda p: p["W1"].T, cd)                                   # (L, E, M)
    w2 = stack(lambda p: p["W2"].T, cd)                                   # (L, M, E)
    b1 = stack(lambda p: p["b1"].reshape(1, -1))                          # (L, 1, M) f32
    b2 = stack(lambda p: p["b2"].reshape(1, E))
    ln1w = stack(lambda p: p["ln1w"].reshape(1, E))
    ln1b = stack(lambda p: p["ln1b"].reshape(1, E))
    ln2w = stack(lambda p: p["ln2w"].reshape(1, E))
    ln2b = stack(lambda p: p["ln2b"].reshape(1, E))

    act_spec = pl.BlockSpec((batch_tile, T, E), lambda b, l: (b, 0, 0))
    # TODO(synk): x is only read at layer 0; pl.Buffered(1) pipeline_mode (or a manual
    # layer-0 copy from pl.ANY) would free one (batch_tile, T, E) VMEM buffer.

    def layer_spec(arr):
        rest = arr.shape[1:]
        zeros = (0,) * len(rest)
        return pl.BlockSpec((1,) + rest, lambda b, l, _z=zeros: (l,) + _z)

    ins = [x, tx.astype(cd), wkv, wq, wo, ln1w, ln1b, w1, b1, w2, b2, ln2w, ln2b]
    in_specs = [act_spec, act_spec] + [layer_spec(a) for a in ins[2:]]

    kernel = functools.partial(encoder_stack_kernel, head_num=H, mlp_chunk=mlp_chunk,
                               compute_dtype=cd)

    # cost estimate (advisory): weights re-streamed once per batch tile + activation I/O.
    n_tiles = B // batch_tile
    w_item = jnp.dtype(cd).itemsize
    weight_bytes_per_layer = (4 * E * E + 2 * E * mlp_dim) * w_item + (mlp_dim + 5 * E) * 4
    flops = L * B * T * (8 * E * E + 4 * T * E + 4 * E * mlp_dim)
    transcendentals = L * B * (H * T * T + T * mlp_dim)
    bytes_accessed = (n_tiles * L * weight_bytes_per_layer
                      + B * T * E * (4 + w_item + 4))              # x (f32) + tx (cd) + out
    cost = pl.CostEstimate(flops=int(flops), transcendentals=int(transcendentals),
                           bytes_accessed=int(bytes_accessed))

    return pl.pallas_call(
        kernel,
        out_shape=jax.ShapeDtypeStruct((B, T, E), jnp.float32),
        grid=(B // batch_tile, L),
        in_specs=in_specs,
        out_specs=act_spec,
        compiler_params=pltpu.CompilerParams(
            dimension_semantics=("parallel", "arbitrary"),
            vmem_limit_bytes=_default_vmem_limit()),
        cost_estimate=cost,
    )(*ins)


# ---------------------------------------------------------------------------
# deterministic parameter init (PyTorch-layout weights) + pure-JAX reference
# ---------------------------------------------------------------------------
def init_params(key, E, head_num, mlp_dim, block_num):
    params = []
    for blk in range(block_num):
        ks = jax.random.split(jax.random.fold_in(key, blk), 7)
        p = {
            "Wqkv": jax.random.normal(ks[0], (3 * E, E), jnp.float32) * 0.05,
            "Wtqkv": jax.random.normal(ks[1], (3 * E, E), jnp.float32) * 0.05,
            "Wo": jax.random.normal(ks[2], (E, E), jnp.float32) * 0.05,
            "W1": jax.random.normal(ks[3], (mlp_dim, E), jnp.float32) * 0.05,
            "b1": jax.random.normal(ks[4], (mlp_dim,), jnp.float32) * 0.05,
            "W2": jax.random.normal(ks[5], (E, mlp_dim), jnp.float32) * 0.05,
            "b2": jax.random.normal(ks[6], (E,), jnp.float32) * 0.05,
            "ln1w": jnp.ones((E,), jnp.float32), "ln1b": jnp.zeros((E,), jnp.float32),
            "ln2w": jnp.ones((E,), jnp.float32), "ln2b": jnp.zeros((E,), jnp.float32),
        }
        params.append(p)
    return params


def ref_forward(x, tx, params, head_num):
    B, T, E = x.shape
    H = head_num
    dh = E // H
    scale = dh ** 0.5

    def split_heads(z):
        z = z.reshape(B, T, dh, 3, H)                 # '(d k h)'
        return jnp.transpose(z, (3, 0, 4, 1, 2))      # -> (k, b, h, t, d)

    cur = x
    for p in params:
        qkv = cur @ p["Wqkv"].T
        tqkv = tx @ p["Wtqkv"].T
        _, key_, val = split_heads(qkv)
        tq, _, _ = split_heads(tqkv)
        energy = jnp.einsum("bhid,bhjd->bhij", tq, key_) * scale
        attn = jax.nn.softmax(energy, axis=-1)
        o = jnp.einsum("bhij,bhjd->bhid", attn, val)
        o = jnp.transpose(o, (0, 2, 1, 3)).reshape(B, T, E)
        o = o @ p["Wo"].T
        h1 = _layernorm(cur + o, p["ln1w"], p["ln1b"])
        m = jax.nn.gelu(h1 @ p["W1"].T + p["b1"], approximate=False)
        m = m @ p["W2"].T + p["b2"]
        cur = _layernorm(h1 + m, p["ln2w"], p["ln2b"])
    return cur


if __name__ == "__main__":
    # small but lane/sublane-aligned shapes (E, mlp multiples of 128; T multiple of 8)
    B, T, E, H, MLP_DIM, NBLOCK = 2, 16, 128, 4, 256, 3
    key = jax.random.PRNGKey(0)
    kx, ktx, kp = jax.random.split(key, 3)
    x = jax.random.normal(kx, (B, T, E), jnp.float32)
    tx = jax.random.normal(ktx, (B, T, E), jnp.float32)
    params = init_params(kp, E, H, MLP_DIM, NBLOCK)

    # f32 path: both the reference and the kernel trace under full-f32 matmul precision
    # so the comparison is not polluted by backend-default low-precision matmuls.
    with jax.default_matmul_precision("float32"):
        ref = jax.block_until_ready(ref_forward(x, tx, params, H))
        out = jax.block_until_ready(transformer_encoder_tx(x, tx, params, H))
    assert out.shape == (B, T, E)
    np.testing.assert_allclose(np.asarray(out), np.asarray(ref), atol=2e-3, rtol=2e-3)

    # bf16 matmul path (f32 accumulation): loose sanity check.
    out_bf16 = jax.block_until_ready(
        transformer_encoder_tx(x, tx, params, H, compute_dtype=jnp.bfloat16))
    assert out_bf16.shape == (B, T, E)
    assert float(jnp.max(jnp.abs(out_bf16 - ref))) < 0.3

    print("KERNEL_OK")
</pallas_src>

<mosaic_0001>
module attributes {stable_mosaic.version = 11 : i64} {
  func.func @encoder_stack_kernel(%arg0: i32, %arg1: i32, %arg2: memref<2x16x128xf32, #tpu.memory_space<vmem>>, %arg3: memref<2x16x128xf32, #tpu.memory_space<vmem>>, %arg4: memref<1x128x256xf32, #tpu.memory_space<vmem>>, %arg5: memref<1x128x128xf32, #tpu.memory_space<vmem>>, %arg6: memref<1x128x128xf32, #tpu.memory_space<vmem>>, %arg7: memref<1x1x128xf32, #tpu.memory_space<vmem>>, %arg8: memref<1x1x128xf32, #tpu.memory_space<vmem>>, %arg9: memref<1x128x256xf32, #tpu.memory_space<vmem>>, %arg10: memref<1x1x256xf32, #tpu.memory_space<vmem>>, %arg11: memref<1x256x128xf32, #tpu.memory_space<vmem>>, %arg12: memref<1x1x128xf32, #tpu.memory_space<vmem>>, %arg13: memref<1x1x128xf32, #tpu.memory_space<vmem>>, %arg14: memref<1x1x128xf32, #tpu.memory_space<vmem>>, %arg15: memref<2x16x128xf32, #tpu.memory_space<vmem>>) attributes {dimension_semantics = [#tpu.dimension_semantics<parallel>, #tpu.dimension_semantics<arbitrary>], iteration_bounds = array<i64: 1, 3>, scalar_prefetch = 0 : i64, scratch_operands = 0 : i64, tpu.core_type = #tpu.core_type<tc>, window_params = [{transform_indices = @transform_0, window_bounds = array<i64: 2, 16, 128>}, {transform_indices = @transform_1, window_bounds = array<i64: 2, 16, 128>}, {transform_indices = @transform_2, window_bounds = array<i64: 1, 128, 256>}, {transform_indices = @transform_3, window_bounds = array<i64: 1, 128, 128>}, {transform_indices = @transform_4, window_bounds = array<i64: 1, 128, 128>}, {transform_indices = @transform_5, window_bounds = array<i64: 1, 1, 128>}, {transform_indices = @transform_6, window_bounds = array<i64: 1, 1, 128>}, {transform_indices = @transform_7, window_bounds = array<i64: 1, 128, 256>}, {transform_indices = @transform_8, window_bounds = array<i64: 1, 1, 256>}, {transform_indices = @transform_9, window_bounds = array<i64: 1, 256, 128>}, {transform_indices = @transform_10, window_bounds = array<i64: 1, 1, 128>}, {transform_indices = @transform_11, window_bounds = array<i64: 1, 1, 128>}, {transform_indices = @transform_12, window_bounds = array<i64: 1, 1, 128>}, {transform_indices = @transform_13, window_bounds = array<i64: 2, 16, 128>}]} {
    %c0_i32 = arith.constant 0 : i32
    %0 = arith.cmpi eq, %arg1, %c0_i32 : i32
    %1 = arith.extui %0 : i1 to i32
    %c0_i32_0 = arith.constant 0 : i32
    %2 = arith.cmpi ne, %1, %c0_i32_0 : i32
    scf.if %2 {
      %c0_87 = arith.constant 0 : index
      %c0_88 = arith.constant 0 : index
      %c0_89 = arith.constant 0 : index
      %198 = vector.load %arg2[%c0_87, %c0_88, %c0_89] : memref<2x16x128xf32, #tpu.memory_space<vmem>>, vector<2x16x128xf32>
      %c0_90 = arith.constant 0 : index
      %c0_91 = arith.constant 0 : index
      %c0_92 = arith.constant 0 : index
      %199 = vector.load %arg15[%c0_90, %c0_91, %c0_92] : memref<2x16x128xf32, #tpu.memory_space<vmem>>, vector<2x16x128xf32>
      tpu.vector_store %arg15[%c0_90, %c0_91, %c0_92], %198 {strides = array<i32>} : memref<2x16x128xf32, #tpu.memory_space<vmem>>, vector<2x16x128xf32>,
    } else {
    }
    %c0 = arith.constant 0 : index
    %c0_1 = arith.constant 0 : index
    %c0_2 = arith.constant 0 : index
    %3 = vector.load %arg15[%c0, %c0_1, %c0_2] : memref<2x16x128xf32, #tpu.memory_space<vmem>>, vector<2x16x128xf32>
    %4 = vector.shape_cast %3 : vector<2x16x128xf32> to vector<32x128xf32>
    %c0_3 = arith.constant 0 : index
    %c0_4 = arith.constant 0 : index
    %c0_5 = arith.constant 0 : index
    %5 = vector.load %arg3[%c0_3, %c0_4, %c0_5] : memref<2x16x128xf32, #tpu.memory_space<vmem>>, vector<2x16x128xf32>
    %6 = vector.shape_cast %5 : vector<2x16x128xf32> to vector<32x128xf32>
    %c0_6 = arith.constant 0 : index
    %c0_7 = arith.constant 0 : index
    %c0_8 = arith.constant 0 : index
    %7 = vector.load %arg4[%c0_6, %c0_7, %c0_8] : memref<1x128x256xf32, #tpu.memory_space<vmem>>, vector<1x128x256xf32>
    %8 = vector.shape_cast %7 : vector<1x128x256xf32> to vector<128x256xf32>
    %cst = arith.constant dense<0.000000e+00> : vector<32x256xf32>
    %9 = tpu.matmul %4, %8, %cst {dimension_numbers = #tpu.dot_dimension_numbers<[1], [0], [0], [1], [0, 0, 1, 1], [], []>, precision = #tpu.contract_precision<fp32>} : vector<32x128xf32>, vector<128x256xf32>, vector<32x256xf32> -> vector<32x256xf32>
    %c0_9 = arith.constant 0 : index
    %c0_10 = arith.constant 0 : index
    %c0_11 = arith.constant 0 : index
    %10 = vector.load %arg5[%c0_9, %c0_10, %c0_11] : memref<1x128x128xf32, #tpu.memory_space<vmem>>, vector<1x128x128xf32>
    %11 = vector.shape_cast %10 : vector<1x128x128xf32> to vector<128x128xf32>
    %cst_12 = arith.constant dense<0.000000e+00> : vector<32x128xf32>
    %12 = tpu.matmul %6, %11, %cst_12 {dimension_numbers = #tpu.dot_dimension_numbers<[1], [0], [0], [1], [0, 0, 1, 1], [], []>, precision = #tpu.contract_precision<fp32>} : vector<32x128xf32>, vector<128x128xf32>, vector<32x128xf32> -> vector<32x128xf32>
    %13 = vector.extract_strided_slice %9 {offsets = [0, 0], sizes = [32, 128], strides = [1, 1]} : vector<32x256xf32> to vector<32x128xf32>
    %14 = vector.extract_strided_slice %9 {offsets = [0, 128], sizes = [32, 128], strides = [1, 1]} : vector<32x256xf32> to vector<32x128xf32>
    %15 = vector.extract_strided_slice %12 {offsets = [0, 0], sizes = [32, 32], strides = [1, 1]} : vector<32x128xf32> to vector<32x32xf32>
    %16 = vector.shape_cast %15 : vector<32x32xf32> to vector<2x16x32xf32>
    %17 = vector.extract_strided_slice %13 {offsets = [0, 0], sizes = [32, 32], strides = [1, 1]} : vector<32x128xf32> to vector<32x32xf32>
    %18 = vector.shape_cast %17 : vector<32x32xf32> to vector<2x16x32xf32>
    %19 = vector.extract_strided_slice %14 {offsets = [0, 0], sizes = [32, 32], strides = [1, 1]} : vector<32x128xf32> to vector<32x32xf32>
    %20 = vector.shape_cast %19 : vector<32x32xf32> to vector<2x16x32xf32>
    "tpu.trace_start"() <{level = 10 : i32, message = "bqd,bkd->bqk"}> : () -> ()
    %cst_13 = arith.constant dense<0.000000e+00> : vector<2x16x16xf32>
    %21 = tpu.matmul %16, %18, %cst_13 {dimension_numbers = #tpu.dot_dimension_numbers<[2], [2], [1], [1], [0, 0, 0, 1, 1, 1], [0], [0]>, precision = #tpu.contract_precision<fp32>} : vector<2x16x32xf32>, vector<2x16x32xf32>, vector<2x16x16xf32> -> vector<2x16x16xf32>
    "tpu.trace_stop"() : () -> ()
    %cst_14 = arith.constant dense<0xFF800000> : vector<2x16xf32>
    %22 = vector.multi_reduction <maximumf>, %21, %cst_14 [2] : vector<2x16x16xf32> to vector<2x16xf32>
    %23 = vector.shape_cast %22 : vector<2x16xf32> to vector<2x16x1xf32>
    %24 = vector.broadcast %23 : vector<2x16x1xf32> to vector<2x16x16xf32>
    %25 = arith.subf %21, %24 : vector<2x16x16xf32>
    %26 = math.exp %25 : vector<2x16x16xf32>
    %cst_15 = arith.constant dense<0.000000e+00> : vector<2x16xf32>
    %27 = vector.multi_reduction <add>, %26, %cst_15 [2] : vector<2x16x16xf32> to vector<2x16xf32>
    %28 = vector.shape_cast %27 : vector<2x16xf32> to vector<2x16x1xf32>
    %29 = vector.broadcast %28 : vector<2x16x1xf32> to vector<2x16x16xf32>
    %30 = arith.divf %26, %29 : vector<2x16x16xf32>
    "tpu.trace_start"() <{level = 10 : i32, message = "bqk,bkd->bqd"}> : () -> ()
    %cst_16 = arith.constant dense<0.000000e+00> : vector<2x16x32xf32>
    %31 = tpu.matmul %30, %20, %cst_16 {dimension_numbers = #tpu.dot_dimension_numbers<[2], [1], [1], [2], [0, 0, 0, 1, 1, 2], [0], [0]>, precision = #tpu.contract_precision<fp32>} : vector<2x16x16xf32>, vector<2x16x32xf32>, vector<2x16x32xf32> -> vector<2x16x32xf32>
    "tpu.trace_stop"() : () -> ()
    %32 = vector.extract_strided_slice %12 {offsets = [0, 32], sizes = [32, 32], strides = [1, 1]} : vector<32x128xf32> to vector<32x32xf32>
    %33 = vector.shape_cast %32 : vector<32x32xf32> to vector<2x16x32xf32>
    %34 = vector.extract_strided_slice %13 {offsets = [0, 32], sizes = [32, 32], strides = [1, 1]} : vector<32x128xf32> to vector<32x32xf32>
    %35 = vector.shape_cast %34 : vector<32x32xf32> to vector<2x16x32xf32>
    %36 = vector.extract_strided_slice %14 {offsets = [0, 32], sizes = [32, 32], strides = [1, 1]} : vector<32x128xf32> to vector<32x32xf32>
    %37 = vector.shape_cast %36 : vector<32x32xf32> to vector<2x16x32xf32>
    "tpu.trace_start"() <{level = 10 : i32, message = "bqd,bkd->bqk"}> : () -> ()
    %cst_17 = arith.constant dense<0.000000e+00> : vector<2x16x16xf32>
    %38 = tpu.matmul %33, %35, %cst_17 {dimension_numbers = #tpu.dot_dimension_numbers<[2], [2], [1], [1], [0, 0, 0, 1, 1, 1], [0], [0]>, precision = #tpu.contract_precision<fp32>} : vector<2x16x32xf32>, vector<2x16x32xf32>, vector<2x16x16xf32> -> vector<2x16x16xf32>
    "tpu.trace_stop"() : () -> ()
    %cst_18 = arith.constant dense<0xFF800000> : vector<2x16xf32>
    %39 = vector.multi_reduction <maximumf>, %38, %cst_18 [2] : vector<2x16x16xf32> to vector<2x16xf32>
    %40 = vector.shape_cast %39 : vector<2x16xf32> to vector<2x16x1xf32>
    %41 = vector.broadcast %40 : vector<2x16x1xf32> to vector<2x16x16xf32>
    %42 = arith.subf %38, %41 : vector<2x16x16xf32>
    %43 = math.exp %42 : vector<2x16x16xf32>
    %cst_19 = arith.constant dense<0.000000e+00> : vector<2x16xf32>
    %44 = vector.multi_reduction <add>, %43, %cst_19 [2] : vector<2x16x16xf32> to vector<2x16xf32>
    %45 = vector.shape_cast %44 : vector<2x16xf32> to vector<2x16x1xf32>
    %46 = vector.broadcast %45 : vector<2x16x1xf32> to vector<2x16x16xf32>
    %47 = arith.divf %43, %46 : vector<2x16x16xf32>
    "tpu.trace_start"() <{level = 10 : i32, message = "bqk,bkd->bqd"}> : () -> ()
    %cst_20 = arith.constant dense<0.000000e+00> : vector<2x16x32xf32>
    %48 = tpu.matmul %47, %37, %cst_20 {dimension_numbers = #tpu.dot_dimension_numbers<[2], [1], [1], [2], [0, 0, 0, 1, 1, 2], [0], [0]>, precision = #tpu.contract_precision<fp32>} : vector<2x16x16xf32>, vector<2x16x32xf32>, vector<2x16x32xf32> -> vector<2x16x32xf32>
    "tpu.trace_stop"() : () -> ()
    %49 = vector.extract_strided_slice %12 {offsets = [0, 64], sizes = [32, 32], strides = [1, 1]} : vector<32x128xf32> to vector<32x32xf32>
    %50 = vector.shape_cast %49 : vector<32x32xf32> to vector<2x16x32xf32>
    %51 = vector.extract_strided_slice %13 {offsets = [0, 64], sizes = [32, 32], strides = [1, 1]} : vector<32x128xf32> to vector<32x32xf32>
    %52 = vector.shape_cast %51 : vector<32x32xf32> to vector<2x16x32xf32>
    %53 = vector.extract_strided_slice %14 {offsets = [0, 64], sizes = [32, 32], strides = [1, 1]} : vector<32x128xf32> to vector<32x32xf32>
    %54 = vector.shape_cast %53 : vector<32x32xf32> to vector<2x16x32xf32>
    "tpu.trace_start"() <{level = 10 : i32, message = "bqd,bkd->bqk"}> : () -> ()
    %cst_21 = arith.constant dense<0.000000e+00> : vector<2x16x16xf32>
    %55 = tpu.matmul %50, %52, %cst_21 {dimension_numbers = #tpu.dot_dimension_numbers<[2], [2], [1], [1], [0, 0, 0, 1, 1, 1], [0], [0]>, precision = #tpu.contract_precision<fp32>} : vector<2x16x32xf32>, vector<2x16x32xf32>, vector<2x16x16xf32> -> vector<2x16x16xf32>
    "tpu.trace_stop"() : () -> ()
    %cst_22 = arith.constant dense<0xFF800000> : vector<2x16xf32>
    %56 = vector.multi_reduction <maximumf>, %55, %cst_22 [2] : vector<2x16x16xf32> to vector<2x16xf32>
    %57 = vector.shape_cast %56 : vector<2x16xf32> to vector<2x16x1xf32>
    %58 = vector.broadcast %57 : vector<2x16x1xf32> to vector<2x16x16xf32>
    %59 = arith.subf %55, %58 : vector<2x16x16xf32>
    %60 = math.exp %59 : vector<2x16x16xf32>
    %cst_23 = arith.constant dense<0.000000e+00> : vector<2x16xf32>
    %61 = vector.multi_reduction <add>, %60, %cst_23 [2] : vector<2x16x16xf32> to vector<2x16xf32>
    %62 = vector.shape_cast %61 : vector<2x16xf32> to vector<2x16x1xf32>
    %63 = vector.broadcast %62 : vector<2x16x1xf32> to vector<2x16x16xf32>
    %64 = arith.divf %60, %63 : vector<2x16x16xf32>
    "tpu.trace_start"() <{level = 10 : i32, message = "bqk,bkd->bqd"}> : () -> ()
    %cst_24 = arith.constant dense<0.000000e+00> : vector<2x16x32xf32>
    %65 = tpu.matmul %64, %54, %cst_24 {dimension_numbers = #tpu.dot_dimension_numbers<[2], [1], [1], [2], [0, 0, 0, 1, 1, 2], [0], [0]>, precision = #tpu.contract_precision<fp32>} : vector<2x16x16xf32>, vector<2x16x32xf32>, vector<2x16x32xf32> -> vector<2x16x32xf32>
    "tpu.trace_stop"() : () -> ()
    %66 = vector.extract_strided_slice %12 {offsets = [0, 96], sizes = [32, 32], strides = [1, 1]} : vector<32x128xf32> to vector<32x32xf32>
    %67 = vector.shape_cast %66 : vector<32x32xf32> to vector<2x16x32xf32>
    %68 = vector.extract_strided_slice %13 {offsets = [0, 96], sizes = [32, 32], strides = [1, 1]} : vector<32x128xf32> to vector<32x32xf32>
    %69 = vector.shape_cast %68 : vector<32x32xf32> to vector<2x16x32xf32>
    %70 = vector.extract_strided_slice %14 {offsets = [0, 96], sizes = [32, 32], strides = [1, 1]} : vector<32x128xf32> to vector<32x32xf32>
    %71 = vector.shape_cast %70 : vector<32x32xf32> to vector<2x16x32xf32>
    "tpu.trace_start"() <{level = 10 : i32, message = "bqd,bkd->bqk"}> : () -> ()
    %cst_25 = arith.constant dense<0.000000e+00> : vector<2x16x16xf32>
    %72 = tpu.matmul %67, %69, %cst_25 {dimension_numbers = #tpu.dot_dimension_numbers<[2], [2], [1], [1], [0, 0, 0, 1, 1, 1], [0], [0]>, precision = #tpu.contract_precision<fp32>} : vector<2x16x32xf32>, vector<2x16x32xf32>, vector<2x16x16xf32> -> vector<2x16x16xf32>
    "tpu.trace_stop"() : () -> ()
    %cst_26 = arith.constant dense<0xFF800000> : vector<2x16xf32>
    %73 = vector.multi_reduction <maximumf>, %72, %cst_26 [2] : vector<2x16x16xf32> to vector<2x16xf32>
    %74 = vector.shape_cast %73 : vector<2x16xf32> to vector<2x16x1xf32>
    %75 = vector.broadcast %74 : vector<2x16x1xf32> to vector<2x16x16xf32>
    %76 = arith.subf %72, %75 : vector<2x16x16xf32>
    %77 = math.exp %76 : vector<2x16x16xf32>
    %cst_27 = arith.constant dense<0.000000e+00> : vector<2x16xf32>
    %78 = vector.multi_reduction <add>, %77, %cst_27 [2] : vector<2x16x16xf32> to vector<2x16xf32>
    %79 = vector.shape_cast %78 : vector<2x16xf32> to vector<2x16x1xf32>
    %80 = vector.broadcast %79 : vector<2x16x1xf32> to vector<2x16x16xf32>
    %81 = arith.divf %77, %80 : vector<2x16x16xf32>
    "tpu.trace_start"() <{level = 10 : i32, message = "bqk,bkd->bqd"}> : () -> ()
    %cst_28 = arith.constant dense<0.000000e+00> : vector<2x16x32xf32>
    %82 = tpu.matmul %81, %71, %cst_28 {dimension_numbers = #tpu.dot_dimension_numbers<[2], [1], [1], [2], [0, 0, 0, 1, 1, 2], [0], [0]>, precision = #tpu.contract_precision<fp32>} : vector<2x16x16xf32>, vector<2x16x32xf32>, vector<2x16x32xf32> -> vector<2x16x32xf32>
    "tpu.trace_stop"() : () -> ()
    %83 = tpu.concatenate %31, %48, %65, %82 in 2 : vector<2x16x32xf32>, vector<2x16x32xf32>, vector<2x16x32xf32>, vector<2x16x32xf32> -> vector<2x16x128xf32>
    %84 = vector.shape_cast %83 : vector<2x16x128xf32> to vector<32x128xf32>
    %c0_29 = arith.constant 0 : index
    %c0_30 = arith.constant 0 : index
    %c0_31 = arith.constant 0 : index
    %85 = vector.load %arg6[%c0_29, %c0_30, %c0_31] : memref<1x128x128xf32, #tpu.memory_space<vmem>>, vector<1x128x128xf32>
    %86 = vector.shape_cast %85 : vector<1x128x128xf32> to vector<128x128xf32>
    %cst_32 = arith.constant dense<0.000000e+00> : vector<32x128xf32>
    %87 = tpu.matmul %84, %86, %cst_32 {dimension_numbers = #tpu.dot_dimension_numbers<[1], [0], [0], [1], [0, 0, 1, 1], [], []>, precision = #tpu.contract_precision<fp32>} : vector<32x128xf32>, vector<128x128xf32>, vector<32x128xf32> -> vector<32x128xf32>
    %88 = arith.addf %4, %87 : vector<32x128xf32>
    %c0_33 = arith.constant 0 : index
    %c0_34 = arith.constant 0 : index
    %c0_35 = arith.constant 0 : index
    %89 = vector.load %arg7[%c0_33, %c0_34, %c0_35] : memref<1x1x128xf32, #tpu.memory_space<vmem>>, vector<1x1x128xf32>
    %90 = vector.shape_cast %89 : vector<1x1x128xf32> to vector<1x128xf32>
    %c0_36 = arith.constant 0 : index
    %c0_37 = arith.constant 0 : index
    %c0_38 = arith.constant 0 : index
    %91 = vector.load %arg8[%c0_36, %c0_37, %c0_38] : memref<1x1x128xf32, #tpu.memory_space<vmem>>, vector<1x1x128xf32>
    %92 = vector.shape_cast %91 : vector<1x1x128xf32> to vector<1x128xf32>
    %cst_39 = arith.constant dense<0.000000e+00> : vector<32xf32>
    %93 = vector.multi_reduction <add>, %88, %cst_39 [1] : vector<32x128xf32> to vector<32xf32>
    %94 = vector.shape_cast %93 : vector<32xf32> to vector<32x1xf32>
    %cst_40 = arith.constant 1.280000e+02 : f32
    %95 = vector.broadcast %cst_40 : f32 to vector<32x1xf32>
    %96 = arith.divf %94, %95 : vector<32x1xf32>
    %97 = vector.broadcast %96 : vector<32x1xf32> to vector<32x128xf32>
    %98 = arith.subf %88, %97 : vector<32x128xf32>
    %99 = arith.mulf %98, %98 : vector<32x128xf32>
    %cst_41 = arith.constant dense<0.000000e+00> : vector<32xf32>
    %100 = vector.multi_reduction <add>, %99, %cst_41 [1] : vector<32x128xf32> to vector<32xf32>
    %101 = vector.shape_cast %100 : vector<32xf32> to vector<32x1xf32>
    %cst_42 = arith.constant 1.280000e+02 : f32
    %102 = vector.broadcast %cst_42 : f32 to vector<32x1xf32>
    %103 = arith.divf %101, %102 : vector<32x1xf32>
    %104 = vector.broadcast %96 : vector<32x1xf32> to vector<32x128xf32>
    %105 = arith.subf %88, %104 : vector<32x128xf32>
    %cst_43 = arith.constant 9.99999974E-6 : f32
    %106 = vector.broadcast %cst_43 : f32 to vector<32x1xf32>
    %107 = arith.addf %103, %106 : vector<32x1xf32>
    %108 = math.rsqrt %107 : vector<32x1xf32>
    %109 = vector.broadcast %108 : vector<32x1xf32> to vector<32x128xf32>
    %110 = arith.mulf %105, %109 : vector<32x128xf32>
    %111 = vector.broadcast %90 : vector<1x128xf32> to vector<32x128xf32>
    %112 = arith.mulf %110, %111 : vector<32x128xf32>
    %113 = vector.broadcast %92 : vector<1x128xf32> to vector<32x128xf32>
    %114 = arith.addf %112, %113 : vector<32x128xf32>
    %c0_44 = arith.constant 0 : index
    %c0_45 = arith.constant 0 : index
    %c0_46 = arith.constant 0 : index
    %115 = vector.load %arg9[%c0_44, %c0_45, %c0_46] : memref<1x128x256xf32, #tpu.memory_space<vmem>>, vector<1x128x256xf32>
    %116 = vector.shape_cast %115 : vector<1x128x256xf32> to vector<128x256xf32>
    %cst_47 = arith.constant dense<0.000000e+00> : vector<32x256xf32>
    %117 = tpu.matmul %114, %116, %cst_47 {dimension_numbers = #tpu.dot_dimension_numbers<[1], [0], [0], [1], [0, 0, 1, 1], [], []>, precision = #tpu.contract_precision<fp32>} : vector<32x128xf32>, vector<128x256xf32>, vector<32x256xf32> -> vector<32x256xf32>
    %c0_48 = arith.constant 0 : index
    %c0_49 = arith.constant 0 : index
    %c0_50 = arith.constant 0 : index
    %118 = vector.load %arg10[%c0_48, %c0_49, %c0_50] : memref<1x1x256xf32, #tpu.memory_space<vmem>>, vector<1x1x256xf32>
    %119 = vector.shape_cast %118 : vector<1x1x256xf32> to vector<1x256xf32>
    %120 = vector.broadcast %119 : vector<1x256xf32> to vector<32x256xf32>
    %121 = arith.addf %117, %120 : vector<32x256xf32>
    %cst_51 = arith.constant 5.000000e-01 : f32
    %122 = vector.broadcast %cst_51 : f32 to vector<32x256xf32>
    %123 = arith.mulf %122, %121 : vector<32x256xf32>
    %cst_52 = arith.constant 0.707106769 : f32
    %124 = vector.broadcast %cst_52 : f32 to vector<32x256xf32>
    %125 = arith.mulf %121, %124 : vector<32x256xf32>
    %126 = math.absf %125 : vector<32x256xf32>
    %cst_53 = arith.constant 0.327591091 : f32
    %127 = vector.broadcast %cst_53 : f32 to vector<32x256xf32>
    %128 = arith.mulf %127, %126 : vector<32x256xf32>
    %cst_54 = arith.constant 1.000000e+00 : f32
    %129 = vector.broadcast %cst_54 : f32 to vector<32x256xf32>
    %130 = arith.addf %129, %128 : vector<32x256xf32>
    %cst_55 = arith.constant 1.000000e+00 : f32
    %131 = vector.broadcast %cst_55 : f32 to vector<32x256xf32>
    %132 = arith.divf %131, %130 : vector<32x256xf32>
    %cst_56 = arith.constant 1.06140542 : f32
    %133 = vector.broadcast %cst_56 : f32 to vector<32x256xf32>
    %134 = arith.mulf %133, %132 : vector<32x256xf32>
    %cst_57 = arith.constant -1.45315206 : f32
    %135 = vector.broadcast %cst_57 : f32 to vector<32x256xf32>
    %136 = arith.addf %134, %135 : vector<32x256xf32>
    %137 = arith.mulf %136, %132 : vector<32x256xf32>
    %cst_58 = arith.constant 1.42141378 : f32
    %138 = vector.broadcast %cst_58 : f32 to vector<32x256xf32>
    %139 = arith.addf %137, %138 : vector<32x256xf32>
    %140 = arith.mulf %139, %132 : vector<32x256xf32>
    %cst_59 = arith.constant -0.284496725 : f32
    %141 = vector.broadcast %cst_59 : f32 to vector<32x256xf32>
    %142 = arith.addf %140, %141 : vector<32x256xf32>
    %143 = arith.mulf %142, %132 : vector<32x256xf32>
    %cst_60 = arith.constant 0.254829586 : f32
    %144 = vector.broadcast %cst_60 : f32 to vector<32x256xf32>
    %145 = arith.addf %143, %144 : vector<32x256xf32>
    %146 = arith.mulf %145, %132 : vector<32x256xf32>
    %cst_61 = arith.constant 0.000000e+00 : f32
    %147 = vector.broadcast %cst_61 : f32 to vector<32x256xf32>
    %148 = arith.subf %147, %126 : vector<32x256xf32>
    %149 = arith.mulf %148, %126 : vector<32x256xf32>
    %150 = math.exp %149 : vector<32x256xf32>
    %151 = arith.mulf %146, %150 : vector<32x256xf32>
    %cst_62 = arith.constant 1.000000e+00 : f32
    %152 = vector.broadcast %cst_62 : f32 to vector<32x256xf32>
    %153 = arith.subf %152, %151 : vector<32x256xf32>
    %cst_63 = arith.constant 0.000000e+00 : f32
    %154 = vector.broadcast %cst_63 : f32 to vector<32x256xf32>
    %155 = arith.cmpf oge, %125, %154 : vector<32x256xf32>
    %cst_64 = arith.constant 0.000000e+00 : f32
    %156 = vector.broadcast %cst_64 : f32 to vector<32x256xf32>
    %157 = arith.subf %156, %153 : vector<32x256xf32>
    %158 = arith.select %155, %153, %157 : vector<32x256xi1>, vector<32x256xf32>
    %cst_65 = arith.constant 1.000000e+00 : f32
    %159 = vector.broadcast %cst_65 : f32 to vector<32x256xf32>
    %160 = arith.addf %159, %158 : vector<32x256xf32>
    %161 = arith.mulf %123, %160 : vector<32x256xf32>
    %c0_66 = arith.constant 0 : index
    %c0_67 = arith.constant 0 : index
    %c0_68 = arith.constant 0 : index
    %162 = vector.load %arg11[%c0_66, %c0_67, %c0_68] : memref<1x256x128xf32, #tpu.memory_space<vmem>>, vector<1x256x128xf32>
    %163 = vector.shape_cast %162 : vector<1x256x128xf32> to vector<256x128xf32>
    %cst_69 = arith.constant dense<0.000000e+00> : vector<32x128xf32>
    %164 = tpu.matmul %161, %163, %cst_69 {dimension_numbers = #tpu.dot_dimension_numbers<[1], [0], [0], [1], [0, 0, 1, 1], [], []>, precision = #tpu.contract_precision<fp32>} : vector<32x256xf32>, vector<256x128xf32>, vector<32x128xf32> -> vector<32x128xf32>
    %c0_70 = arith.constant 0 : index
    %c0_71 = arith.constant 0 : index
    %c0_72 = arith.constant 0 : index
    %165 = vector.load %arg12[%c0_70, %c0_71, %c0_72] : memref<1x1x128xf32, #tpu.memory_space<vmem>>, vector<1x1x128xf32>
    %166 = vector.shape_cast %165 : vector<1x1x128xf32> to vector<1x128xf32>
    %167 = vector.broadcast %166 : vector<1x128xf32> to vector<32x128xf32>
    %168 = arith.addf %164, %167 : vector<32x128xf32>
    %169 = arith.addf %114, %168 : vector<32x128xf32>
    %c0_73 = arith.constant 0 : index
    %c0_74 = arith.constant 0 : index
    %c0_75 = arith.constant 0 : index
    %170 = vector.load %arg13[%c0_73, %c0_74, %c0_75] : memref<1x1x128xf32, #tpu.memory_space<vmem>>, vector<1x1x128xf32>
    %171 = vector.shape_cast %170 : vector<1x1x128xf32> to vector<1x128xf32>
    %c0_76 = arith.constant 0 : index
    %c0_77 = arith.constant 0 : index
    %c0_78 = arith.constant 0 : index
    %172 = vector.load %arg14[%c0_76, %c0_77, %c0_78] : memref<1x1x128xf32, #tpu.memory_space<vmem>>, vector<1x1x128xf32>
    %173 = vector.shape_cast %172 : vector<1x1x128xf32> to vector<1x128xf32>
    %cst_79 = arith.constant dense<0.000000e+00> : vector<32xf32>
    %174 = vector.multi_reduction <add>, %169, %cst_79 [1] : vector<32x128xf32> to vector<32xf32>
    %175 = vector.shape_cast %174 : vector<32xf32> to vector<32x1xf32>
    %cst_80 = arith.constant 1.280000e+02 : f32
    %176 = vector.broadcast %cst_80 : f32 to vector<32x1xf32>
    %177 = arith.divf %175, %176 : vector<32x1xf32>
    %178 = vector.broadcast %177 : vector<32x1xf32> to vector<32x128xf32>
    %179 = arith.subf %169, %178 : vector<32x128xf32>
    %180 = arith.mulf %179, %179 : vector<32x128xf32>
    %cst_81 = arith.constant dense<0.000000e+00> : vector<32xf32>
    %181 = vector.multi_reduction <add>, %180, %cst_81 [1] : vector<32x128xf32> to vector<32xf32>
    %182 = vector.shape_cast %181 : vector<32xf32> to vector<32x1xf32>
    %cst_82 = arith.constant 1.280000e+02 : f32
    %183 = vector.broadcast %cst_82 : f32 to vector<32x1xf32>
    %184 = arith.divf %182, %183 : vector<32x1xf32>
    %185 = vector.broadcast %177 : vector<32x1xf32> to vector<32x128xf32>
    %186 = arith.subf %169, %185 : vector<32x128xf32>
    %cst_83 = arith.constant 9.99999974E-6 : f32
    %187 = vector.broadcast %cst_83 : f32 to vector<32x1xf32>
    %188 = arith.addf %184, %187 : vector<32x1xf32>
    %189 = math.rsqrt %188 : vector<32x1xf32>
    %190 = vector.broadcast %189 : vector<32x1xf32> to vector<32x128xf32>
    %191 = arith.mulf %186, %190 : vector<32x128xf32>
    %192 = vector.broadcast %171 : vector<1x128xf32> to vector<32x128xf32>
    %193 = arith.mulf %191, %192 : vector<32x128xf32>
    %194 = vector.broadcast %173 : vector<1x128xf32> to vector<32x128xf32>
    %195 = arith.addf %193, %194 : vector<32x128xf32>
    %196 = vector.shape_cast %195 : vector<32x128xf32> to vector<2x16x128xf32>
    %c0_84 = arith.constant 0 : index
    %c0_85 = arith.constant 0 : index
    %c0_86 = arith.constant 0 : index
    %197 = vector.load %arg15[%c0_84, %c0_85, %c0_86] : memref<2x16x128xf32, #tpu.memory_space<vmem>>, vector<2x16x128xf32>
    tpu.vector_store %arg15[%c0_84, %c0_85, %c0_86], %196 {strides = array<i32>} : memref<2x16x128xf32, #tpu.memory_space<vmem>>, vector<2x16x128xf32>,
    return
  }
  func.func @transform_0(%arg0: i32, %arg1: i32) -> (i32, i32, i32) {
    %c0_i32 = arith.constant 0 : i32
    %c0_i32_0 = arith.constant 0 : i32
    %c0_i32_1 = arith.constant 0 : i32
    return %arg0, %c0_i32, %c0_i32_0 : i32, i32, i32
  }
  func.func @transform_1(%arg0: i32, %arg1: i32) -> (i32, i32, i32) {
    %c0_i32 = arith.constant 0 : i32
    %c0_i32_0 = arith.constant 0 : i32
    %c0_i32_1 = arith.constant 0 : i32
    return %arg0, %c0_i32, %c0_i32_0 : i32, i32, i32
  }
  func.func @transform_2(%arg0: i32, %arg1: i32) -> (i32, i32, i32) {
    %c0_i32 = arith.constant 0 : i32
    %c0_i32_0 = arith.constant 0 : i32
    %c0_i32_1 = arith.constant 0 : i32
    return %arg1, %c0_i32, %c0_i32_0 : i32, i32, i32
  }
  func.func @transform_3(%arg0: i32, %arg1: i32) -> (i32, i32, i32) {
    %c0_i32 = arith.constant 0 : i32
    %c0_i32_0 = arith.constant 0 : i32
    %c0_i32_1 = arith.constant 0 : i32
    return %arg1, %c0_i32, %c0_i32_0 : i32, i32, i32
  }
  func.func @transform_4(%arg0: i32, %arg1: i32) -> (i32, i32, i32) {
    %c0_i32 = arith.constant 0 : i32
    %c0_i32_0 = arith.constant 0 : i32
    %c0_i32_1 = arith.constant 0 : i32
    return %arg1, %c0_i32, %c0_i32_0 : i32, i32, i32
  }
  func.func @transform_5(%arg0: i32, %arg1: i32) -> (i32, i32, i32) {
    %c0_i32 = arith.constant 0 : i32
    %c0_i32_0 = arith.constant 0 : i32
    %c0_i32_1 = arith.constant 0 : i32
    return %arg1, %c0_i32, %c0_i32_0 : i32, i32, i32
  }
  func.func @transform_6(%arg0: i32, %arg1: i32) -> (i32, i32, i32) {
    %c0_i32 = arith.constant 0 : i32
    %c0_i32_0 = arith.constant 0 : i32
    %c0_i32_1 = arith.constant 0 : i32
    return %arg1, %c0_i32, %c0_i32_0 : i32, i32, i32
  }
  func.func @transform_7(%arg0: i32, %arg1: i32) -> (i32, i32, i32) {
    %c0_i32 = arith.constant 0 : i32
    %c0_i32_0 = arith.constant 0 : i32
    %c0_i32_1 = arith.constant 0 : i32
    return %arg1, %c0_i32, %c0_i32_0 : i32, i32, i32
  }
  func.func @transform_8(%arg0: i32, %arg1: i32) -> (i32, i32, i32) {
    %c0_i32 = arith.constant 0 : i32
    %c0_i32_0 = arith.constant 0 : i32
    %c0_i32_1 = arith.constant 0 : i32
    return %arg1, %c0_i32, %c0_i32_0 : i32, i32, i32
  }
  func.func @transform_9(%arg0: i32, %arg1: i32) -> (i32, i32, i32) {
    %c0_i32 = arith.constant 0 : i32
    %c0_i32_0 = arith.constant 0 : i32
    %c0_i32_1 = arith.constant 0 : i32
    return %arg1, %c0_i32, %c0_i32_0 : i32, i32, i32
  }
  func.func @transform_10(%arg0: i32, %arg1: i32) -> (i32, i32, i32) {
    %c0_i32 = arith.constant 0 : i32
    %c0_i32_0 = arith.constant 0 : i32
    %c0_i32_1 = arith.constant 0 : i32
    return %arg1, %c0_i32, %c0_i32_0 : i32, i32, i32
  }
  func.func @transform_11(%arg0: i32, %arg1: i32) -> (i32, i32, i32) {
    %c0_i32 = arith.constant 0 : i32
    %c0_i32_0 = arith.constant 0 : i32
    %c0_i32_1 = arith.constant 0 : i32
    return %arg1, %c0_i32, %c0_i32_0 : i32, i32, i32
  }
  func.func @transform_12(%arg0: i32, %arg1: i32) -> (i32, i32, i32) {
    %c0_i32 = arith.constant 0 : i32
    %c0_i32_0 = arith.constant 0 : i32
    %c0_i32_1 = arith.constant 0 : i32
    return %arg1, %c0_i32, %c0_i32_0 : i32, i32, i32
  }
  func.func @transform_13(%arg0: i32, %arg1: i32) -> (i32, i32, i32) {
    %c0_i32 = arith.constant 0 : i32
    %c0_i32_0 = arith.constant 0 : i32
    %c0_i32_1 = arith.constant 0 : i32
    return %arg0, %c0_i32, %c0_i32_0 : i32, i32, i32
  }
}

</mosaic_0001>

<llo_original>
// kernel: tpu_custom_call.1
$region0: #{tpu_custom_call.1}
  #allocation0 [shape = 'u32[]', space=smem, size = 0x4, offset = 0x4, fixed_abs, tag = 'smem constant byte address 0x4 - core index']
  #allocation1 [shape = 'u32[72,128]{1,0:T(1,128)}', space=vmem, size = 0x9000, scoped, tag = 'internal scratch']
  %s0 = inlined_call_operand.hbm [shape: f32[2,16,128], index: 0, kind: input, shape index: {}]
  %s1 = inlined_call_operand.hbm [shape: f32[2,16,128], index: 1, kind: input, shape index: {}]
  %s2 = inlined_call_operand.hbm [shape: f32[3,128,256], index: 2, kind: input, shape index: {}]
  %s3 = inlined_call_operand.hbm [shape: f32[3,128,128], index: 3, kind: input, shape index: {}]
  %s4 = inlined_call_operand.hbm [shape: f32[3,128,128], index: 4, kind: input, shape index: {}]
  %s5 = inlined_call_operand.hbm [shape: f32[3,1,128], index: 5, kind: input, shape index: {}]
  %s6 = inlined_call_operand.hbm [shape: f32[3,1,128], index: 6, kind: input, shape index: {}]
  %s7 = inlined_call_operand.hbm [shape: f32[3,128,256], index: 7, kind: input, shape index: {}]
  %s8 = inlined_call_operand.vmem [shape: f32[3,1,256], index: 8, kind: input, shape index: {}]
  %s9 = inlined_call_operand.hbm [shape: f32[3,256,128], index: 9, kind: input, shape index: {}]
  %s10 = inlined_call_operand.vmem [shape: f32[3,1,128], index: 10, kind: input, shape index: {}]
  %s11 = inlined_call_operand.hbm [shape: f32[3,1,128], index: 11, kind: input, shape index: {}]
  %s12 = inlined_call_operand.hbm [shape: f32[3,1,128], index: 12, kind: input, shape index: {}]
  %s13 = inlined_call_operand.hbm [shape: f32[2,16,128], index: 13, kind: output, shape index: {}]
  %s14 = sld [smem:[#allocation0]]
  $region133: #{tpu_custom_call.1} parent=0
    _
  %s16 = ssub.s32 1, %s14
  %s17 = scalar_select 0, %s16, %s14
  $region1: #{tpu_custom_call.1} parent=0
    #allocation2 [shape = 'u8[16384]{0}', space=vmem, size = 0x4000, scoped, tag = 'input window, operand 0, single buffered']
    #allocation3 [shape = 's32[2]{0}', space=sflag, size = 0x8, scoped, tag = 'scoped memory for tpu_custom_call.1']
    #allocation4 [shape = 's32[2]{0}', space=sflag, size = 0x8, scoped, tag = 'scoped memory for tpu_custom_call.1']
    #allocation5 [shape = 'u8[16384]{0}', space=vmem, size = 0x4000, scoped, tag = 'input window, operand 1, single buffered']
    #allocation6 [shape = 's32[1]{0}', space=sflag, size = 0x4, scoped, tag = 'scoped memory for tpu_custom_call.1']
    #allocation7 [shape = 'u8[262144]{0}', space=vmem, size = 0x40000, scoped, tag = 'input window, operand 2']
    #allocation8 [shape = 'u8[131072]{0}', space=vmem, size = 0x20000, scoped, tag = 'input window, operand 3']
    #allocation9 [shape = 'u8[131072]{0}', space=vmem, size = 0x20000, scoped, tag = 'input window, operand 4']
    #allocation10 [shape = 'u8[1024]{0}', space=vmem, size = 0x400, scoped, tag = 'input window, operand 5']
    #allocation11 [shape = 'u8[1024]{0}', space=vmem, size = 0x400, scoped, tag = 'input window, operand 6']
    #allocation12 [shape = 'u8[262144]{0}', space=vmem, size = 0x40000, scoped, tag = 'input window, operand 7']
    #allocation13 [shape = 'u8[262144]{0}', space=vmem, size = 0x40000, scoped, tag = 'input window, operand 9']
    #allocation14 [shape = 'u8[1024]{0}', space=vmem, size = 0x400, scoped, tag = 'input window, operand 11']
    #allocation15 [shape = 'u8[1024]{0}', space=vmem, size = 0x400, scoped, tag = 'input window, operand 12']
    #allocation16 [shape = 'u8[16384]{0}', space=vmem, size = 0x4000, scoped, tag = 'output window, operand 0, single buffered']
    %18 = vsyncpa [#allocation3], 0
    %19 = vsyncpa [#allocation6], 0
    %20 = vsyncpa [#allocation4], 0
    loop: start=0, step=1, limit=5
    $region2: #{tpu_custom_call.1} parent=1 // loop_pre_header
      _
    $region3: #{tpu_custom_call.1} parent=1 // loop_header
      %s22 = sphi 0, %s26
      %p23 = scmp.ge.s32.totalorder %s22, 5
      %s29 = sphi 0, %s41
      %s30 = sphi 0, %s37
      %s31 = sphi 0, %s29
      %s32 = sphi 0, %s30
      %s33 = sphi 0, %s31
      %s34 = sphi 0, %s32
      %s44 = sphi 0, %s46
      %s47 = sphi 0, %s44
      %s48 = sphi 0, %s47
      %s64 = sphi 0, %s48
      %s70 = sphi 0, %s72
      %s73 = sphi 0, %s70
      %s74 = sphi 0, %s73
      %s90 = sphi 0, %s74
      %s96 = sphi 0, %s98
      %s99 = sphi 0, %s96
      %s100 = sphi 0, %s99
      %s116 = sphi 0, %s100
      %s122 = sphi 0, %s124
      %s125 = sphi 0, %s122
      %s126 = sphi 0, %s125
      %s142 = sphi 0, %s126
      %s148 = sphi 0, %s150
      %s151 = sphi 0, %s148
      %s152 = sphi 0, %s151
      %s168 = sphi 0, %s152
      %s174 = sphi 0, %s176
      %s177 = sphi 0, %s174
      %s178 = sphi 0, %s177
      %s194 = sphi 0, %s178
      %s200 = sphi 0, %s202
      %s203 = sphi 0, %s200
      %s204 = sphi 0, %s203
      %s220 = sphi 0, %s204
      %s226 = sphi 0, %s228
      %s229 = sphi 0, %s226
      %s230 = sphi 0, %s229
      %s246 = sphi 0, %s230
      %s252 = sphi 0, %s254
      %s255 = sphi 0, %s252
      %s256 = sphi 0, %s255
      %s272 = sphi 0, %s256
      %s278 = sphi 0, %s280
      %s281 = sphi 0, %s278
      %s282 = sphi 0, %s281
      %s298 = sphi 0, %s282
      %s304 = sphi 0, %s306
      %s307 = sphi 0, %s304
      %s308 = sphi 0, %s307
      %s324 = sphi 0, %s308
      %s330 = sphi 0, %s332
      %s333 = sphi 0, %s330
      %s334 = sphi 0, %s333
      %s350 = sphi 0, %s334
      %s356 = sphi 0, %s358
      %s359 = sphi 0, %s356
      %s360 = sphi 0, %s359
      %s376 = sphi 0, %s360
      %s382 = sphi 0, %s384
      %s385 = sphi 0, %s382
      %s386 = sphi 0, %s385
      %s402 = sphi 0, %s386
    $region4: #{tpu_custom_call.1} parent=1 // loop_header_branch
      %25 = sbr.rel (%p23) target = $region8
    $region5: #{tpu_custom_call.1} parent=1 // loop_body
      %s27 = ssub.s32 %s22, 1
      %s28 = ssub.s32 %s22, 2
      %s35 = sadd.s32 1, %s30
      %p36 = scmp.ge.s32.totalorder %s35, 3
      %s37 = scalar_select %p36, 0, %s35
      %s38 = sadd.s32 1, %s29
      %s39 = scalar_select %p36, %s38, %s29
      %p40 = scmp.ge.s32.totalorder %s39, 1
      %s41 = scalar_select %p40, 0, %s39
      %s42 = ssub.s32 %s29, %s41
      %p43 = scmp.eq.s32.totalorder %s42, 0
      %s45 = sadd.s32 %s44, 1
      %s46 = scalar_select %p43, %s44, %s45
      %p49 = pneg %p43
      %p50 = scmp.eq.s32.totalorder %s22, 2
      %p51 = por %p49, %p50
      %p52 = scmp.ne.s32.totalorder %s44, %s47
      %p53 = scmp.eq.s32.totalorder %s22, 0
      %p54 = por %p52, %p53
      %p55 = scmp.ne.s32.totalorder %s44, %s47
      %p56 = scmp.eq.s32.totalorder %s27, 2
      %p57 = por %p55, %p56
      %p58 = scmp.ne.s32.totalorder %s47, %s48
      %p59 = scmp.eq.s32.totalorder %s27, 0
      %p60 = por %p58, %p59
      %p61 = scmp.ne.s32.totalorder %s47, %s48
      %p62 = scmp.eq.s32.totalorder %s28, 2
      %p63 = por %p61, %p62
      %p65 = scmp.ne.s32.totalorder %s48, %s64
      %p66 = scmp.eq.s32.totalorder %s28, 0
      %p67 = por %p65, %p66
      %s68 = ssub.s32 %s29, %s41
      %p69 = scmp.eq.s32.totalorder %s68, 0
      %s71 = sadd.s32 %s70, 1
      %s72 = scalar_select %p69, %s70, %s71
      %p75 = pneg %p69
      %p76 = scmp.eq.s32.totalorder %s22, 2
      %p77 = por %p75, %p76
      %p78 = scmp.ne.s32.totalorder %s70, %s73
      %p79 = scmp.eq.s32.totalorder %s22, 0
      %p80 = por %p78, %p79
      %p81 = scmp.ne.s32.totalorder %s70, %s73
      %p82 = scmp.eq.s32.totalorder %s27, 2
      %p83 = por %p81, %p82
      %p84 = scmp.ne.s32.totalorder %s73, %s74
      %p85 = scmp.eq.s32.totalorder %s27, 0
      %p86 = por %p84, %p85
      %p87 = scmp.ne.s32.totalorder %s73, %s74
      %p88 = scmp.eq.s32.totalorder %s28, 2
      %p89 = por %p87, %p88
      %p91 = scmp.ne.s32.totalorder %s74, %s90
      %p92 = scmp.eq.s32.totalorder %s28, 0
      %p93 = por %p91, %p92
      %s94 = ssub.s32 %s30, %s37
      %p95 = scmp.eq.s32.totalorder %s94, 0
      %s97 = sadd.s32 %s96, 1
      %s98 = scalar_select %p95, %s96, %s97
      %p101 = pneg %p95
      %p102 = scmp.eq.s32.totalorder %s22, 2
      %p103 = por %p101, %p102
      %p104 = scmp.ne.s32.totalorder %s96, %s99
      %p105 = scmp.eq.s32.totalorder %s22, 0
      %p106 = por %p104, %p105
      %p107 = scmp.ne.s32.totalorder %s96, %s99
      %p108 = scmp.eq.s32.totalorder %s27, 2
      %p109 = por %p107, %p108
      %p110 = scmp.ne.s32.totalorder %s99, %s100
      %p111 = scmp.eq.s32.totalorder %s27, 0
      %p112 = por %p110, %p111
      %p113 = scmp.ne.s32.totalorder %s99, %s100
      %p114 = scmp.eq.s32.totalorder %s28, 2
      %p115 = por %p113, %p114
      %p117 = scmp.ne.s32.totalorder %s100, %s116
      %p118 = scmp.eq.s32.totalorder %s28, 0
      %p119 = por %p117, %p118
      %s120 = ssub.s32 %s30, %s37
      %p121 = scmp.eq.s32.totalorder %s120, 0
      %s123 = sadd.s32 %s122, 1
      %s124 = scalar_select %p121, %s122, %s123
      %p127 = pneg %p121
      %p128 = scmp.eq.s32.totalorder %s22, 2
      %p129 = por %p127, %p128
      %p130 = scmp.ne.s32.totalorder %s122, %s125
      %p131 = scmp.eq.s32.totalorder %s22, 0
      %p132 = por %p130, %p131
      %p133 = scmp.ne.s32.totalorder %s122, %s125
      %p134 = scmp.eq.s32.totalorder %s27, 2
      %p135 = por %p133, %p134
      %p136 = scmp.ne.s32.totalorder %s125, %s126
      %p137 = scmp.eq.s32.totalorder %s27, 0
      %p138 = por %p136, %p137
      %p139 = scmp.ne.s32.totalorder %s125, %s126
      %p140 = scmp.eq.s32.totalorder %s28, 2
      %p141 = por %p139, %p140
      %p143 = scmp.ne.s32.totalorder %s126, %s142
      %p144 = scmp.eq.s32.totalorder %s28, 0
      %p145 = por %p143, %p144
      %s146 = ssub.s32 %s30, %s37
      %p147 = scmp.eq.s32.totalorder %s146, 0
      %s149 = sadd.s32 %s148, 1
      %s150 = scalar_select %p147, %s148, %s149
      %p153 = pneg %p147
      %p154 = scmp.eq.s32.totalorder %s22, 2
      %p155 = por %p153, %p154
      %p156 = scmp.ne.s32.totalorder %s148, %s151
      %p157 = scmp.eq.s32.totalorder %s22, 0
      %p158 = por %p156, %p157
      %p159 = scmp.ne.s32.totalorder %s148, %s151
      %p160 = scmp.eq.s32.totalorder %s27, 2
      %p161 = por %p159, %p160
      %p162 = scmp.ne.s32.totalorder %s151, %s152
      %p163 = scmp.eq.s32.totalorder %s27, 0
      %p164 = por %p162, %p163
      %p165 = scmp.ne.s32.totalorder %s151, %s152
      %p166 = scmp.eq.s32.totalorder %s28, 2
      %p167 = por %p165, %p166
      %p169 = scmp.ne.s32.totalorder %s152, %s168
      %p170 = scmp.eq.s32.totalorder %s28, 0
      %p171 = por %p169, %p170
      %s172 = ssub.s32 %s30, %s37
      %p173 = scmp.eq.s32.totalorder %s172, 0
      %s175 = sadd.s32 %s174, 1
      %s176 = scalar_select %p173, %s174, %s175
      %p179 = pneg %p173
      %p180 = scmp.eq.s32.totalorder %s22, 2
      %p181 = por %p179, %p180
      %p182 = scmp.ne.s32.totalorder %s174, %s177
      %p183 = scmp.eq.s32.totalorder %s22, 0
      %p184 = por %p182, %p183
      %p185 = scmp.ne.s32.totalorder %s174, %s177
      %p186 = scmp.eq.s32.totalorder %s27, 2
      %p187 = por %p185, %p186
      %p188 = scmp.ne.s32.totalorder %s177, %s178
      %p189 = scmp.eq.s32.totalorder %s27, 0
      %p190 = por %p188, %p189
      %p191 = scmp.ne.s32.totalorder %s177, %s178
      %p192 = scmp.eq.s32.totalorder %s28, 2
      %p193 = por %p191, %p192
      %p195 = scmp.ne.s32.totalorder %s178, %s194
      %p196 = scmp.eq.s32.totalorder %s28, 0
      %p197 = por %p195, %p196
      %s198 = ssub.s32 %s30, %s37
      %p199 = scmp.eq.s32.totalorder %s198, 0
      %s201 = sadd.s32 %s200, 1
      %s202 = scalar_select %p199, %s200, %s201
      %p205 = pneg %p199
      %p206 = scmp.eq.s32.totalorder %s22, 2
      %p207 = por %p205, %p206
      %p208 = scmp.ne.s32.totalorder %s200, %s203
      %p209 = scmp.eq.s32.totalorder %s22, 0
      %p210 = por %p208, %p209
      %p211 = scmp.ne.s32.totalorder %s200, %s203
      %p212 = scmp.eq.s32.totalorder %s27, 2
      %p213 = por %p211, %p212
      %p214 = scmp.ne.s32.totalorder %s203, %s204
      %p215 = scmp.eq.s32.totalorder %s27, 0
      %p216 = por %p214, %p215
      %p217 = scmp.ne.s32.totalorder %s203, %s204
      %p218 = scmp.eq.s32.totalorder %s28, 2
      %p219 = por %p217, %p218
      %p221 = scmp.ne.s32.totalorder %s204, %s220
      %p222 = scmp.eq.s32.totalorder %s28, 0
      %p223 = por %p221, %p222
      %s224 = ssub.s32 %s30, %s37
      %p225 = scmp.eq.s32.totalorder %s224, 0
      %s227 = sadd.s32 %s226, 1
      %s228 = scalar_select %p225, %s226, %s227
      %p231 = pneg %p225
      %p232 = scmp.eq.s32.totalorder %s22, 2
      %p233 = por %p231, %p232
      %p234 = scmp.ne.s32.totalorder %s226, %s229
      %p235 = scmp.eq.s32.totalorder %s22, 0
      %p236 = por %p234, %p235
      %p237 = scmp.ne.s32.totalorder %s226, %s229
      %p238 = scmp.eq.s32.totalorder %s27, 2
      %p239 = por %p237, %p238
      %p240 = scmp.ne.s32.totalorder %s229, %s230
      %p241 = scmp.eq.s32.totalorder %s27, 0
      %p242 = por %p240, %p241
      %p243 = scmp.ne.s32.totalorder %s229, %s230
      %p244 = scmp.eq.s32.totalorder %s28, 2
      %p245 = por %p243, %p244
      %p247 = scmp.ne.s32.totalorder %s230, %s246
      %p248 = scmp.eq.s32.totalorder %s28, 0
      %p249 = por %p247, %p248
      %s250 = ssub.s32 %s30, %s37
      %p251 = scmp.eq.s32.totalorder %s250, 0
      %s253 = sadd.s32 %s252, 1
      %s254 = scalar_select %p251, %s252, %s253
      %p257 = pneg %p251
      %p258 = scmp.eq.s32.totalorder %s22, 2
      %p259 = por %p257, %p258
      %p260 = scmp.ne.s32.totalorder %s252, %s255
      %p261 = scmp.eq.s32.totalorder %s22, 0
      %p262 = por %p260, %p261
      %p263 = scmp.ne.s32.totalorder %s252, %s255
      %p264 = scmp.eq.s32.totalorder %s27, 2
      %p265 = por %p263, %p264
      %p266 = scmp.ne.s32.totalorder %s255, %s256
      %p267 = scmp.eq.s32.totalorder %s27, 0
      %p268 = por %p266, %p267
      %p269 = scmp.ne.s32.totalorder %s255, %s256
      %p270 = scmp.eq.s32.totalorder %s28, 2
      %p271 = por %p269, %p270
      %p273 = scmp.ne.s32.totalorder %s256, %s272
      %p274 = scmp.eq.s32.totalorder %s28, 0
      %p275 = por %p273, %p274
      %s276 = ssub.s32 %s30, %s37
      %p277 = scmp.eq.s32.totalorder %s276, 0
      %s279 = sadd.s32 %s278, 1
      %s280 = scalar_select %p277, %s278, %s279
      %p283 = pneg %p277
      %p284 = scmp.eq.s32.totalorder %s22, 2
      %p285 = por %p283, %p284
      %p286 = scmp.ne.s32.totalorder %s278, %s281
      %p287 = scmp.eq.s32.totalorder %s22, 0
      %p288 = por %p286, %p287
      %p289 = scmp.ne.s32.totalorder %s278, %s281
      %p290 = scmp.eq.s32.totalorder %s27, 2
      %p291 = por %p289, %p290
      %p292 = scmp.ne.s32.totalorder %s281, %s282
      %p293 = scmp.eq.s32.totalorder %s27, 0
      %p294 = por %p292, %p293
      %p295 = scmp.ne.s32.totalorder %s281, %s282
      %p296 = scmp.eq.s32.totalorder %s28, 2
      %p297 = por %p295, %p296
      %p299 = scmp.ne.s32.totalorder %s282, %s298
      %p300 = scmp.eq.s32.totalorder %s28, 0
      %p301 = por %p299, %p300
      %s302 = ssub.s32 %s30, %s37
      %p303 = scmp.eq.s32.totalorder %s302, 0
      %s305 = sadd.s32 %s304, 1
      %s306 = scalar_select %p303, %s304, %s305
      %p309 = pneg %p303
      %p310 = scmp.eq.s32.totalorder %s22, 2
      %p311 = por %p309, %p310
      %p312 = scmp.ne.s32.totalorder %s304, %s307
      %p313 = scmp.eq.s32.totalorder %s22, 0
      %p314 = por %p312, %p313
      %p315 = scmp.ne.s32.totalorder %s304, %s307
      %p316 = scmp.eq.s32.totalorder %s27, 2
      %p317 = por %p315, %p316
      %p318 = scmp.ne.s32.totalorder %s307, %s308
      %p319 = scmp.eq.s32.totalorder %s27, 0
      %p320 = por %p318, %p319
      %p321 = scmp.ne.s32.totalorder %s307, %s308
      %p322 = scmp.eq.s32.totalorder %s28, 2
      %p323 = por %p321, %p322
      %p325 = scmp.ne.s32.totalorder %s308, %s324
      %p326 = scmp.eq.s32.totalorder %s28, 0
      %p327 = por %p325, %p326
      %s328 = ssub.s32 %s30, %s37
      %p329 = scmp.eq.s32.totalorder %s328, 0
      %s331 = sadd.s32 %s330, 1
      %s332 = scalar_select %p329, %s330, %s331
      %p335 = pneg %p329
      %p336 = scmp.eq.s32.totalorder %s22, 2
      %p337 = por %p335, %p336
      %p338 = scmp.ne.s32.totalorder %s330, %s333
      %p339 = scmp.eq.s32.totalorder %s22, 0
      %p340 = por %p338, %p339
      %p341 = scmp.ne.s32.totalorder %s330, %s333
      %p342 = scmp.eq.s32.totalorder %s27, 2
      %p343 = por %p341, %p342
      %p344 = scmp.ne.s32.totalorder %s333, %s334
      %p345 = scmp.eq.s32.totalorder %s27, 0
      %p346 = por %p344, %p345
      %p347 = scmp.ne.s32.totalorder %s333, %s334
      %p348 = scmp.eq.s32.totalorder %s28, 2
      %p349 = por %p347, %p348
      %p351 = scmp.ne.s32.totalorder %s334, %s350
      %p352 = scmp.eq.s32.totalorder %s28, 0
      %p353 = por %p351, %p352
      %s354 = ssub.s32 %s30, %s37
      %p355 = scmp.eq.s32.totalorder %s354, 0
      %s357 = sadd.s32 %s356, 1
      %s358 = scalar_select %p355, %s356, %s357
      %p361 = pneg %p355
      %p362 = scmp.eq.s32.totalorder %s22, 2
      %p363 = por %p361, %p362
      %p364 = scmp.ne.s32.totalorder %s356, %s359
      %p365 = scmp.eq.s32.totalorder %s22, 0
      %p366 = por %p364, %p365
      %p367 = scmp.ne.s32.totalorder %s356, %s359
      %p368 = scmp.eq.s32.totalorder %s27, 2
      %p369 = por %p367, %p368
      %p370 = scmp.ne.s32.totalorder %s359, %s360
      %p371 = scmp.eq.s32.totalorder %s27, 0
      %p372 = por %p370, %p371
      %p373 = scmp.ne.s32.totalorder %s359, %s360
      %p374 = scmp.eq.s32.totalorder %s28, 2
      %p375 = por %p373, %p374
      %p377 = scmp.ne.s32.totalorder %s360, %s376
      %p378 = scmp.eq.s32.totalorder %s28, 0
      %p379 = por %p377, %p378
      %s380 = ssub.s32 %s29, %s41
      %p381 = scmp.eq.s32.totalorder %s380, 0
      %s383 = sadd.s32 %s382, 1
      %s384 = scalar_select %p381, %s382, %s383
      %p387 = pneg %p381
      %p388 = scmp.eq.s32.totalorder %s22, 2
      %p389 = por %p387, %p388
      %p390 = scmp.ne.s32.totalorder %s382, %s385
      %p391 = scmp.eq.s32.totalorder %s22, 0
      %p392 = por %p390, %p391
      %p393 = scmp.ne.s32.totalorder %s382, %s385
      %p394 = scmp.eq.s32.totalorder %s27, 2
      %p395 = por %p393, %p394
      %p396 = scmp.ne.s32.totalorder %s385, %s386
      %p397 = scmp.eq.s32.totalorder %s27, 0
      %p398 = por %p396, %p397
      %p399 = scmp.ne.s32.totalorder %s385, %s386
      %p400 = scmp.eq.s32.totalorder %s28, 2
      %p401 = por %p399, %p400
      %p403 = scmp.ne.s32.totalorder %s386, %s402
      %p404 = scmp.eq.s32.totalorder %s28, 0
      %p405 = por %p403, %p404
      %p406 = scmp.le.s32.totalorder 1, %s22
      %p407 = scmp.lt.s32.totalorder %s22, 4
      %p408 = pnand %p406, %p407
      %p409 = pneg %p408
      // Predicated region
      $region9: #{tpu_custom_call.1} parent=5 // pred_check
        _
      $region10: #{tpu_custom_call.1} parent=5 // pred_check_branch
        %411 = sbr.rel (%p408) target = $region12
      $region11: #{tpu_custom_call.1} parent=5 // pred_region
        %s412 = ssub.s32 %s22, 1
        // Predicated region
        $region13: #{tpu_custom_call.1} parent=11 // pred_check
          %p413 = pneg %p60
        $region14: #{tpu_custom_call.1} parent=11 // pred_check_branch
          %415 = sbr.rel (%p413) target = $region16
        $region15: #{tpu_custom_call.1} parent=11 // pred_region
          %s416 = smul.u32 2, %s31
          %418 = vsyncadd [#allocation3], 0
          %s419 = smul.addr %s416, 2
          %s420 = smul.addr %s419, 8
          %s421 = scalar_lea.hbm %s0, %s420
          %s422 = sshll.u32 %s421, 4
          %s423 = int_to_ptr.hbm [resolvable:$true] %s422
          %s424 = sshll.u32 [#allocation2], 4
          %s425 = int_to_ptr.vmem [resolvable:$true] %s424
          %430 = dma.hbm_to_vmem [thread:$0]  %s423, 512, %s425, [#allocation3], 128, 128, 8
        $region16: #{tpu_custom_call.1} parent=11 // pred_fallthru
          _
        // Predicated region
        $region17: #{tpu_custom_call.1} parent=11 // pred_check
          %p431 = pneg %p86
        $region18: #{tpu_custom_call.1} parent=11 // pred_check_branch
          %433 = sbr.rel (%p431) target = $region20
        $region19: #{tpu_custom_call.1} parent=11 // pred_region
          %s434 = smul.u32 2, %s31
          %436 = vsyncadd [#allocation6], 0
          %s437 = smul.addr %s434, 2
          %s438 = smul.addr %s437, 8
          %s439 = scalar_lea.hbm %s1, %s438
          %s440 = sshll.u32 %s439, 4
          %s441 = int_to_ptr.hbm [resolvable:$true] %s440
          %s442 = sshll.u32 [#allocation5], 4
          %s443 = int_to_ptr.vmem [resolvable:$true] %s442
          %448 = dma.hbm_to_vmem [thread:$0]  %s441, 512, %s443, [#allocation6], 128, 128, 8
        $region20: #{tpu_custom_call.1} parent=11 // pred_fallthru
          _
      $region12: #{tpu_custom_call.1} parent=5 // pred_fallthru
        _
      %p449 = scmp.lt.s32.totalorder %s22, 3
      // Predicated region
      $region21: #{tpu_custom_call.1} parent=5 // pred_check
        %p450 = pneg %p449
      $region22: #{tpu_custom_call.1} parent=5 // pred_check_branch
        %452 = sbr.rel (%p450) target = $region24
      $region23: #{tpu_custom_call.1} parent=5 // pred_region
        // Predicated region
        $region25: #{tpu_custom_call.1} parent=23 // pred_check
          %p453 = pneg %p106
        $region26: #{tpu_custom_call.1} parent=23 // pred_check_branch
          %455 = sbr.rel (%p453) target = $region28
        $region27: #{tpu_custom_call.1} parent=23 // pred_region
          %s456 = sand.u32 %s22, 1
          %s457 = scalar_lea.sflag [#allocation3], %s456
          %s458 = sand.u32 %s96, 1
          %s459 = smul.addr %s458, 256
          %s460 = scalar_lea.vmem [#allocation7], %s459
          %462 = vsyncadd %s457, 0
          %s463 = smul.addr %s30, 32
          %s464 = smul.addr %s463, 8
          %s465 = scalar_lea.hbm %s2, %s464
          %s466 = sshll.u32 %s465, 4
          %s467 = int_to_ptr.hbm [resolvable:$true] %s466
          %s468 = sshll.u32 %s460, 4
          %s469 = int_to_ptr.vmem [resolvable:$true] %s468
          %474 = dma.hbm_to_vmem [thread:$0]  %s467, 4096, %s469, %s457, 256, 256, 16
        $region28: #{tpu_custom_call.1} parent=23 // pred_fallthru
          _
        // Predicated region
        $region29: #{tpu_custom_call.1} parent=23 // pred_check
          %p475 = pneg %p132
        $region30: #{tpu_custom_call.1} parent=23 // pred_check_branch
          %477 = sbr.rel (%p475) target = $region32
        $region31: #{tpu_custom_call.1} parent=23 // pred_region
          %s478 = sand.u32 %s22, 1
          %s479 = scalar_lea.sflag [#allocation3], %s478
          %s480 = sand.u32 %s122, 1
          %s481 = smul.addr %s480, 128
          %s482 = scalar_lea.vmem [#allocation8], %s481
          %484 = vsyncadd %s479, 0
          %s485 = smul.addr %s30, 16
          %s486 = smul.addr %s485, 8
          %s487 = scalar_lea.hbm %s3, %s486
          %s488 = sshll.u32 %s487, 4
          %s489 = int_to_ptr.hbm [resolvable:$true] %s488
          %s490 = sshll.u32 %s482, 4
          %s491 = int_to_ptr.vmem [resolvable:$true] %s490
          %496 = dma.hbm_to_vmem [thread:$0]  %s489, 2048, %s491, %s479, 128, 128, 8
        $region32: #{tpu_custom_call.1} parent=23 // pred_fallthru
          _
        // Predicated region
        $region33: #{tpu_custom_call.1} parent=23 // pred_check
          %p497 = pneg %p158
        $region34: #{tpu_custom_call.1} parent=23 // pred_check_branch
          %499 = sbr.rel (%p497) target = $region36
        $region35: #{tpu_custom_call.1} parent=23 // pred_region
          %s500 = sand.u32 %s22, 1
          %s501 = scalar_lea.sflag [#allocation3], %s500
          %s502 = sand.u32 %s148, 1
          %s503 = smul.addr %s502, 128
          %s504 = scalar_lea.vmem [#allocation9], %s503
          %506 = vsyncadd %s501, 0
          %s507 = smul.addr %s30, 16
          %s508 = smul.addr %s507, 8
          %s509 = scalar_lea.hbm %s4, %s508
          %s510 = sshll.u32 %s509, 4
          %s511 = int_to_ptr.hbm [resolvable:$true] %s510
          %s512 = sshll.u32 %s504, 4
          %s513 = int_to_ptr.vmem [resolvable:$true] %s512
          %518 = dma.hbm_to_vmem [thread:$0]  %s511, 2048, %s513, %s501, 128, 128, 8
        $region36: #{tpu_custom_call.1} parent=23 // pred_fallthru
          _
        // Predicated region
        $region37: #{tpu_custom_call.1} parent=23 // pred_check
          %p519 = pneg %p184
        $region38: #{tpu_custom_call.1} parent=23 // pred_check_branch
          %521 = sbr.rel (%p519) target = $region40
        $region39: #{tpu_custom_call.1} parent=23 // pred_region
          %s522 = sand.u32 %s22, 1
          %s523 = scalar_lea.sflag [#allocation3], %s522
          %s524 = sand.u32 %s174, 1
          %s525 = scalar_lea.vmem [#allocation10], %s524
          %527 = vsyncadd %s523, 0
          %s528 = scalar_lea.hbm %s5, %s30
          %s530 = sshll.u32 %s528, 4
          %s531 = int_to_ptr.hbm [resolvable:$true] %s530
          %s532 = sshll.u32 %s525, 4
          %s533 = int_to_ptr.vmem [resolvable:$true] %s532
          %535 = dma.hbm_to_vmem [thread:$0]  %s531, 16, %s533, %s523
        $region40: #{tpu_custom_call.1} parent=23 // pred_fallthru
          _
        // Predicated region
        $region41: #{tpu_custom_call.1} parent=23 // pred_check
          %p536 = pneg %p210
        $region42: #{tpu_custom_call.1} parent=23 // pred_check_branch
          %538 = sbr.rel (%p536) target = $region44
        $region43: #{tpu_custom_call.1} parent=23 // pred_region
          %s539 = sand.u32 %s22, 1
          %s540 = scalar_lea.sflag [#allocation3], %s539
          %s541 = sand.u32 %s200, 1
          %s542 = scalar_lea.vmem [#allocation11], %s541
          %544 = vsyncadd %s540, 0
          %s545 = scalar_lea.hbm %s6, %s30
          %s547 = sshll.u32 %s545, 4
          %s548 = int_to_ptr.hbm [resolvable:$true] %s547
          %s549 = sshll.u32 %s542, 4
          %s550 = int_to_ptr.vmem [resolvable:$true] %s549
          %552 = dma.hbm_to_vmem [thread:$0]  %s548, 16, %s550, %s540
        $region44: #{tpu_custom_call.1} parent=23 // pred_fallthru
          _
        // Predicated region
        $region45: #{tpu_custom_call.1} parent=23 // pred_check
          %p553 = pneg %p236
        $region46: #{tpu_custom_call.1} parent=23 // pred_check_branch
          %555 = sbr.rel (%p553) target = $region48
        $region47: #{tpu_custom_call.1} parent=23 // pred_region
          %s556 = sand.u32 %s22, 1
          %s557 = scalar_lea.sflag [#allocation3], %s556
          %s558 = sand.u32 %s226, 1
          %s559 = smul.addr %s558, 256
          %s560 = scalar_lea.vmem [#allocation12], %s559
          %562 = vsyncadd %s557, 0
          %s563 = smul.addr %s30, 32
          %s564 = smul.addr %s563, 8
          %s565 = scalar_lea.hbm %s7, %s564
          %s566 = sshll.u32 %s565, 4
          %s567 = int_to_ptr.hbm [resolvable:$true] %s566
          %s568 = sshll.u32 %s560, 4
          %s569 = int_to_ptr.vmem [resolvable:$true] %s568
          %574 = dma.hbm_to_vmem [thread:$0]  %s567, 4096, %s569, %s557, 256, 256, 16
        $region48: #{tpu_custom_call.1} parent=23 // pred_fallthru
          _
        // Predicated region
        $region49: #{tpu_custom_call.1} parent=23 // pred_check
          %p575 = pneg %p262
        $region50: #{tpu_custom_call.1} parent=23 // pred_check_branch
          %577 = sbr.rel (%p575) target = $region52
        $region51: #{tpu_custom_call.1} parent=23 // pred_region
          %p578 = scmp.lt.s32.totalorder %s30, 2
          %s579 = scalar_select %p578, %s30, 2
          %s580 = smul.addr %s579, 2
          %s581 = scalar_lea.vmem %s8, %s580
        $region52: #{tpu_custom_call.1} parent=23 // pred_fallthru
          _
        // Predicated region
        $region53: #{tpu_custom_call.1} parent=23 // pred_check
          %p582 = pneg %p288
        $region54: #{tpu_custom_call.1} parent=23 // pred_check_branch
          %584 = sbr.rel (%p582) target = $region56
        $region55: #{tpu_custom_call.1} parent=23 // pred_region
          %s585 = sand.u32 %s22, 1
          %s586 = scalar_lea.sflag [#allocation3], %s585
          %s587 = sand.u32 %s278, 1
          %s588 = smul.addr %s587, 256
          %s589 = scalar_lea.vmem [#allocation13], %s588
          %591 = vsyncadd %s586, 0
          %s592 = smul.addr %s30, 32
          %s593 = smul.addr %s592, 8
          %s594 = scalar_lea.hbm %s9, %s593
          %s595 = sshll.u32 %s594, 4
          %s596 = int_to_ptr.hbm [resolvable:$true] %s595
          %s597 = sshll.u32 %s589, 4
          %s598 = int_to_ptr.vmem [resolvable:$true] %s597
          %603 = dma.hbm_to_vmem [thread:$0]  %s596, 4096, %s598, %s586, 128, 128, 8
        $region56: #{tpu_custom_call.1} parent=23 // pred_fallthru
          _
        // Predicated region
        $region57: #{tpu_custom_call.1} parent=23 // pred_check
          %p604 = pneg %p314
        $region58: #{tpu_custom_call.1} parent=23 // pred_check_branch
          %606 = sbr.rel (%p604) target = $region60
        $region59: #{tpu_custom_call.1} parent=23 // pred_region
          %p607 = scmp.lt.s32.totalorder %s30, 2
          %s608 = scalar_select %p607, %s30, 2
          %s609 = scalar_lea.vmem %s10, %s608
        $region60: #{tpu_custom_call.1} parent=23 // pred_fallthru
          _
        // Predicated region
        $region61: #{tpu_custom_call.1} parent=23 // pred_check
          %p610 = pneg %p340
        $region62: #{tpu_custom_call.1} parent=23 // pred_check_branch
          %612 = sbr.rel (%p610) target = $region64
        $region63: #{tpu_custom_call.1} parent=23 // pred_region
          %s613 = sand.u32 %s22, 1
          %s614 = scalar_lea.sflag [#allocation3], %s613
          %s615 = sand.u32 %s330, 1
          %s616 = scalar_lea.vmem [#allocation14], %s615
          %618 = vsyncadd %s614, 0
          %s619 = scalar_lea.hbm %s11, %s30
          %s621 = sshll.u32 %s619, 4
          %s622 = int_to_ptr.hbm [resolvable:$true] %s621
          %s623 = sshll.u32 %s616, 4
          %s624 = int_to_ptr.vmem [resolvable:$true] %s623
          %626 = dma.hbm_to_vmem [thread:$0]  %s622, 16, %s624, %s614
        $region64: #{tpu_custom_call.1} parent=23 // pred_fallthru
          _
        // Predicated region
        $region65: #{tpu_custom_call.1} parent=23 // pred_check
          %p627 = pneg %p366
        $region66: #{tpu_custom_call.1} parent=23 // pred_check_branch
          %629 = sbr.rel (%p627) target = $region68
        $region67: #{tpu_custom_call.1} parent=23 // pred_region
          %s630 = sand.u32 %s22, 1
          %s631 = scalar_lea.sflag [#allocation3], %s630
          %s632 = sand.u32 %s356, 1
          %s633 = scalar_lea.vmem [#allocation15], %s632
          %635 = vsyncadd %s631, 0
          %s636 = scalar_lea.hbm %s12, %s30
          %s638 = sshll.u32 %s636, 4
          %s639 = int_to_ptr.hbm [resolvable:$true] %s638
          %s640 = sshll.u32 %s633, 4
          %s641 = int_to_ptr.vmem [resolvable:$true] %s640
          %643 = dma.hbm_to_vmem [thread:$0]  %s639, 16, %s641, %s631
        $region68: #{tpu_custom_call.1} parent=23 // pred_fallthru
          _
      $region24: #{tpu_custom_call.1} parent=5 // pred_fallthru
        _
      %p644 = scmp.le.s32.totalorder 1, %s22
      %p645 = scmp.lt.s32.totalorder %s22, 4
      %p646 = pnand %p644, %p645
      %p647 = pneg %p646
      // Predicated region
      $region69: #{tpu_custom_call.1} parent=5 // pred_check
        _
      $region70: #{tpu_custom_call.1} parent=5 // pred_check_branch
        %649 = sbr.rel (%p646) target = $region72
      $region71: #{tpu_custom_call.1} parent=5 // pred_region
        %s650 = ssub.s32 %s22, 1
        // Predicated region
        $region73: #{tpu_custom_call.1} parent=71 // pred_check
          %p651 = pneg %p60
        $region74: #{tpu_custom_call.1} parent=71 // pred_check_branch
          %653 = sbr.rel (%p651) target = $region76
        $region75: #{tpu_custom_call.1} parent=71 // pred_region
          %655 = dma.done [#allocation3], 512
        $region76: #{tpu_custom_call.1} parent=71 // pred_fallthru
          _
        // Predicated region
        $region77: #{tpu_custom_call.1} parent=71 // pred_check
          %p656 = pneg %p86
        $region78: #{tpu_custom_call.1} parent=71 // pred_check_branch
          %658 = sbr.rel (%p656) target = $region80
        $region79: #{tpu_custom_call.1} parent=71 // pred_region
          %660 = dma.done [#allocation6], 512
        $region80: #{tpu_custom_call.1} parent=71 // pred_fallthru
          _
        %s661 = sand.u32 %s27, 1
        %s662 = scalar_lea.sflag [#allocation3], %s661
        %s663 = sand.u32 %s99, 1
        %s664 = smul.addr %s663, 256
        %s665 = scalar_lea.vmem [#allocation7], %s664
        // Predicated region
        $region81: #{tpu_custom_call.1} parent=71 // pred_check
          %p666 = pneg %p112
        $region82: #{tpu_custom_call.1} parent=71 // pred_check_branch
          %668 = sbr.rel (%p666) target = $region84
        $region83: #{tpu_custom_call.1} parent=71 // pred_region
          %670 = dma.done %s662, 4096
        $region84: #{tpu_custom_call.1} parent=71 // pred_fallthru
          _
        %s671 = sand.u32 %s27, 1
        %s672 = scalar_lea.sflag [#allocation3], %s671
        %s673 = sand.u32 %s125, 1
        %s674 = smul.addr %s673, 128
        %s675 = scalar_lea.vmem [#allocation8], %s674
        // Predicated region
        $region85: #{tpu_custom_call.1} parent=71 // pred_check
          %p676 = pneg %p138
        $region86: #{tpu_custom_call.1} parent=71 // pred_check_branch
          %678 = sbr.rel (%p676) target = $region88
        $region87: #{tpu_custom_call.1} parent=71 // pred_region
          %680 = dma.done %s672, 2048
        $region88: #{tpu_custom_call.1} parent=71 // pred_fallthru
          _
        %s681 = sand.u32 %s27, 1
        %s682 = scalar_lea.sflag [#allocation3], %s681
        %s683 = sand.u32 %s151, 1
        %s684 = smul.addr %s683, 128
        %s685 = scalar_lea.vmem [#allocation9], %s684
        // Predicated region
        $region89: #{tpu_custom_call.1} parent=71 // pred_check
          %p686 = pneg %p164
        $region90: #{tpu_custom_call.1} parent=71 // pred_check_branch
          %688 = sbr.rel (%p686) target = $region92
        $region91: #{tpu_custom_call.1} parent=71 // pred_region
          %690 = dma.done %s682, 2048
        $region92: #{tpu_custom_call.1} parent=71 // pred_fallthru
          _
        %s691 = sand.u32 %s27, 1
        %s692 = scalar_lea.sflag [#allocation3], %s691
        %s693 = sand.u32 %s177, 1
        %s694 = scalar_lea.vmem [#allocation10], %s693
        // Predicated region
        $region93: #{tpu_custom_call.1} parent=71 // pred_check
          %p695 = pneg %p190
        $region94: #{tpu_custom_call.1} parent=71 // pred_check_branch
          %697 = sbr.rel (%p695) target = $region96
        $region95: #{tpu_custom_call.1} parent=71 // pred_region
          %699 = dma.done %s692, 16
        $region96: #{tpu_custom_call.1} parent=71 // pred_fallthru
          _
        %s700 = sand.u32 %s27, 1
        %s701 = scalar_lea.sflag [#allocation3], %s700
        %s702 = sand.u32 %s203, 1
        %s703 = scalar_lea.vmem [#allocation11], %s702
        // Predicated region
        $region97: #{tpu_custom_call.1} parent=71 // pred_check
          %p704 = pneg %p216
        $region98: #{tpu_custom_call.1} parent=71 // pred_check_branch
          %706 = sbr.rel (%p704) target = $region100
        $region99: #{tpu_custom_call.1} parent=71 // pred_region
          %708 = dma.done %s701, 16
        $region100: #{tpu_custom_call.1} parent=71 // pred_fallthru
          _
        %s709 = sand.u32 %s27, 1
        %s710 = scalar_lea.sflag [#allocation3], %s709
        %s711 = sand.u32 %s229, 1
        %s712 = smul.addr %s711, 256
        %s713 = scalar_lea.vmem [#allocation12], %s712
        // Predicated region
        $region101: #{tpu_custom_call.1} parent=71 // pred_check
          %p714 = pneg %p242
        $region102: #{tpu_custom_call.1} parent=71 // pred_check_branch
          %716 = sbr.rel (%p714) target = $region104
        $region103: #{tpu_custom_call.1} parent=71 // pred_region
          %718 = dma.done %s710, 4096
        $region104: #{tpu_custom_call.1} parent=71 // pred_fallthru
          _
        %s719 = sand.u32 %s27, 1
        %s720 = scalar_lea.sflag [#allocation3], %s719
        %s721 = sand.u32 %s281, 1
        %s722 = smul.addr %s721, 256
        %s723 = scalar_lea.vmem [#allocation13], %s722
        // Predicated region
        $region105: #{tpu_custom_call.1} parent=71 // pred_check
          %p724 = pneg %p294
        $region106: #{tpu_custom_call.1} parent=71 // pred_check_branch
          %726 = sbr.rel (%p724) target = $region108
        $region107: #{tpu_custom_call.1} parent=71 // pred_region
          %728 = dma.done %s720, 4096
        $region108: #{tpu_custom_call.1} parent=71 // pred_fallthru
          _
        %s729 = sand.u32 %s27, 1
        %s730 = scalar_lea.sflag [#allocation3], %s729
        %s731 = sand.u32 %s333, 1
        %s732 = scalar_lea.vmem [#allocation14], %s731
        // Predicated region
        $region109: #{tpu_custom_call.1} parent=71 // pred_check
          %p733 = pneg %p346
        $region110: #{tpu_custom_call.1} parent=71 // pred_check_branch
          %735 = sbr.rel (%p733) target = $region112
        $region111: #{tpu_custom_call.1} parent=71 // pred_region
          %737 = dma.done %s730, 16
        $region112: #{tpu_custom_call.1} parent=71 // pred_fallthru
          _
        %s738 = sand.u32 %s27, 1
        %s739 = scalar_lea.sflag [#allocation3], %s738
        %s740 = sand.u32 %s359, 1
        %s741 = scalar_lea.vmem [#allocation15], %s740
        // Predicated region
        $region113: #{tpu_custom_call.1} parent=71 // pred_check
          %p742 = pneg %p372
        $region114: #{tpu_custom_call.1} parent=71 // pred_check_branch
          %744 = sbr.rel (%p742) target = $region116
        $region115: #{tpu_custom_call.1} parent=71 // pred_region
          %746 = dma.done %s739, 16
        $region116: #{tpu_custom_call.1} parent=71 // pred_fallthru
          _
        %p747 = pneg %p60
        %p748 = pneg %p57
        %p749 = pneg %p86
        %p750 = pneg %p83
        %s751 = sand.u32 %s27, 1
        %s752 = scalar_lea.sflag [#allocation3], %s751
        %s753 = sand.u32 %s99, 1
        %s754 = smul.addr %s753, 256
        %s755 = scalar_lea.vmem [#allocation7], %s754
        %p756 = pneg %p112
        %p757 = pneg %p109
        %s758 = sand.u32 %s27, 1
        %s759 = scalar_lea.sflag [#allocation3], %s758
        %s760 = sand.u32 %s125, 1
        %s761 = smul.addr %s760, 128
        %s762 = scalar_lea.vmem [#allocation8], %s761
        %p763 = pneg %p138
        %p764 = pneg %p135
        %s765 = sand.u32 %s27, 1
        %s766 = scalar_lea.sflag [#allocation3], %s765
        %s767 = sand.u32 %s151, 1
        %s768 = smul.addr %s767, 128
        %s769 = scalar_lea.vmem [#allocation9], %s768
        %p770 = pneg %p164
        %p771 = pneg %p161
        %s772 = sand.u32 %s27, 1
        %s773 = scalar_lea.sflag [#allocation3], %s772
        %s774 = sand.u32 %s177, 1
        %s775 = scalar_lea.vmem [#allocation10], %s774
        %p776 = pneg %p190
        %p777 = pneg %p187
        %s778 = sand.u32 %s27, 1
        %s779 = scalar_lea.sflag [#allocation3], %s778
        %s780 = sand.u32 %s203, 1
        %s781 = scalar_lea.vmem [#allocation11], %s780
        %p782 = pneg %p216
        %p783 = pneg %p213
        %s784 = sand.u32 %s27, 1
        %s785 = scalar_lea.sflag [#allocation3], %s784
        %s786 = sand.u32 %s229, 1
        %s787 = smul.addr %s786, 256
        %s788 = scalar_lea.vmem [#allocation12], %s787
        %p789 = pneg %p242
        %p790 = pneg %p239
        %p791 = scmp.lt.s32.totalorder %s32, 2
        %s792 = scalar_select %p791, %s32, 2
        %s793 = smul.addr %s792, 2
        %s794 = scalar_lea.vmem %s8, %s793
        %p795 = pneg %p268
        %p796 = pneg %p265
        %s797 = sand.u32 %s27, 1
        %s798 = scalar_lea.sflag [#allocation3], %s797
        %s799 = sand.u32 %s281, 1
        %s800 = smul.addr %s799, 256
        %s801 = scalar_lea.vmem [#allocation13], %s800
        %p802 = pneg %p294
        %p803 = pneg %p291
        %p804 = scmp.lt.s32.totalorder %s32, 2
        %s805 = scalar_select %p804, %s32, 2
        %s806 = scalar_lea.vmem %s10, %s805
        %p807 = pneg %p320
        %p808 = pneg %p317
        %s809 = sand.u32 %s27, 1
        %s810 = scalar_lea.sflag [#allocation3], %s809
        %s811 = sand.u32 %s333, 1
        %s812 = scalar_lea.vmem [#allocation14], %s811
        %p813 = pneg %p346
        %p814 = pneg %p343
        %s815 = sand.u32 %s27, 1
        %s816 = scalar_lea.sflag [#allocation3], %s815
        %s817 = sand.u32 %s359, 1
        %s818 = scalar_lea.vmem [#allocation15], %s817
        %p819 = pneg %p372
        %p820 = pneg %p369
        %p821 = pneg %p398
        %p822 = pneg %p395
        %s823 = smul.u32 2, %s31
        %s824 = smul.u32 2, %s31
        %p825 = scmp.lt.s32.totalorder %s32, 2
        %s826 = scalar_select %p825, %s32, 2
        %s827 = smul.addr %s826, 2
        %s828 = scalar_lea.vmem %s8, %s827
        %p829 = scmp.lt.s32.totalorder %s32, 2
        %s830 = scalar_select %p829, %s32, 2
        %s831 = scalar_lea.vmem %s10, %s830
        %s832 = smul.u32 2, %s31
        %p833 = scmp.eq.s32.totalorder %s32, 0
        // Predicated region
        $region117: #{tpu_custom_call.1} parent=71 // pred_check
          %p834 = pneg %p833
        $region118: #{tpu_custom_call.1} parent=71 // pred_check_branch
          %836 = sbr.rel (%p834) target = $region120
        $region119: #{tpu_custom_call.1} parent=71 // pred_region
          %v837 = vld [vmem:[#allocation2] sm:$0xff]
          %v838 = vld [vmem:[#allocation2 + $0x8] sm:$0xff]
          %v839 = vld [vmem:[#allocation2 + $0x10] sm:$0xff]
          %v840 = vld [vmem:[#allocation2 + $0x18] sm:$0xff]
          %841 = vst [vmem:[#allocation16] sm:$0xff] %v837
          %842 = vst [vmem:[#allocation16 + $0x8] sm:$0xff] %v838
          %843 = vst [vmem:[#allocation16 + $0x10] sm:$0xff] %v839
          %844 = vst [vmem:[#allocation16 + $0x18] sm:$0xff] %v840
        $region120: #{tpu_custom_call.1} parent=71 // pred_fallthru
          _
        %v845 = vld [vmem:[#allocation16] sm:$0xff]
        %v846 = vld [vmem:[#allocation16 + $0x8] sm:$0xff]
        %v847 = vld [vmem:[#allocation16 + $0x10] sm:$0xff]
        %v848 = vld [vmem:[#allocation16 + $0x18] sm:$0xff]
        %v849 = vld [vmem:[#allocation5] sm:$0xff]
        %v850 = vld [vmem:[#allocation5 + $0x8] sm:$0xff]
        %v851 = vld [vmem:[#allocation5 + $0x10] sm:$0xff]
        %v852 = vld [vmem:[#allocation5 + $0x18] sm:$0xff]
        %v853 = vld [vmem:[%s665] sm:$0xff]
        %v854 = vld [vmem:[%s665 + $0x8] sm:$0xff]
        %v855 = vld [vmem:[%s665 + $0x10] sm:$0xff]
        %v856 = vld [vmem:[%s665 + $0x18] sm:$0xff]
        %v857 = vld [vmem:[%s665 + $0x20] sm:$0xff]
        %v858 = vld [vmem:[%s665 + $0x28] sm:$0xff]
        %v859 = vld [vmem:[%s665 + $0x30] sm:$0xff]
        %v860 = vld [vmem:[%s665 + $0x38] sm:$0xff]
        %v861 = vld [vmem:[%s665 + $0x40] sm:$0xff]
        %v862 = vld [vmem:[%s665 + $0x48] sm:$0xff]
        %v863 = vld [vmem:[%s665 + $0x50] sm:$0xff]
        %v864 = vld [vmem:[%s665 + $0x58] sm:$0xff]
        %v865 = vld [vmem:[%s665 + $0x60] sm:$0xff]
        %v866 = vld [vmem:[%s665 + $0x68] sm:$0xff]
        %v867 = vld [vmem:[%s665 + $0x70] sm:$0xff]
        %v868 = vld [vmem:[%s665 + $0x78] sm:$0xff]
        %v869 = vld [vmem:[%s665 + $0x80] sm:$0xff]
        %v870 = vld [vmem:[%s665 + $0x88] sm:$0xff]
        %v871 = vld [vmem:[%s665 + $0x90] sm:$0xff]
        %v872 = vld [vmem:[%s665 + $0x98] sm:$0xff]
        %v873 = vld [vmem:[%s665 + $0xa0] sm:$0xff]
        %v874 = vld [vmem:[%s665 + $0xa8] sm:$0xff]
        %v875 = vld [vmem:[%s665 + $0xb0] sm:$0xff]
        %v876 = vld [vmem:[%s665 + $0xb8] sm:$0xff]
        %v877 = vld [vmem:[%s665 + $0xc0] sm:$0xff]
        %v878 = vld [vmem:[%s665 + $0xc8] sm:$0xff]
        %v879 = vld [vmem:[%s665 + $0xd0] sm:$0xff]
        %v880 = vld [vmem:[%s665 + $0xd8] sm:$0xff]
        %v881 = vld [vmem:[%s665 + $0xe0] sm:$0xff]
        %v882 = vld [vmem:[%s665 + $0xe8] sm:$0xff]
        %v883 = vld [vmem:[%s665 + $0xf0] sm:$0xff]
        %v884 = vld [vmem:[%s665 + $0xf8] sm:$0xff]
        %v885 = vand.u32 %v883, 4294901760
        %886 = vmatpush.msra.mxu0 %v885
        %v887 = vand.u32 %v881, 4294901760
        %888 = vmatpush.msra.mxu0 %v887
        %v889 = vand.u32 %v879, 4294901760
        %890 = vmatpush.msra.mxu0 %v889
        %v891 = vand.u32 %v877, 4294901760
        %892 = vmatpush.msra.mxu0 %v891
        %v893 = vand.u32 %v875, 4294901760
        %894 = vmatpush.msra.mxu0 %v893
        %v895 = vand.u32 %v873, 4294901760
        %896 = vmatpush.msra.mxu0 %v895
        %v897 = vand.u32 %v871, 4294901760
        %898 = vmatpush.msra.mxu0 %v897
        %v899 = vand.u32 %v869, 4294901760
        %900 = vmatpush.msra.mxu0 %v899
        %v901 = vand.u32 %v867, 4294901760
        %902 = vmatpush.msra.mxu0 %v901
        %v903 = vand.u32 %v865, 4294901760
        %904 = vmatpush.msra.mxu0 %v903
        %v905 = vand.u32 %v863, 4294901760
        %906 = vmatpush.msra.mxu0 %v905
        %v907 = vand.u32 %v861, 4294901760
        %908 = vmatpush.msra.mxu0 %v907
        %v909 = vand.u32 %v859, 4294901760
        %910 = vmatpush.msra.mxu0 %v909
        %v911 = vand.u32 %v857, 4294901760
        %912 = vmatpush.msra.mxu0 %v911
        %v913 = vand.u32 %v855, 4294901760
        %914 = vmatpush.msra.mxu0 %v913
        %v915 = vand.u32 %v853, 4294901760
        %916 = vmatpush.msra.mxu0 %v915
        %v917 = vand.u32 %v845, 4294901760
        %v918 = vsub.f32 %v845, %v917
        %v919 = vand.u32 %v918, 4294901760
        %v920 = vsub.f32 %v918, %v919
        %v921 = vand.u32 %v920, 4294901760
        %922 = vmatmul.f32.gmra.mxu0 %v921
        %v923 = vpop.f32.mrf.mxu0
        %v924 = vadd.f32 0.0, %v923
        %v925 = vand.u32 %v846, 4294901760
        %v926 = vsub.f32 %v846, %v925
        %v927 = vand.u32 %v926, 4294901760
        %v928 = vsub.f32 %v926, %v927
        %v929 = vand.u32 %v928, 4294901760
        %930 = vmatmul.f32.gmra.mxu0 %v929
        %v931 = vpop.f32.mrf.mxu0
        %v932 = vadd.f32 0.0, %v931
        %v933 = vand.u32 %v847, 4294901760
        %v934 = vsub.f32 %v847, %v933
        %v935 = vand.u32 %v934, 4294901760
        %v936 = vsub.f32 %v934, %v935
        %v937 = vand.u32 %v936, 4294901760
        %938 = vmatmul.f32.gmra.mxu0 %v937
        %v939 = vpop.f32.mrf.mxu0
        %v940 = vadd.f32 0.0, %v939
        %v941 = vand.u32 %v848, 4294901760
        %v942 = vsub.f32 %v848, %v941
        %v943 = vand.u32 %v942, 4294901760
        %v944 = vsub.f32 %v942, %v943
        %v945 = vand.u32 %v944, 4294901760
        %946 = vmatmul.f32.gmra.mxu0 %v945
        %v947 = vpop.f32.mrf.mxu0
        %v948 = vadd.f32 0.0, %v947
        %949 = vdwg.mxu0
        %v950 = vand.u32 %v883, 4294901760
        %v951 = vsub.f32 %v883, %v950
        %v952 = vand.u32 %v951, 4294901760
        %v953 = vsub.f32 %v951, %v952
        %v954 = vand.u32 %v953, 4294901760
        %955 = vmatpush.msra.mxu0 %v954
        %v956 = vand.u32 %v881, 4294901760
        %v957 = vsub.f32 %v881, %v956
        %v958 = vand.u32 %v957, 4294901760
        %v959 = vsub.f32 %v957, %v958
        %v960 = vand.u32 %v959, 4294901760
        %961 = vmatpush.msra.mxu0 %v960
        %v962 = vand.u32 %v879, 4294901760
        %v963 = vsub.f32 %v879, %v962
        %v964 = vand.u32 %v963, 4294901760
        %v965 = vsub.f32 %v963, %v964
        %v966 = vand.u32 %v965, 4294901760
        %967 = vmatpush.msra.mxu0 %v966
        %v968 = vand.u32 %v877, 4294901760
        %v969 = vsub.f32 %v877, %v968
        %v970 = vand.u32 %v969, 4294901760
        %v971 = vsub.f32 %v969, %v970
        %v972 = vand.u32 %v971, 4294901760
        %973 = vmatpush.msra.mxu0 %v972
        %v974 = vand.u32 %v875, 4294901760
        %v975 = vsub.f32 %v875, %v974
        %v976 = vand.u32 %v975, 4294901760
        %v977 = vsub.f32 %v975, %v976
        %v978 = vand.u32 %v977, 4294901760
        %979 = vmatpush.msra.mxu0 %v978
        %v980 = vand.u32 %v873, 4294901760
        %v981 = vsub.f32 %v873, %v980
        %v982 = vand.u32 %v981, 4294901760
        %v983 = vsub.f32 %v981, %v982
        %v984 = vand.u32 %v983, 4294901760
        %985 = vmatpush.msra.mxu0 %v984
        %v986 = vand.u32 %v871, 4294901760
        %v987 = vsub.f32 %v871, %v986
        %v988 = vand.u32 %v987, 4294901760
        %v989 = vsub.f32 %v987, %v988
        %v990 = vand.u32 %v989, 4294901760
        %991 = vmatpush.msra.mxu0 %v990
        %v992 = vand.u32 %v869, 4294901760
        %v993 = vsub.f32 %v869, %v992
        %v994 = vand.u32 %v993, 4294901760
        %v995 = vsub.f32 %v993, %v994
        %v996 = vand.u32 %v995, 4294901760
        %997 = vmatpush.msra.mxu0 %v996
        %v998 = vand.u32 %v867, 4294901760
        %v999 = vsub.f32 %v867, %v998
        %v1000 = vand.u32 %v999, 4294901760
        %v1001 = vsub.f32 %v999, %v1000
        %v1002 = vand.u32 %v1001, 4294901760
        %1003 = vmatpush.msra.mxu0 %v1002
        %v1004 = vand.u32 %v865, 4294901760
        %v1005 = vsub.f32 %v865, %v1004
        %v1006 = vand.u32 %v1005, 4294901760
        %v1007 = vsub.f32 %v1005, %v1006
        %v1008 = vand.u32 %v1007, 4294901760
        %1009 = vmatpush.msra.mxu0 %v1008
        %v1010 = vand.u32 %v863, 4294901760
        %v1011 = vsub.f32 %v863, %v1010
        %v1012 = vand.u32 %v1011, 4294901760
        %v1013 = vsub.f32 %v1011, %v1012
        %v1014 = vand.u32 %v1013, 4294901760
        %1015 = vmatpush.msra.mxu0 %v1014
        %v1016 = vand.u32 %v861, 4294901760
        %v1017 = vsub.f32 %v861, %v1016
        %v1018 = vand.u32 %v1017, 4294901760
        %v1019 = vsub.f32 %v1017, %v1018
        %v1020 = vand.u32 %v1019, 4294901760
        %1021 = vmatpush.msra.mxu0 %v1020
        %v1022 = vand.u32 %v859, 4294901760
        %v1023 = vsub.f32 %v859, %v1022
        %v1024 = vand.u32 %v1023, 4294901760
        %v1025 = vsub.f32 %v1023, %v1024
        %v1026 = vand.u32 %v1025, 4294901760
        %1027 = vmatpush.msra.mxu0 %v1026
        %v1028 = vand.u32 %v857, 4294901760
        %v1029 = vsub.f32 %v857, %v1028
        %v1030 = vand.u32 %v1029, 4294901760
        %v1031 = vsub.f32 %v1029, %v1030
        %v1032 = vand.u32 %v1031, 4294901760
        %1033 = vmatpush.msra.mxu0 %v1032
        %v1034 = vand.u32 %v855, 4294901760
        %v1035 = vsub.f32 %v855, %v1034
        %v1036 = vand.u32 %v1035, 4294901760
        %v1037 = vsub.f32 %v1035, %v1036
        %v1038 = vand.u32 %v1037, 4294901760
        %1039 = vmatpush.msra.mxu0 %v1038
        %v1040 = vand.u32 %v853, 4294901760
        %v1041 = vsub.f32 %v853, %v1040
        %v1042 = vand.u32 %v1041, 4294901760
        %v1043 = vsub.f32 %v1041, %v1042
        %v1044 = vand.u32 %v1043, 4294901760
        %1045 = vmatpush.msra.mxu0 %v1044
        %v1046 = vand.u32 %v845, 4294901760
        %1047 = vmatmul.f32.gmra.mxu0 %v1046
        %v1048 = vpop.f32.mrf.mxu0
        %v1049 = vadd.f32 %v924, %v1048
        %v1050 = vand.u32 %v846, 4294901760
        %1051 = vmatmul.f32.gmra.mxu0 %v1050
        %v1052 = vpop.f32.mrf.mxu0
        %v1053 = vadd.f32 %v932, %v1052
        %v1054 = vand.u32 %v847, 4294901760
        %1055 = vmatmul.f32.gmra.mxu0 %v1054
        %v1056 = vpop.f32.mrf.mxu0
        %v1057 = vadd.f32 %v940, %v1056
        %v1058 = vand.u32 %v848, 4294901760
        %1059 = vmatmul.f32.gmra.mxu0 %v1058
        %v1060 = vpop.f32.mrf.mxu0
        %v1061 = vadd.f32 %v948, %v1060
        %1062 = vdwg.mxu0
        %v1063 = vand.u32 %v883, 4294901760
        %v1064 = vsub.f32 %v883, %v1063
        %1065 = vmatpush.msra.mxu0 %v1064
        %v1066 = vand.u32 %v881, 4294901760
        %v1067 = vsub.f32 %v881, %v1066
        %1068 = vmatpush.msra.mxu0 %v1067
        %v1069 = vand.u32 %v879, 4294901760
        %v1070 = vsub.f32 %v879, %v1069
        %1071 = vmatpush.msra.mxu0 %v1070
        %v1072 = vand.u32 %v877, 4294901760
        %v1073 = vsub.f32 %v877, %v1072
        %1074 = vmatpush.msra.mxu0 %v1073
        %v1075 = vand.u32 %v875, 4294901760
        %v1076 = vsub.f32 %v875, %v1075
        %1077 = vmatpush.msra.mxu0 %v1076
        %v1078 = vand.u32 %v873, 4294901760
        %v1079 = vsub.f32 %v873, %v1078
        %1080 = vmatpush.msra.mxu0 %v1079
        %v1081 = vand.u32 %v871, 4294901760
        %v1082 = vsub.f32 %v871, %v1081
        %1083 = vmatpush.msra.mxu0 %v1082
        %v1084 = vand.u32 %v869, 4294901760
        %v1085 = vsub.f32 %v869, %v1084
        %1086 = vmatpush.msra.mxu0 %v1085
        %v1087 = vand.u32 %v867, 4294901760
        %v1088 = vsub.f32 %v867, %v1087
        %1089 = vmatpush.msra.mxu0 %v1088
        %v1090 = vand.u32 %v865, 4294901760
        %v1091 = vsub.f32 %v865, %v1090
        %1092 = vmatpush.msra.mxu0 %v1091
        %v1093 = vand.u32 %v863, 4294901760
        %v1094 = vsub.f32 %v863, %v1093
        %1095 = vmatpush.msra.mxu0 %v1094
        %v1096 = vand.u32 %v861, 4294901760
        %v1097 = vsub.f32 %v861, %v1096
        %1098 = vmatpush.msra.mxu0 %v1097
        %v1099 = vand.u32 %v859, 4294901760
        %v1100 = vsub.f32 %v859, %v1099
        %1101 = vmatpush.msra.mxu0 %v1100
        %v1102 = vand.u32 %v857, 4294901760
        %v1103 = vsub.f32 %v857, %v1102
        %1104 = vmatpush.msra.mxu0 %v1103
        %v1105 = vand.u32 %v855, 4294901760
        %v1106 = vsub.f32 %v855, %v1105
        %1107 = vmatpush.msra.mxu0 %v1106
        %v1108 = vand.u32 %v853, 4294901760
        %v1109 = vsub.f32 %v853, %v1108
        %1110 = vmatpush.msra.mxu0 %v1109
        %v1111 = vand.u32 %v845, 4294901760
        %v1112 = vsub.f32 %v845, %v1111
        %1113 = vmatmul.f32.gmra.mxu0 %v1112
        %v1114 = vpop.f32.mrf.mxu0
        %v1115 = vadd.f32 %v1049, %v1114
        %v1116 = vand.u32 %v846, 4294901760
        %v1117 = vsub.f32 %v846, %v1116
        %1118 = vmatmul.f32.gmra.mxu0 %v1117
        %v1119 = vpop.f32.mrf.mxu0
        %v1120 = vadd.f32 %v1053, %v1119
        %v1121 = vand.u32 %v847, 4294901760
        %v1122 = vsub.f32 %v847, %v1121
        %1123 = vmatmul.f32.gmra.mxu0 %v1122
        %v1124 = vpop.f32.mrf.mxu0
        %v1125 = vadd.f32 %v1057, %v1124
        %v1126 = vand.u32 %v848, 4294901760
        %v1127 = vsub.f32 %v848, %v1126
        %1128 = vmatmul.f32.gmra.mxu0 %v1127
        %v1129 = vpop.f32.mrf.mxu0
        %v1130 = vadd.f32 %v1061, %v1129
        %1131 = vdwg.mxu0
        %v1132 = vand.u32 %v883, 4294901760
        %1133 = vmatpush.msra.mxu0 %v1132
        %v1134 = vand.u32 %v881, 4294901760
        %1135 = vmatpush.msra.mxu0 %v1134
        %v1136 = vand.u32 %v879, 4294901760
        %1137 = vmatpush.msra.mxu0 %v1136
        %v1138 = vand.u32 %v877, 4294901760
        %1139 = vmatpush.msra.mxu0 %v1138
        %v1140 = vand.u32 %v875, 4294901760
        %1141 = vmatpush.msra.mxu0 %v1140
        %v1142 = vand.u32 %v873, 4294901760
        %1143 = vmatpush.msra.mxu0 %v1142
        %v1144 = vand.u32 %v871, 4294901760
        %1145 = vmatpush.msra.mxu0 %v1144
        %v1146 = vand.u32 %v869, 4294901760
        %1147 = vmatpush.msra.mxu0 %v1146
        %v1148 = vand.u32 %v867, 4294901760
        %1149 = vmatpush.msra.mxu0 %v1148
        %v1150 = vand.u32 %v865, 4294901760
        %1151 = vmatpush.msra.mxu0 %v1150
        %v1152 = vand.u32 %v863, 4294901760
        %1153 = vmatpush.msra.mxu0 %v1152
        %v1154 = vand.u32 %v861, 4294901760
        %1155 = vmatpush.msra.mxu0 %v1154
        %v1156 = vand.u32 %v859, 4294901760
        %1157 = vmatpush.msra.mxu0 %v1156
        %v1158 = vand.u32 %v857, 4294901760
        %1159 = vmatpush.msra.mxu0 %v1158
        %v1160 = vand.u32 %v855, 4294901760
        %1161 = vmatpush.msra.mxu0 %v1160
        %v1162 = vand.u32 %v853, 4294901760
        %1163 = vmatpush.msra.mxu0 %v1162
        %v1164 = vand.u32 %v845, 4294901760
        %v1165 = vsub.f32 %v845, %v1164
        %v1166 = vand.u32 %v1165, 4294901760
        %1167 = vmatmul.f32.gmra.mxu0 %v1166
        %v1168 = vpop.f32.mrf.mxu0
        %v1169 = vadd.f32 %v1115, %v1168
        %v1170 = vand.u32 %v846, 4294901760
        %v1171 = vsub.f32 %v846, %v1170
        %v1172 = vand.u32 %v1171, 4294901760
        %1173 = vmatmul.f32.gmra.mxu0 %v1172
        %v1174 = vpop.f32.mrf.mxu0
        %v1175 = vadd.f32 %v1120, %v1174
        %v1176 = vand.u32 %v847, 4294901760
        %v1177 = vsub.f32 %v847, %v1176
        %v1178 = vand.u32 %v1177, 4294901760
        %1179 = vmatmul.f32.gmra.mxu0 %v1178
        %v1180 = vpop.f32.mrf.mxu0
        %v1181 = vadd.f32 %v1125, %v1180
        %v1182 = vand.u32 %v848, 4294901760
        %v1183 = vsub.f32 %v848, %v1182
        %v1184 = vand.u32 %v1183, 4294901760
        %1185 = vmatmul.f32.gmra.mxu0 %v1184
        %v1186 = vpop.f32.mrf.mxu0
        %v1187 = vadd.f32 %v1130, %v1186
        %1188 = vdwg.mxu0
        %v1189 = vand.u32 %v883, 4294901760
        %v1190 = vsub.f32 %v883, %v1189
        %v1191 = vand.u32 %v1190, 4294901760
        %1192 = vmatpush.msra.mxu0 %v1191
        %v1193 = vand.u32 %v881, 4294901760
        %v1194 = vsub.f32 %v881, %v1193
        %v1195 = vand.u32 %v1194, 4294901760
        %1196 = vmatpush.msra.mxu0 %v1195
        %v1197 = vand.u32 %v879, 4294901760
        %v1198 = vsub.f32 %v879, %v1197
        %v1199 = vand.u32 %v1198, 4294901760
        %1200 = vmatpush.msra.mxu0 %v1199
        %v1201 = vand.u32 %v877, 4294901760
        %v1202 = vsub.f32 %v877, %v1201
        %v1203 = vand.u32 %v1202, 4294901760
        %1204 = vmatpush.msra.mxu0 %v1203
        %v1205 = vand.u32 %v875, 4294901760
        %v1206 = vsub.f32 %v875, %v1205
        %v1207 = vand.u32 %v1206, 4294901760
        %1208 = vmatpush.msra.mxu0 %v1207
        %v1209 = vand.u32 %v873, 4294901760
        %v1210 = vsub.f32 %v873, %v1209
        %v1211 = vand.u32 %v1210, 4294901760
        %1212 = vmatpush.msra.mxu0 %v1211
        %v1213 = vand.u32 %v871, 4294901760
        %v1214 = vsub.f32 %v871, %v1213
        %v1215 = vand.u32 %v1214, 4294901760
        %1216 = vmatpush.msra.mxu0 %v1215
        %v1217 = vand.u32 %v869, 4294901760
        %v1218 = vsub.f32 %v869, %v1217
        %v1219 = vand.u32 %v1218, 4294901760
        %1220 = vmatpush.msra.mxu0 %v1219
        %v1221 = vand.u32 %v867, 4294901760
        %v1222 = vsub.f32 %v867, %v1221
        %v1223 = vand.u32 %v1222, 4294901760
        %1224 = vmatpush.msra.mxu0 %v1223
        %v1225 = vand.u32 %v865, 4294901760
        %v1226 = vsub.f32 %v865, %v1225
        %v1227 = vand.u32 %v1226, 4294901760
        %1228 = vmatpush.msra.mxu0 %v1227
        %v1229 = vand.u32 %v863, 4294901760
        %v1230 = vsub.f32 %v863, %v1229
        %v1231 = vand.u32 %v1230, 4294901760
        %1232 = vmatpush.msra.mxu0 %v1231
        %v1233 = vand.u32 %v861, 4294901760
        %v1234 = vsub.f32 %v861, %v1233
        %v1235 = vand.u32 %v1234, 4294901760
        %1236 = vmatpush.msra.mxu0 %v1235
        %v1237 = vand.u32 %v859, 4294901760
        %v1238 = vsub.f32 %v859, %v1237
        %v1239 = vand.u32 %v1238, 4294901760
        %1240 = vmatpush.msra.mxu0 %v1239
        %v1241 = vand.u32 %v857, 4294901760
        %v1242 = vsub.f32 %v857, %v1241
        %v1243 = vand.u32 %v1242, 4294901760
        %1244 = vmatpush.msra.mxu0 %v1243
        %v1245 = vand.u32 %v855, 4294901760
        %v1246 = vsub.f32 %v855, %v1245
        %v1247 = vand.u32 %v1246, 4294901760
        %1248 = vmatpush.msra.mxu0 %v1247
        %v1249 = vand.u32 %v853, 4294901760
        %v1250 = vsub.f32 %v853, %v1249
        %v1251 = vand.u32 %v1250, 4294901760
        %1252 = vmatpush.msra.mxu0 %v1251
        %v1253 = vand.u32 %v845, 4294901760
        %1254 = vmatmul.f32.gmra.mxu0 %v1253
        %v1255 = vpop.f32.mrf.mxu0
        %v1256 = vadd.f32 %v1169, %v1255
        %v1257 = vand.u32 %v846, 4294901760
        %1258 = vmatmul.f32.gmra.mxu0 %v1257
        %v1259 = vpop.f32.mrf.mxu0
        %v1260 = vadd.f32 %v1175, %v1259
        %v1261 = vand.u32 %v847, 4294901760
        %1262 = vmatmul.f32.gmra.mxu0 %v1261
        %v1263 = vpop.f32.mrf.mxu0
        %v1264 = vadd.f32 %v1181, %v1263
        %v1265 = vand.u32 %v848, 4294901760
        %1266 = vmatmul.f32.gmra.mxu0 %v1265
        %v1267 = vpop.f32.mrf.mxu0
        %v1268 = vadd.f32 %v1187, %v1267
        %1269 = vdwg.mxu0
        %v1270 = vand.u32 %v883, 4294901760
        %1271 = vmatpush.msra.mxu0 %v1270
        %v1272 = vand.u32 %v881, 4294901760
        %1273 = vmatpush.msra.mxu0 %v1272
        %v1274 = vand.u32 %v879, 4294901760
        %1275 = vmatpush.msra.mxu0 %v1274
        %v1276 = vand.u32 %v877, 4294901760
        %1277 = vmatpush.msra.mxu0 %v1276
        %v1278 = vand.u32 %v875, 4294901760
        %1279 = vmatpush.msra.mxu0 %v1278
        %v1280 = vand.u32 %v873, 4294901760
        %1281 = vmatpush.msra.mxu0 %v1280
        %v1282 = vand.u32 %v871, 4294901760
        %1283 = vmatpush.msra.mxu0 %v1282
        %v1284 = vand.u32 %v869, 4294901760
        %1285 = vmatpush.msra.mxu0 %v1284
        %v1286 = vand.u32 %v867, 4294901760
        %1287 = vmatpush.msra.mxu0 %v1286
        %v1288 = vand.u32 %v865, 4294901760
        %1289 = vmatpush.msra.mxu0 %v1288
        %v1290 = vand.u32 %v863, 4294901760
        %1291 = vmatpush.msra.mxu0 %v1290
        %v1292 = vand.u32 %v861, 4294901760
        %1293 = vmatpush.msra.mxu0 %v1292
        %v1294 = vand.u32 %v859, 4294901760
        %1295 = vmatpush.msra.mxu0 %v1294
        %v1296 = vand.u32 %v857, 4294901760
        %1297 = vmatpush.msra.mxu0 %v1296
        %v1298 = vand.u32 %v855, 4294901760
        %1299 = vmatpush.msra.mxu0 %v1298
        %v1300 = vand.u32 %v853, 4294901760
        %1301 = vmatpush.msra.mxu0 %v1300
        %v1302 = vand.u32 %v845, 4294901760
        %1303 = vmatmul.f32.gmra.mxu0 %v1302
        %v1304 = vpop.f32.mrf.mxu0
        %v1305 = vadd.f32 %v1256, %v1304
        %v1306 = vand.u32 %v846, 4294901760
        %1307 = vmatmul.f32.gmra.mxu0 %v1306
        %v1308 = vpop.f32.mrf.mxu0
        %v1309 = vadd.f32 %v1260, %v1308
        %v1310 = vand.u32 %v847, 4294901760
        %1311 = vmatmul.f32.gmra.mxu0 %v1310
        %v1312 = vpop.f32.mrf.mxu0
        %v1313 = vadd.f32 %v1264, %v1312
        %v1314 = vand.u32 %v848, 4294901760
        %1315 = vmatmul.f32.gmra.mxu0 %v1314
        %v1316 = vpop.f32.mrf.mxu0
        %v1317 = vadd.f32 %v1268, %v1316
        %1318 = vdwg.mxu0
        %v1319 = vand.u32 %v884, 4294901760
        %1320 = vmatpush.msra.mxu0 %v1319
        %v1321 = vand.u32 %v882, 4294901760
        %1322 = vmatpush.msra.mxu0 %v1321
        %v1323 = vand.u32 %v880, 4294901760
        %1324 = vmatpush.msra.mxu0 %v1323
        %v1325 = vand.u32 %v878, 4294901760
        %1326 = vmatpush.msra.mxu0 %v1325
        %v1327 = vand.u32 %v876, 4294901760
        %1328 = vmatpush.msra.mxu0 %v1327
        %v1329 = vand.u32 %v874, 4294901760
        %1330 = vmatpush.msra.mxu0 %v1329
        %v1331 = vand.u32 %v872, 4294901760
        %1332 = vmatpush.msra.mxu0 %v1331
        %v1333 = vand.u32 %v870, 4294901760
        %1334 = vmatpush.msra.mxu0 %v1333
        %v1335 = vand.u32 %v868, 4294901760
        %1336 = vmatpush.msra.mxu0 %v1335
        %v1337 = vand.u32 %v866, 4294901760
        %1338 = vmatpush.msra.mxu0 %v1337
        %v1339 = vand.u32 %v864, 4294901760
        %1340 = vmatpush.msra.mxu0 %v1339
        %v1341 = vand.u32 %v862, 4294901760
        %1342 = vmatpush.msra.mxu0 %v1341
        %v1343 = vand.u32 %v860, 4294901760
        %1344 = vmatpush.msra.mxu0 %v1343
        %v1345 = vand.u32 %v858, 4294901760
        %1346 = vmatpush.msra.mxu0 %v1345
        %v1347 = vand.u32 %v856, 4294901760
        %1348 = vmatpush.msra.mxu0 %v1347
        %v1349 = vand.u32 %v854, 4294901760
        %1350 = vmatpush.msra.mxu0 %v1349
        %v1351 = vand.u32 %v845, 4294901760
        %v1352 = vsub.f32 %v845, %v1351
        %v1353 = vand.u32 %v1352, 4294901760
        %v1354 = vsub.f32 %v1352, %v1353
        %v1355 = vand.u32 %v1354, 4294901760
        %1356 = vmatmul.f32.gmra.mxu0 %v1355
        %v1357 = vpop.f32.mrf.mxu0
        %v1358 = vadd.f32 0.0, %v1357
        %v1359 = vand.u32 %v846, 4294901760
        %v1360 = vsub.f32 %v846, %v1359
        %v1361 = vand.u32 %v1360, 4294901760
        %v1362 = vsub.f32 %v1360, %v1361
        %v1363 = vand.u32 %v1362, 4294901760
        %1364 = vmatmul.f32.gmra.mxu0 %v1363
        %v1365 = vpop.f32.mrf.mxu0
        %v1366 = vadd.f32 0.0, %v1365
        %v1367 = vand.u32 %v847, 4294901760
        %v1368 = vsub.f32 %v847, %v1367
        %v1369 = vand.u32 %v1368, 4294901760
        %v1370 = vsub.f32 %v1368, %v1369
        %v1371 = vand.u32 %v1370, 4294901760
        %1372 = vmatmul.f32.gmra.mxu0 %v1371
        %v1373 = vpop.f32.mrf.mxu0
        %v1374 = vadd.f32 0.0, %v1373
        %v1375 = vand.u32 %v848, 4294901760
        %v1376 = vsub.f32 %v848, %v1375
        %v1377 = vand.u32 %v1376, 4294901760
        %v1378 = vsub.f32 %v1376, %v1377
        %v1379 = vand.u32 %v1378, 4294901760
        %1380 = vmatmul.f32.gmra.mxu0 %v1379
        %v1381 = vpop.f32.mrf.mxu0
        %v1382 = vadd.f32 0.0, %v1381
        %1383 = vdwg.mxu0
        %v1384 = vand.u32 %v884, 4294901760
        %v1385 = vsub.f32 %v884, %v1384
        %v1386 = vand.u32 %v1385, 4294901760
        %v1387 = vsub.f32 %v1385, %v1386
        %v1388 = vand.u32 %v1387, 4294901760
        %1389 = vmatpush.msra.mxu0 %v1388
        %v1390 = vand.u32 %v882, 4294901760
        %v1391 = vsub.f32 %v882, %v1390
        %v1392 = vand.u32 %v1391, 4294901760
        %v1393 = vsub.f32 %v1391, %v1392
        %v1394 = vand.u32 %v1393, 4294901760
        %1395 = vmatpush.msra.mxu0 %v1394
        %v1396 = vand.u32 %v880, 4294901760
        %v1397 = vsub.f32 %v880, %v1396
        %v1398 = vand.u32 %v1397, 4294901760
        %v1399 = vsub.f32 %v1397, %v1398
        %v1400 = vand.u32 %v1399, 4294901760
        %1401 = vmatpush.msra.mxu0 %v1400
        %v1402 = vand.u32 %v878, 4294901760
        %v1403 = vsub.f32 %v878, %v1402
        %v1404 = vand.u32 %v1403, 4294901760
        %v1405 = vsub.f32 %v1403, %v1404
        %v1406 = vand.u32 %v1405, 4294901760
        %1407 = vmatpush.msra.mxu0 %v1406
        %v1408 = vand.u32 %v876, 4294901760
        %v1409 = vsub.f32 %v876, %v1408
        %v1410 = vand.u32 %v1409, 4294901760
        %v1411 = vsub.f32 %v1409, %v1410
        %v1412 = vand.u32 %v1411, 4294901760
        %1413 = vmatpush.msra.mxu0 %v1412
        %v1414 = vand.u32 %v874, 4294901760
        %v1415 = vsub.f32 %v874, %v1414
        %v1416 = vand.u32 %v1415, 4294901760
        %v1417 = vsub.f32 %v1415, %v1416
        %v1418 = vand.u32 %v1417, 4294901760
        %1419 = vmatpush.msra.mxu0 %v1418
        %v1420 = vand.u32 %v872, 4294901760
        %v1421 = vsub.f32 %v872, %v1420
        %v1422 = vand.u32 %v1421, 4294901760
        %v1423 = vsub.f32 %v1421, %v1422
        %v1424 = vand.u32 %v1423, 4294901760
        %1425 = vmatpush.msra.mxu0 %v1424
        %v1426 = vand.u32 %v870, 4294901760
        %v1427 = vsub.f32 %v870, %v1426
        %v1428 = vand.u32 %v1427, 4294901760
        %v1429 = vsub.f32 %v1427, %v1428
        %v1430 = vand.u32 %v1429, 4294901760
        %1431 = vmatpush.msra.mxu0 %v1430
        %v1432 = vand.u32 %v868, 4294901760
        %v1433 = vsub.f32 %v868, %v1432
        %v1434 = vand.u32 %v1433, 4294901760
        %v1435 = vsub.f32 %v1433, %v1434
        %v1436 = vand.u32 %v1435, 4294901760
        %1437 = vmatpush.msra.mxu0 %v1436
        %v1438 = vand.u32 %v866, 4294901760
        %v1439 = vsub.f32 %v866, %v1438
        %v1440 = vand.u32 %v1439, 4294901760
        %v1441 = vsub.f32 %v1439, %v1440
        %v1442 = vand.u32 %v1441, 4294901760
        %1443 = vmatpush.msra.mxu0 %v1442
        %v1444 = vand.u32 %v864, 4294901760
        %v1445 = vsub.f32 %v864, %v1444
        %v1446 = vand.u32 %v1445, 4294901760
        %v1447 = vsub.f32 %v1445, %v1446
        %v1448 = vand.u32 %v1447, 4294901760
        %1449 = vmatpush.msra.mxu0 %v1448
        %v1450 = vand.u32 %v862, 4294901760
        %v1451 = vsub.f32 %v862, %v1450
        %v1452 = vand.u32 %v1451, 4294901760
        %v1453 = vsub.f32 %v1451, %v1452
        %v1454 = vand.u32 %v1453, 4294901760
        %1455 = vmatpush.msra.mxu0 %v1454
        %v1456 = vand.u32 %v860, 4294901760
        %v1457 = vsub.f32 %v860, %v1456
        %v1458 = vand.u32 %v1457, 4294901760
        %v1459 = vsub.f32 %v1457, %v1458
        %v1460 = vand.u32 %v1459, 4294901760
        %1461 = vmatpush.msra.mxu0 %v1460
        %v1462 = vand.u32 %v858, 4294901760
        %v1463 = vsub.f32 %v858, %v1462
        %v1464 = vand.u32 %v1463, 4294901760
        %v1465 = vsub.f32 %v1463, %v1464
        %v1466 = vand.u32 %v1465, 4294901760
        %1467 = vmatpush.msra.mxu0 %v1466
        %v1468 = vand.u32 %v856, 4294901760
        %v1469 = vsub.f32 %v856, %v1468
        %v1470 = vand.u32 %v1469, 4294901760
        %v1471 = vsub.f32 %v1469, %v1470
        %v1472 = vand.u32 %v1471, 4294901760
        %1473 = vmatpush.msra.mxu0 %v1472
        %v1474 = vand.u32 %v854, 4294901760
        %v1475 = vsub.f32 %v854, %v1474
        %v1476 = vand.u32 %v1475, 4294901760
        %v1477 = vsub.f32 %v1475, %v1476
        %v1478 = vand.u32 %v1477, 4294901760
        %1479 = vmatpush.msra.mxu0 %v1478
        %v1480 = vand.u32 %v845, 4294901760
        %1481 = vmatmul.f32.gmra.mxu0 %v1480
        %v1482 = vpop.f32.mrf.mxu0
        %v1483 = vadd.f32 %v1358, %v1482
        %v1484 = vand.u32 %v846, 4294901760
        %1485 = vmatmul.f32.gmra.mxu0 %v1484
        %v1486 = vpop.f32.mrf.mxu0
        %v1487 = vadd.f32 %v1366, %v1486
        %v1488 = vand.u32 %v847, 4294901760
        %1489 = vmatmul.f32.gmra.mxu0 %v1488
        %v1490 = vpop.f32.mrf.mxu0
        %v1491 = vadd.f32 %v1374, %v1490
        %v1492 = vand.u32 %v848, 4294901760
        %1493 = vmatmul.f32.gmra.mxu0 %v1492
        %v1494 = vpop.f32.mrf.mxu0
        %v1495 = vadd.f32 %v1382, %v1494
        %1496 = vdwg.mxu0
        %v1497 = vand.u32 %v884, 4294901760
        %v1498 = vsub.f32 %v884, %v1497
        %1499 = vmatpush.msra.mxu0 %v1498
        %v1500 = vand.u32 %v882, 4294901760
        %v1501 = vsub.f32 %v882, %v1500
        %1502 = vmatpush.msra.mxu0 %v1501
        %v1503 = vand.u32 %v880, 4294901760
        %v1504 = vsub.f32 %v880, %v1503
        %1505 = vmatpush.msra.mxu0 %v1504
        %v1506 = vand.u32 %v878, 4294901760
        %v1507 = vsub.f32 %v878, %v1506
        %1508 = vmatpush.msra.mxu0 %v1507
        %v1509 = vand.u32 %v876, 4294901760
        %v1510 = vsub.f32 %v876, %v1509
        %1511 = vmatpush.msra.mxu0 %v1510
        %v1512 = vand.u32 %v874, 4294901760
        %v1513 = vsub.f32 %v874, %v1512
        %1514 = vmatpush.msra.mxu0 %v1513
        %v1515 = vand.u32 %v872, 4294901760
        %v1516 = vsub.f32 %v872, %v1515
        %1517 = vmatpush.msra.mxu0 %v1516
        %v1518 = vand.u32 %v870, 4294901760
        %v1519 = vsub.f32 %v870, %v1518
        %1520 = vmatpush.msra.mxu0 %v1519
        %v1521 = vand.u32 %v868, 4294901760
        %v1522 = vsub.f32 %v868, %v1521
        %1523 = vmatpush.msra.mxu0 %v1522
        %v1524 = vand.u32 %v866, 4294901760
        %v1525 = vsub.f32 %v866, %v1524
        %1526 = vmatpush.msra.mxu0 %v1525
        %v1527 = vand.u32 %v864, 4294901760
        %v1528 = vsub.f32 %v864, %v1527
        %1529 = vmatpush.msra.mxu0 %v1528
        %v1530 = vand.u32 %v862, 4294901760
        %v1531 = vsub.f32 %v862, %v1530
        %1532 = vmatpush.msra.mxu0 %v1531
        %v1533 = vand.u32 %v860, 4294901760
        %v1534 = vsub.f32 %v860, %v1533
        %1535 = vmatpush.msra.mxu0 %v1534
        %v1536 = vand.u32 %v858, 4294901760
        %v1537 = vsub.f32 %v858, %v1536
        %1538 = vmatpush.msra.mxu0 %v1537
        %v1539 = vand.u32 %v856, 4294901760
        %v1540 = vsub.f32 %v856, %v1539
        %1541 = vmatpush.msra.mxu0 %v1540
        %v1542 = vand.u32 %v854, 4294901760
        %v1543 = vsub.f32 %v854, %v1542
        %1544 = vmatpush.msra.mxu0 %v1543
        %v1545 = vand.u32 %v845, 4294901760
        %v1546 = vsub.f32 %v845, %v1545
        %1547 = vmatmul.f32.gmra.mxu0 %v1546
        %v1548 = vpop.f32.mrf.mxu0
        %v1549 = vadd.f32 %v1483, %v1548
        %v1550 = vand.u32 %v846, 4294901760
        %v1551 = vsub.f32 %v846, %v1550
        %1552 = vmatmul.f32.gmra.mxu0 %v1551
        %v1553 = vpop.f32.mrf.mxu0
        %v1554 = vadd.f32 %v1487, %v1553
        %v1555 = vand.u32 %v847, 4294901760
        %v1556 = vsub.f32 %v847, %v1555
        %1557 = vmatmul.f32.gmra.mxu0 %v1556
        %v1558 = vpop.f32.mrf.mxu0
        %v1559 = vadd.f32 %v1491, %v1558
        %v1560 = vand.u32 %v848, 4294901760
        %v1561 = vsub.f32 %v848, %v1560
        %1562 = vmatmul.f32.gmra.mxu0 %v1561
        %v1563 = vpop.f32.mrf.mxu0
        %v1564 = vadd.f32 %v1495, %v1563
        %1565 = vdwg.mxu0
        %v1566 = vand.u32 %v884, 4294901760
        %1567 = vmatpush.msra.mxu0 %v1566
        %v1568 = vand.u32 %v882, 4294901760
        %1569 = vmatpush.msra.mxu0 %v1568
        %v1570 = vand.u32 %v880, 4294901760
        %1571 = vmatpush.msra.mxu0 %v1570
        %v1572 = vand.u32 %v878, 4294901760
        %1573 = vmatpush.msra.mxu0 %v1572
        %v1574 = vand.u32 %v876, 4294901760
        %1575 = vmatpush.msra.mxu0 %v1574
        %v1576 = vand.u32 %v874, 4294901760
        %1577 = vmatpush.msra.mxu0 %v1576
        %v1578 = vand.u32 %v872, 4294901760
        %1579 = vmatpush.msra.mxu0 %v1578
        %v1580 = vand.u32 %v870, 4294901760
        %1581 = vmatpush.msra.mxu0 %v1580
        %v1582 = vand.u32 %v868, 4294901760
        %1583 = vmatpush.msra.mxu0 %v1582
        %v1584 = vand.u32 %v866, 4294901760
        %1585 = vmatpush.msra.mxu0 %v1584
        %v1586 = vand.u32 %v864, 4294901760
        %1587 = vmatpush.msra.mxu0 %v1586
        %v1588 = vand.u32 %v862, 4294901760
        %1589 = vmatpush.msra.mxu0 %v1588
        %v1590 = vand.u32 %v860, 4294901760
        %1591 = vmatpush.msra.mxu0 %v1590
        %v1592 = vand.u32 %v858, 4294901760
        %1593 = vmatpush.msra.mxu0 %v1592
        %v1594 = vand.u32 %v856, 4294901760
        %1595 = vmatpush.msra.mxu0 %v1594
        %v1596 = vand.u32 %v854, 4294901760
        %1597 = vmatpush.msra.mxu0 %v1596
        %v1598 = vand.u32 %v845, 4294901760
        %v1599 = vsub.f32 %v845, %v1598
        %v1600 = vand.u32 %v1599, 4294901760
        %1601 = vmatmul.f32.gmra.mxu0 %v1600
        %v1602 = vpop.f32.mrf.mxu0
        %v1603 = vadd.f32 %v1549, %v1602
        %v1604 = vand.u32 %v846, 4294901760
        %v1605 = vsub.f32 %v846, %v1604
        %v1606 = vand.u32 %v1605, 4294901760
        %1607 = vmatmul.f32.gmra.mxu0 %v1606
        %v1608 = vpop.f32.mrf.mxu0
        %v1609 = vadd.f32 %v1554, %v1608
        %v1610 = vand.u32 %v847, 4294901760
        %v1611 = vsub.f32 %v847, %v1610
        %v1612 = vand.u32 %v1611, 4294901760
        %1613 = vmatmul.f32.gmra.mxu0 %v1612
        %v1614 = vpop.f32.mrf.mxu0
        %v1615 = vadd.f32 %v1559, %v1614
        %v1616 = vand.u32 %v848, 4294901760
        %v1617 = vsub.f32 %v848, %v1616
        %v1618 = vand.u32 %v1617, 4294901760
        %1619 = vmatmul.f32.gmra.mxu0 %v1618
        %v1620 = vpop.f32.mrf.mxu0
        %v1621 = vadd.f32 %v1564, %v1620
        %1622 = vdwg.mxu0
        %v1623 = vand.u32 %v884, 4294901760
        %v1624 = vsub.f32 %v884, %v1623
        %v1625 = vand.u32 %v1624, 4294901760
        %1626 = vmatpush.msra.mxu0 %v1625
        %v1627 = vand.u32 %v882, 4294901760
        %v1628 = vsub.f32 %v882, %v1627
        %v1629 = vand.u32 %v1628, 4294901760
        %1630 = vmatpush.msra.mxu0 %v1629
        %v1631 = vand.u32 %v880, 4294901760
        %v1632 = vsub.f32 %v880, %v1631
        %v1633 = vand.u32 %v1632, 4294901760
        %1634 = vmatpush.msra.mxu0 %v1633
        %v1635 = vand.u32 %v878, 4294901760
        %v1636 = vsub.f32 %v878, %v1635
        %v1637 = vand.u32 %v1636, 4294901760
        %1638 = vmatpush.msra.mxu0 %v1637
        %v1639 = vand.u32 %v876, 4294901760
        %v1640 = vsub.f32 %v876, %v1639
        %v1641 = vand.u32 %v1640, 4294901760
        %1642 = vmatpush.msra.mxu0 %v1641
        %v1643 = vand.u32 %v874, 4294901760
        %v1644 = vsub.f32 %v874, %v1643
        %v1645 = vand.u32 %v1644, 4294901760
        %1646 = vmatpush.msra.mxu0 %v1645
        %v1647 = vand.u32 %v872, 4294901760
        %v1648 = vsub.f32 %v872, %v1647
        %v1649 = vand.u32 %v1648, 4294901760
        %1650 = vmatpush.msra.mxu0 %v1649
        %v1651 = vand.u32 %v870, 4294901760
        %v1652 = vsub.f32 %v870, %v1651
        %v1653 = vand.u32 %v1652, 4294901760
        %1654 = vmatpush.msra.mxu0 %v1653
        %v1655 = vand.u32 %v868, 4294901760
        %v1656 = vsub.f32 %v868, %v1655
        %v1657 = vand.u32 %v1656, 4294901760
        %1658 = vmatpush.msra.mxu0 %v1657
        %v1659 = vand.u32 %v866, 4294901760
        %v1660 = vsub.f32 %v866, %v1659
        %v1661 = vand.u32 %v1660, 4294901760
        %1662 = vmatpush.msra.mxu0 %v1661
        %v1663 = vand.u32 %v864, 4294901760
        %v1664 = vsub.f32 %v864, %v1663
        %v1665 = vand.u32 %v1664, 4294901760
        %1666 = vmatpush.msra.mxu0 %v1665
        %v1667 = vand.u32 %v862, 4294901760
        %v1668 = vsub.f32 %v862, %v1667
        %v1669 = vand.u32 %v1668, 4294901760
        %1670 = vmatpush.msra.mxu0 %v1669
        %v1671 = vand.u32 %v860, 4294901760
        %v1672 = vsub.f32 %v860, %v1671
        %v1673 = vand.u32 %v1672, 4294901760
        %1674 = vmatpush.msra.mxu0 %v1673
        %v1675 = vand.u32 %v858, 4294901760
        %v1676 = vsub.f32 %v858, %v1675
        %v1677 = vand.u32 %v1676, 4294901760
        %1678 = vmatpush.msra.mxu0 %v1677
        %v1679 = vand.u32 %v856, 4294901760
        %v1680 = vsub.f32 %v856, %v1679
        %v1681 = vand.u32 %v1680, 4294901760
        %1682 = vmatpush.msra.mxu0 %v1681
        %v1683 = vand.u32 %v854, 4294901760
        %v1684 = vsub.f32 %v854, %v1683
        %v1685 = vand.u32 %v1684, 4294901760
        %1686 = vmatpush.msra.mxu0 %v1685
        %v1687 = vand.u32 %v845, 4294901760
        %1688 = vmatmul.f32.gmra.mxu0 %v1687
        %v1689 = vpop.f32.mrf.mxu0
        %v1690 = vadd.f32 %v1603, %v1689
        %v1691 = vand.u32 %v846, 4294901760
        %1692 = vmatmul.f32.gmra.mxu0 %v1691
        %v1693 = vpop.f32.mrf.mxu0
        %v1694 = vadd.f32 %v1609, %v1693
        %v1695 = vand.u32 %v847, 4294901760
        %1696 = vmatmul.f32.gmra.mxu0 %v1695
        %v1697 = vpop.f32.mrf.mxu0
        %v1698 = vadd.f32 %v1615, %v1697
        %v1699 = vand.u32 %v848, 4294901760
        %1700 = vmatmul.f32.gmra.mxu0 %v1699
        %v1701 = vpop.f32.mrf.mxu0
        %v1702 = vadd.f32 %v1621, %v1701
        %1703 = vdwg.mxu0
        %v1704 = vand.u32 %v884, 4294901760
        %1705 = vmatpush.msra.mxu0 %v1704
        %v1706 = vand.u32 %v882, 4294901760
        %1707 = vmatpush.msra.mxu0 %v1706
        %v1708 = vand.u32 %v880, 4294901760
        %1709 = vmatpush.msra.mxu0 %v1708
        %v1710 = vand.u32 %v878, 4294901760
        %1711 = vmatpush.msra.mxu0 %v1710
        %v1712 = vand.u32 %v876, 4294901760
        %1713 = vmatpush.msra.mxu0 %v1712
        %v1714 = vand.u32 %v874, 4294901760
        %1715 = vmatpush.msra.mxu0 %v1714
        %v1716 = vand.u32 %v872, 4294901760
        %1717 = vmatpush.msra.mxu0 %v1716
        %v1718 = vand.u32 %v870, 4294901760
        %1719 = vmatpush.msra.mxu0 %v1718
        %v1720 = vand.u32 %v868, 4294901760
        %1721 = vmatpush.msra.mxu0 %v1720
        %v1722 = vand.u32 %v866, 4294901760
        %1723 = vmatpush.msra.mxu0 %v1722
        %v1724 = vand.u32 %v864, 4294901760
        %1725 = vmatpush.msra.mxu0 %v1724
        %v1726 = vand.u32 %v862, 4294901760
        %1727 = vmatpush.msra.mxu0 %v1726
        %v1728 = vand.u32 %v860, 4294901760
        %1729 = vmatpush.msra.mxu0 %v1728
        %v1730 = vand.u32 %v858, 4294901760
        %1731 = vmatpush.msra.mxu0 %v1730
        %v1732 = vand.u32 %v856, 4294901760
        %1733 = vmatpush.msra.mxu0 %v1732
        %v1734 = vand.u32 %v854, 4294901760
        %1735 = vmatpush.msra.mxu0 %v1734
        %v1736 = vand.u32 %v845, 4294901760
        %1737 = vmatmul.f32.gmra.mxu0 %v1736
        %v1738 = vpop.f32.mrf.mxu0
        %v1739 = vadd.f32 %v1690, %v1738
        %v1740 = vand.u32 %v846, 4294901760
        %1741 = vmatmul.f32.gmra.mxu0 %v1740
        %v1742 = vpop.f32.mrf.mxu0
        %v1743 = vadd.f32 %v1694, %v1742
        %v1744 = vand.u32 %v847, 4294901760
        %1745 = vmatmul.f32.gmra.mxu0 %v1744
        %v1746 = vpop.f32.mrf.mxu0
        %v1747 = vadd.f32 %v1698, %v1746
        %v1748 = vand.u32 %v848, 4294901760
        %1749 = vmatmul.f32.gmra.mxu0 %v1748
        %v1750 = vpop.f32.mrf.mxu0
        %v1751 = vadd.f32 %v1702, %v1750
        %1752 = vdwg.mxu0
        %v1753 = vld [vmem:[%s675] sm:$0xff]
        %v1754 = vld [vmem:[%s675 + $0x8] sm:$0xff]
        %v1755 = vld [vmem:[%s675 + $0x10] sm:$0xff]
        %v1756 = vld [vmem:[%s675 + $0x18] sm:$0xff]
        %v1757 = vld [vmem:[%s675 + $0x20] sm:$0xff]
        %v1758 = vld [vmem:[%s675 + $0x28] sm:$0xff]
        %v1759 = vld [vmem:[%s675 + $0x30] sm:$0xff]
        %v1760 = vld [vmem:[%s675 + $0x38] sm:$0xff]
        %v1761 = vld [vmem:[%s675 + $0x40] sm:$0xff]
        %v1762 = vld [vmem:[%s675 + $0x48] sm:$0xff]
        %v1763 = vld [vmem:[%s675 + $0x50] sm:$0xff]
        %v1764 = vld [vmem:[%s675 + $0x58] sm:$0xff]
        %v1765 = vld [vmem:[%s675 + $0x60] sm:$0xff]
        %v1766 = vld [vmem:[%s675 + $0x68] sm:$0xff]
        %v1767 = vld [vmem:[%s675 + $0x70] sm:$0xff]
        %v1768 = vld [vmem:[%s675 + $0x78] sm:$0xff]
        %v1769 = vand.u32 %v1768, 4294901760
        %1770 = vmatpush.msra.mxu0 %v1769
        %v1771 = vand.u32 %v1767, 4294901760
        %1772 = vmatpush.msra.mxu0 %v1771
        %v1773 = vand.u32 %v1766, 4294901760
        %1774 = vmatpush.msra.mxu0 %v1773
        %v1775 = vand.u32 %v1765, 4294901760
        %1776 = vmatpush.msra.mxu0 %v1775
        %v1777 = vand.u32 %v1764, 4294901760
        %1778 = vmatpush.msra.mxu0 %v1777
        %v1779 = vand.u32 %v1763, 4294901760
        %1780 = vmatpush.msra.mxu0 %v1779
        %v1781 = vand.u32 %v1762, 4294901760
        %1782 = vmatpush.msra.mxu0 %v1781
        %v1783 = vand.u32 %v1761, 4294901760
        %1784 = vmatpush.msra.mxu0 %v1783
        %v1785 = vand.u32 %v1760, 4294901760
        %1786 = vmatpush.msra.mxu0 %v1785
        %v1787 = vand.u32 %v1759, 4294901760
        %1788 = vmatpush.msra.mxu0 %v1787
        %v1789 = vand.u32 %v1758, 4294901760
        %1790 = vmatpush.msra.mxu0 %v1789
        %v1791 = vand.u32 %v1757, 4294901760
        %1792 = vmatpush.msra.mxu0 %v1791
        %v1793 = vand.u32 %v1756, 4294901760
        %1794 = vmatpush.msra.mxu0 %v1793
        %v1795 = vand.u32 %v1755, 4294901760
        %1796 = vmatpush.msra.mxu0 %v1795
        %v1797 = vand.u32 %v1754, 4294901760
        %1798 = vmatpush.msra.mxu0 %v1797
        %v1799 = vand.u32 %v1753, 4294901760
        %1800 = vmatpush.msra.mxu0 %v1799
        %v1801 = vand.u32 %v849, 4294901760
        %v1802 = vsub.f32 %v849, %v1801
        %v1803 = vand.u32 %v1802, 4294901760
        %v1804 = vsub.f32 %v1802, %v1803
        %v1805 = vand.u32 %v1804, 4294901760
        %1806 = vmatmul.f32.gmra.mxu0 %v1805
        %v1807 = vpop.f32.mrf.mxu0
        %v1808 = vadd.f32 0.0, %v1807
        %v1809 = vand.u32 %v850, 4294901760
        %v1810 = vsub.f32 %v850, %v1809
        %v1811 = vand.u32 %v1810, 4294901760
        %v1812 = vsub.f32 %v1810, %v1811
        %v1813 = vand.u32 %v1812, 4294901760
        %1814 = vmatmul.f32.gmra.mxu0 %v1813
        %v1815 = vpop.f32.mrf.mxu0
        %v1816 = vadd.f32 0.0, %v1815
        %v1817 = vand.u32 %v851, 4294901760
        %v1818 = vsub.f32 %v851, %v1817
        %v1819 = vand.u32 %v1818, 4294901760
        %v1820 = vsub.f32 %v1818, %v1819
        %v1821 = vand.u32 %v1820, 4294901760
        %1822 = vmatmul.f32.gmra.mxu0 %v1821
        %v1823 = vpop.f32.mrf.mxu0
        %v1824 = vadd.f32 0.0, %v1823
        %v1825 = vand.u32 %v852, 4294901760
        %v1826 = vsub.f32 %v852, %v1825
        %v1827 = vand.u32 %v1826, 4294901760
        %v1828 = vsub.f32 %v1826, %v1827
        %v1829 = vand.u32 %v1828, 4294901760
        %1830 = vmatmul.f32.gmra.mxu0 %v1829
        %v1831 = vpop.f32.mrf.mxu0
        %v1832 = vadd.f32 0.0, %v1831
        %1833 = vdwg.mxu0
        %v1834 = vand.u32 %v1768, 4294901760
        %v1835 = vsub.f32 %v1768, %v1834
        %v1836 = vand.u32 %v1835, 4294901760
        %v1837 = vsub.f32 %v1835, %v1836
        %v1838 = vand.u32 %v1837, 4294901760
        %1839 = vmatpush.msra.mxu0 %v1838
        %v1840 = vand.u32 %v1767, 4294901760
        %v1841 = vsub.f32 %v1767, %v1840
        %v1842 = vand.u32 %v1841, 4294901760
        %v1843 = vsub.f32 %v1841, %v1842
        %v1844 = vand.u32 %v1843, 4294901760
        %1845 = vmatpush.msra.mxu0 %v1844
        %v1846 = vand.u32 %v1766, 4294901760
        %v1847 = vsub.f32 %v1766, %v1846
        %v1848 = vand.u32 %v1847, 4294901760
        %v1849 = vsub.f32 %v1847, %v1848
        %v1850 = vand.u32 %v1849, 4294901760
        %1851 = vmatpush.msra.mxu0 %v1850
        %v1852 = vand.u32 %v1765, 4294901760
        %v1853 = vsub.f32 %v1765, %v1852
        %v1854 = vand.u32 %v1853, 4294901760
        %v1855 = vsub.f32 %v1853, %v1854
        %v1856 = vand.u32 %v1855, 4294901760
        %1857 = vmatpush.msra.mxu0 %v1856
        %v1858 = vand.u32 %v1764, 4294901760
        %v1859 = vsub.f32 %v1764, %v1858
        %v1860 = vand.u32 %v1859, 4294901760
        %v1861 = vsub.f32 %v1859, %v1860
        %v1862 = vand.u32 %v1861, 4294901760
        %1863 = vmatpush.msra.mxu0 %v1862
        %v1864 = vand.u32 %v1763, 4294901760
        %v1865 = vsub.f32 %v1763, %v1864
        %v1866 = vand.u32 %v1865, 4294901760
        %v1867 = vsub.f32 %v1865, %v1866
        %v1868 = vand.u32 %v1867, 4294901760
        %1869 = vmatpush.msra.mxu0 %v1868
        %v1870 = vand.u32 %v1762, 4294901760
        %v1871 = vsub.f32 %v1762, %v1870
        %v1872 = vand.u32 %v1871, 4294901760
        %v1873 = vsub.f32 %v1871, %v1872
        %v1874 = vand.u32 %v1873, 4294901760
        %1875 = vmatpush.msra.mxu0 %v1874
        %v1876 = vand.u32 %v1761, 4294901760
        %v1877 = vsub.f32 %v1761, %v1876
        %v1878 = vand.u32 %v1877, 4294901760
        %v1879 = vsub.f32 %v1877, %v1878
        %v1880 = vand.u32 %v1879, 4294901760
        %1881 = vmatpush.msra.mxu0 %v1880
        %v1882 = vand.u32 %v1760, 4294901760
        %v1883 = vsub.f32 %v1760, %v1882
        %v1884 = vand.u32 %v1883, 4294901760
        %v1885 = vsub.f32 %v1883, %v1884
        %v1886 = vand.u32 %v1885, 4294901760
        %1887 = vmatpush.msra.mxu0 %v1886
        %v1888 = vand.u32 %v1759, 4294901760
        %v1889 = vsub.f32 %v1759, %v1888
        %v1890 = vand.u32 %v1889, 4294901760
        %v1891 = vsub.f32 %v1889, %v1890
        %v1892 = vand.u32 %v1891, 4294901760
        %1893 = vmatpush.msra.mxu0 %v1892
        %v1894 = vand.u32 %v1758, 4294901760
        %v1895 = vsub.f32 %v1758, %v1894
        %v1896 = vand.u32 %v1895, 4294901760
        %v1897 = vsub.f32 %v1895, %v1896
        %v1898 = vand.u32 %v1897, 4294901760
        %1899 = vmatpush.msra.mxu0 %v1898
        %v1900 = vand.u32 %v1757, 4294901760
        %v1901 = vsub.f32 %v1757, %v1900
        %v1902 = vand.u32 %v1901, 4294901760
        %v1903 = vsub.f32 %v1901, %v1902
        %v1904 = vand.u32 %v1903, 4294901760
        %1905 = vmatpush.msra.mxu0 %v1904
        %v1906 = vand.u32 %v1756, 4294901760
        %v1907 = vsub.f32 %v1756, %v1906
        %v1908 = vand.u32 %v1907, 4294901760
        %v1909 = vsub.f32 %v1907, %v1908
        %v1910 = vand.u32 %v1909, 4294901760
        %1911 = vmatpush.msra.mxu0 %v1910
        %v1912 = vand.u32 %v1755, 4294901760
        %v1913 = vsub.f32 %v1755, %v1912
        %v1914 = vand.u32 %v1913, 4294901760
        %v1915 = vsub.f32 %v1913, %v1914
        %v1916 = vand.u32 %v1915, 4294901760
        %1917 = vmatpush.msra.mxu0 %v1916
        %v1918 = vand.u32 %v1754, 4294901760
        %v1919 = vsub.f32 %v1754, %v1918
        %v1920 = vand.u32 %v1919, 4294901760
        %v1921 = vsub.f32 %v1919, %v1920
        %v1922 = vand.u32 %v1921, 4294901760
        %1923 = vmatpush.msra.mxu0 %v1922
        %v1924 = vand.u32 %v1753, 4294901760
        %v1925 = vsub.f32 %v1753, %v1924
        %v1926 = vand.u32 %v1925, 4294901760
        %v1927 = vsub.f32 %v1925, %v1926
        %v1928 = vand.u32 %v1927, 4294901760
        %1929 = vmatpush.msra.mxu0 %v1928
        %v1930 = vand.u32 %v849, 4294901760
        %1931 = vmatmul.f32.gmra.mxu0 %v1930
        %v1932 = vpop.f32.mrf.mxu0
        %v1933 = vadd.f32 %v1808, %v1932
        %v1934 = vand.u32 %v850, 4294901760
        %1935 = vmatmul.f32.gmra.mxu0 %v1934
        %v1936 = vpop.f32.mrf.mxu0
        %v1937 = vadd.f32 %v1816, %v1936
        %v1938 = vand.u32 %v851, 4294901760
        %1939 = vmatmul.f32.gmra.mxu0 %v1938
        %v1940 = vpop.f32.mrf.mxu0
        %v1941 = vadd.f32 %v1824, %v1940
        %v1942 = vand.u32 %v852, 4294901760
        %1943 = vmatmul.f32.gmra.mxu0 %v1942
        %v1944 = vpop.f32.mrf.mxu0
        %v1945 = vadd.f32 %v1832, %v1944
        %1946 = vdwg.mxu0
        %v1947 = vand.u32 %v1768, 4294901760
        %v1948 = vsub.f32 %v1768, %v1947
        %1949 = vmatpush.msra.mxu0 %v1948
        %v1950 = vand.u32 %v1767, 4294901760
        %v1951 = vsub.f32 %v1767, %v1950
        %1952 = vmatpush.msra.mxu0 %v1951
        %v1953 = vand.u32 %v1766, 4294901760
        %v1954 = vsub.f32 %v1766, %v1953
        %1955 = vmatpush.msra.mxu0 %v1954
        %v1956 = vand.u32 %v1765, 4294901760
        %v1957 = vsub.f32 %v1765, %v1956
        %1958 = vmatpush.msra.mxu0 %v1957
        %v1959 = vand.u32 %v1764, 4294901760
        %v1960 = vsub.f32 %v1764, %v1959
        %1961 = vmatpush.msra.mxu0 %v1960
        %v1962 = vand.u32 %v1763, 4294901760
        %v1963 = vsub.f32 %v1763, %v1962
        %1964 = vmatpush.msra.mxu0 %v1963
        %v1965 = vand.u32 %v1762, 4294901760
        %v1966 = vsub.f32 %v1762, %v1965
        %1967 = vmatpush.msra.mxu0 %v1966
        %v1968 = vand.u32 %v1761, 4294901760
        %v1969 = vsub.f32 %v1761, %v1968
        %1970 = vmatpush.msra.mxu0 %v1969
        %v1971 = vand.u32 %v1760, 4294901760
        %v1972 = vsub.f32 %v1760, %v1971
        %1973 = vmatpush.msra.mxu0 %v1972
        %v1974 = vand.u32 %v1759, 4294901760
        %v1975 = vsub.f32 %v1759, %v1974
        %1976 = vmatpush.msra.mxu0 %v1975
        %v1977 = vand.u32 %v1758, 4294901760
        %v1978 = vsub.f32 %v1758, %v1977
        %1979 = vmatpush.msra.mxu0 %v1978
        %v1980 = vand.u32 %v1757, 4294901760
        %v1981 = vsub.f32 %v1757, %v1980
        %1982 = vmatpush.msra.mxu0 %v1981
        %v1983 = vand.u32 %v1756, 4294901760
        %v1984 = vsub.f32 %v1756, %v1983
        %1985 = vmatpush.msra.mxu0 %v1984
        %v1986 = vand.u32 %v1755, 4294901760
        %v1987 = vsub.f32 %v1755, %v1986
        %1988 = vmatpush.msra.mxu0 %v1987
        %v1989 = vand.u32 %v1754, 4294901760
        %v1990 = vsub.f32 %v1754, %v1989
        %1991 = vmatpush.msra.mxu0 %v1990
        %v1992 = vand.u32 %v1753, 4294901760
        %v1993 = vsub.f32 %v1753, %v1992
        %1994 = vmatpush.msra.mxu0 %v1993
        %v1995 = vand.u32 %v849, 4294901760
        %v1996 = vsub.f32 %v849, %v1995
        %1997 = vmatmul.f32.gmra.mxu0 %v1996
        %v1998 = vpop.f32.mrf.mxu0
        %v1999 = vadd.f32 %v1933, %v1998
        %v2000 = vand.u32 %v850, 4294901760
        %v2001 = vsub.f32 %v850, %v2000
        %2002 = vmatmul.f32.gmra.mxu0 %v2001
        %v2003 = vpop.f32.mrf.mxu0
        %v2004 = vadd.f32 %v1937, %v2003
        %v2005 = vand.u32 %v851, 4294901760
        %v2006 = vsub.f32 %v851, %v2005
        %2007 = vmatmul.f32.gmra.mxu0 %v2006
        %v2008 = vpop.f32.mrf.mxu0
        %v2009 = vadd.f32 %v1941, %v2008
        %v2010 = vand.u32 %v852, 4294901760
        %v2011 = vsub.f32 %v852, %v2010
        %2012 = vmatmul.f32.gmra.mxu0 %v2011
        %v2013 = vpop.f32.mrf.mxu0
        %v2014 = vadd.f32 %v1945, %v2013
        %2015 = vdwg.mxu0
        %v2016 = vand.u32 %v1768, 4294901760
        %2017 = vmatpush.msra.mxu0 %v2016
        %v2018 = vand.u32 %v1767, 4294901760
        %2019 = vmatpush.msra.mxu0 %v2018
        %v2020 = vand.u32 %v1766, 4294901760
        %2021 = vmatpush.msra.mxu0 %v2020
        %v2022 = vand.u32 %v1765, 4294901760
        %2023 = vmatpush.msra.mxu0 %v2022
        %v2024 = vand.u32 %v1764, 4294901760
        %2025 = vmatpush.msra.mxu0 %v2024
        %v2026 = vand.u32 %v1763, 4294901760
        %2027 = vmatpush.msra.mxu0 %v2026
        %v2028 = vand.u32 %v1762, 4294901760
        %2029 = vmatpush.msra.mxu0 %v2028
        %v2030 = vand.u32 %v1761, 4294901760
        %2031 = vmatpush.msra.mxu0 %v2030
        %v2032 = vand.u32 %v1760, 4294901760
        %2033 = vmatpush.msra.mxu0 %v2032
        %v2034 = vand.u32 %v1759, 4294901760
        %2035 = vmatpush.msra.mxu0 %v2034
        %v2036 = vand.u32 %v1758, 4294901760
        %2037 = vmatpush.msra.mxu0 %v2036
        %v2038 = vand.u32 %v1757, 4294901760
        %2039 = vmatpush.msra.mxu0 %v2038
        %v2040 = vand.u32 %v1756, 4294901760
        %2041 = vmatpush.msra.mxu0 %v2040
        %v2042 = vand.u32 %v1755, 4294901760
        %2043 = vmatpush.msra.mxu0 %v2042
        %v2044 = vand.u32 %v1754, 4294901760
        %2045 = vmatpush.msra.mxu0 %v2044
        %v2046 = vand.u32 %v1753, 4294901760
        %2047 = vmatpush.msra.mxu0 %v2046
        %v2048 = vand.u32 %v849, 4294901760
        %v2049 = vsub.f32 %v849, %v2048
        %v2050 = vand.u32 %v2049, 4294901760
        %2051 = vmatmul.f32.gmra.mxu0 %v2050
        %v2052 = vpop.f32.mrf.mxu0
        %v2053 = vadd.f32 %v1999, %v2052
        %v2054 = vand.u32 %v850, 4294901760
        %v2055 = vsub.f32 %v850, %v2054
        %v2056 = vand.u32 %v2055, 4294901760
        %2057 = vmatmul.f32.gmra.mxu0 %v2056
        %v2058 = vpop.f32.mrf.mxu0
        %v2059 = vadd.f32 %v2004, %v2058
        %v2060 = vand.u32 %v851, 4294901760
        %v2061 = vsub.f32 %v851, %v2060
        %v2062 = vand.u32 %v2061, 4294901760
        %2063 = vmatmul.f32.gmra.mxu0 %v2062
        %v2064 = vpop.f32.mrf.mxu0
        %v2065 = vadd.f32 %v2009, %v2064
        %v2066 = vand.u32 %v852, 4294901760
        %v2067 = vsub.f32 %v852, %v2066
        %v2068 = vand.u32 %v2067, 4294901760
        %2069 = vmatmul.f32.gmra.mxu0 %v2068
        %v2070 = vpop.f32.mrf.mxu0
        %v2071 = vadd.f32 %v2014, %v2070
        %2072 = vdwg.mxu0
        %v2073 = vand.u32 %v1768, 4294901760
        %v2074 = vsub.f32 %v1768, %v2073
        %v2075 = vand.u32 %v2074, 4294901760
        %2076 = vmatpush.msra.mxu0 %v2075
        %v2077 = vand.u32 %v1767, 4294901760
        %v2078 = vsub.f32 %v1767, %v2077
        %v2079 = vand.u32 %v2078, 4294901760
        %2080 = vmatpush.msra.mxu0 %v2079
        %v2081 = vand.u32 %v1766, 4294901760
        %v2082 = vsub.f32 %v1766, %v2081
        %v2083 = vand.u32 %v2082, 4294901760
        %2084 = vmatpush.msra.mxu0 %v2083
        %v2085 = vand.u32 %v1765, 4294901760
        %v2086 = vsub.f32 %v1765, %v2085
        %v2087 = vand.u32 %v2086, 4294901760
        %2088 = vmatpush.msra.mxu0 %v2087
        %v2089 = vand.u32 %v1764, 4294901760
        %v2090 = vsub.f32 %v1764, %v2089
        %v2091 = vand.u32 %v2090, 4294901760
        %2092 = vmatpush.msra.mxu0 %v2091
        %v2093 = vand.u32 %v1763, 4294901760
        %v2094 = vsub.f32 %v1763, %v2093
        %v2095 = vand.u32 %v2094, 4294901760
        %2096 = vmatpush.msra.mxu0 %v2095
        %v2097 = vand.u32 %v1762, 4294901760
        %v2098 = vsub.f32 %v1762, %v2097
        %v2099 = vand.u32 %v2098, 4294901760
        %2100 = vmatpush.msra.mxu0 %v2099
        %v2101 = vand.u32 %v1761, 4294901760
        %v2102 = vsub.f32 %v1761, %v2101
        %v2103 = vand.u32 %v2102, 4294901760
        %2104 = vmatpush.msra.mxu0 %v2103
        %v2105 = vand.u32 %v1760, 4294901760
        %v2106 = vsub.f32 %v1760, %v2105
        %v2107 = vand.u32 %v2106, 4294901760
        %2108 = vmatpush.msra.mxu0 %v2107
        %v2109 = vand.u32 %v1759, 4294901760
        %v2110 = vsub.f32 %v1759, %v2109
        %v2111 = vand.u32 %v2110, 4294901760
        %2112 = vmatpush.msra.mxu0 %v2111
        %v2113 = vand.u32 %v1758, 4294901760
        %v2114 = vsub.f32 %v1758, %v2113
        %v2115 = vand.u32 %v2114, 4294901760
        %2116 = vmatpush.msra.mxu0 %v2115
        %v2117 = vand.u32 %v1757, 4294901760
        %v2118 = vsub.f32 %v1757, %v2117
        %v2119 = vand.u32 %v2118, 4294901760
        %2120 = vmatpush.msra.mxu0 %v2119
        %v2121 = vand.u32 %v1756, 4294901760
        %v2122 = vsub.f32 %v1756, %v2121
        %v2123 = vand.u32 %v2122, 4294901760
        %2124 = vmatpush.msra.mxu0 %v2123
        %v2125 = vand.u32 %v1755, 4294901760
        %v2126 = vsub.f32 %v1755, %v2125
        %v2127 = vand.u32 %v2126, 4294901760
        %2128 = vmatpush.msra.mxu0 %v2127
        %v2129 = vand.u32 %v1754, 4294901760
        %v2130 = vsub.f32 %v1754, %v2129
        %v2131 = vand.u32 %v2130, 4294901760
        %2132 = vmatpush.msra.mxu0 %v2131
        %v2133 = vand.u32 %v1753, 4294901760
        %v2134 = vsub.f32 %v1753, %v2133
        %v2135 = vand.u32 %v2134, 4294901760
        %2136 = vmatpush.msra.mxu0 %v2135
        %v2137 = vand.u32 %v849, 4294901760
        %2138 = vmatmul.f32.gmra.mxu0 %v2137
        %v2139 = vpop.f32.mrf.mxu0
        %v2140 = vadd.f32 %v2053, %v2139
        %v2141 = vand.u32 %v850, 4294901760
        %2142 = vmatmul.f32.gmra.mxu0 %v2141
        %v2143 = vpop.f32.mrf.mxu0
        %v2144 = vadd.f32 %v2059, %v2143
        %v2145 = vand.u32 %v851, 4294901760
        %2146 = vmatmul.f32.gmra.mxu0 %v2145
        %v2147 = vpop.f32.mrf.mxu0
        %v2148 = vadd.f32 %v2065, %v2147
        %v2149 = vand.u32 %v852, 4294901760
        %2150 = vmatmul.f32.gmra.mxu0 %v2149
        %v2151 = vpop.f32.mrf.mxu0
        %v2152 = vadd.f32 %v2071, %v2151
        %2153 = vdwg.mxu0
        %v2154 = vand.u32 %v1768, 4294901760
        %2155 = vmatpush.msra.mxu0 %v2154
        %v2156 = vand.u32 %v1767, 4294901760
        %2157 = vmatpush.msra.mxu0 %v2156
        %v2158 = vand.u32 %v1766, 4294901760
        %2159 = vmatpush.msra.mxu0 %v2158
        %v2160 = vand.u32 %v1765, 4294901760
        %2161 = vmatpush.msra.mxu0 %v2160
        %v2162 = vand.u32 %v1764, 4294901760
        %2163 = vmatpush.msra.mxu0 %v2162
        %v2164 = vand.u32 %v1763, 4294901760
        %2165 = vmatpush.msra.mxu0 %v2164
        %v2166 = vand.u32 %v1762, 4294901760
        %2167 = vmatpush.msra.mxu0 %v2166
        %v2168 = vand.u32 %v1761, 4294901760
        %2169 = vmatpush.msra.mxu0 %v2168
        %v2170 = vand.u32 %v1760, 4294901760
        %2171 = vmatpush.msra.mxu0 %v2170
        %v2172 = vand.u32 %v1759, 4294901760
        %2173 = vmatpush.msra.mxu0 %v2172
        %v2174 = vand.u32 %v1758, 4294901760
        %2175 = vmatpush.msra.mxu0 %v2174
        %v2176 = vand.u32 %v1757, 4294901760
        %2177 = vmatpush.msra.mxu0 %v2176
        %v2178 = vand.u32 %v1756, 4294901760
        %2179 = vmatpush.msra.mxu0 %v2178
        %v2180 = vand.u32 %v1755, 4294901760
        %2181 = vmatpush.msra.mxu0 %v2180
        %v2182 = vand.u32 %v1754, 4294901760
        %2183 = vmatpush.msra.mxu0 %v2182
        %v2184 = vand.u32 %v1753, 4294901760
        %2185 = vmatpush.msra.mxu0 %v2184
        %v2186 = vand.u32 %v849, 4294901760
        %2187 = vmatmul.f32.gmra.mxu0 %v2186
        %v2188 = vpop.f32.mrf.mxu0
        %v2189 = vadd.f32 %v2140, %v2188
        %v2190 = vand.u32 %v850, 4294901760
        %2191 = vmatmul.f32.gmra.mxu0 %v2190
        %v2192 = vpop.f32.mrf.mxu0
        %v2193 = vadd.f32 %v2144, %v2192
        %v2194 = vand.u32 %v851, 4294901760
        %2195 = vmatmul.f32.gmra.mxu0 %v2194
        %v2196 = vpop.f32.mrf.mxu0
        %v2197 = vadd.f32 %v2148, %v2196
        %v2198 = vand.u32 %v852, 4294901760
        %2199 = vmatmul.f32.gmra.mxu0 %v2198
        %v2200 = vpop.f32.mrf.mxu0
        %v2201 = vadd.f32 %v2152, %v2200
        %2202 = vdwg.mxu0
        %vm2203 = vcmask 261120
        %v2205 = vsel %vm2203, %v2189, 0
        %v2208 = vsel %vm2203, %v2193, 0
        %v2211 = vsel %vm2203, %v1305, 0
        %v2214 = vsel %vm2203, %v1309, 0
        %2216 = vmatpush.xpose.msra.mxu0 0.0
        %2217 = vmatpush.xpose.msra.mxu0 0.0
        %2218 = vmatpush.xpose.msra.mxu0 0.0
        %2219 = vmatpush.xpose.msra.mxu0 0.0
        %2220 = vmatpush.xpose.msra.mxu0 0.0
        %2221 = vmatpush.xpose.msra.mxu0 0.0
        %2222 = vmatpush.xpose.msra.mxu0 0.0
        %2223 = vmatpush.xpose.msra.mxu0 0.0
        %2224 = vmatpush.xpose.msra.mxu0 0.0
        %2225 = vmatpush.xpose.msra.mxu0 0.0
        %2226 = vmatpush.xpose.msra.mxu0 0.0
        %2227 = vmatpush.xpose.msra.mxu0 0.0
        %2228 = vmatpush.xpose.msra.mxu0 0.0
        %2229 = vmatpush.xpose.msra.mxu0 0.0
        %v2230 = vand.u32 %v2214, 4294901760
        %2231 = vmatpush.xpose.msra.mxu0 %v2230
        %v2232 = vand.u32 %v2211, 4294901760
        %2233 = vmatpush.xpose.msra.mxu0 %v2232
        %v2234 = vand.u32 %v2205, 4294901760
        %v2235 = vsub.f32 %v2205, %v2234
        %v2236 = vand.u32 %v2235, 4294901760
        %v2237 = vsub.f32 %v2235, %v2236
        %v2238 = vand.u32 %v2237, 4294901760
        %2239 = vmatmul.f32.gmra.mxu0 %v2238
        %v2240 = vpop.f32.mrf.mxu0
        %v2241 = vadd.f32 0.0, %v2240
        %v2242 = vand.u32 %v2208, 4294901760
        %v2243 = vsub.f32 %v2208, %v2242
        %v2244 = vand.u32 %v2243, 4294901760
        %v2245 = vsub.f32 %v2243, %v2244
        %v2246 = vand.u32 %v2245, 4294901760
        %2247 = vmatmul.f32.gmra.mxu0 %v2246
        %v2248 = vpop.f32.mrf.mxu0
        %v2249 = vadd.f32 0.0, %v2248
        %2250 = vdwg.mxu0
        %2251 = vmatpush.xpose.msra.mxu0 0.0
        %2252 = vmatpush.xpose.msra.mxu0 0.0
        %2253 = vmatpush.xpose.msra.mxu0 0.0
        %2254 = vmatpush.xpose.msra.mxu0 0.0
        %2255 = vmatpush.xpose.msra.mxu0 0.0
        %2256 = vmatpush.xpose.msra.mxu0 0.0
        %2257 = vmatpush.xpose.msra.mxu0 0.0
        %2258 = vmatpush.xpose.msra.mxu0 0.0
        %2259 = vmatpush.xpose.msra.mxu0 0.0
        %2260 = vmatpush.xpose.msra.mxu0 0.0
        %2261 = vmatpush.xpose.msra.mxu0 0.0
        %2262 = vmatpush.xpose.msra.mxu0 0.0
        %2263 = vmatpush.xpose.msra.mxu0 0.0
        %2264 = vmatpush.xpose.msra.mxu0 0.0
        %v2265 = vand.u32 %v2214, 4294901760
        %v2266 = vsub.f32 %v2214, %v2265
        %v2267 = vand.u32 %v2266, 4294901760
        %v2268 = vsub.f32 %v2266, %v2267
        %v2269 = vand.u32 %v2268, 4294901760
        %2270 = vmatpush.xpose.msra.mxu0 %v2269
        %v2271 = vand.u32 %v2211, 4294901760
        %v2272 = vsub.f32 %v2211, %v2271
        %v2273 = vand.u32 %v2272, 4294901760
        %v2274 = vsub.f32 %v2272, %v2273
        %v2275 = vand.u32 %v2274, 4294901760
        %2276 = vmatpush.xpose.msra.mxu0 %v2275
        %v2277 = vand.u32 %v2205, 4294901760
        %2278 = vmatmul.f32.gmra.mxu0 %v2277
        %v2279 = vpop.f32.mrf.mxu0
        %v2280 = vadd.f32 %v2241, %v2279
        %v2281 = vand.u32 %v2208, 4294901760
        %2282 = vmatmul.f32.gmra.mxu0 %v2281
        %v2283 = vpop.f32.mrf.mxu0
        %v2284 = vadd.f32 %v2249, %v2283
        %2285 = vdwg.mxu0
        %2286 = vmatpush.xpose.msra.mxu0 0.0
        %2287 = vmatpush.xpose.msra.mxu0 0.0
        %2288 = vmatpush.xpose.msra.mxu0 0.0
        %2289 = vmatpush.xpose.msra.mxu0 0.0
        %2290 = vmatpush.xpose.msra.mxu0 0.0
        %2291 = vmatpush.xpose.msra.mxu0 0.0
        %2292 = vmatpush.xpose.msra.mxu0 0.0
        %2293 = vmatpush.xpose.msra.mxu0 0.0
        %2294 = vmatpush.xpose.msra.mxu0 0.0
        %2295 = vmatpush.xpose.msra.mxu0 0.0
        %2296 = vmatpush.xpose.msra.mxu0 0.0
        %2297 = vmatpush.xpose.msra.mxu0 0.0
        %2298 = vmatpush.xpose.msra.mxu0 0.0
        %2299 = vmatpush.xpose.msra.mxu0 0.0
        %v2300 = vand.u32 %v2214, 4294901760
        %v2301 = vsub.f32 %v2214, %v2300
        %2302 = vmatpush.xpose.msra.mxu0 %v2301
        %v2303 = vand.u32 %v2211, 4294901760
        %v2304 = vsub.f32 %v2211, %v2303
        %2305 = vmatpush.xpose.msra.mxu0 %v2304
        %v2306 = vand.u32 %v2205, 4294901760
        %v2307 = vsub.f32 %v2205, %v2306
        %2308 = vmatmul.f32.gmra.mxu0 %v2307
        %v2309 = vpop.f32.mrf.mxu0
        %v2310 = vadd.f32 %v2280, %v2309
        %v2311 = vand.u32 %v2208, 4294901760
        %v2312 = vsub.f32 %v2208, %v2311
        %2313 = vmatmul.f32.gmra.mxu0 %v2312
        %v2314 = vpop.f32.mrf.mxu0
        %v2315 = vadd.f32 %v2284, %v2314
        %2316 = vdwg.mxu0
        %2317 = vmatpush.xpose.msra.mxu0 0.0
        %2318 = vmatpush.xpose.msra.mxu0 0.0
        %2319 = vmatpush.xpose.msra.mxu0 0.0
        %2320 = vmatpush.xpose.msra.mxu0 0.0
        %2321 = vmatpush.xpose.msra.mxu0 0.0
        %2322 = vmatpush.xpose.msra.mxu0 0.0
        %2323 = vmatpush.xpose.msra.mxu0 0.0
        %2324 = vmatpush.xpose.msra.mxu0 0.0
        %2325 = vmatpush.xpose.msra.mxu0 0.0
        %2326 = vmatpush.xpose.msra.mxu0 0.0
        %2327 = vmatpush.xpose.msra.mxu0 0.0
        %2328 = vmatpush.xpose.msra.mxu0 0.0
        %2329 = vmatpush.xpose.msra.mxu0 0.0
        %2330 = vmatpush.xpose.msra.mxu0 0.0
        %v2331 = vand.u32 %v2214, 4294901760
        %2332 = vmatpush.xpose.msra.mxu0 %v2331
        %v2333 = vand.u32 %v2211, 4294901760
        %2334 = vmatpush.xpose.msra.mxu0 %v2333
        %v2335 = vand.u32 %v2205, 4294901760
        %v2336 = vsub.f32 %v2205, %v2335
        %v2337 = vand.u32 %v2336, 4294901760
        %2338 = vmatmul.f32.gmra.mxu0 %v2337
        %v2339 = vpop.f32.mrf.mxu0
        %v2340 = vadd.f32 %v2310, %v2339
        %v2341 = vand.u32 %v2208, 4294901760
        %v2342 = vsub.f32 %v2208, %v2341
        %v2343 = vand.u32 %v2342, 4294901760
        %2344 = vmatmul.f32.gmra.mxu0 %v2343
        %v2345 = vpop.f32.mrf.mxu0
        %v2346 = vadd.f32 %v2315, %v2345
        %2347 = vdwg.mxu0
        %2348 = vmatpush.xpose.msra.mxu0 0.0
        %2349 = vmatpush.xpose.msra.mxu0 0.0
        %2350 = vmatpush.xpose.msra.mxu0 0.0
        %2351 = vmatpush.xpose.msra.mxu0 0.0
        %2352 = vmatpush.xpose.msra.mxu0 0.0
        %2353 = vmatpush.xpose.msra.mxu0 0.0
        %2354 = vmatpush.xpose.msra.mxu0 0.0
        %2355 = vmatpush.xpose.msra.mxu0 0.0
        %2356 = vmatpush.xpose.msra.mxu0 0.0
        %2357 = vmatpush.xpose.msra.mxu0 0.0
        %2358 = vmatpush.xpose.msra.mxu0 0.0
        %2359 = vmatpush.xpose.msra.mxu0 0.0
        %2360 = vmatpush.xpose.msra.mxu0 0.0
        %2361 = vmatpush.xpose.msra.mxu0 0.0
        %v2362 = vand.u32 %v2214, 4294901760
        %v2363 = vsub.f32 %v2214, %v2362
        %v2364 = vand.u32 %v2363, 4294901760
        %2365 = vmatpush.xpose.msra.mxu0 %v2364
        %v2366 = vand.u32 %v2211, 4294901760
        %v2367 = vsub.f32 %v2211, %v2366
        %v2368 = vand.u32 %v2367, 4294901760
        %2369 = vmatpush.xpose.msra.mxu0 %v2368
        %v2370 = vand.u32 %v2205, 4294901760
        %2371 = vmatmul.f32.gmra.mxu0 %v2370
        %v2372 = vpop.f32.mrf.mxu0
        %v2373 = vadd.f32 %v2340, %v2372
        %v2374 = vand.u32 %v2208, 4294901760
        %2375 = vmatmul.f32.gmra.mxu0 %v2374
        %v2376 = vpop.f32.mrf.mxu0
        %v2377 = vadd.f32 %v2346, %v2376
        %2378 = vdwg.mxu0
        %2379 = vmatpush.xpose.msra.mxu0 0.0
        %2380 = vmatpush.xpose.msra.mxu0 0.0
        %2381 = vmatpush.xpose.msra.mxu0 0.0
        %2382 = vmatpush.xpose.msra.mxu0 0.0
        %2383 = vmatpush.xpose.msra.mxu0 0.0
        %2384 = vmatpush.xpose.msra.mxu0 0.0
        %2385 = vmatpush.xpose.msra.mxu0 0.0
        %2386 = vmatpush.xpose.msra.mxu0 0.0
        %2387 = vmatpush.xpose.msra.mxu0 0.0
        %2388 = vmatpush.xpose.msra.mxu0 0.0
        %2389 = vmatpush.xpose.msra.mxu0 0.0
        %2390 = vmatpush.xpose.msra.mxu0 0.0
        %2391 = vmatpush.xpose.msra.mxu0 0.0
        %2392 = vmatpush.xpose.msra.mxu0 0.0
        %v2393 = vand.u32 %v2214, 4294901760
        %2394 = vmatpush.xpose.msra.mxu0 %v2393
        %v2395 = vand.u32 %v2211, 4294901760
        %2396 = vmatpush.xpose.msra.mxu0 %v2395
        %v2397 = vand.u32 %v2205, 4294901760
        %2398 = vmatmul.f32.gmra.mxu0 %v2397
        %v2399 = vpop.f32.mrf.mxu0
        %v2400 = vadd.f32 %v2373, %v2399
        %v2401 = vand.u32 %v2208, 4294901760
        %2402 = vmatmul.f32.gmra.mxu0 %v2401
        %v2403 = vpop.f32.mrf.mxu0
        %v2404 = vadd.f32 %v2377, %v2403
        %2405 = vdwg.mxu0
        %v2407 = vsel %vm2203, %v2197, 0
        %v2410 = vsel %vm2203, %v2201, 0
        %v2413 = vsel %vm2203, %v1313, 0
        %v2416 = vsel %vm2203, %v1317, 0
        %2418 = vmatpush.xpose.msra.mxu0 0.0
        %2419 = vmatpush.xpose.msra.mxu0 0.0
        %2420 = vmatpush.xpose.msra.mxu0 0.0
        %2421 = vmatpush.xpose.msra.mxu0 0.0
        %2422 = vmatpush.xpose.msra.mxu0 0.0
        %2423 = vmatpush.xpose.msra.mxu0 0.0
        %2424 = vmatpush.xpose.msra.mxu0 0.0
        %2425 = vmatpush.xpose.msra.mxu0 0.0
        %2426 = vmatpush.xpose.msra.mxu0 0.0
        %2427 = vmatpush.xpose.msra.mxu0 0.0
        %2428 = vmatpush.xpose.msra.mxu0 0.0
        %2429 = vmatpush.xpose.msra.mxu0 0.0
        %2430 = vmatpush.xpose.msra.mxu0 0.0
        %2431 = vmatpush.xpose.msra.mxu0 0.0
        %v2432 = vand.u32 %v2416, 4294901760
        %2433 = vmatpush.xpose.msra.mxu0 %v2432
        %v2434 = vand.u32 %v2413, 4294901760
        %2435 = vmatpush.xpose.msra.mxu0 %v2434
        %v2436 = vand.u32 %v2407, 4294901760
        %v2437 = vsub.f32 %v2407, %v2436
        %v2438 = vand.u32 %v2437, 4294901760
        %v2439 = vsub.f32 %v2437, %v2438
        %v2440 = vand.u32 %v2439, 4294901760
        %2441 = vmatmul.f32.gmra.mxu0 %v2440
        %v2442 = vpop.f32.mrf.mxu0
        %v2443 = vadd.f32 0.0, %v2442
        %v2444 = vand.u32 %v2410, 4294901760
        %v2445 = vsub.f32 %v2410, %v2444
        %v2446 = vand.u32 %v2445, 4294901760
        %v2447 = vsub.f32 %v2445, %v2446
        %v2448 = vand.u32 %v2447, 4294901760
        %2449 = vmatmul.f32.gmra.mxu0 %v2448
        %v2450 = vpop.f32.mrf.mxu0
        %v2451 = vadd.f32 0.0, %v2450
        %2452 = vdwg.mxu0
        %2453 = vmatpush.xpose.msra.mxu0 0.0
        %2454 = vmatpush.xpose.msra.mxu0 0.0
        %2455 = vmatpush.xpose.msra.mxu0 0.0
        %2456 = vmatpush.xpose.msra.mxu0 0.0
        %2457 = vmatpush.xpose.msra.mxu0 0.0
        %2458 = vmatpush.xpose.msra.mxu0 0.0
        %2459 = vmatpush.xpose.msra.mxu0 0.0
        %2460 = vmatpush.xpose.msra.mxu0 0.0
        %2461 = vmatpush.xpose.msra.mxu0 0.0
        %2462 = vmatpush.xpose.msra.mxu0 0.0
        %2463 = vmatpush.xpose.msra.mxu0 0.0
        %2464 = vmatpush.xpose.msra.mxu0 0.0
        %2465 = vmatpush.xpose.msra.mxu0 0.0
        %2466 = vmatpush.xpose.msra.mxu0 0.0
        %v2467 = vand.u32 %v2416, 4294901760
        %v2468 = vsub.f32 %v2416, %v2467
        %v2469 = vand.u32 %v2468, 4294901760
        %v2470 = vsub.f32 %v2468, %v2469
        %v2471 = vand.u32 %v2470, 4294901760
        %2472 = vmatpush.xpose.msra.mxu0 %v2471
        %v2473 = vand.u32 %v2413, 4294901760
        %v2474 = vsub.f32 %v2413, %v2473
        %v2475 = vand.u32 %v2474, 4294901760
        %v2476 = vsub.f32 %v2474, %v2475
        %v2477 = vand.u32 %v2476, 4294901760
        %2478 = vmatpush.xpose.msra.mxu0 %v2477
        %v2479 = vand.u32 %v2407, 4294901760
        %2480 = vmatmul.f32.gmra.mxu0 %v2479
        %v2481 = vpop.f32.mrf.mxu0
        %v2482 = vadd.f32 %v2443, %v2481
        %v2483 = vand.u32 %v2410, 4294901760
        %2484 = vmatmul.f32.gmra.mxu0 %v2483
        %v2485 = vpop.f32.mrf.mxu0
        %v2486 = vadd.f32 %v2451, %v2485
        %2487 = vdwg.mxu0
        %2488 = vmatpush.xpose.msra.mxu0 0.0
        %2489 = vmatpush.xpose.msra.mxu0 0.0
        %2490 = vmatpush.xpose.msra.mxu0 0.0
        %2491 = vmatpush.xpose.msra.mxu0 0.0
        %2492 = vmatpush.xpose.msra.mxu0 0.0
        %2493 = vmatpush.xpose.msra.mxu0 0.0
        %2494 = vmatpush.xpose.msra.mxu0 0.0
        %2495 = vmatpush.xpose.msra.mxu0 0.0
        %2496 = vmatpush.xpose.msra.mxu0 0.0
        %2497 = vmatpush.xpose.msra.mxu0 0.0
        %2498 = vmatpush.xpose.msra.mxu0 0.0
        %2499 = vmatpush.xpose.msra.mxu0 0.0
        %2500 = vmatpush.xpose.msra.mxu0 0.0
        %2501 = vmatpush.xpose.msra.mxu0 0.0
        %v2502 = vand.u32 %v2416, 4294901760
        %v2503 = vsub.f32 %v2416, %v2502
        %2504 = vmatpush.xpose.msra.mxu0 %v2503
        %v2505 = vand.u32 %v2413, 4294901760
        %v2506 = vsub.f32 %v2413, %v2505
        %2507 = vmatpush.xpose.msra.mxu0 %v2506
        %v2508 = vand.u32 %v2407, 4294901760
        %v2509 = vsub.f32 %v2407, %v2508
        %2510 = vmatmul.f32.gmra.mxu0 %v2509
        %v2511 = vpop.f32.mrf.mxu0
        %v2512 = vadd.f32 %v2482, %v2511
        %v2513 = vand.u32 %v2410, 4294901760
        %v2514 = vsub.f32 %v2410, %v2513
        %2515 = vmatmul.f32.gmra.mxu0 %v2514
        %v2516 = vpop.f32.mrf.mxu0
        %v2517 = vadd.f32 %v2486, %v2516
        %2518 = vdwg.mxu0
        %2519 = vmatpush.xpose.msra.mxu0 0.0
        %2520 = vmatpush.xpose.msra.mxu0 0.0
        %2521 = vmatpush.xpose.msra.mxu0 0.0
        %2522 = vmatpush.xpose.msra.mxu0 0.0
        %2523 = vmatpush.xpose.msra.mxu0 0.0
        %2524 = vmatpush.xpose.msra.mxu0 0.0
        %2525 = vmatpush.xpose.msra.mxu0 0.0
        %2526 = vmatpush.xpose.msra.mxu0 0.0
        %2527 = vmatpush.xpose.msra.mxu0 0.0
        %2528 = vmatpush.xpose.msra.mxu0 0.0
        %2529 = vmatpush.xpose.msra.mxu0 0.0
        %2530 = vmatpush.xpose.msra.mxu0 0.0
        %2531 = vmatpush.xpose.msra.mxu0 0.0
        %2532 = vmatpush.xpose.msra.mxu0 0.0
        %v2533 = vand.u32 %v2416, 4294901760
        %2534 = vmatpush.xpose.msra.mxu0 %v2533
        %v2535 = vand.u32 %v2413, 4294901760
        %2536 = vmatpush.xpose.msra.mxu0 %v2535
        %v2537 = vand.u32 %v2407, 4294901760
        %v2538 = vsub.f32 %v2407, %v2537
        %v2539 = vand.u32 %v2538, 4294901760
        %2540 = vmatmul.f32.gmra.mxu0 %v2539
        %v2541 = vpop.f32.mrf.mxu0
        %v2542 = vadd.f32 %v2512, %v2541
        %v2543 = vand.u32 %v2410, 4294901760
        %v2544 = vsub.f32 %v2410, %v2543
        %v2545 = vand.u32 %v2544, 4294901760
        %2546 = vmatmul.f32.gmra.mxu0 %v2545
        %v2547 = vpop.f32.mrf.mxu0
        %v2548 = vadd.f32 %v2517, %v2547
        %2549 = vdwg.mxu0
        %2550 = vmatpush.xpose.msra.mxu0 0.0
        %2551 = vmatpush.xpose.msra.mxu0 0.0
        %2552 = vmatpush.xpose.msra.mxu0 0.0
        %2553 = vmatpush.xpose.msra.mxu0 0.0
        %2554 = vmatpush.xpose.msra.mxu0 0.0
        %2555 = vmatpush.xpose.msra.mxu0 0.0
        %2556 = vmatpush.xpose.msra.mxu0 0.0
        %2557 = vmatpush.xpose.msra.mxu0 0.0
        %2558 = vmatpush.xpose.msra.mxu0 0.0
        %2559 = vmatpush.xpose.msra.mxu0 0.0
        %2560 = vmatpush.xpose.msra.mxu0 0.0
        %2561 = vmatpush.xpose.msra.mxu0 0.0
        %2562 = vmatpush.xpose.msra.mxu0 0.0
        %2563 = vmatpush.xpose.msra.mxu0 0.0
        %v2564 = vand.u32 %v2416, 4294901760
        %v2565 = vsub.f32 %v2416, %v2564
        %v2566 = vand.u32 %v2565, 4294901760
        %2567 = vmatpush.xpose.msra.mxu0 %v2566
        %v2568 = vand.u32 %v2413, 4294901760
        %v2569 = vsub.f32 %v2413, %v2568
        %v2570 = vand.u32 %v2569, 4294901760
        %2571 = vmatpush.xpose.msra.mxu0 %v2570
        %v2572 = vand.u32 %v2407, 4294901760
        %2573 = vmatmul.f32.gmra.mxu0 %v2572
        %v2574 = vpop.f32.mrf.mxu0
        %v2575 = vadd.f32 %v2542, %v2574
        %v2576 = vand.u32 %v2410, 4294901760
        %2577 = vmatmul.f32.gmra.mxu0 %v2576
        %v2578 = vpop.f32.mrf.mxu0
        %v2579 = vadd.f32 %v2548, %v2578
        %2580 = vdwg.mxu0
        %2581 = vmatpush.xpose.msra.mxu0 0.0
        %2582 = vmatpush.xpose.msra.mxu0 0.0
        %2583 = vmatpush.xpose.msra.mxu0 0.0
        %2584 = vmatpush.xpose.msra.mxu0 0.0
        %2585 = vmatpush.xpose.msra.mxu0 0.0
        %2586 = vmatpush.xpose.msra.mxu0 0.0
        %2587 = vmatpush.xpose.msra.mxu0 0.0
        %2588 = vmatpush.xpose.msra.mxu0 0.0
        %2589 = vmatpush.xpose.msra.mxu0 0.0
        %2590 = vmatpush.xpose.msra.mxu0 0.0
        %2591 = vmatpush.xpose.msra.mxu0 0.0
        %2592 = vmatpush.xpose.msra.mxu0 0.0
        %2593 = vmatpush.xpose.msra.mxu0 0.0
        %2594 = vmatpush.xpose.msra.mxu0 0.0
        %v2595 = vand.u32 %v2416, 4294901760
        %2596 = vmatpush.xpose.msra.mxu0 %v2595
        %v2597 = vand.u32 %v2413, 4294901760
        %2598 = vmatpush.xpose.msra.mxu0 %v2597
        %v2599 = vand.u32 %v2407, 4294901760
        %2600 = vmatmul.f32.gmra.mxu0 %v2599
        %v2601 = vpop.f32.mrf.mxu0
        %v2602 = vadd.f32 %v2575, %v2601
        %v2603 = vand.u32 %v2410, 4294901760
        %2604 = vmatmul.f32.gmra.mxu0 %v2603
        %v2605 = vpop.f32.mrf.mxu0
        %v2606 = vadd.f32 %v2579, %v2605
        %2607 = vdwg.mxu0
        %vm2608 = vcmask 130048
        %v2609 = vsel %vm2608, %v2400, -inf
        %2610 = vmax.xlane.f32.xlu0 %v2609
        %v2611 = vpop.xlane.xlu0 %2610
        %v2612 = vsel %vm2608, %v2404, -inf
        %2613 = vmax.xlane.f32.xlu0 %v2612
        %v2614 = vpop.xlane.xlu0 %2613
        %v2615 = vsel %vm2608, %v2602, -inf
        %2616 = vmax.xlane.f32.xlu0 %v2615
        %v2617 = vpop.xlane.xlu0 %2616
        %v2618 = vsel %vm2608, %v2606, -inf
        %2619 = vmax.xlane.f32.xlu0 %v2618
        %v2620 = vpop.xlane.xlu0 %2619
        %v2621 = vsub.f32 %v2400, %v2611
        %v2622 = vsub.f32 %v2404, %v2614
        %v2623 = vsub.f32 %v2602, %v2617
        %v2624 = vsub.f32 %v2606, %v2620
        %v2625 = vmul.f32 %v2621, 1.442695
        %v2626 = vpow.pop %v2625
        %v2627 = vmul.f32 %v2622, 1.442695
        %v2628 = vpow.pop %v2627
        %v2629 = vmul.f32 %v2623, 1.442695
        %v2630 = vpow.pop %v2629
        %v2631 = vmul.f32 %v2624, 1.442695
        %v2632 = vpow.pop %v2631
        %v2633 = vsel %vm2608, %v2626, 0.0
        %2634 = vadd.xlane.f32.xlu0 %v2633
        %v2635 = vpop.xlane.xlu0 %2634
        %v2636 = vsel %vm2608, %v2628, 0.0
        %2637 = vadd.xlane.f32.xlu0 %v2636
        %v2638 = vpop.xlane.xlu0 %2637
        %v2639 = vsel %vm2608, %v2630, 0.0
        %2640 = vadd.xlane.f32.xlu0 %v2639
        %v2641 = vpop.xlane.xlu0 %2640
        %v2642 = vsel %vm2608, %v2632, 0.0
        %2643 = vadd.xlane.f32.xlu0 %v2642
        %v2644 = vpop.xlane.xlu0 %2643
        %v2645 = vrcp.pop %v2635
        %v2646 = vmul.f32 %v2635, %v2645
        %v2647 = vsub.f32 1.0, %v2646
        %v2648 = vmul.f32 %v2645, %v2647
        %v2649 = vadd.f32 %v2645, %v2648
        %vm2650 = vweird.f32 %v2635
        %vm2651 = vweird.f32 %v2645
        %vm2652 = vmor %vm2650, %vm2651
        %v2653 = vsel %vm2652, %v2645, %v2649
        %v2654 = vand.u32 2147483647, %v2635
        %vm2655 = vcmp.eq.f32.partialorder %v2654, 8.507059e+37
        %v2656 = vand.u32 %v2635, 2147483648
        %v2657 = vor.u32 1.1754944e-38, %v2656
        %v2658 = vsel %vm2655, %v2657, %v2653
        %v2659 = vmul.f32 %v2626, %v2658
        %v2660 = vrcp.pop %v2638
        %v2661 = vmul.f32 %v2638, %v2660
        %v2662 = vsub.f32 1.0, %v2661
        %v2663 = vmul.f32 %v2660, %v2662
        %v2664 = vadd.f32 %v2660, %v2663
        %vm2665 = vweird.f32 %v2638
        %vm2666 = vweird.f32 %v2660
        %vm2667 = vmor %vm2665, %vm2666
        %v2668 = vsel %vm2667, %v2660, %v2664
        %v2669 = vand.u32 2147483647, %v2638
        %vm2670 = vcmp.eq.f32.partialorder %v2669, 8.507059e+37
        %v2671 = vand.u32 %v2638, 2147483648
        %v2672 = vor.u32 1.1754944e-38, %v2671
        %v2673 = vsel %vm2670, %v2672, %v2668
        %v2674 = vmul.f32 %v2628, %v2673
        %v2675 = vrcp.pop %v2641
        %v2676 = vmul.f32 %v2641, %v2675
        %v2677 = vsub.f32 1.0, %v2676
        %v2678 = vmul.f32 %v2675, %v2677
        %v2679 = vadd.f32 %v2675, %v2678
        %vm2680 = vweird.f32 %v2641
        %vm2681 = vweird.f32 %v2675
        %vm2682 = vmor %vm2680, %vm2681
        %v2683 = vsel %vm2682, %v2675, %v2679
        %v2684 = vand.u32 2147483647, %v2641
        %vm2685 = vcmp.eq.f32.partialorder %v2684, 8.507059e+37
        %v2686 = vand.u32 %v2641, 2147483648
        %v2687 = vor.u32 1.1754944e-38, %v2686
        %v2688 = vsel %vm2685, %v2687, %v2683
        %v2689 = vmul.f32 %v2630, %v2688
        %v2690 = vrcp.pop %v2644
        %v2691 = vmul.f32 %v2644, %v2690
        %v2692 = vsub.f32 1.0, %v2691
        %v2693 = vmul.f32 %v2690, %v2692
        %v2694 = vadd.f32 %v2690, %v2693
        %vm2695 = vweird.f32 %v2644
        %vm2696 = vweird.f32 %v2690
        %vm2697 = vmor %vm2695, %vm2696
        %v2698 = vsel %vm2697, %v2690, %v2694
        %v2699 = vand.u32 2147483647, %v2644
        %vm2700 = vcmp.eq.f32.partialorder %v2699, 8.507059e+37
        %v2701 = vand.u32 %v2644, 2147483648
        %v2702 = vor.u32 1.1754944e-38, %v2701
        %v2703 = vsel %vm2700, %v2702, %v2698
        %v2704 = vmul.f32 %v2632, %v2703
        %v2706 = vsel %vm2608, %v2659, 0
        %v2709 = vsel %vm2608, %v2674, 0
        %2711 = vmatpush.msra.mxu0 0.0
        %2712 = vmatpush.msra.mxu0 0.0
        %2713 = vmatpush.msra.mxu0 0.0
        %2714 = vmatpush.msra.mxu0 0.0
        %2715 = vmatpush.msra.mxu0 0.0
        %2716 = vmatpush.msra.mxu0 0.0
        %2717 = vmatpush.msra.mxu0 0.0
        %2718 = vmatpush.msra.mxu0 0.0
        %2719 = vmatpush.msra.mxu0 0.0
        %2720 = vmatpush.msra.mxu0 0.0
        %2721 = vmatpush.msra.mxu0 0.0
        %2722 = vmatpush.msra.mxu0 0.0
        %2723 = vmatpush.msra.mxu0 0.0
        %2724 = vmatpush.msra.mxu0 0.0
        %v2725 = vand.u32 %v1743, 4294901760
        %2726 = vmatpush.msra.mxu0 %v2725
        %v2727 = vand.u32 %v1739, 4294901760
        %2728 = vmatpush.msra.mxu0 %v2727
        %v2729 = vand.u32 %v2706, 4294901760
        %v2730 = vsub.f32 %v2706, %v2729
        %v2731 = vand.u32 %v2730, 4294901760
        %v2732 = vsub.f32 %v2730, %v2731
        %v2733 = vand.u32 %v2732, 4294901760
        %2734 = vmatmul.f32.gmra.mxu0 %v2733
        %v2735 = vpop.f32.mrf.mxu0
        %v2736 = vadd.f32 0.0, %v2735
        %v2737 = vand.u32 %v2709, 4294901760
        %v2738 = vsub.f32 %v2709, %v2737
        %v2739 = vand.u32 %v2738, 4294901760
        %v2740 = vsub.f32 %v2738, %v2739
        %v2741 = vand.u32 %v2740, 4294901760
        %2742 = vmatmul.f32.gmra.mxu0 %v2741
        %v2743 = vpop.f32.mrf.mxu0
        %v2744 = vadd.f32 0.0, %v2743
        %2745 = vdwg.mxu0
        %2746 = vmatpush.msra.mxu0 0.0
        %2747 = vmatpush.msra.mxu0 0.0
        %2748 = vmatpush.msra.mxu0 0.0
        %2749 = vmatpush.msra.mxu0 0.0
        %2750 = vmatpush.msra.mxu0 0.0
        %2751 = vmatpush.msra.mxu0 0.0
        %2752 = vmatpush.msra.mxu0 0.0
        %2753 = vmatpush.msra.mxu0 0.0
        %2754 = vmatpush.msra.mxu0 0.0
        %2755 = vmatpush.msra.mxu0 0.0
        %2756 = vmatpush.msra.mxu0 0.0
        %2757 = vmatpush.msra.mxu0 0.0
        %2758 = vmatpush.msra.mxu0 0.0
        %2759 = vmatpush.msra.mxu0 0.0
        %v2760 = vand.u32 %v1743, 4294901760
        %v2761 = vsub.f32 %v1743, %v2760
        %v2762 = vand.u32 %v2761, 4294901760
        %v2763 = vsub.f32 %v2761, %v2762
        %v2764 = vand.u32 %v2763, 4294901760
        %2765 = vmatpush.msra.mxu0 %v2764
        %v2766 = vand.u32 %v1739, 4294901760
        %v2767 = vsub.f32 %v1739, %v2766
        %v2768 = vand.u32 %v2767, 4294901760
        %v2769 = vsub.f32 %v2767, %v2768
        %v2770 = vand.u32 %v2769, 4294901760
        %2771 = vmatpush.msra.mxu0 %v2770
        %v2772 = vand.u32 %v2706, 4294901760
        %2773 = vmatmul.f32.gmra.mxu0 %v2772
        %v2774 = vpop.f32.mrf.mxu0
        %v2775 = vadd.f32 %v2736, %v2774
        %v2776 = vand.u32 %v2709, 4294901760
        %2777 = vmatmul.f32.gmra.mxu0 %v2776
        %v2778 = vpop.f32.mrf.mxu0
        %v2779 = vadd.f32 %v2744, %v2778
        %2780 = vdwg.mxu0
        %2781 = vmatpush.msra.mxu0 0.0
        %2782 = vmatpush.msra.mxu0 0.0
        %2783 = vmatpush.msra.mxu0 0.0
        %2784 = vmatpush.msra.mxu0 0.0
        %2785 = vmatpush.msra.mxu0 0.0
        %2786 = vmatpush.msra.mxu0 0.0
        %2787 = vmatpush.msra.mxu0 0.0
        %2788 = vmatpush.msra.mxu0 0.0
        %2789 = vmatpush.msra.mxu0 0.0
        %2790 = vmatpush.msra.mxu0 0.0
        %2791 = vmatpush.msra.mxu0 0.0
        %2792 = vmatpush.msra.mxu0 0.0
        %2793 = vmatpush.msra.mxu0 0.0
        %2794 = vmatpush.msra.mxu0 0.0
        %v2795 = vand.u32 %v1743, 4294901760
        %v2796 = vsub.f32 %v1743, %v2795
        %2797 = vmatpush.msra.mxu0 %v2796
        %v2798 = vand.u32 %v1739, 4294901760
        %v2799 = vsub.f32 %v1739, %v2798
        %2800 = vmatpush.msra.mxu0 %v2799
        %v2801 = vand.u32 %v2706, 4294901760
        %v2802 = vsub.f32 %v2706, %v2801
        %2803 = vmatmul.f32.gmra.mxu0 %v2802
        %v2804 = vpop.f32.mrf.mxu0
        %v2805 = vadd.f32 %v2775, %v2804
        %v2806 = vand.u32 %v2709, 4294901760
        %v2807 = vsub.f32 %v2709, %v2806
        %2808 = vmatmul.f32.gmra.mxu0 %v2807
        %v2809 = vpop.f32.mrf.mxu0
        %v2810 = vadd.f32 %v2779, %v2809
        %2811 = vdwg.mxu0
        %2812 = vmatpush.msra.mxu0 0.0
        %2813 = vmatpush.msra.mxu0 0.0
        %2814 = vmatpush.msra.mxu0 0.0
        %2815 = vmatpush.msra.mxu0 0.0
        %2816 = vmatpush.msra.mxu0 0.0
        %2817 = vmatpush.msra.mxu0 0.0
        %2818 = vmatpush.msra.mxu0 0.0
        %2819 = vmatpush.msra.mxu0 0.0
        %2820 = vmatpush.msra.mxu0 0.0
        %2821 = vmatpush.msra.mxu0 0.0
        %2822 = vmatpush.msra.mxu0 0.0
        %2823 = vmatpush.msra.mxu0 0.0
        %2824 = vmatpush.msra.mxu0 0.0
        %2825 = vmatpush.msra.mxu0 0.0
        %v2826 = vand.u32 %v1743, 4294901760
        %2827 = vmatpush.msra.mxu0 %v2826
        %v2828 = vand.u32 %v1739, 4294901760
        %2829 = vmatpush.msra.mxu0 %v2828
        %v2830 = vand.u32 %v2706, 4294901760
        %v2831 = vsub.f32 %v2706, %v2830
        %v2832 = vand.u32 %v2831, 4294901760
        %2833 = vmatmul.f32.gmra.mxu0 %v2832
        %v2834 = vpop.f32.mrf.mxu0
        %v2835 = vadd.f32 %v2805, %v2834
        %v2836 = vand.u32 %v2709, 4294901760
        %v2837 = vsub.f32 %v2709, %v2836
        %v2838 = vand.u32 %v2837, 4294901760
        %2839 = vmatmul.f32.gmra.mxu0 %v2838
        %v2840 = vpop.f32.mrf.mxu0
        %v2841 = vadd.f32 %v2810, %v2840
        %2842 = vdwg.mxu0
        %2843 = vmatpush.msra.mxu0 0.0
        %2844 = vmatpush.msra.mxu0 0.0
        %2845 = vmatpush.msra.mxu0 0.0
        %2846 = vmatpush.msra.mxu0 0.0
        %2847 = vmatpush.msra.mxu0 0.0
        %2848 = vmatpush.msra.mxu0 0.0
        %2849 = vmatpush.msra.mxu0 0.0
        %2850 = vmatpush.msra.mxu0 0.0
        %2851 = vmatpush.msra.mxu0 0.0
        %2852 = vmatpush.msra.mxu0 0.0
        %2853 = vmatpush.msra.mxu0 0.0
        %2854 = vmatpush.msra.mxu0 0.0
        %2855 = vmatpush.msra.mxu0 0.0
        %2856 = vmatpush.msra.mxu0 0.0
        %v2857 = vand.u32 %v1743, 4294901760
        %v2858 = vsub.f32 %v1743, %v2857
        %v2859 = vand.u32 %v2858, 4294901760
        %2860 = vmatpush.msra.mxu0 %v2859
        %v2861 = vand.u32 %v1739, 4294901760
        %v2862 = vsub.f32 %v1739, %v2861
        %v2863 = vand.u32 %v2862, 4294901760
        %2864 = vmatpush.msra.mxu0 %v2863
        %v2865 = vand.u32 %v2706, 4294901760
        %2866 = vmatmul.f32.gmra.mxu0 %v2865
        %v2867 = vpop.f32.mrf.mxu0
        %v2868 = vadd.f32 %v2835, %v2867
        %v2869 = vand.u32 %v2709, 4294901760
        %2870 = vmatmul.f32.gmra.mxu0 %v2869
        %v2871 = vpop.f32.mrf.mxu0
        %v2872 = vadd.f32 %v2841, %v2871
        %2873 = vdwg.mxu0
        %2874 = vmatpush.msra.mxu0 0.0
        %2875 = vmatpush.msra.mxu0 0.0
        %2876 = vmatpush.msra.mxu0 0.0
        %2877 = vmatpush.msra.mxu0 0.0
        %2878 = vmatpush.msra.mxu0 0.0
        %2879 = vmatpush.msra.mxu0 0.0
        %2880 = vmatpush.msra.mxu0 0.0
        %2881 = vmatpush.msra.mxu0 0.0
        %2882 = vmatpush.msra.mxu0 0.0
        %2883 = vmatpush.msra.mxu0 0.0
        %2884 = vmatpush.msra.mxu0 0.0
        %2885 = vmatpush.msra.mxu0 0.0
        %2886 = vmatpush.msra.mxu0 0.0
        %2887 = vmatpush.msra.mxu0 0.0
        %v2888 = vand.u32 %v1743, 4294901760
        %2889 = vmatpush.msra.mxu0 %v2888
        %v2890 = vand.u32 %v1739, 4294901760
        %2891 = vmatpush.msra.mxu0 %v2890
        %v2892 = vand.u32 %v2706, 4294901760
        %2893 = vmatmul.f32.gmra.mxu0 %v2892
        %v2894 = vpop.f32.mrf.mxu0
        %v2895 = vadd.f32 %v2868, %v2894
        %v2896 = vand.u32 %v2709, 4294901760
        %2897 = vmatmul.f32.gmra.mxu0 %v2896
        %v2898 = vpop.f32.mrf.mxu0
        %v2899 = vadd.f32 %v2872, %v2898
        %2900 = vdwg.mxu0
        %v2902 = vsel %vm2608, %v2689, 0
        %v2905 = vsel %vm2608, %v2704, 0
        %2907 = vmatpush.msra.mxu0 0.0
        %2908 = vmatpush.msra.mxu0 0.0
        %2909 = vmatpush.msra.mxu0 0.0
        %2910 = vmatpush.msra.mxu0 0.0
        %2911 = vmatpush.msra.mxu0 0.0
        %2912 = vmatpush.msra.mxu0 0.0
        %2913 = vmatpush.msra.mxu0 0.0
        %2914 = vmatpush.msra.mxu0 0.0
        %2915 = vmatpush.msra.mxu0 0.0
        %2916 = vmatpush.msra.mxu0 0.0
        %2917 = vmatpush.msra.mxu0 0.0
        %2918 = vmatpush.msra.mxu0 0.0
        %2919 = vmatpush.msra.mxu0 0.0
        %2920 = vmatpush.msra.mxu0 0.0
        %v2921 = vand.u32 %v1751, 4294901760
        %2922 = vmatpush.msra.mxu0 %v2921
        %v2923 = vand.u32 %v1747, 4294901760
        %2924 = vmatpush.msra.mxu0 %v2923
        %v2925 = vand.u32 %v2902, 4294901760
        %v2926 = vsub.f32 %v2902, %v2925
        %v2927 = vand.u32 %v2926, 4294901760
        %v2928 = vsub.f32 %v2926, %v2927
        %v2929 = vand.u32 %v2928, 4294901760
        %2930 = vmatmul.f32.gmra.mxu0 %v2929
        %v2931 = vpop.f32.mrf.mxu0
        %v2932 = vadd.f32 0.0, %v2931
        %v2933 = vand.u32 %v2905, 4294901760
        %v2934 = vsub.f32 %v2905, %v2933
        %v2935 = vand.u32 %v2934, 4294901760
        %v2936 = vsub.f32 %v2934, %v2935
        %v2937 = vand.u32 %v2936, 4294901760
        %2938 = vmatmul.f32.gmra.mxu0 %v2937
        %v2939 = vpop.f32.mrf.mxu0
        %v2940 = vadd.f32 0.0, %v2939
        %2941 = vdwg.mxu0
        %2942 = vmatpush.msra.mxu0 0.0
        %2943 = vmatpush.msra.mxu0 0.0
        %2944 = vmatpush.msra.mxu0 0.0
        %2945 = vmatpush.msra.mxu0 0.0
        %2946 = vmatpush.msra.mxu0 0.0
        %2947 = vmatpush.msra.mxu0 0.0
        %2948 = vmatpush.msra.mxu0 0.0
        %2949 = vmatpush.msra.mxu0 0.0
        %2950 = vmatpush.msra.mxu0 0.0
        %2951 = vmatpush.msra.mxu0 0.0
        %2952 = vmatpush.msra.mxu0 0.0
        %2953 = vmatpush.msra.mxu0 0.0
        %2954 = vmatpush.msra.mxu0 0.0
        %2955 = vmatpush.msra.mxu0 0.0
        %v2956 = vand.u32 %v1751, 4294901760
        %v2957 = vsub.f32 %v1751, %v2956
        %v2958 = vand.u32 %v2957, 4294901760
        %v2959 = vsub.f32 %v2957, %v2958
        %v2960 = vand.u32 %v2959, 4294901760
        %2961 = vmatpush.msra.mxu0 %v2960
        %v2962 = vand.u32 %v1747, 4294901760
        %v2963 = vsub.f32 %v1747, %v2962
        %v2964 = vand.u32 %v2963, 4294901760
        %v2965 = vsub.f32 %v2963, %v2964
        %v2966 = vand.u32 %v2965, 4294901760
        %2967 = vmatpush.msra.mxu0 %v2966
        %v2968 = vand.u32 %v2902, 4294901760
        %2969 = vmatmul.f32.gmra.mxu0 %v2968
        %v2970 = vpop.f32.mrf.mxu0
        %v2971 = vadd.f32 %v2932, %v2970
        %v2972 = vand.u32 %v2905, 4294901760
        %2973 = vmatmul.f32.gmra.mxu0 %v2972
        %v2974 = vpop.f32.mrf.mxu0
        %v2975 = vadd.f32 %v2940, %v2974
        %2976 = vdwg.mxu0
        %2977 = vmatpush.msra.mxu0 0.0
        %2978 = vmatpush.msra.mxu0 0.0
        %2979 = vmatpush.msra.mxu0 0.0
        %2980 = vmatpush.msra.mxu0 0.0
        %2981 = vmatpush.msra.mxu0 0.0
        %2982 = vmatpush.msra.mxu0 0.0
        %2983 = vmatpush.msra.mxu0 0.0
        %2984 = vmatpush.msra.mxu0 0.0
        %2985 = vmatpush.msra.mxu0 0.0
        %2986 = vmatpush.msra.mxu0 0.0
        %2987 = vmatpush.msra.mxu0 0.0
        %2988 = vmatpush.msra.mxu0 0.0
        %2989 = vmatpush.msra.mxu0 0.0
        %2990 = vmatpush.msra.mxu0 0.0
        %v2991 = vand.u32 %v1751, 4294901760
        %v2992 = vsub.f32 %v1751, %v2991
        %2993 = vmatpush.msra.mxu0 %v2992
        %v2994 = vand.u32 %v1747, 4294901760
        %v2995 = vsub.f32 %v1747, %v2994
        %2996 = vmatpush.msra.mxu0 %v2995
        %v2997 = vand.u32 %v2902, 4294901760
        %v2998 = vsub.f32 %v2902, %v2997
        %2999 = vmatmul.f32.gmra.mxu0 %v2998
        %v3000 = vpop.f32.mrf.mxu0
        %v3001 = vadd.f32 %v2971, %v3000
        %v3002 = vand.u32 %v2905, 4294901760
        %v3003 = vsub.f32 %v2905, %v3002
        %3004 = vmatmul.f32.gmra.mxu0 %v3003
        %v3005 = vpop.f32.mrf.mxu0
        %v3006 = vadd.f32 %v2975, %v3005
        %3007 = vdwg.mxu0
        %3008 = vmatpush.msra.mxu0 0.0
        %3009 = vmatpush.msra.mxu0 0.0
        %3010 = vmatpush.msra.mxu0 0.0
        %3011 = vmatpush.msra.mxu0 0.0
        %3012 = vmatpush.msra.mxu0 0.0
        %3013 = vmatpush.msra.mxu0 0.0
        %3014 = vmatpush.msra.mxu0 0.0
        %3015 = vmatpush.msra.mxu0 0.0
        %3016 = vmatpush.msra.mxu0 0.0
        %3017 = vmatpush.msra.mxu0 0.0
        %3018 = vmatpush.msra.mxu0 0.0
        %3019 = vmatpush.msra.mxu0 0.0
        %3020 = vmatpush.msra.mxu0 0.0
        %3021 = vmatpush.msra.mxu0 0.0
        %v3022 = vand.u32 %v1751, 4294901760
        %3023 = vmatpush.msra.mxu0 %v3022
        %v3024 = vand.u32 %v1747, 4294901760
        %3025 = vmatpush.msra.mxu0 %v3024
        %v3026 = vand.u32 %v2902, 4294901760
        %v3027 = vsub.f32 %v2902, %v3026
        %v3028 = vand.u32 %v3027, 4294901760
        %3029 = vmatmul.f32.gmra.mxu0 %v3028
        %v3030 = vpop.f32.mrf.mxu0
        %v3031 = vadd.f32 %v3001, %v3030
        %v3032 = vand.u32 %v2905, 4294901760
        %v3033 = vsub.f32 %v2905, %v3032
        %v3034 = vand.u32 %v3033, 4294901760
        %3035 = vmatmul.f32.gmra.mxu0 %v3034
        %v3036 = vpop.f32.mrf.mxu0
        %v3037 = vadd.f32 %v3006, %v3036
        %3038 = vdwg.mxu0
        %3039 = vmatpush.msra.mxu0 0.0
        %3040 = vmatpush.msra.mxu0 0.0
        %3041 = vmatpush.msra.mxu0 0.0
        %3042 = vmatpush.msra.mxu0 0.0
        %3043 = vmatpush.msra.mxu0 0.0
        %3044 = vmatpush.msra.mxu0 0.0
        %3045 = vmatpush.msra.mxu0 0.0
        %3046 = vmatpush.msra.mxu0 0.0
        %3047 = vmatpush.msra.mxu0 0.0
        %3048 = vmatpush.msra.mxu0 0.0
        %3049 = vmatpush.msra.mxu0 0.0
        %3050 = vmatpush.msra.mxu0 0.0
        %3051 = vmatpush.msra.mxu0 0.0
        %3052 = vmatpush.msra.mxu0 0.0
        %v3053 = vand.u32 %v1751, 4294901760
        %v3054 = vsub.f32 %v1751, %v3053
        %v3055 = vand.u32 %v3054, 4294901760
        %3056 = vmatpush.msra.mxu0 %v3055
        %v3057 = vand.u32 %v1747, 4294901760
        %v3058 = vsub.f32 %v1747, %v3057
        %v3059 = vand.u32 %v3058, 4294901760
        %3060 = vmatpush.msra.mxu0 %v3059
        %v3061 = vand.u32 %v2902, 4294901760
        %3062 = vmatmul.f32.gmra.mxu0 %v3061
        %v3063 = vpop.f32.mrf.mxu0
        %v3064 = vadd.f32 %v3031, %v3063
        %v3065 = vand.u32 %v2905, 4294901760
        %3066 = vmatmul.f32.gmra.mxu0 %v3065
        %v3067 = vpop.f32.mrf.mxu0
        %v3068 = vadd.f32 %v3037, %v3067
        %3069 = vdwg.mxu0
        %3070 = vmatpush.msra.mxu0 0.0
        %3071 = vmatpush.msra.mxu0 0.0
        %3072 = vmatpush.msra.mxu0 0.0
        %3073 = vmatpush.msra.mxu0 0.0
        %3074 = vmatpush.msra.mxu0 0.0
        %3075 = vmatpush.msra.mxu0 0.0
        %3076 = vmatpush.msra.mxu0 0.0
        %3077 = vmatpush.msra.mxu0 0.0
        %3078 = vmatpush.msra.mxu0 0.0
        %3079 = vmatpush.msra.mxu0 0.0
        %3080 = vmatpush.msra.mxu0 0.0
        %3081 = vmatpush.msra.mxu0 0.0
        %3082 = vmatpush.msra.mxu0 0.0
        %3083 = vmatpush.msra.mxu0 0.0
        %v3084 = vand.u32 %v1751, 4294901760
        %3085 = vmatpush.msra.mxu0 %v3084
        %v3086 = vand.u32 %v1747, 4294901760
        %3087 = vmatpush.msra.mxu0 %v3086
        %v3088 = vand.u32 %v2902, 4294901760
        %3089 = vmatmul.f32.gmra.mxu0 %v3088
        %v3090 = vpop.f32.mrf.mxu0
        %v3091 = vadd.f32 %v3064, %v3090
        %v3092 = vand.u32 %v2905, 4294901760
        %3093 = vmatmul.f32.gmra.mxu0 %v3092
        %v3094 = vpop.f32.mrf.mxu0
        %v3095 = vadd.f32 %v3068, %v3094
        %3096 = vdwg.mxu0
        %3097 = vrot.lane.b32.xlu0 %v2189, 96
        %v3098 = vpop.permute.xlu0 %3097
        %3099 = vrot.lane.b32.xlu0 %v2193, 96
        %v3100 = vpop.permute.xlu0 %3099
        %3101 = vrot.lane.b32.xlu0 %v1305, 96
        %v3102 = vpop.permute.xlu0 %3101
        %3103 = vrot.lane.b32.xlu0 %v1309, 96
        %v3104 = vpop.permute.xlu0 %3103
        %v3105 = vsel %vm2203, %v3098, 0
        %v3107 = vsel %vm2203, %v3100, 0
        %v3109 = vsel %vm2203, %v3102, 0
        %v3111 = vsel %vm2203, %v3104, 0
        %3113 = vmatpush.xpose.msra.mxu0 0.0
        %3114 = vmatpush.xpose.msra.mxu0 0.0
        %3115 = vmatpush.xpose.msra.mxu0 0.0
        %3116 = vmatpush.xpose.msra.mxu0 0.0
        %3117 = vmatpush.xpose.msra.mxu0 0.0
        %3118 = vmatpush.xpose.msra.mxu0 0.0
        %3119 = vmatpush.xpose.msra.mxu0 0.0
        %3120 = vmatpush.xpose.msra.mxu0 0.0
        %3121 = vmatpush.xpose.msra.mxu0 0.0
        %3122 = vmatpush.xpose.msra.mxu0 0.0
        %3123 = vmatpush.xpose.msra.mxu0 0.0
        %3124 = vmatpush.xpose.msra.mxu0 0.0
        %3125 = vmatpush.xpose.msra.mxu0 0.0
        %3126 = vmatpush.xpose.msra.mxu0 0.0
        %v3127 = vand.u32 %v3111, 4294901760
        %3128 = vmatpush.xpose.msra.mxu0 %v3127
        %v3129 = vand.u32 %v3109, 4294901760
        %3130 = vmatpush.xpose.msra.mxu0 %v3129
        %v3131 = vand.u32 %v3105, 4294901760
        %v3132 = vsub.f32 %v3105, %v3131
        %v3133 = vand.u32 %v3132, 4294901760
        %v3134 = vsub.f32 %v3132, %v3133
        %v3135 = vand.u32 %v3134, 4294901760
        %3136 = vmatmul.f32.gmra.mxu0 %v3135
        %v3137 = vpop.f32.mrf.mxu0
        %v3138 = vadd.f32 0.0, %v3137
        %v3139 = vand.u32 %v3107, 4294901760
        %v3140 = vsub.f32 %v3107, %v3139
        %v3141 = vand.u32 %v3140, 4294901760
        %v3142 = vsub.f32 %v3140, %v3141
        %v3143 = vand.u32 %v3142, 4294901760
        %3144 = vmatmul.f32.gmra.mxu0 %v3143
        %v3145 = vpop.f32.mrf.mxu0
        %v3146 = vadd.f32 0.0, %v3145
        %3147 = vdwg.mxu0
        %3148 = vmatpush.xpose.msra.mxu0 0.0
        %3149 = vmatpush.xpose.msra.mxu0 0.0
        %3150 = vmatpush.xpose.msra.mxu0 0.0
        %3151 = vmatpush.xpose.msra.mxu0 0.0
        %3152 = vmatpush.xpose.msra.mxu0 0.0
        %3153 = vmatpush.xpose.msra.mxu0 0.0
        %3154 = vmatpush.xpose.msra.mxu0 0.0
        %3155 = vmatpush.xpose.msra.mxu0 0.0
        %3156 = vmatpush.xpose.msra.mxu0 0.0
        %3157 = vmatpush.xpose.msra.mxu0 0.0
        %3158 = vmatpush.xpose.msra.mxu0 0.0
        %3159 = vmatpush.xpose.msra.mxu0 0.0
        %3160 = vmatpush.xpose.msra.mxu0 0.0
        %3161 = vmatpush.xpose.msra.mxu0 0.0
        %v3162 = vand.u32 %v3111, 4294901760
        %v3163 = vsub.f32 %v3111, %v3162
        %v3164 = vand.u32 %v3163, 4294901760
        %v3165 = vsub.f32 %v3163, %v3164
        %v3166 = vand.u32 %v3165, 4294901760
        %3167 = vmatpush.xpose.msra.mxu0 %v3166
        %v3168 = vand.u32 %v3109, 4294901760
        %v3169 = vsub.f32 %v3109, %v3168
        %v3170 = vand.u32 %v3169, 4294901760
        %v3171 = vsub.f32 %v3169, %v3170
        %v3172 = vand.u32 %v3171, 4294901760
        %3173 = vmatpush.xpose.msra.mxu0 %v3172
        %v3174 = vand.u32 %v3105, 4294901760
        %3175 = vmatmul.f32.gmra.mxu0 %v3174
        %v3176 = vpop.f32.mrf.mxu0
        %v3177 = vadd.f32 %v3138, %v3176
        %v3178 = vand.u32 %v3107, 4294901760
        %3179 = vmatmul.f32.gmra.mxu0 %v3178
        %v3180 = vpop.f32.mrf.mxu0
        %v3181 = vadd.f32 %v3146, %v3180
        %3182 = vdwg.mxu0
        %3183 = vmatpush.xpose.msra.mxu0 0.0
        %3184 = vmatpush.xpose.msra.mxu0 0.0
        %3185 = vmatpush.xpose.msra.mxu0 0.0
        %3186 = vmatpush.xpose.msra.mxu0 0.0
        %3187 = vmatpush.xpose.msra.mxu0 0.0
        %3188 = vmatpush.xpose.msra.mxu0 0.0
        %3189 = vmatpush.xpose.msra.mxu0 0.0
        %3190 = vmatpush.xpose.msra.mxu0 0.0
        %3191 = vmatpush.xpose.msra.mxu0 0.0
        %3192 = vmatpush.xpose.msra.mxu0 0.0
        %3193 = vmatpush.xpose.msra.mxu0 0.0
        %3194 = vmatpush.xpose.msra.mxu0 0.0
        %3195 = vmatpush.xpose.msra.mxu0 0.0
        %3196 = vmatpush.xpose.msra.mxu0 0.0
        %v3197 = vand.u32 %v3111, 4294901760
        %v3198 = vsub.f32 %v3111, %v3197
        %3199 = vmatpush.xpose.msra.mxu0 %v3198
        %v3200 = vand.u32 %v3109, 4294901760
        %v3201 = vsub.f32 %v3109, %v3200
        %3202 = vmatpush.xpose.msra.mxu0 %v3201
        %v3203 = vand.u32 %v3105, 4294901760
        %v3204 = vsub.f32 %v3105, %v3203
        %3205 = vmatmul.f32.gmra.mxu0 %v3204
        %v3206 = vpop.f32.mrf.mxu0
        %v3207 = vadd.f32 %v3177, %v3206
        %v3208 = vand.u32 %v3107, 4294901760
        %v3209 = vsub.f32 %v3107, %v3208
        %3210 = vmatmul.f32.gmra.mxu0 %v3209
        %v3211 = vpop.f32.mrf.mxu0
        %v3212 = vadd.f32 %v3181, %v3211
        %3213 = vdwg.mxu0
        %3214 = vmatpush.xpose.msra.mxu0 0.0
        %3215 = vmatpush.xpose.msra.mxu0 0.0
        %3216 = vmatpush.xpose.msra.mxu0 0.0
        %3217 = vmatpush.xpose.msra.mxu0 0.0
        %3218 = vmatpush.xpose.msra.mxu0 0.0
        %3219 = vmatpush.xpose.msra.mxu0 0.0
        %3220 = vmatpush.xpose.msra.mxu0 0.0
        %3221 = vmatpush.xpose.msra.mxu0 0.0
        %3222 = vmatpush.xpose.msra.mxu0 0.0
        %3223 = vmatpush.xpose.msra.mxu0 0.0
        %3224 = vmatpush.xpose.msra.mxu0 0.0
        %3225 = vmatpush.xpose.msra.mxu0 0.0
        %3226 = vmatpush.xpose.msra.mxu0 0.0
        %3227 = vmatpush.xpose.msra.mxu0 0.0
        %v3228 = vand.u32 %v3111, 4294901760
        %3229 = vmatpush.xpose.msra.mxu0 %v3228
        %v3230 = vand.u32 %v3109, 4294901760
        %3231 = vmatpush.xpose.msra.mxu0 %v3230
        %v3232 = vand.u32 %v3105, 4294901760
        %v3233 = vsub.f32 %v3105, %v3232
        %v3234 = vand.u32 %v3233, 4294901760
        %3235 = vmatmul.f32.gmra.mxu0 %v3234
        %v3236 = vpop.f32.mrf.mxu0
        %v3237 = vadd.f32 %v3207, %v3236
        %v3238 = vand.u32 %v3107, 4294901760
        %v3239 = vsub.f32 %v3107, %v3238
        %v3240 = vand.u32 %v3239, 4294901760
        %3241 = vmatmul.f32.gmra.mxu0 %v3240
        %v3242 = vpop.f32.mrf.mxu0
        %v3243 = vadd.f32 %v3212, %v3242
        %3244 = vdwg.mxu0
        %3245 = vmatpush.xpose.msra.mxu0 0.0
        %3246 = vmatpush.xpose.msra.mxu0 0.0
        %3247 = vmatpush.xpose.msra.mxu0 0.0
        %3248 = vmatpush.xpose.msra.mxu0 0.0
        %3249 = vmatpush.xpose.msra.mxu0 0.0
        %3250 = vmatpush.xpose.msra.mxu0 0.0
        %3251 = vmatpush.xpose.msra.mxu0 0.0
        %3252 = vmatpush.xpose.msra.mxu0 0.0
        %3253 = vmatpush.xpose.msra.mxu0 0.0
        %3254 = vmatpush.xpose.msra.mxu0 0.0
        %3255 = vmatpush.xpose.msra.mxu0 0.0
        %3256 = vmatpush.xpose.msra.mxu0 0.0
        %3257 = vmatpush.xpose.msra.mxu0 0.0
        %3258 = vmatpush.xpose.msra.mxu0 0.0
        %v3259 = vand.u32 %v3111, 4294901760
        %v3260 = vsub.f32 %v3111, %v3259
        %v3261 = vand.u32 %v3260, 4294901760
        %3262 = vmatpush.xpose.msra.mxu0 %v3261
        %v3263 = vand.u32 %v3109, 4294901760
        %v3264 = vsub.f32 %v3109, %v3263
        %v3265 = vand.u32 %v3264, 4294901760
        %3266 = vmatpush.xpose.msra.mxu0 %v3265
        %v3267 = vand.u32 %v3105, 4294901760
        %3268 = vmatmul.f32.gmra.mxu0 %v3267
        %v3269 = vpop.f32.mrf.mxu0
        %v3270 = vadd.f32 %v3237, %v3269
        %v3271 = vand.u32 %v3107, 4294901760
        %3272 = vmatmul.f32.gmra.mxu0 %v3271
        %v3273 = vpop.f32.mrf.mxu0
        %v3274 = vadd.f32 %v3243, %v3273
        %3275 = vdwg.mxu0
        %3276 = vmatpush.xpose.msra.mxu0 0.0
        %3277 = vmatpush.xpose.msra.mxu0 0.0
        %3278 = vmatpush.xpose.msra.mxu0 0.0
        %3279 = vmatpush.xpose.msra.mxu0 0.0
        %3280 = vmatpush.xpose.msra.mxu0 0.0
        %3281 = vmatpush.xpose.msra.mxu0 0.0
        %3282 = vmatpush.xpose.msra.mxu0 0.0
        %3283 = vmatpush.xpose.msra.mxu0 0.0
        %3284 = vmatpush.xpose.msra.mxu0 0.0
        %3285 = vmatpush.xpose.msra.mxu0 0.0
        %3286 = vmatpush.xpose.msra.mxu0 0.0
        %3287 = vmatpush.xpose.msra.mxu0 0.0
        %3288 = vmatpush.xpose.msra.mxu0 0.0
        %3289 = vmatpush.xpose.msra.mxu0 0.0
        %v3290 = vand.u32 %v3111, 4294901760
        %3291 = vmatpush.xpose.msra.mxu0 %v3290
        %v3292 = vand.u32 %v3109, 4294901760
        %3293 = vmatpush.xpose.msra.mxu0 %v3292
        %v3294 = vand.u32 %v3105, 4294901760
        %3295 = vmatmul.f32.gmra.mxu0 %v3294
        %v3296 = vpop.f32.mrf.mxu0
        %v3297 = vadd.f32 %v3270, %v3296
        %v3298 = vand.u32 %v3107, 4294901760
        %3299 = vmatmul.f32.gmra.mxu0 %v3298
        %v3300 = vpop.f32.mrf.mxu0
        %v3301 = vadd.f32 %v3274, %v3300
        %3302 = vdwg.mxu0
        %3303 = vrot.lane.b32.xlu0 %v2197, 96
        %v3304 = vpop.permute.xlu0 %3303
        %3305 = vrot.lane.b32.xlu0 %v2201, 96
        %v3306 = vpop.permute.xlu0 %3305
        %3307 = vrot.lane.b32.xlu0 %v1313, 96
        %v3308 = vpop.permute.xlu0 %3307
        %3309 = vrot.lane.b32.xlu0 %v1317, 96
        %v3310 = vpop.permute.xlu0 %3309
        %v3311 = vsel %vm2203, %v3304, 0
        %v3313 = vsel %vm2203, %v3306, 0
        %v3315 = vsel %vm2203, %v3308, 0
        %v3317 = vsel %vm2203, %v3310, 0
        %3319 = vmatpush.xpose.msra.mxu0 0.0
        %3320 = vmatpush.xpose.msra.mxu0 0.0
        %3321 = vmatpush.xpose.msra.mxu0 0.0
        %3322 = vmatpush.xpose.msra.mxu0 0.0
        %3323 = vmatpush.xpose.msra.mxu0 0.0
        %3324 = vmatpush.xpose.msra.mxu0 0.0
        %3325 = vmatpush.xpose.msra.mxu0 0.0
        %3326 = vmatpush.xpose.msra.mxu0 0.0
        %3327 = vmatpush.xpose.msra.mxu0 0.0
        %3328 = vmatpush.xpose.msra.mxu0 0.0
        %3329 = vmatpush.xpose.msra.mxu0 0.0
        %3330 = vmatpush.xpose.msra.mxu0 0.0
        %3331 = vmatpush.xpose.msra.mxu0 0.0
        %3332 = vmatpush.xpose.msra.mxu0 0.0
        %v3333 = vand.u32 %v3317, 4294901760
        %3334 = vmatpush.xpose.msra.mxu0 %v3333
        %v3335 = vand.u32 %v3315, 4294901760
        %3336 = vmatpush.xpose.msra.mxu0 %v3335
        %v3337 = vand.u32 %v3311, 4294901760
        %v3338 = vsub.f32 %v3311, %v3337
        %v3339 = vand.u32 %v3338, 4294901760
        %v3340 = vsub.f32 %v3338, %v3339
        %v3341 = vand.u32 %v3340, 4294901760
        %3342 = vmatmul.f32.gmra.mxu0 %v3341
        %v3343 = vpop.f32.mrf.mxu0
        %v3344 = vadd.f32 0.0, %v3343
        %v3345 = vand.u32 %v3313, 4294901760
        %v3346 = vsub.f32 %v3313, %v3345
        %v3347 = vand.u32 %v3346, 4294901760
        %v3348 = vsub.f32 %v3346, %v3347
        %v3349 = vand.u32 %v3348, 4294901760
        %3350 = vmatmul.f32.gmra.mxu0 %v3349
        %v3351 = vpop.f32.mrf.mxu0
        %v3352 = vadd.f32 0.0, %v3351
        %3353 = vdwg.mxu0
        %3354 = vmatpush.xpose.msra.mxu0 0.0
        %3355 = vmatpush.xpose.msra.mxu0 0.0
        %3356 = vmatpush.xpose.msra.mxu0 0.0
        %3357 = vmatpush.xpose.msra.mxu0 0.0
        %3358 = vmatpush.xpose.msra.mxu0 0.0
        %3359 = vmatpush.xpose.msra.mxu0 0.0
        %3360 = vmatpush.xpose.msra.mxu0 0.0
        %3361 = vmatpush.xpose.msra.mxu0 0.0
        %3362 = vmatpush.xpose.msra.mxu0 0.0
        %3363 = vmatpush.xpose.msra.mxu0 0.0
        %3364 = vmatpush.xpose.msra.mxu0 0.0
        %3365 = vmatpush.xpose.msra.mxu0 0.0
        %3366 = vmatpush.xpose.msra.mxu0 0.0
        %3367 = vmatpush.xpose.msra.mxu0 0.0
        %v3368 = vand.u32 %v3317, 4294901760
        %v3369 = vsub.f32 %v3317, %v3368
        %v3370 = vand.u32 %v3369, 4294901760
        %v3371 = vsub.f32 %v3369, %v3370
        %v3372 = vand.u32 %v3371, 4294901760
        %3373 = vmatpush.xpose.msra.mxu0 %v3372
        %v3374 = vand.u32 %v3315, 4294901760
        %v3375 = vsub.f32 %v3315, %v3374
        %v3376 = vand.u32 %v3375, 4294901760
        %v3377 = vsub.f32 %v3375, %v3376
        %v3378 = vand.u32 %v3377, 4294901760
        %3379 = vmatpush.xpose.msra.mxu0 %v3378
        %v3380 = vand.u32 %v3311, 4294901760
        %3381 = vmatmul.f32.gmra.mxu0 %v3380
        %v3382 = vpop.f32.mrf.mxu0
        %v3383 = vadd.f32 %v3344, %v3382
        %v3384 = vand.u32 %v3313, 4294901760
        %3385 = vmatmul.f32.gmra.mxu0 %v3384
        %v3386 = vpop.f32.mrf.mxu0
        %v3387 = vadd.f32 %v3352, %v3386
        %3388 = vdwg.mxu0
        %3389 = vmatpush.xpose.msra.mxu0 0.0
        %3390 = vmatpush.xpose.msra.mxu0 0.0
        %3391 = vmatpush.xpose.msra.mxu0 0.0
        %3392 = vmatpush.xpose.msra.mxu0 0.0
        %3393 = vmatpush.xpose.msra.mxu0 0.0
        %3394 = vmatpush.xpose.msra.mxu0 0.0
        %3395 = vmatpush.xpose.msra.mxu0 0.0
        %3396 = vmatpush.xpose.msra.mxu0 0.0
        %3397 = vmatpush.xpose.msra.mxu0 0.0
        %3398 = vmatpush.xpose.msra.mxu0 0.0
        %3399 = vmatpush.xpose.msra.mxu0 0.0
        %3400 = vmatpush.xpose.msra.mxu0 0.0
        %3401 = vmatpush.xpose.msra.mxu0 0.0
        %3402 = vmatpush.xpose.msra.mxu0 0.0
        %v3403 = vand.u32 %v3317, 4294901760
        %v3404 = vsub.f32 %v3317, %v3403
        %3405 = vmatpush.xpose.msra.mxu0 %v3404
        %v3406 = vand.u32 %v3315, 4294901760
        %v3407 = vsub.f32 %v3315, %v3406
        %3408 = vmatpush.xpose.msra.mxu0 %v3407
        %v3409 = vand.u32 %v3311, 4294901760
        %v3410 = vsub.f32 %v3311, %v3409
        %3411 = vmatmul.f32.gmra.mxu0 %v3410
        %v3412 = vpop.f32.mrf.mxu0
        %v3413 = vadd.f32 %v3383, %v3412
        %v3414 = vand.u32 %v3313, 4294901760
        %v3415 = vsub.f32 %v3313, %v3414
        %3416 = vmatmul.f32.gmra.mxu0 %v3415
        %v3417 = vpop.f32.mrf.mxu0
        %v3418 = vadd.f32 %v3387, %v3417
        %3419 = vdwg.mxu0
        %3420 = vmatpush.xpose.msra.mxu0 0.0
        %3421 = vmatpush.xpose.msra.mxu0 0.0
        %3422 = vmatpush.xpose.msra.mxu0 0.0
        %3423 = vmatpush.xpose.msra.mxu0 0.0
        %3424 = vmatpush.xpose.msra.mxu0 0.0
        %3425 = vmatpush.xpose.msra.mxu0 0.0
        %3426 = vmatpush.xpose.msra.mxu0 0.0
        %3427 = vmatpush.xpose.msra.mxu0 0.0
        %3428 = vmatpush.xpose.msra.mxu0 0.0
        %3429 = vmatpush.xpose.msra.mxu0 0.0
        %3430 = vmatpush.xpose.msra.mxu0 0.0
        %3431 = vmatpush.xpose.msra.mxu0 0.0
        %3432 = vmatpush.xpose.msra.mxu0 0.0
        %3433 = vmatpush.xpose.msra.mxu0 0.0
        %v3434 = vand.u32 %v3317, 4294901760
        %3435 = vmatpush.xpose.msra.mxu0 %v3434
        %v3436 = vand.u32 %v3315, 4294901760
        %3437 = vmatpush.xpose.msra.mxu0 %v3436
        %v3438 = vand.u32 %v3311, 4294901760
        %v3439 = vsub.f32 %v3311, %v3438
        %v3440 = vand.u32 %v3439, 4294901760
        %3441 = vmatmul.f32.gmra.mxu0 %v3440
        %v3442 = vpop.f32.mrf.mxu0
        %v3443 = vadd.f32 %v3413, %v3442
        %v3444 = vand.u32 %v3313, 4294901760
        %v3445 = vsub.f32 %v3313, %v3444
        %v3446 = vand.u32 %v3445, 4294901760
        %3447 = vmatmul.f32.gmra.mxu0 %v3446
        %v3448 = vpop.f32.mrf.mxu0
        %v3449 = vadd.f32 %v3418, %v3448
        %3450 = vdwg.mxu0
        %3451 = vmatpush.xpose.msra.mxu0 0.0
        %3452 = vmatpush.xpose.msra.mxu0 0.0
        %3453 = vmatpush.xpose.msra.mxu0 0.0
        %3454 = vmatpush.xpose.msra.mxu0 0.0
        %3455 = vmatpush.xpose.msra.mxu0 0.0
        %3456 = vmatpush.xpose.msra.mxu0 0.0
        %3457 = vmatpush.xpose.msra.mxu0 0.0
        %3458 = vmatpush.xpose.msra.mxu0 0.0
        %3459 = vmatpush.xpose.msra.mxu0 0.0
        %3460 = vmatpush.xpose.msra.mxu0 0.0
        %3461 = vmatpush.xpose.msra.mxu0 0.0
        %3462 = vmatpush.xpose.msra.mxu0 0.0
        %3463 = vmatpush.xpose.msra.mxu0 0.0
        %3464 = vmatpush.xpose.msra.mxu0 0.0
        %v3465 = vand.u32 %v3317, 4294901760
        %v3466 = vsub.f32 %v3317, %v3465
        %v3467 = vand.u32 %v3466, 4294901760
        %3468 = vmatpush.xpose.msra.mxu0 %v3467
        %v3469 = vand.u32 %v3315, 4294901760
        %v3470 = vsub.f32 %v3315, %v3469
        %v3471 = vand.u32 %v3470, 4294901760
        %3472 = vmatpush.xpose.msra.mxu0 %v3471
        %v3473 = vand.u32 %v3311, 4294901760
        %3474 = vmatmul.f32.gmra.mxu0 %v3473
        %v3475 = vpop.f32.mrf.mxu0
        %v3476 = vadd.f32 %v3443, %v3475
        %v3477 = vand.u32 %v3313, 4294901760
        %3478 = vmatmul.f32.gmra.mxu0 %v3477
        %v3479 = vpop.f32.mrf.mxu0
        %v3480 = vadd.f32 %v3449, %v3479
        %3481 = vdwg.mxu0
        %3482 = vmatpush.xpose.msra.mxu0 0.0
        %3483 = vmatpush.xpose.msra.mxu0 0.0
        %3484 = vmatpush.xpose.msra.mxu0 0.0
        %3485 = vmatpush.xpose.msra.mxu0 0.0
        %3486 = vmatpush.xpose.msra.mxu0 0.0
        %3487 = vmatpush.xpose.msra.mxu0 0.0
        %3488 = vmatpush.xpose.msra.mxu0 0.0
        %3489 = vmatpush.xpose.msra.mxu0 0.0
        %3490 = vmatpush.xpose.msra.mxu0 0.0
        %3491 = vmatpush.xpose.msra.mxu0 0.0
        %3492 = vmatpush.xpose.msra.mxu0 0.0
        %3493 = vmatpush.xpose.msra.mxu0 0.0
        %3494 = vmatpush.xpose.msra.mxu0 0.0
        %3495 = vmatpush.xpose.msra.mxu0 0.0
        %v3496 = vand.u32 %v3317, 4294901760
        %3497 = vmatpush.xpose.msra.mxu0 %v3496
        %v3498 = vand.u32 %v3315, 4294901760
        %3499 = vmatpush.xpose.msra.mxu0 %v3498
        %v3500 = vand.u32 %v3311, 4294901760
        %3501 = vmatmul.f32.gmra.mxu0 %v3500
        %v3502 = vpop.f32.mrf.mxu0
        %v3503 = vadd.f32 %v3476, %v3502
        %v3504 = vand.u32 %v3313, 4294901760
        %3505 = vmatmul.f32.gmra.mxu0 %v3504
        %v3506 = vpop.f32.mrf.mxu0
        %v3507 = vadd.f32 %v3480, %v3506
        %3508 = vdwg.mxu0
        %v3509 = vsel %vm2608, %v3297, -inf
        %3510 = vmax.xlane.f32.xlu0 %v3509
        %v3511 = vpop.xlane.xlu0 %3510
        %v3512 = vsel %vm2608, %v3301, -inf
        %3513 = vmax.xlane.f32.xlu0 %v3512
        %v3514 = vpop.xlane.xlu0 %3513
        %v3515 = vsel %vm2608, %v3503, -inf
        %3516 = vmax.xlane.f32.xlu0 %v3515
        %v3517 = vpop.xlane.xlu0 %3516
        %v3518 = vsel %vm2608, %v3507, -inf
        %3519 = vmax.xlane.f32.xlu0 %v3518
        %v3520 = vpop.xlane.xlu0 %3519
        %v3521 = vsub.f32 %v3297, %v3511
        %v3522 = vsub.f32 %v3301, %v3514
        %v3523 = vsub.f32 %v3503, %v3517
        %v3524 = vsub.f32 %v3507, %v3520
        %v3525 = vmul.f32 %v3521, 1.442695
        %v3526 = vpow.pop %v3525
        %v3527 = vmul.f32 %v3522, 1.442695
        %v3528 = vpow.pop %v3527
        %v3529 = vmul.f32 %v3523, 1.442695
        %v3530 = vpow.pop %v3529
        %v3531 = vmul.f32 %v3524, 1.442695
        %v3532 = vpow.pop %v3531
        %v3533 = vsel %vm2608, %v3526, 0.0
        %3534 = vadd.xlane.f32.xlu0 %v3533
        %v3535 = vpop.xlane.xlu0 %3534
        %v3536 = vsel %vm2608, %v3528, 0.0
        %3537 = vadd.xlane.f32.xlu0 %v3536
        %v3538 = vpop.xlane.xlu0 %3537
        %v3539 = vsel %vm2608, %v3530, 0.0
        %3540 = vadd.xlane.f32.xlu0 %v3539
        %v3541 = vpop.xlane.xlu0 %3540
        %v3542 = vsel %vm2608, %v3532, 0.0
        %3543 = vadd.xlane.f32.xlu0 %v3542
        %v3544 = vpop.xlane.xlu0 %3543
        %v3545 = vrcp.pop %v3535
        %v3546 = vmul.f32 %v3535, %v3545
        %v3547 = vsub.f32 1.0, %v3546
        %v3548 = vmul.f32 %v3545, %v3547
        %v3549 = vadd.f32 %v3545, %v3548
        %vm3550 = vweird.f32 %v3535
        %vm3551 = vweird.f32 %v3545
        %vm3552 = vmor %vm3550, %vm3551
        %v3553 = vsel %vm3552, %v3545, %v3549
        %v3554 = vand.u32 2147483647, %v3535
        %vm3555 = vcmp.eq.f32.partialorder %v3554, 8.507059e+37
        %v3556 = vand.u32 %v3535, 2147483648
        %v3557 = vor.u32 1.1754944e-38, %v3556
        %v3558 = vsel %vm3555, %v3557, %v3553
        %v3559 = vmul.f32 %v3526, %v3558
        %v3560 = vrcp.pop %v3538
        %v3561 = vmul.f32 %v3538, %v3560
        %v3562 = vsub.f32 1.0, %v3561
        %v3563 = vmul.f32 %v3560, %v3562
        %v3564 = vadd.f32 %v3560, %v3563
        %vm3565 = vweird.f32 %v3538
        %vm3566 = vweird.f32 %v3560
        %vm3567 = vmor %vm3565, %vm3566
        %v3568 = vsel %vm3567, %v3560, %v3564
        %v3569 = vand.u32 2147483647, %v3538
        %vm3570 = vcmp.eq.f32.partialorder %v3569, 8.507059e+37
        %v3571 = vand.u32 %v3538, 2147483648
        %v3572 = vor.u32 1.1754944e-38, %v3571
        %v3573 = vsel %vm3570, %v3572, %v3568
        %v3574 = vmul.f32 %v3528, %v3573
        %v3575 = vrcp.pop %v3541
        %v3576 = vmul.f32 %v3541, %v3575
        %v3577 = vsub.f32 1.0, %v3576
        %v3578 = vmul.f32 %v3575, %v3577
        %v3579 = vadd.f32 %v3575, %v3578
        %vm3580 = vweird.f32 %v3541
        %vm3581 = vweird.f32 %v3575
        %vm3582 = vmor %vm3580, %vm3581
        %v3583 = vsel %vm3582, %v3575, %v3579
        %v3584 = vand.u32 2147483647, %v3541
        %vm3585 = vcmp.eq.f32.partialorder %v3584, 8.507059e+37
        %v3586 = vand.u32 %v3541, 2147483648
        %v3587 = vor.u32 1.1754944e-38, %v3586
        %v3588 = vsel %vm3585, %v3587, %v3583
        %v3589 = vmul.f32 %v3530, %v3588
        %v3590 = vrcp.pop %v3544
        %v3591 = vmul.f32 %v3544, %v3590
        %v3592 = vsub.f32 1.0, %v3591
        %v3593 = vmul.f32 %v3590, %v3592
        %v3594 = vadd.f32 %v3590, %v3593
        %vm3595 = vweird.f32 %v3544
        %vm3596 = vweird.f32 %v3590
        %vm3597 = vmor %vm3595, %vm3596
        %v3598 = vsel %vm3597, %v3590, %v3594
        %v3599 = vand.u32 2147483647, %v3544
        %vm3600 = vcmp.eq.f32.partialorder %v3599, 8.507059e+37
        %v3601 = vand.u32 %v3544, 2147483648
        %v3602 = vor.u32 1.1754944e-38, %v3601
        %v3603 = vsel %vm3600, %v3602, %v3598
        %v3604 = vmul.f32 %v3532, %v3603
        %3607 = vrot.lane.b32.xlu0 %v1739, 96
        %v3608 = vpop.permute.xlu0 %3607
        %3609 = vrot.lane.b32.xlu0 %v1743, 96
        %v3610 = vpop.permute.xlu0 %3609
        %v3614 = vsel %vm2608, %v3559, 0
        %v3617 = vsel %vm2608, %v3574, 0
        %3619 = vmatpush.msra.mxu0 0.0
        %3620 = vmatpush.msra.mxu0 0.0
        %3621 = vmatpush.msra.mxu0 0.0
        %3622 = vmatpush.msra.mxu0 0.0
        %3623 = vmatpush.msra.mxu0 0.0
        %3624 = vmatpush.msra.mxu0 0.0
        %3625 = vmatpush.msra.mxu0 0.0
        %3626 = vmatpush.msra.mxu0 0.0
        %3627 = vmatpush.msra.mxu0 0.0
        %3628 = vmatpush.msra.mxu0 0.0
        %3629 = vmatpush.msra.mxu0 0.0
        %3630 = vmatpush.msra.mxu0 0.0
        %3631 = vmatpush.msra.mxu0 0.0
        %3632 = vmatpush.msra.mxu0 0.0
        %v3633 = vand.u32 %v3610, 4294901760
        %3634 = vmatpush.msra.mxu0 %v3633
        %v3635 = vand.u32 %v3608, 4294901760
        %3636 = vmatpush.msra.mxu0 %v3635
        %v3637 = vand.u32 %v3614, 4294901760
        %v3638 = vsub.f32 %v3614, %v3637
        %v3639 = vand.u32 %v3638, 4294901760
        %v3640 = vsub.f32 %v3638, %v3639
        %v3641 = vand.u32 %v3640, 4294901760
        %3642 = vmatmul.f32.gmra.mxu0 %v3641
        %v3643 = vpop.f32.mrf.mxu0
        %v3644 = vadd.f32 0.0, %v3643
        %v3645 = vand.u32 %v3617, 4294901760
        %v3646 = vsub.f32 %v3617, %v3645
        %v3647 = vand.u32 %v3646, 4294901760
        %v3648 = vsub.f32 %v3646, %v3647
        %v3649 = vand.u32 %v3648, 4294901760
        %3650 = vmatmul.f32.gmra.mxu0 %v3649
        %v3651 = vpop.f32.mrf.mxu0
        %v3652 = vadd.f32 0.0, %v3651
        %3653 = vdwg.mxu0
        %3654 = vmatpush.msra.mxu0 0.0
        %3655 = vmatpush.msra.mxu0 0.0
        %3656 = vmatpush.msra.mxu0 0.0
        %3657 = vmatpush.msra.mxu0 0.0
        %3658 = vmatpush.msra.mxu0 0.0
        %3659 = vmatpush.msra.mxu0 0.0
        %3660 = vmatpush.msra.mxu0 0.0
        %3661 = vmatpush.msra.mxu0 0.0
        %3662 = vmatpush.msra.mxu0 0.0
        %3663 = vmatpush.msra.mxu0 0.0
        %3664 = vmatpush.msra.mxu0 0.0
        %3665 = vmatpush.msra.mxu0 0.0
        %3666 = vmatpush.msra.mxu0 0.0
        %3667 = vmatpush.msra.mxu0 0.0
        %v3668 = vand.u32 %v3610, 4294901760
        %v3669 = vsub.f32 %v3610, %v3668
        %v3670 = vand.u32 %v3669, 4294901760
        %v3671 = vsub.f32 %v3669, %v3670
        %v3672 = vand.u32 %v3671, 4294901760
        %3673 = vmatpush.msra.mxu0 %v3672
        %v3674 = vand.u32 %v3608, 4294901760
        %v3675 = vsub.f32 %v3608, %v3674
        %v3676 = vand.u32 %v3675, 4294901760
        %v3677 = vsub.f32 %v3675, %v3676
        %v3678 = vand.u32 %v3677, 4294901760
        %3679 = vmatpush.msra.mxu0 %v3678
        %v3680 = vand.u32 %v3614, 4294901760
        %3681 = vmatmul.f32.gmra.mxu0 %v3680
        %v3682 = vpop.f32.mrf.mxu0
        %v3683 = vadd.f32 %v3644, %v3682
        %v3684 = vand.u32 %v3617, 4294901760
        %3685 = vmatmul.f32.gmra.mxu0 %v3684
        %v3686 = vpop.f32.mrf.mxu0
        %v3687 = vadd.f32 %v3652, %v3686
        %3688 = vdwg.mxu0
        %3689 = vmatpush.msra.mxu0 0.0
        %3690 = vmatpush.msra.mxu0 0.0
        %3691 = vmatpush.msra.mxu0 0.0
        %3692 = vmatpush.msra.mxu0 0.0
        %3693 = vmatpush.msra.mxu0 0.0
        %3694 = vmatpush.msra.mxu0 0.0
        %3695 = vmatpush.msra.mxu0 0.0
        %3696 = vmatpush.msra.mxu0 0.0
        %3697 = vmatpush.msra.mxu0 0.0
        %3698 = vmatpush.msra.mxu0 0.0
        %3699 = vmatpush.msra.mxu0 0.0
        %3700 = vmatpush.msra.mxu0 0.0
        %3701 = vmatpush.msra.mxu0 0.0
        %3702 = vmatpush.msra.mxu0 0.0
        %v3703 = vand.u32 %v3610, 4294901760
        %v3704 = vsub.f32 %v3610, %v3703
        %3705 = vmatpush.msra.mxu0 %v3704
        %v3706 = vand.u32 %v3608, 4294901760
        %v3707 = vsub.f32 %v3608, %v3706
        %3708 = vmatpush.msra.mxu0 %v3707
        %v3709 = vand.u32 %v3614, 4294901760
        %v3710 = vsub.f32 %v3614, %v3709
        %3711 = vmatmul.f32.gmra.mxu0 %v3710
        %v3712 = vpop.f32.mrf.mxu0
        %v3713 = vadd.f32 %v3683, %v3712
        %v3714 = vand.u32 %v3617, 4294901760
        %v3715 = vsub.f32 %v3617, %v3714
        %3716 = vmatmul.f32.gmra.mxu0 %v3715
        %v3717 = vpop.f32.mrf.mxu0
        %v3718 = vadd.f32 %v3687, %v3717
        %3719 = vdwg.mxu0
        %3720 = vmatpush.msra.mxu0 0.0
        %3721 = vmatpush.msra.mxu0 0.0
        %3722 = vmatpush.msra.mxu0 0.0
        %3723 = vmatpush.msra.mxu0 0.0
        %3724 = vmatpush.msra.mxu0 0.0
        %3725 = vmatpush.msra.mxu0 0.0
        %3726 = vmatpush.msra.mxu0 0.0
        %3727 = vmatpush.msra.mxu0 0.0
        %3728 = vmatpush.msra.mxu0 0.0
        %3729 = vmatpush.msra.mxu0 0.0
        %3730 = vmatpush.msra.mxu0 0.0
        %3731 = vmatpush.msra.mxu0 0.0
        %3732 = vmatpush.msra.mxu0 0.0
        %3733 = vmatpush.msra.mxu0 0.0
        %v3734 = vand.u32 %v3610, 4294901760
        %3735 = vmatpush.msra.mxu0 %v3734
        %v3736 = vand.u32 %v3608, 4294901760
        %3737 = vmatpush.msra.mxu0 %v3736
        %v3738 = vand.u32 %v3614, 4294901760
        %v3739 = vsub.f32 %v3614, %v3738
        %v3740 = vand.u32 %v3739, 4294901760
        %3741 = vmatmul.f32.gmra.mxu0 %v3740
        %v3742 = vpop.f32.mrf.mxu0
        %v3743 = vadd.f32 %v3713, %v3742
        %v3744 = vand.u32 %v3617, 4294901760
        %v3745 = vsub.f32 %v3617, %v3744
        %v3746 = vand.u32 %v3745, 4294901760
        %3747 = vmatmul.f32.gmra.mxu0 %v3746
        %v3748 = vpop.f32.mrf.mxu0
        %v3749 = vadd.f32 %v3718, %v3748
        %3750 = vdwg.mxu0
        %3751 = vmatpush.msra.mxu0 0.0
        %3752 = vmatpush.msra.mxu0 0.0
        %3753 = vmatpush.msra.mxu0 0.0
        %3754 = vmatpush.msra.mxu0 0.0
        %3755 = vmatpush.msra.mxu0 0.0
        %3756 = vmatpush.msra.mxu0 0.0
        %3757 = vmatpush.msra.mxu0 0.0
        %3758 = vmatpush.msra.mxu0 0.0
        %3759 = vmatpush.msra.mxu0 0.0
        %3760 = vmatpush.msra.mxu0 0.0
        %3761 = vmatpush.msra.mxu0 0.0
        %3762 = vmatpush.msra.mxu0 0.0
        %3763 = vmatpush.msra.mxu0 0.0
        %3764 = vmatpush.msra.mxu0 0.0
        %v3765 = vand.u32 %v3610, 4294901760
        %v3766 = vsub.f32 %v3610, %v3765
        %v3767 = vand.u32 %v3766, 4294901760
        %3768 = vmatpush.msra.mxu0 %v3767
        %v3769 = vand.u32 %v3608, 4294901760
        %v3770 = vsub.f32 %v3608, %v3769
        %v3771 = vand.u32 %v3770, 4294901760
        %3772 = vmatpush.msra.mxu0 %v3771
        %v3773 = vand.u32 %v3614, 4294901760
        %3774 = vmatmul.f32.gmra.mxu0 %v3773
        %v3775 = vpop.f32.mrf.mxu0
        %v3776 = vadd.f32 %v3743, %v3775
        %v3777 = vand.u32 %v3617, 4294901760
        %3778 = vmatmul.f32.gmra.mxu0 %v3777
        %v3779 = vpop.f32.mrf.mxu0
        %v3780 = vadd.f32 %v3749, %v3779
        %3781 = vdwg.mxu0
        %3782 = vmatpush.msra.mxu0 0.0
        %3783 = vmatpush.msra.mxu0 0.0
        %3784 = vmatpush.msra.mxu0 0.0
        %3785 = vmatpush.msra.mxu0 0.0
        %3786 = vmatpush.msra.mxu0 0.0
        %3787 = vmatpush.msra.mxu0 0.0
        %3788 = vmatpush.msra.mxu0 0.0
        %3789 = vmatpush.msra.mxu0 0.0
        %3790 = vmatpush.msra.mxu0 0.0
        %3791 = vmatpush.msra.mxu0 0.0
        %3792 = vmatpush.msra.mxu0 0.0
        %3793 = vmatpush.msra.mxu0 0.0
        %3794 = vmatpush.msra.mxu0 0.0
        %3795 = vmatpush.msra.mxu0 0.0
        %v3796 = vand.u32 %v3610, 4294901760
        %3797 = vmatpush.msra.mxu0 %v3796
        %v3798 = vand.u32 %v3608, 4294901760
        %3799 = vmatpush.msra.mxu0 %v3798
        %v3800 = vand.u32 %v3614, 4294901760
        %3801 = vmatmul.f32.gmra.mxu0 %v3800
        %v3802 = vpop.f32.mrf.mxu0
        %v3803 = vadd.f32 %v3776, %v3802
        %v3804 = vand.u32 %v3617, 4294901760
        %3805 = vmatmul.f32.gmra.mxu0 %v3804
        %v3806 = vpop.f32.mrf.mxu0
        %v3807 = vadd.f32 %v3780, %v3806
        %3808 = vdwg.mxu0
        %3811 = vrot.lane.b32.xlu0 %v1747, 96
        %v3812 = vpop.permute.xlu0 %3811
        %3813 = vrot.lane.b32.xlu0 %v1751, 96
        %v3814 = vpop.permute.xlu0 %3813
        %v3818 = vsel %vm2608, %v3589, 0
        %v3821 = vsel %vm2608, %v3604, 0
        %3823 = vmatpush.msra.mxu0 0.0
        %3824 = vmatpush.msra.mxu0 0.0
        %3825 = vmatpush.msra.mxu0 0.0
        %3826 = vmatpush.msra.mxu0 0.0
        %3827 = vmatpush.msra.mxu0 0.0
        %3828 = vmatpush.msra.mxu0 0.0
        %3829 = vmatpush.msra.mxu0 0.0
        %3830 = vmatpush.msra.mxu0 0.0
        %3831 = vmatpush.msra.mxu0 0.0
        %3832 = vmatpush.msra.mxu0 0.0
        %3833 = vmatpush.msra.mxu0 0.0
        %3834 = vmatpush.msra.mxu0 0.0
        %3835 = vmatpush.msra.mxu0 0.0
        %3836 = vmatpush.msra.mxu0 0.0
        %v3837 = vand.u32 %v3814, 4294901760
        %3838 = vmatpush.msra.mxu0 %v3837
        %v3839 = vand.u32 %v3812, 4294901760
        %3840 = vmatpush.msra.mxu0 %v3839
        %v3841 = vand.u32 %v3818, 4294901760
        %v3842 = vsub.f32 %v3818, %v3841
        %v3843 = vand.u32 %v3842, 4294901760
        %v3844 = vsub.f32 %v3842, %v3843
        %v3845 = vand.u32 %v3844, 4294901760
        %3846 = vmatmul.f32.gmra.mxu0 %v3845
        %v3847 = vpop.f32.mrf.mxu0
        %v3848 = vadd.f32 0.0, %v3847
        %v3849 = vand.u32 %v3821, 4294901760
        %v3850 = vsub.f32 %v3821, %v3849
        %v3851 = vand.u32 %v3850, 4294901760
        %v3852 = vsub.f32 %v3850, %v3851
        %v3853 = vand.u32 %v3852, 4294901760
        %3854 = vmatmul.f32.gmra.mxu0 %v3853
        %v3855 = vpop.f32.mrf.mxu0
        %v3856 = vadd.f32 0.0, %v3855
        %3857 = vdwg.mxu0
        %3858 = vmatpush.msra.mxu0 0.0
        %3859 = vmatpush.msra.mxu0 0.0
        %3860 = vmatpush.msra.mxu0 0.0
        %3861 = vmatpush.msra.mxu0 0.0
        %3862 = vmatpush.msra.mxu0 0.0
        %3863 = vmatpush.msra.mxu0 0.0
        %3864 = vmatpush.msra.mxu0 0.0
        %3865 = vmatpush.msra.mxu0 0.0
        %3866 = vmatpush.msra.mxu0 0.0
        %3867 = vmatpush.msra.mxu0 0.0
        %3868 = vmatpush.msra.mxu0 0.0
        %3869 = vmatpush.msra.mxu0 0.0
        %3870 = vmatpush.msra.mxu0 0.0
        %3871 = vmatpush.msra.mxu0 0.0
        %v3872 = vand.u32 %v3814, 4294901760
        %v3873 = vsub.f32 %v3814, %v3872
        %v3874 = vand.u32 %v3873, 4294901760
        %v3875 = vsub.f32 %v3873, %v3874
        %v3876 = vand.u32 %v3875, 4294901760
        %3877 = vmatpush.msra.mxu0 %v3876
        %v3878 = vand.u32 %v3812, 4294901760
        %v3879 = vsub.f32 %v3812, %v3878
        %v3880 = vand.u32 %v3879, 4294901760
        %v3881 = vsub.f32 %v3879, %v3880
        %v3882 = vand.u32 %v3881, 4294901760
        %3883 = vmatpush.msra.mxu0 %v3882
        %v3884 = vand.u32 %v3818, 4294901760
        %3885 = vmatmul.f32.gmra.mxu0 %v3884
        %v3886 = vpop.f32.mrf.mxu0
        %v3887 = vadd.f32 %v3848, %v3886
        %v3888 = vand.u32 %v3821, 4294901760
        %3889 = vmatmul.f32.gmra.mxu0 %v3888
        %v3890 = vpop.f32.mrf.mxu0
        %v3891 = vadd.f32 %v3856, %v3890
        %3892 = vdwg.mxu0
        %3893 = vmatpush.msra.mxu0 0.0
        %3894 = vmatpush.msra.mxu0 0.0
        %3895 = vmatpush.msra.mxu0 0.0
        %3896 = vmatpush.msra.mxu0 0.0
        %3897 = vmatpush.msra.mxu0 0.0
        %3898 = vmatpush.msra.mxu0 0.0
        %3899 = vmatpush.msra.mxu0 0.0
        %3900 = vmatpush.msra.mxu0 0.0
        %3901 = vmatpush.msra.mxu0 0.0
        %3902 = vmatpush.msra.mxu0 0.0
        %3903 = vmatpush.msra.mxu0 0.0
        %3904 = vmatpush.msra.mxu0 0.0
        %3905 = vmatpush.msra.mxu0 0.0
        %3906 = vmatpush.msra.mxu0 0.0
        %v3907 = vand.u32 %v3814, 4294901760
        %v3908 = vsub.f32 %v3814, %v3907
        %3909 = vmatpush.msra.mxu0 %v3908
        %v3910 = vand.u32 %v3812, 4294901760
        %v3911 = vsub.f32 %v3812, %v3910
        %3912 = vmatpush.msra.mxu0 %v3911
        %v3913 = vand.u32 %v3818, 4294901760
        %v3914 = vsub.f32 %v3818, %v3913
        %3915 = vmatmul.f32.gmra.mxu0 %v3914
        %v3916 = vpop.f32.mrf.mxu0
        %v3917 = vadd.f32 %v3887, %v3916
        %v3918 = vand.u32 %v3821, 4294901760
        %v3919 = vsub.f32 %v3821, %v3918
        %3920 = vmatmul.f32.gmra.mxu0 %v3919
        %v3921 = vpop.f32.mrf.mxu0
        %v3922 = vadd.f32 %v3891, %v3921
        %3923 = vdwg.mxu0
        %3924 = vmatpush.msra.mxu0 0.0
        %3925 = vmatpush.msra.mxu0 0.0
        %3926 = vmatpush.msra.mxu0 0.0
        %3927 = vmatpush.msra.mxu0 0.0
        %3928 = vmatpush.msra.mxu0 0.0
        %3929 = vmatpush.msra.mxu0 0.0
        %3930 = vmatpush.msra.mxu0 0.0
        %3931 = vmatpush.msra.mxu0 0.0
        %3932 = vmatpush.msra.mxu0 0.0
        %3933 = vmatpush.msra.mxu0 0.0
        %3934 = vmatpush.msra.mxu0 0.0
        %3935 = vmatpush.msra.mxu0 0.0
        %3936 = vmatpush.msra.mxu0 0.0
        %3937 = vmatpush.msra.mxu0 0.0
        %v3938 = vand.u32 %v3814, 4294901760
        %3939 = vmatpush.msra.mxu0 %v3938
        %v3940 = vand.u32 %v3812, 4294901760
        %3941 = vmatpush.msra.mxu0 %v3940
        %v3942 = vand.u32 %v3818, 4294901760
        %v3943 = vsub.f32 %v3818, %v3942
        %v3944 = vand.u32 %v3943, 4294901760
        %3945 = vmatmul.f32.gmra.mxu0 %v3944
        %v3946 = vpop.f32.mrf.mxu0
        %v3947 = vadd.f32 %v3917, %v3946
        %v3948 = vand.u32 %v3821, 4294901760
        %v3949 = vsub.f32 %v3821, %v3948
        %v3950 = vand.u32 %v3949, 4294901760
        %3951 = vmatmul.f32.gmra.mxu0 %v3950
        %v3952 = vpop.f32.mrf.mxu0
        %v3953 = vadd.f32 %v3922, %v3952
        %3954 = vdwg.mxu0
        %3955 = vmatpush.msra.mxu0 0.0
        %3956 = vmatpush.msra.mxu0 0.0
        %3957 = vmatpush.msra.mxu0 0.0
        %3958 = vmatpush.msra.mxu0 0.0
        %3959 = vmatpush.msra.mxu0 0.0
        %3960 = vmatpush.msra.mxu0 0.0
        %3961 = vmatpush.msra.mxu0 0.0
        %3962 = vmatpush.msra.mxu0 0.0
        %3963 = vmatpush.msra.mxu0 0.0
        %3964 = vmatpush.msra.mxu0 0.0
        %3965 = vmatpush.msra.mxu0 0.0
        %3966 = vmatpush.msra.mxu0 0.0
        %3967 = vmatpush.msra.mxu0 0.0
        %3968 = vmatpush.msra.mxu0 0.0
        %v3969 = vand.u32 %v3814, 4294901760
        %v3970 = vsub.f32 %v3814, %v3969
        %v3971 = vand.u32 %v3970, 4294901760
        %3972 = vmatpush.msra.mxu0 %v3971
        %v3973 = vand.u32 %v3812, 4294901760
        %v3974 = vsub.f32 %v3812, %v3973
        %v3975 = vand.u32 %v3974, 4294901760
        %3976 = vmatpush.msra.mxu0 %v3975
        %v3977 = vand.u32 %v3818, 4294901760
        %3978 = vmatmul.f32.gmra.mxu0 %v3977
        %v3979 = vpop.f32.mrf.mxu0
        %v3980 = vadd.f32 %v3947, %v3979
        %v3981 = vand.u32 %v3821, 4294901760
        %3982 = vmatmul.f32.gmra.mxu0 %v3981
        %v3983 = vpop.f32.mrf.mxu0
        %v3984 = vadd.f32 %v3953, %v3983
        %3985 = vdwg.mxu0
        %3986 = vmatpush.msra.mxu0 0.0
        %3987 = vmatpush.msra.mxu0 0.0
        %3988 = vmatpush.msra.mxu0 0.0
        %3989 = vmatpush.msra.mxu0 0.0
        %3990 = vmatpush.msra.mxu0 0.0
        %3991 = vmatpush.msra.mxu0 0.0
        %3992 = vmatpush.msra.mxu0 0.0
        %3993 = vmatpush.msra.mxu0 0.0
        %3994 = vmatpush.msra.mxu0 0.0
        %3995 = vmatpush.msra.mxu0 0.0
        %3996 = vmatpush.msra.mxu0 0.0
        %3997 = vmatpush.msra.mxu0 0.0
        %3998 = vmatpush.msra.mxu0 0.0
        %3999 = vmatpush.msra.mxu0 0.0
        %v4000 = vand.u32 %v3814, 4294901760
        %4001 = vmatpush.msra.mxu0 %v4000
        %v4002 = vand.u32 %v3812, 4294901760
        %4003 = vmatpush.msra.mxu0 %v4002
        %v4004 = vand.u32 %v3818, 4294901760
        %4005 = vmatmul.f32.gmra.mxu0 %v4004
        %v4006 = vpop.f32.mrf.mxu0
        %v4007 = vadd.f32 %v3980, %v4006
        %v4008 = vand.u32 %v3821, 4294901760
        %4009 = vmatmul.f32.gmra.mxu0 %v4008
        %v4010 = vpop.f32.mrf.mxu0
        %v4011 = vadd.f32 %v3984, %v4010
        %4012 = vdwg.mxu0
        %4013 = vrot.lane.b32.xlu0 %v2189, 64
        %v4014 = vpop.permute.xlu0 %4013
        %4015 = vrot.lane.b32.xlu0 %v2193, 64
        %v4016 = vpop.permute.xlu0 %4015
        %4017 = vrot.lane.b32.xlu0 %v1305, 64
        %v4018 = vpop.permute.xlu0 %4017
        %4019 = vrot.lane.b32.xlu0 %v1309, 64
        %v4020 = vpop.permute.xlu0 %4019
        %v4021 = vsel %vm2203, %v4014, 0
        %v4023 = vsel %vm2203, %v4016, 0
        %v4025 = vsel %vm2203, %v4018, 0
        %v4027 = vsel %vm2203, %v4020, 0
        %4029 = vmatpush.xpose.msra.mxu0 0.0
        %4030 = vmatpush.xpose.msra.mxu0 0.0
        %4031 = vmatpush.xpose.msra.mxu0 0.0
        %4032 = vmatpush.xpose.msra.mxu0 0.0
        %4033 = vmatpush.xpose.msra.mxu0 0.0
        %4034 = vmatpush.xpose.msra.mxu0 0.0
        %4035 = vmatpush.xpose.msra.mxu0 0.0
        %4036 = vmatpush.xpose.msra.mxu0 0.0
        %4037 = vmatpush.xpose.msra.mxu0 0.0
        %4038 = vmatpush.xpose.msra.mxu0 0.0
        %4039 = vmatpush.xpose.msra.mxu0 0.0
        %4040 = vmatpush.xpose.msra.mxu0 0.0
        %4041 = vmatpush.xpose.msra.mxu0 0.0
        %4042 = vmatpush.xpose.msra.mxu0 0.0
        %v4043 = vand.u32 %v4027, 4294901760
        %4044 = vmatpush.xpose.msra.mxu0 %v4043
        %v4045 = vand.u32 %v4025, 4294901760
        %4046 = vmatpush.xpose.msra.mxu0 %v4045
        %v4047 = vand.u32 %v4021, 4294901760
        %v4048 = vsub.f32 %v4021, %v4047
        %v4049 = vand.u32 %v4048, 4294901760
        %v4050 = vsub.f32 %v4048, %v4049
        %v4051 = vand.u32 %v4050, 4294901760
        %4052 = vmatmul.f32.gmra.mxu0 %v4051
        %v4053 = vpop.f32.mrf.mxu0
        %v4054 = vadd.f32 0.0, %v4053
        %v4055 = vand.u32 %v4023, 4294901760
        %v4056 = vsub.f32 %v4023, %v4055
        %v4057 = vand.u32 %v4056, 4294901760
        %v4058 = vsub.f32 %v4056, %v4057
        %v4059 = vand.u32 %v4058, 4294901760
        %4060 = vmatmul.f32.gmra.mxu0 %v4059
        %v4061 = vpop.f32.mrf.mxu0
        %v4062 = vadd.f32 0.0, %v4061
        %4063 = vdwg.mxu0
        %4064 = vmatpush.xpose.msra.mxu0 0.0
        %4065 = vmatpush.xpose.msra.mxu0 0.0
        %4066 = vmatpush.xpose.msra.mxu0 0.0
        %4067 = vmatpush.xpose.msra.mxu0 0.0
        %4068 = vmatpush.xpose.msra.mxu0 0.0
        %4069 = vmatpush.xpose.msra.mxu0 0.0
        %4070 = vmatpush.xpose.msra.mxu0 0.0
        %4071 = vmatpush.xpose.msra.mxu0 0.0
        %4072 = vmatpush.xpose.msra.mxu0 0.0
        %4073 = vmatpush.xpose.msra.mxu0 0.0
        %4074 = vmatpush.xpose.msra.mxu0 0.0
        %4075 = vmatpush.xpose.msra.mxu0 0.0
        %4076 = vmatpush.xpose.msra.mxu0 0.0
        %4077 = vmatpush.xpose.msra.mxu0 0.0
        %v4078 = vand.u32 %v4027, 4294901760
        %v4079 = vsub.f32 %v4027, %v4078
        %v4080 = vand.u32 %v4079, 4294901760
        %v4081 = vsub.f32 %v4079, %v4080
        %v4082 = vand.u32 %v4081, 4294901760
        %4083 = vmatpush.xpose.msra.mxu0 %v4082
        %v4084 = vand.u32 %v4025, 4294901760
        %v4085 = vsub.f32 %v4025, %v4084
        %v4086 = vand.u32 %v4085, 4294901760
        %v4087 = vsub.f32 %v4085, %v4086
        %v4088 = vand.u32 %v4087, 4294901760
        %4089 = vmatpush.xpose.msra.mxu0 %v4088
        %v4090 = vand.u32 %v4021, 4294901760
        %4091 = vmatmul.f32.gmra.mxu0 %v4090
        %v4092 = vpop.f32.mrf.mxu0
        %v4093 = vadd.f32 %v4054, %v4092
        %v4094 = vand.u32 %v4023, 4294901760
        %4095 = vmatmul.f32.gmra.mxu0 %v4094
        %v4096 = vpop.f32.mrf.mxu0
        %v4097 = vadd.f32 %v4062, %v4096
        %4098 = vdwg.mxu0
        %4099 = vmatpush.xpose.msra.mxu0 0.0
        %4100 = vmatpush.xpose.msra.mxu0 0.0
        %4101 = vmatpush.xpose.msra.mxu0 0.0
        %4102 = vmatpush.xpose.msra.mxu0 0.0
        %4103 = vmatpush.xpose.msra.mxu0 0.0
        %4104 = vmatpush.xpose.msra.mxu0 0.0
        %4105 = vmatpush.xpose.msra.mxu0 0.0
        %4106 = vmatpush.xpose.msra.mxu0 0.0
        %4107 = vmatpush.xpose.msra.mxu0 0.0
        %4108 = vmatpush.xpose.msra.mxu0 0.0
        %4109 = vmatpush.xpose.msra.mxu0 0.0
        %4110 = vmatpush.xpose.msra.mxu0 0.0
        %4111 = vmatpush.xpose.msra.mxu0 0.0
        %4112 = vmatpush.xpose.msra.mxu0 0.0
        %v4113 = vand.u32 %v4027, 4294901760
        %v4114 = vsub.f32 %v4027, %v4113
        %4115 = vmatpush.xpose.msra.mxu0 %v4114
        %v4116 = vand.u32 %v4025, 4294901760
        %v4117 = vsub.f32 %v4025, %v4116
        %4118 = vmatpush.xpose.msra.mxu0 %v4117
        %v4119 = vand.u32 %v4021, 4294901760
        %v4120 = vsub.f32 %v4021, %v4119
        %4121 = vmatmul.f32.gmra.mxu0 %v4120
        %v4122 = vpop.f32.mrf.mxu0
        %v4123 = vadd.f32 %v4093, %v4122
        %v4124 = vand.u32 %v4023, 4294901760
        %v4125 = vsub.f32 %v4023, %v4124
        %4126 = vmatmul.f32.gmra.mxu0 %v4125
        %v4127 = vpop.f32.mrf.mxu0
        %v4128 = vadd.f32 %v4097, %v4127
        %4129 = vdwg.mxu0
        %4130 = vmatpush.xpose.msra.mxu0 0.0
        %4131 = vmatpush.xpose.msra.mxu0 0.0
        %4132 = vmatpush.xpose.msra.mxu0 0.0
        %4133 = vmatpush.xpose.msra.mxu0 0.0
        %4134 = vmatpush.xpose.msra.mxu0 0.0
        %4135 = vmatpush.xpose.msra.mxu0 0.0
        %4136 = vmatpush.xpose.msra.mxu0 0.0
        %4137 = vmatpush.xpose.msra.mxu0 0.0
        %4138 = vmatpush.xpose.msra.mxu0 0.0
        %4139 = vmatpush.xpose.msra.mxu0 0.0
        %4140 = vmatpush.xpose.msra.mxu0 0.0
        %4141 = vmatpush.xpose.msra.mxu0 0.0
        %4142 = vmatpush.xpose.msra.mxu0 0.0
        %4143 = vmatpush.xpose.msra.mxu0 0.0
        %v4144 = vand.u32 %v4027, 4294901760
        %4145 = vmatpush.xpose.msra.mxu0 %v4144
        %v4146 = vand.u32 %v4025, 4294901760
        %4147 = vmatpush.xpose.msra.mxu0 %v4146
        %v4148 = vand.u32 %v4021, 4294901760
        %v4149 = vsub.f32 %v4021, %v4148
        %v4150 = vand.u32 %v4149, 4294901760
        %4151 = vmatmul.f32.gmra.mxu0 %v4150
        %v4152 = vpop.f32.mrf.mxu0
        %v4153 = vadd.f32 %v4123, %v4152
        %v4154 = vand.u32 %v4023, 4294901760
        %v4155 = vsub.f32 %v4023, %v4154
        %v4156 = vand.u32 %v4155, 4294901760
        %4157 = vmatmul.f32.gmra.mxu0 %v4156
        %v4158 = vpop.f32.mrf.mxu0
        %v4159 = vadd.f32 %v4128, %v4158
        %4160 = vdwg.mxu0
        %4161 = vmatpush.xpose.msra.mxu0 0.0
        %4162 = vmatpush.xpose.msra.mxu0 0.0
        %4163 = vmatpush.xpose.msra.mxu0 0.0
        %4164 = vmatpush.xpose.msra.mxu0 0.0
        %4165 = vmatpush.xpose.msra.mxu0 0.0
        %4166 = vmatpush.xpose.msra.mxu0 0.0
        %4167 = vmatpush.xpose.msra.mxu0 0.0
        %4168 = vmatpush.xpose.msra.mxu0 0.0
        %4169 = vmatpush.xpose.msra.mxu0 0.0
        %4170 = vmatpush.xpose.msra.mxu0 0.0
        %4171 = vmatpush.xpose.msra.mxu0 0.0
        %4172 = vmatpush.xpose.msra.mxu0 0.0
        %4173 = vmatpush.xpose.msra.mxu0 0.0
        %4174 = vmatpush.xpose.msra.mxu0 0.0
        %v4175 = vand.u32 %v4027, 4294901760
        %v4176 = vsub.f32 %v4027, %v4175
        %v4177 = vand.u32 %v4176, 4294901760
        %4178 = vmatpush.xpose.msra.mxu0 %v4177
        %v4179 = vand.u32 %v4025, 4294901760
        %v4180 = vsub.f32 %v4025, %v4179
        %v4181 = vand.u32 %v4180, 4294901760
        %4182 = vmatpush.xpose.msra.mxu0 %v4181
        %v4183 = vand.u32 %v4021, 4294901760
        %4184 = vmatmul.f32.gmra.mxu0 %v4183
        %v4185 = vpop.f32.mrf.mxu0
        %v4186 = vadd.f32 %v4153, %v4185
        %v4187 = vand.u32 %v4023, 4294901760
        %4188 = vmatmul.f32.gmra.mxu0 %v4187
        %v4189 = vpop.f32.mrf.mxu0
        %v4190 = vadd.f32 %v4159, %v4189
        %4191 = vdwg.mxu0
        %4192 = vmatpush.xpose.msra.mxu0 0.0
        %4193 = vmatpush.xpose.msra.mxu0 0.0
        %4194 = vmatpush.xpose.msra.mxu0 0.0
        %4195 = vmatpush.xpose.msra.mxu0 0.0
        %4196 = vmatpush.xpose.msra.mxu0 0.0
        %4197 = vmatpush.xpose.msra.mxu0 0.0
        %4198 = vmatpush.xpose.msra.mxu0 0.0
        %4199 = vmatpush.xpose.msra.mxu0 0.0
        %4200 = vmatpush.xpose.msra.mxu0 0.0
        %4201 = vmatpush.xpose.msra.mxu0 0.0
        %4202 = vmatpush.xpose.msra.mxu0 0.0
        %4203 = vmatpush.xpose.msra.mxu0 0.0
        %4204 = vmatpush.xpose.msra.mxu0 0.0
        %4205 = vmatpush.xpose.msra.mxu0 0.0
        %v4206 = vand.u32 %v4027, 4294901760
        %4207 = vmatpush.xpose.msra.mxu0 %v4206
        %v4208 = vand.u32 %v4025, 4294901760
        %4209 = vmatpush.xpose.msra.mxu0 %v4208
        %v4210 = vand.u32 %v4021, 4294901760
        %4211 = vmatmul.f32.gmra.mxu0 %v4210
        %v4212 = vpop.f32.mrf.mxu0
        %v4213 = vadd.f32 %v4186, %v4212
        %v4214 = vand.u32 %v4023, 4294901760
        %4215 = vmatmul.f32.gmra.mxu0 %v4214
        %v4216 = vpop.f32.mrf.mxu0
        %v4217 = vadd.f32 %v4190, %v4216
        %4218 = vdwg.mxu0
        %4219 = vrot.lane.b32.xlu0 %v2197, 64
        %v4220 = vpop.permute.xlu0 %4219
        %4221 = vrot.lane.b32.xlu0 %v2201, 64
        %v4222 = vpop.permute.xlu0 %4221
        %4223 = vrot.lane.b32.xlu0 %v1313, 64
        %v4224 = vpop.permute.xlu0 %4223
        %4225 = vrot.lane.b32.xlu0 %v1317, 64
        %v4226 = vpop.permute.xlu0 %4225
        %v4227 = vsel %vm2203, %v4220, 0
        %v4229 = vsel %vm2203, %v4222, 0
        %v4231 = vsel %vm2203, %v4224, 0
        %v4233 = vsel %vm2203, %v4226, 0
        %4235 = vmatpush.xpose.msra.mxu0 0.0
        %4236 = vmatpush.xpose.msra.mxu0 0.0
        %4237 = vmatpush.xpose.msra.mxu0 0.0
        %4238 = vmatpush.xpose.msra.mxu0 0.0
        %4239 = vmatpush.xpose.msra.mxu0 0.0
        %4240 = vmatpush.xpose.msra.mxu0 0.0
        %4241 = vmatpush.xpose.msra.mxu0 0.0
        %4242 = vmatpush.xpose.msra.mxu0 0.0
        %4243 = vmatpush.xpose.msra.mxu0 0.0
        %4244 = vmatpush.xpose.msra.mxu0 0.0
        %4245 = vmatpush.xpose.msra.mxu0 0.0
        %4246 = vmatpush.xpose.msra.mxu0 0.0
        %4247 = vmatpush.xpose.msra.mxu0 0.0
        %4248 = vmatpush.xpose.msra.mxu0 0.0
        %v4249 = vand.u32 %v4233, 4294901760
        %4250 = vmatpush.xpose.msra.mxu0 %v4249
        %v4251 = vand.u32 %v4231, 4294901760
        %4252 = vmatpush.xpose.msra.mxu0 %v4251
        %v4253 = vand.u32 %v4227, 4294901760
        %v4254 = vsub.f32 %v4227, %v4253
        %v4255 = vand.u32 %v4254, 4294901760
        %v4256 = vsub.f32 %v4254, %v4255
        %v4257 = vand.u32 %v4256, 4294901760
        %4258 = vmatmul.f32.gmra.mxu0 %v4257
        %v4259 = vpop.f32.mrf.mxu0
        %v4260 = vadd.f32 0.0, %v4259
        %v4261 = vand.u32 %v4229, 4294901760
        %v4262 = vsub.f32 %v4229, %v4261
        %v4263 = vand.u32 %v4262, 4294901760
        %v4264 = vsub.f32 %v4262, %v4263
        %v4265 = vand.u32 %v4264, 4294901760
        %4266 = vmatmul.f32.gmra.mxu0 %v4265
        %v4267 = vpop.f32.mrf.mxu0
        %v4268 = vadd.f32 0.0, %v4267
        %4269 = vdwg.mxu0
        %4270 = vmatpush.xpose.msra.mxu0 0.0
        %4271 = vmatpush.xpose.msra.mxu0 0.0
        %4272 = vmatpush.xpose.msra.mxu0 0.0
        %4273 = vmatpush.xpose.msra.mxu0 0.0
        %4274 = vmatpush.xpose.msra.mxu0 0.0
        %4275 = vmatpush.xpose.msra.mxu0 0.0
        %4276 = vmatpush.xpose.msra.mxu0 0.0
        %4277 = vmatpush.xpose.msra.mxu0 0.0
        %4278 = vmatpush.xpose.msra.mxu0 0.0
        %4279 = vmatpush.xpose.msra.mxu0 0.0
        %4280 = vmatpush.xpose.msra.mxu0 0.0
        %4281 = vmatpush.xpose.msra.mxu0 0.0
        %4282 = vmatpush.xpose.msra.mxu0 0.0
        %4283 = vmatpush.xpose.msra.mxu0 0.0
        %v4284 = vand.u32 %v4233, 4294901760
        %v4285 = vsub.f32 %v4233, %v4284
        %v4286 = vand.u32 %v4285, 4294901760
        %v4287 = vsub.f32 %v4285, %v4286
        %v4288 = vand.u32 %v4287, 4294901760
        %4289 = vmatpush.xpose.msra.mxu0 %v4288
        %v4290 = vand.u32 %v4231, 4294901760
        %v4291 = vsub.f32 %v4231, %v4290
        %v4292 = vand.u32 %v4291, 4294901760
        %v4293 = vsub.f32 %v4291, %v4292
        %v4294 = vand.u32 %v4293, 4294901760
        %4295 = vmatpush.xpose.msra.mxu0 %v4294
        %v4296 = vand.u32 %v4227, 4294901760
        %4297 = vmatmul.f32.gmra.mxu0 %v4296
        %v4298 = vpop.f32.mrf.mxu0
        %v4299 = vadd.f32 %v4260, %v4298
        %v4300 = vand.u32 %v4229, 4294901760
        %4301 = vmatmul.f32.gmra.mxu0 %v4300
        %v4302 = vpop.f32.mrf.mxu0
        %v4303 = vadd.f32 %v4268, %v4302
        %4304 = vdwg.mxu0
        %4305 = vmatpush.xpose.msra.mxu0 0.0
        %4306 = vmatpush.xpose.msra.mxu0 0.0
        %4307 = vmatpush.xpose.msra.mxu0 0.0
        %4308 = vmatpush.xpose.msra.mxu0 0.0
        %4309 = vmatpush.xpose.msra.mxu0 0.0
        %4310 = vmatpush.xpose.msra.mxu0 0.0
        %4311 = vmatpush.xpose.msra.mxu0 0.0
        %4312 = vmatpush.xpose.msra.mxu0 0.0
        %4313 = vmatpush.xpose.msra.mxu0 0.0
        %4314 = vmatpush.xpose.msra.mxu0 0.0
        %4315 = vmatpush.xpose.msra.mxu0 0.0
        %4316 = vmatpush.xpose.msra.mxu0 0.0
        %4317 = vmatpush.xpose.msra.mxu0 0.0
        %4318 = vmatpush.xpose.msra.mxu0 0.0
        %v4319 = vand.u32 %v4233, 4294901760
        %v4320 = vsub.f32 %v4233, %v4319
        %4321 = vmatpush.xpose.msra.mxu0 %v4320
        %v4322 = vand.u32 %v4231, 4294901760
        %v4323 = vsub.f32 %v4231, %v4322
        %4324 = vmatpush.xpose.msra.mxu0 %v4323
        %v4325 = vand.u32 %v4227, 4294901760
        %v4326 = vsub.f32 %v4227, %v4325
        %4327 = vmatmul.f32.gmra.mxu0 %v4326
        %v4328 = vpop.f32.mrf.mxu0
        %v4329 = vadd.f32 %v4299, %v4328
        %v4330 = vand.u32 %v4229, 4294901760
        %v4331 = vsub.f32 %v4229, %v4330
        %4332 = vmatmul.f32.gmra.mxu0 %v4331
        %v4333 = vpop.f32.mrf.mxu0
        %v4334 = vadd.f32 %v4303, %v4333
        %4335 = vdwg.mxu0
        %4336 = vmatpush.xpose.msra.mxu0 0.0
        %4337 = vmatpush.xpose.msra.mxu0 0.0
        %4338 = vmatpush.xpose.msra.mxu0 0.0
        %4339 = vmatpush.xpose.msra.mxu0 0.0
        %4340 = vmatpush.xpose.msra.mxu0 0.0
        %4341 = vmatpush.xpose.msra.mxu0 0.0
        %4342 = vmatpush.xpose.msra.mxu0 0.0
        %4343 = vmatpush.xpose.msra.mxu0 0.0
        %4344 = vmatpush.xpose.msra.mxu0 0.0
        %4345 = vmatpush.xpose.msra.mxu0 0.0
        %4346 = vmatpush.xpose.msra.mxu0 0.0
        %4347 = vmatpush.xpose.msra.mxu0 0.0
        %4348 = vmatpush.xpose.msra.mxu0 0.0
        %4349 = vmatpush.xpose.msra.mxu0 0.0
        %v4350 = vand.u32 %v4233, 4294901760
        %4351 = vmatpush.xpose.msra.mxu0 %v4350
        %v4352 = vand.u32 %v4231, 4294901760
        %4353 = vmatpush.xpose.msra.mxu0 %v4352
        %v4354 = vand.u32 %v4227, 4294901760
        %v4355 = vsub.f32 %v4227, %v4354
        %v4356 = vand.u32 %v4355, 4294901760
        %4357 = vmatmul.f32.gmra.mxu0 %v4356
        %v4358 = vpop.f32.mrf.mxu0
        %v4359 = vadd.f32 %v4329, %v4358
        %v4360 = vand.u32 %v4229, 4294901760
        %v4361 = vsub.f32 %v4229, %v4360
        %v4362 = vand.u32 %v4361, 4294901760
        %4363 = vmatmul.f32.gmra.mxu0 %v4362
        %v4364 = vpop.f32.mrf.mxu0
        %v4365 = vadd.f32 %v4334, %v4364
        %4366 = vdwg.mxu0
        %4367 = vmatpush.xpose.msra.mxu0 0.0
        %4368 = vmatpush.xpose.msra.mxu0 0.0
        %4369 = vmatpush.xpose.msra.mxu0 0.0
        %4370 = vmatpush.xpose.msra.mxu0 0.0
        %4371 = vmatpush.xpose.msra.mxu0 0.0
        %4372 = vmatpush.xpose.msra.mxu0 0.0
        %4373 = vmatpush.xpose.msra.mxu0 0.0
        %4374 = vmatpush.xpose.msra.mxu0 0.0
        %4375 = vmatpush.xpose.msra.mxu0 0.0
        %4376 = vmatpush.xpose.msra.mxu0 0.0
        %4377 = vmatpush.xpose.msra.mxu0 0.0
        %4378 = vmatpush.xpose.msra.mxu0 0.0
        %4379 = vmatpush.xpose.msra.mxu0 0.0
        %4380 = vmatpush.xpose.msra.mxu0 0.0
        %v4381 = vand.u32 %v4233, 4294901760
        %v4382 = vsub.f32 %v4233, %v4381
        %v4383 = vand.u32 %v4382, 4294901760
        %4384 = vmatpush.xpose.msra.mxu0 %v4383
        %v4385 = vand.u32 %v4231, 4294901760
        %v4386 = vsub.f32 %v4231, %v4385
        %v4387 = vand.u32 %v4386, 4294901760
        %4388 = vmatpush.xpose.msra.mxu0 %v4387
        %v4389 = vand.u32 %v4227, 4294901760
        %4390 = vmatmul.f32.gmra.mxu0 %v4389
        %v4391 = vpop.f32.mrf.mxu0
        %v4392 = vadd.f32 %v4359, %v4391
        %v4393 = vand.u32 %v4229, 4294901760
        %4394 = vmatmul.f32.gmra.mxu0 %v4393
        %v4395 = vpop.f32.mrf.mxu0
        %v4396 = vadd.f32 %v4365, %v4395
        %4397 = vdwg.mxu0
        %4398 = vmatpush.xpose.msra.mxu0 0.0
        %4399 = vmatpush.xpose.msra.mxu0 0.0
        %4400 = vmatpush.xpose.msra.mxu0 0.0
        %4401 = vmatpush.xpose.msra.mxu0 0.0
        %4402 = vmatpush.xpose.msra.mxu0 0.0
        %4403 = vmatpush.xpose.msra.mxu0 0.0
        %4404 = vmatpush.xpose.msra.mxu0 0.0
        %4405 = vmatpush.xpose.msra.mxu0 0.0
        %4406 = vmatpush.xpose.msra.mxu0 0.0
        %4407 = vmatpush.xpose.msra.mxu0 0.0
        %4408 = vmatpush.xpose.msra.mxu0 0.0
        %4409 = vmatpush.xpose.msra.mxu0 0.0
        %4410 = vmatpush.xpose.msra.mxu0 0.0
        %4411 = vmatpush.xpose.msra.mxu0 0.0
        %v4412 = vand.u32 %v4233, 4294901760
        %4413 = vmatpush.xpose.msra.mxu0 %v4412
        %v4414 = vand.u32 %v4231, 4294901760
        %4415 = vmatpush.xpose.msra.mxu0 %v4414
        %v4416 = vand.u32 %v4227, 4294901760
        %4417 = vmatmul.f32.gmra.mxu0 %v4416
        %v4418 = vpop.f32.mrf.mxu0
        %v4419 = vadd.f32 %v4392, %v4418
        %v4420 = vand.u32 %v4229, 4294901760
        %4421 = vmatmul.f32.gmra.mxu0 %v4420
        %v4422 = vpop.f32.mrf.mxu0
        %v4423 = vadd.f32 %v4396, %v4422
        %4424 = vdwg.mxu0
        %v4425 = vsel %vm2608, %v4213, -inf
        %4426 = vmax.xlane.f32.xlu0 %v4425
        %v4427 = vpop.xlane.xlu0 %4426
        %v4428 = vsel %vm2608, %v4217, -inf
        %4429 = vmax.xlane.f32.xlu0 %v4428
        %v4430 = vpop.xlane.xlu0 %4429
        %v4431 = vsel %vm2608, %v4419, -inf
        %4432 = vmax.xlane.f32.xlu0 %v4431
        %v4433 = vpop.xlane.xlu0 %4432
        %v4434 = vsel %vm2608, %v4423, -inf
        %4435 = vmax.xlane.f32.xlu0 %v4434
        %v4436 = vpop.xlane.xlu0 %4435
        %v4437 = vsub.f32 %v4213, %v4427
        %v4438 = vsub.f32 %v4217, %v4430
        %v4439 = vsub.f32 %v4419, %v4433
        %v4440 = vsub.f32 %v4423, %v4436
        %v4441 = vmul.f32 %v4437, 1.442695
        %v4442 = vpow.pop %v4441
        %v4443 = vmul.f32 %v4438, 1.442695
        %v4444 = vpow.pop %v4443
        %v4445 = vmul.f32 %v4439, 1.442695
        %v4446 = vpow.pop %v4445
        %v4447 = vmul.f32 %v4440, 1.442695
        %v4448 = vpow.pop %v4447
        %v4449 = vsel %vm2608, %v4442, 0.0
        %4450 = vadd.xlane.f32.xlu0 %v4449
        %v4451 = vpop.xlane.xlu0 %4450
        %v4452 = vsel %vm2608, %v4444, 0.0
        %4453 = vadd.xlane.f32.xlu0 %v4452
        %v4454 = vpop.xlane.xlu0 %4453
        %v4455 = vsel %vm2608, %v4446, 0.0
        %4456 = vadd.xlane.f32.xlu0 %v4455
        %v4457 = vpop.xlane.xlu0 %4456
        %v4458 = vsel %vm2608, %v4448, 0.0
        %4459 = vadd.xlane.f32.xlu0 %v4458
        %v4460 = vpop.xlane.xlu0 %4459
        %v4461 = vrcp.pop %v4451
        %v4462 = vmul.f32 %v4451, %v4461
        %v4463 = vsub.f32 1.0, %v4462
        %v4464 = vmul.f32 %v4461, %v4463
        %v4465 = vadd.f32 %v4461, %v4464
        %vm4466 = vweird.f32 %v4451
        %vm4467 = vweird.f32 %v4461
        %vm4468 = vmor %vm4466, %vm4467
        %v4469 = vsel %vm4468, %v4461, %v4465
        %v4470 = vand.u32 2147483647, %v4451
        %vm4471 = vcmp.eq.f32.partialorder %v4470, 8.507059e+37
        %v4472 = vand.u32 %v4451, 2147483648
        %v4473 = vor.u32 1.1754944e-38, %v4472
        %v4474 = vsel %vm4471, %v4473, %v4469
        %v4475 = vmul.f32 %v4442, %v4474
        %v4476 = vrcp.pop %v4454
        %v4477 = vmul.f32 %v4454, %v4476
        %v4478 = vsub.f32 1.0, %v4477
        %v4479 = vmul.f32 %v4476, %v4478
        %v4480 = vadd.f32 %v4476, %v4479
        %vm4481 = vweird.f32 %v4454
        %vm4482 = vweird.f32 %v4476
        %vm4483 = vmor %vm4481, %vm4482
        %v4484 = vsel %vm4483, %v4476, %v4480
        %v4485 = vand.u32 2147483647, %v4454
        %vm4486 = vcmp.eq.f32.partialorder %v4485, 8.507059e+37
        %v4487 = vand.u32 %v4454, 2147483648
        %v4488 = vor.u32 1.1754944e-38, %v4487
        %v4489 = vsel %vm4486, %v4488, %v4484
        %v4490 = vmul.f32 %v4444, %v4489
        %v4491 = vrcp.pop %v4457
        %v4492 = vmul.f32 %v4457, %v4491
        %v4493 = vsub.f32 1.0, %v4492
        %v4494 = vmul.f32 %v4491, %v4493
        %v4495 = vadd.f32 %v4491, %v4494
        %vm4496 = vweird.f32 %v4457
        %vm4497 = vweird.f32 %v4491
        %vm4498 = vmor %vm4496, %vm4497
        %v4499 = vsel %vm4498, %v4491, %v4495
        %v4500 = vand.u32 2147483647, %v4457
        %vm4501 = vcmp.eq.f32.partialorder %v4500, 8.507059e+37
        %v4502 = vand.u32 %v4457, 2147483648
        %v4503 = vor.u32 1.1754944e-38, %v4502
        %v4504 = vsel %vm4501, %v4503, %v4499
        %v4505 = vmul.f32 %v4446, %v4504
        %v4506 = vrcp.pop %v4460
        %v4507 = vmul.f32 %v4460, %v4506
        %v4508 = vsub.f32 1.0, %v4507
        %v4509 = vmul.f32 %v4506, %v4508
        %v4510 = vadd.f32 %v4506, %v4509
        %vm4511 = vweird.f32 %v4460
        %vm4512 = vweird.f32 %v4506
        %vm4513 = vmor %vm4511, %vm4512
        %v4514 = vsel %vm4513, %v4506, %v4510
        %v4515 = vand.u32 2147483647, %v4460
        %vm4516 = vcmp.eq.f32.partialorder %v4515, 8.507059e+37
        %v4517 = vand.u32 %v4460, 2147483648
        %v4518 = vor.u32 1.1754944e-38, %v4517
        %v4519 = vsel %vm4516, %v4518, %v4514
        %v4520 = vmul.f32 %v4448, %v4519
        %4521 = vrot.lane.b32.xlu0 %v1739, 64
        %v4522 = vpop.permute.xlu0 %4521
        %4523 = vrot.lane.b32.xlu0 %v1743, 64
        %v4524 = vpop.permute.xlu0 %4523
        %v4528 = vsel %vm2608, %v4475, 0
        %v4531 = vsel %vm2608, %v4490, 0
        %4533 = vmatpush.msra.mxu0 0.0
        %4534 = vmatpush.msra.mxu0 0.0
        %4535 = vmatpush.msra.mxu0 0.0
        %4536 = vmatpush.msra.mxu0 0.0
        %4537 = vmatpush.msra.mxu0 0.0
        %4538 = vmatpush.msra.mxu0 0.0
        %4539 = vmatpush.msra.mxu0 0.0
        %4540 = vmatpush.msra.mxu0 0.0
        %4541 = vmatpush.msra.mxu0 0.0
        %4542 = vmatpush.msra.mxu0 0.0
        %4543 = vmatpush.msra.mxu0 0.0
        %4544 = vmatpush.msra.mxu0 0.0
        %4545 = vmatpush.msra.mxu0 0.0
        %4546 = vmatpush.msra.mxu0 0.0
        %v4547 = vand.u32 %v4524, 4294901760
        %4548 = vmatpush.msra.mxu0 %v4547
        %v4549 = vand.u32 %v4522, 4294901760
        %4550 = vmatpush.msra.mxu0 %v4549
        %v4551 = vand.u32 %v4528, 4294901760
        %v4552 = vsub.f32 %v4528, %v4551
        %v4553 = vand.u32 %v4552, 4294901760
        %v4554 = vsub.f32 %v4552, %v4553
        %v4555 = vand.u32 %v4554, 4294901760
        %4556 = vmatmul.f32.gmra.mxu0 %v4555
        %v4557 = vpop.f32.mrf.mxu0
        %v4558 = vadd.f32 0.0, %v4557
        %v4559 = vand.u32 %v4531, 4294901760
        %v4560 = vsub.f32 %v4531, %v4559
        %v4561 = vand.u32 %v4560, 4294901760
        %v4562 = vsub.f32 %v4560, %v4561
        %v4563 = vand.u32 %v4562, 4294901760
        %4564 = vmatmul.f32.gmra.mxu0 %v4563
        %v4565 = vpop.f32.mrf.mxu0
        %v4566 = vadd.f32 0.0, %v4565
        %4567 = vdwg.mxu0
        %4568 = vmatpush.msra.mxu0 0.0
        %4569 = vmatpush.msra.mxu0 0.0
        %4570 = vmatpush.msra.mxu0 0.0
        %4571 = vmatpush.msra.mxu0 0.0
        %4572 = vmatpush.msra.mxu0 0.0
        %4573 = vmatpush.msra.mxu0 0.0
        %4574 = vmatpush.msra.mxu0 0.0
        %4575 = vmatpush.msra.mxu0 0.0
        %4576 = vmatpush.msra.mxu0 0.0
        %4577 = vmatpush.msra.mxu0 0.0
        %4578 = vmatpush.msra.mxu0 0.0
        %4579 = vmatpush.msra.mxu0 0.0
        %4580 = vmatpush.msra.mxu0 0.0
        %4581 = vmatpush.msra.mxu0 0.0
        %v4582 = vand.u32 %v4524, 4294901760
        %v4583 = vsub.f32 %v4524, %v4582
        %v4584 = vand.u32 %v4583, 4294901760
        %v4585 = vsub.f32 %v4583, %v4584
        %v4586 = vand.u32 %v4585, 4294901760
        %4587 = vmatpush.msra.mxu0 %v4586
        %v4588 = vand.u32 %v4522, 4294901760
        %v4589 = vsub.f32 %v4522, %v4588
        %v4590 = vand.u32 %v4589, 4294901760
        %v4591 = vsub.f32 %v4589, %v4590
        %v4592 = vand.u32 %v4591, 4294901760
        %4593 = vmatpush.msra.mxu0 %v4592
        %v4594 = vand.u32 %v4528, 4294901760
        %4595 = vmatmul.f32.gmra.mxu0 %v4594
        %v4596 = vpop.f32.mrf.mxu0
        %v4597 = vadd.f32 %v4558, %v4596
        %v4598 = vand.u32 %v4531, 4294901760
        %4599 = vmatmul.f32.gmra.mxu0 %v4598
        %v4600 = vpop.f32.mrf.mxu0
        %v4601 = vadd.f32 %v4566, %v4600
        %4602 = vdwg.mxu0
        %4603 = vmatpush.msra.mxu0 0.0
        %4604 = vmatpush.msra.mxu0 0.0
        %4605 = vmatpush.msra.mxu0 0.0
        %4606 = vmatpush.msra.mxu0 0.0
        %4607 = vmatpush.msra.mxu0 0.0
        %4608 = vmatpush.msra.mxu0 0.0
        %4609 = vmatpush.msra.mxu0 0.0
        %4610 = vmatpush.msra.mxu0 0.0
        %4611 = vmatpush.msra.mxu0 0.0
        %4612 = vmatpush.msra.mxu0 0.0
        %4613 = vmatpush.msra.mxu0 0.0
        %4614 = vmatpush.msra.mxu0 0.0
        %4615 = vmatpush.msra.mxu0 0.0
        %4616 = vmatpush.msra.mxu0 0.0
        %v4617 = vand.u32 %v4524, 4294901760
        %v4618 = vsub.f32 %v4524, %v4617
        %4619 = vmatpush.msra.mxu0 %v4618
        %v4620 = vand.u32 %v4522, 4294901760
        %v4621 = vsub.f32 %v4522, %v4620
        %4622 = vmatpush.msra.mxu0 %v4621
        %v4623 = vand.u32 %v4528, 4294901760
        %v4624 = vsub.f32 %v4528, %v4623
        %4625 = vmatmul.f32.gmra.mxu0 %v4624
        %v4626 = vpop.f32.mrf.mxu0
        %v4627 = vadd.f32 %v4597, %v4626
        %v4628 = vand.u32 %v4531, 4294901760
        %v4629 = vsub.f32 %v4531, %v4628
        %4630 = vmatmul.f32.gmra.mxu0 %v4629
        %v4631 = vpop.f32.mrf.mxu0
        %v4632 = vadd.f32 %v4601, %v4631
        %4633 = vdwg.mxu0
        %4634 = vmatpush.msra.mxu0 0.0
        %4635 = vmatpush.msra.mxu0 0.0
        %4636 = vmatpush.msra.mxu0 0.0
        %4637 = vmatpush.msra.mxu0 0.0
        %4638 = vmatpush.msra.mxu0 0.0
        %4639 = vmatpush.msra.mxu0 0.0
        %4640 = vmatpush.msra.mxu0 0.0
        %4641 = vmatpush.msra.mxu0 0.0
        %4642 = vmatpush.msra.mxu0 0.0
        %4643 = vmatpush.msra.mxu0 0.0
        %4644 = vmatpush.msra.mxu0 0.0
        %4645 = vmatpush.msra.mxu0 0.0
        %4646 = vmatpush.msra.mxu0 0.0
        %4647 = vmatpush.msra.mxu0 0.0
        %v4648 = vand.u32 %v4524, 4294901760
        %4649 = vmatpush.msra.mxu0 %v4648
        %v4650 = vand.u32 %v4522, 4294901760
        %4651 = vmatpush.msra.mxu0 %v4650
        %v4652 = vand.u32 %v4528, 4294901760
        %v4653 = vsub.f32 %v4528, %v4652
        %v4654 = vand.u32 %v4653, 4294901760
        %4655 = vmatmul.f32.gmra.mxu0 %v4654
        %v4656 = vpop.f32.mrf.mxu0
        %v4657 = vadd.f32 %v4627, %v4656
        %v4658 = vand.u32 %v4531, 4294901760
        %v4659 = vsub.f32 %v4531, %v4658
        %v4660 = vand.u32 %v4659, 4294901760
        %4661 = vmatmul.f32.gmra.mxu0 %v4660
        %v4662 = vpop.f32.mrf.mxu0
        %v4663 = vadd.f32 %v4632, %v4662
        %4664 = vdwg.mxu0
        %4665 = vmatpush.msra.mxu0 0.0
        %4666 = vmatpush.msra.mxu0 0.0
        %4667 = vmatpush.msra.mxu0 0.0
        %4668 = vmatpush.msra.mxu0 0.0
        %4669 = vmatpush.msra.mxu0 0.0
        %4670 = vmatpush.msra.mxu0 0.0
        %4671 = vmatpush.msra.mxu0 0.0
        %4672 = vmatpush.msra.mxu0 0.0
        %4673 = vmatpush.msra.mxu0 0.0
        %4674 = vmatpush.msra.mxu0 0.0
        %4675 = vmatpush.msra.mxu0 0.0
        %4676 = vmatpush.msra.mxu0 0.0
        %4677 = vmatpush.msra.mxu0 0.0
        %4678 = vmatpush.msra.mxu0 0.0
        %v4679 = vand.u32 %v4524, 4294901760
        %v4680 = vsub.f32 %v4524, %v4679
        %v4681 = vand.u32 %v4680, 4294901760
        %4682 = vmatpush.msra.mxu0 %v4681
        %v4683 = vand.u32 %v4522, 4294901760
        %v4684 = vsub.f32 %v4522, %v4683
        %v4685 = vand.u32 %v4684, 4294901760
        %4686 = vmatpush.msra.mxu0 %v4685
        %v4687 = vand.u32 %v4528, 4294901760
        %4688 = vmatmul.f32.gmra.mxu0 %v4687
        %v4689 = vpop.f32.mrf.mxu0
        %v4690 = vadd.f32 %v4657, %v4689
        %v4691 = vand.u32 %v4531, 4294901760
        %4692 = vmatmul.f32.gmra.mxu0 %v4691
        %v4693 = vpop.f32.mrf.mxu0
        %v4694 = vadd.f32 %v4663, %v4693
        %4695 = vdwg.mxu0
        %4696 = vmatpush.msra.mxu0 0.0
        %4697 = vmatpush.msra.mxu0 0.0
        %4698 = vmatpush.msra.mxu0 0.0
        %4699 = vmatpush.msra.mxu0 0.0
        %4700 = vmatpush.msra.mxu0 0.0
        %4701 = vmatpush.msra.mxu0 0.0
        %4702 = vmatpush.msra.mxu0 0.0
        %4703 = vmatpush.msra.mxu0 0.0
        %4704 = vmatpush.msra.mxu0 0.0
        %4705 = vmatpush.msra.mxu0 0.0
        %4706 = vmatpush.msra.mxu0 0.0
        %4707 = vmatpush.msra.mxu0 0.0
        %4708 = vmatpush.msra.mxu0 0.0
        %4709 = vmatpush.msra.mxu0 0.0
        %v4710 = vand.u32 %v4524, 4294901760
        %4711 = vmatpush.msra.mxu0 %v4710
        %v4712 = vand.u32 %v4522, 4294901760
        %4713 = vmatpush.msra.mxu0 %v4712
        %v4714 = vand.u32 %v4528, 4294901760
        %4715 = vmatmul.f32.gmra.mxu0 %v4714
        %v4716 = vpop.f32.mrf.mxu0
        %v4717 = vadd.f32 %v4690, %v4716
        %v4718 = vand.u32 %v4531, 4294901760
        %4719 = vmatmul.f32.gmra.mxu0 %v4718
        %v4720 = vpop.f32.mrf.mxu0
        %v4721 = vadd.f32 %v4694, %v4720
        %4722 = vdwg.mxu0
        %4723 = vrot.lane.b32.xlu0 %v1747, 64
        %v4724 = vpop.permute.xlu0 %4723
        %4725 = vrot.lane.b32.xlu0 %v1751, 64
        %v4726 = vpop.permute.xlu0 %4725
        %v4730 = vsel %vm2608, %v4505, 0
        %v4733 = vsel %vm2608, %v4520, 0
        %4735 = vmatpush.msra.mxu0 0.0
        %4736 = vmatpush.msra.mxu0 0.0
        %4737 = vmatpush.msra.mxu0 0.0
        %4738 = vmatpush.msra.mxu0 0.0
        %4739 = vmatpush.msra.mxu0 0.0
        %4740 = vmatpush.msra.mxu0 0.0
        %4741 = vmatpush.msra.mxu0 0.0
        %4742 = vmatpush.msra.mxu0 0.0
        %4743 = vmatpush.msra.mxu0 0.0
        %4744 = vmatpush.msra.mxu0 0.0
        %4745 = vmatpush.msra.mxu0 0.0
        %4746 = vmatpush.msra.mxu0 0.0
        %4747 = vmatpush.msra.mxu0 0.0
        %4748 = vmatpush.msra.mxu0 0.0
        %v4749 = vand.u32 %v4726, 4294901760
        %4750 = vmatpush.msra.mxu0 %v4749
        %v4751 = vand.u32 %v4724, 4294901760
        %4752 = vmatpush.msra.mxu0 %v4751
        %v4753 = vand.u32 %v4730, 4294901760
        %v4754 = vsub.f32 %v4730, %v4753
        %v4755 = vand.u32 %v4754, 4294901760
        %v4756 = vsub.f32 %v4754, %v4755
        %v4757 = vand.u32 %v4756, 4294901760
        %4758 = vmatmul.f32.gmra.mxu0 %v4757
        %v4759 = vpop.f32.mrf.mxu0
        %v4760 = vadd.f32 0.0, %v4759
        %v4761 = vand.u32 %v4733, 4294901760
        %v4762 = vsub.f32 %v4733, %v4761
        %v4763 = vand.u32 %v4762, 4294901760
        %v4764 = vsub.f32 %v4762, %v4763
        %v4765 = vand.u32 %v4764, 4294901760
        %4766 = vmatmul.f32.gmra.mxu0 %v4765
        %v4767 = vpop.f32.mrf.mxu0
        %v4768 = vadd.f32 0.0, %v4767
        %4769 = vdwg.mxu0
        %4770 = vmatpush.msra.mxu0 0.0
        %4771 = vmatpush.msra.mxu0 0.0
        %4772 = vmatpush.msra.mxu0 0.0
        %4773 = vmatpush.msra.mxu0 0.0
        %4774 = vmatpush.msra.mxu0 0.0
        %4775 = vmatpush.msra.mxu0 0.0
        %4776 = vmatpush.msra.mxu0 0.0
        %4777 = vmatpush.msra.mxu0 0.0
        %4778 = vmatpush.msra.mxu0 0.0
        %4779 = vmatpush.msra.mxu0 0.0
        %4780 = vmatpush.msra.mxu0 0.0
        %4781 = vmatpush.msra.mxu0 0.0
        %4782 = vmatpush.msra.mxu0 0.0
        %4783 = vmatpush.msra.mxu0 0.0
        %v4784 = vand.u32 %v4726, 4294901760
        %v4785 = vsub.f32 %v4726, %v4784
        %v4786 = vand.u32 %v4785, 4294901760
        %v4787 = vsub.f32 %v4785, %v4786
        %v4788 = vand.u32 %v4787, 4294901760
        %4789 = vmatpush.msra.mxu0 %v4788
        %v4790 = vand.u32 %v4724, 4294901760
        %v4791 = vsub.f32 %v4724, %v4790
        %v4792 = vand.u32 %v4791, 4294901760
        %v4793 = vsub.f32 %v4791, %v4792
        %v4794 = vand.u32 %v4793, 4294901760
        %4795 = vmatpush.msra.mxu0 %v4794
        %v4796 = vand.u32 %v4730, 4294901760
        %4797 = vmatmul.f32.gmra.mxu0 %v4796
        %v4798 = vpop.f32.mrf.mxu0
        %v4799 = vadd.f32 %v4760, %v4798
        %v4800 = vand.u32 %v4733, 4294901760
        %4801 = vmatmul.f32.gmra.mxu0 %v4800
        %v4802 = vpop.f32.mrf.mxu0
        %v4803 = vadd.f32 %v4768, %v4802
        %4804 = vdwg.mxu0
        %4805 = vmatpush.msra.mxu0 0.0
        %4806 = vmatpush.msra.mxu0 0.0
        %4807 = vmatpush.msra.mxu0 0.0
        %4808 = vmatpush.msra.mxu0 0.0
        %4809 = vmatpush.msra.mxu0 0.0
        %4810 = vmatpush.msra.mxu0 0.0
        %4811 = vmatpush.msra.mxu0 0.0
        %4812 = vmatpush.msra.mxu0 0.0
        %4813 = vmatpush.msra.mxu0 0.0
        %4814 = vmatpush.msra.mxu0 0.0
        %4815 = vmatpush.msra.mxu0 0.0
        %4816 = vmatpush.msra.mxu0 0.0
        %4817 = vmatpush.msra.mxu0 0.0
        %4818 = vmatpush.msra.mxu0 0.0
        %v4819 = vand.u32 %v4726, 4294901760
        %v4820 = vsub.f32 %v4726, %v4819
        %4821 = vmatpush.msra.mxu0 %v4820
        %v4822 = vand.u32 %v4724, 4294901760
        %v4823 = vsub.f32 %v4724, %v4822
        %4824 = vmatpush.msra.mxu0 %v4823
        %v4825 = vand.u32 %v4730, 4294901760
        %v4826 = vsub.f32 %v4730, %v4825
        %4827 = vmatmul.f32.gmra.mxu0 %v4826
        %v4828 = vpop.f32.mrf.mxu0
        %v4829 = vadd.f32 %v4799, %v4828
        %v4830 = vand.u32 %v4733, 4294901760
        %v4831 = vsub.f32 %v4733, %v4830
        %4832 = vmatmul.f32.gmra.mxu0 %v4831
        %v4833 = vpop.f32.mrf.mxu0
        %v4834 = vadd.f32 %v4803, %v4833
        %4835 = vdwg.mxu0
        %4836 = vmatpush.msra.mxu0 0.0
        %4837 = vmatpush.msra.mxu0 0.0
        %4838 = vmatpush.msra.mxu0 0.0
        %4839 = vmatpush.msra.mxu0 0.0
        %4840 = vmatpush.msra.mxu0 0.0
        %4841 = vmatpush.msra.mxu0 0.0
        %4842 = vmatpush.msra.mxu0 0.0
        %4843 = vmatpush.msra.mxu0 0.0
        %4844 = vmatpush.msra.mxu0 0.0
        %4845 = vmatpush.msra.mxu0 0.0
        %4846 = vmatpush.msra.mxu0 0.0
        %4847 = vmatpush.msra.mxu0 0.0
        %4848 = vmatpush.msra.mxu0 0.0
        %4849 = vmatpush.msra.mxu0 0.0
        %v4850 = vand.u32 %v4726, 4294901760
        %4851 = vmatpush.msra.mxu0 %v4850
        %v4852 = vand.u32 %v4724, 4294901760
        %4853 = vmatpush.msra.mxu0 %v4852
        %v4854 = vand.u32 %v4730, 4294901760
        %v4855 = vsub.f32 %v4730, %v4854
        %v4856 = vand.u32 %v4855, 4294901760
        %4857 = vmatmul.f32.gmra.mxu0 %v4856
        %v4858 = vpop.f32.mrf.mxu0
        %v4859 = vadd.f32 %v4829, %v4858
        %v4860 = vand.u32 %v4733, 4294901760
        %v4861 = vsub.f32 %v4733, %v4860
        %v4862 = vand.u32 %v4861, 4294901760
        %4863 = vmatmul.f32.gmra.mxu0 %v4862
        %v4864 = vpop.f32.mrf.mxu0
        %v4865 = vadd.f32 %v4834, %v4864
        %4866 = vdwg.mxu0
        %4867 = vmatpush.msra.mxu0 0.0
        %4868 = vmatpush.msra.mxu0 0.0
        %4869 = vmatpush.msra.mxu0 0.0
        %4870 = vmatpush.msra.mxu0 0.0
        %4871 = vmatpush.msra.mxu0 0.0
        %4872 = vmatpush.msra.mxu0 0.0
        %4873 = vmatpush.msra.mxu0 0.0
        %4874 = vmatpush.msra.mxu0 0.0
        %4875 = vmatpush.msra.mxu0 0.0
        %4876 = vmatpush.msra.mxu0 0.0
        %4877 = vmatpush.msra.mxu0 0.0
        %4878 = vmatpush.msra.mxu0 0.0
        %4879 = vmatpush.msra.mxu0 0.0
        %4880 = vmatpush.msra.mxu0 0.0
        %v4881 = vand.u32 %v4726, 4294901760
        %v4882 = vsub.f32 %v4726, %v4881
        %v4883 = vand.u32 %v4882, 4294901760
        %4884 = vmatpush.msra.mxu0 %v4883
        %v4885 = vand.u32 %v4724, 4294901760
        %v4886 = vsub.f32 %v4724, %v4885
        %v4887 = vand.u32 %v4886, 4294901760
        %4888 = vmatpush.msra.mxu0 %v4887
        %v4889 = vand.u32 %v4730, 4294901760
        %4890 = vmatmul.f32.gmra.mxu0 %v4889
        %v4891 = vpop.f32.mrf.mxu0
        %v4892 = vadd.f32 %v4859, %v4891
        %v4893 = vand.u32 %v4733, 4294901760
        %4894 = vmatmul.f32.gmra.mxu0 %v4893
        %v4895 = vpop.f32.mrf.mxu0
        %v4896 = vadd.f32 %v4865, %v4895
        %4897 = vdwg.mxu0
        %4898 = vmatpush.msra.mxu0 0.0
        %4899 = vmatpush.msra.mxu0 0.0
        %4900 = vmatpush.msra.mxu0 0.0
        %4901 = vmatpush.msra.mxu0 0.0
        %4902 = vmatpush.msra.mxu0 0.0
        %4903 = vmatpush.msra.mxu0 0.0
        %4904 = vmatpush.msra.mxu0 0.0
        %4905 = vmatpush.msra.mxu0 0.0
        %4906 = vmatpush.msra.mxu0 0.0
        %4907 = vmatpush.msra.mxu0 0.0
        %4908 = vmatpush.msra.mxu0 0.0
        %4909 = vmatpush.msra.mxu0 0.0
        %4910 = vmatpush.msra.mxu0 0.0
        %4911 = vmatpush.msra.mxu0 0.0
        %v4912 = vand.u32 %v4726, 4294901760
        %4913 = vmatpush.msra.mxu0 %v4912
        %v4914 = vand.u32 %v4724, 4294901760
        %4915 = vmatpush.msra.mxu0 %v4914
        %v4916 = vand.u32 %v4730, 4294901760
        %4917 = vmatmul.f32.gmra.mxu0 %v4916
        %v4918 = vpop.f32.mrf.mxu0
        %v4919 = vadd.f32 %v4892, %v4918
        %v4920 = vand.u32 %v4733, 4294901760
        %4921 = vmatmul.f32.gmra.mxu0 %v4920
        %v4922 = vpop.f32.mrf.mxu0
        %v4923 = vadd.f32 %v4896, %v4922
        %4924 = vdwg.mxu0
        %4925 = vrot.lane.b32.xlu0 %v2189, 32
        %v4926 = vpop.permute.xlu0 %4925
        %4927 = vrot.lane.b32.xlu0 %v2193, 32
        %v4928 = vpop.permute.xlu0 %4927
        %4929 = vrot.lane.b32.xlu0 %v1305, 32
        %v4930 = vpop.permute.xlu0 %4929
        %4931 = vrot.lane.b32.xlu0 %v1309, 32
        %v4932 = vpop.permute.xlu0 %4931
        %v4933 = vsel %vm2203, %v4926, 0
        %v4935 = vsel %vm2203, %v4928, 0
        %v4937 = vsel %vm2203, %v4930, 0
        %v4939 = vsel %vm2203, %v4932, 0
        %4941 = vmatpush.xpose.msra.mxu0 0.0
        %4942 = vmatpush.xpose.msra.mxu0 0.0
        %4943 = vmatpush.xpose.msra.mxu0 0.0
        %4944 = vmatpush.xpose.msra.mxu0 0.0
        %4945 = vmatpush.xpose.msra.mxu0 0.0
        %4946 = vmatpush.xpose.msra.mxu0 0.0
        %4947 = vmatpush.xpose.msra.mxu0 0.0
        %4948 = vmatpush.xpose.msra.mxu0 0.0
        %4949 = vmatpush.xpose.msra.mxu0 0.0
        %4950 = vmatpush.xpose.msra.mxu0 0.0
        %4951 = vmatpush.xpose.msra.mxu0 0.0
        %4952 = vmatpush.xpose.msra.mxu0 0.0
        %4953 = vmatpush.xpose.msra.mxu0 0.0
        %4954 = vmatpush.xpose.msra.mxu0 0.0
        %v4955 = vand.u32 %v4939, 4294901760
        %4956 = vmatpush.xpose.msra.mxu0 %v4955
        %v4957 = vand.u32 %v4937, 4294901760
        %4958 = vmatpush.xpose.msra.mxu0 %v4957
        %v4959 = vand.u32 %v4933, 4294901760
        %v4960 = vsub.f32 %v4933, %v4959
        %v4961 = vand.u32 %v4960, 4294901760
        %v4962 = vsub.f32 %v4960, %v4961
        %v4963 = vand.u32 %v4962, 4294901760
        %4964 = vmatmul.f32.gmra.mxu0 %v4963
        %v4965 = vpop.f32.mrf.mxu0
        %v4966 = vadd.f32 0.0, %v4965
        %v4967 = vand.u32 %v4935, 4294901760
        %v4968 = vsub.f32 %v4935, %v4967
        %v4969 = vand.u32 %v4968, 4294901760
        %v4970 = vsub.f32 %v4968, %v4969
        %v4971 = vand.u32 %v4970, 4294901760
        %4972 = vmatmul.f32.gmra.mxu0 %v4971
        %v4973 = vpop.f32.mrf.mxu0
        %v4974 = vadd.f32 0.0, %v4973
        %4975 = vdwg.mxu0
        %4976 = vmatpush.xpose.msra.mxu0 0.0
        %4977 = vmatpush.xpose.msra.mxu0 0.0
        %4978 = vmatpush.xpose.msra.mxu0 0.0
        %4979 = vmatpush.xpose.msra.mxu0 0.0
        %4980 = vmatpush.xpose.msra.mxu0 0.0
        %4981 = vmatpush.xpose.msra.mxu0 0.0
        %4982 = vmatpush.xpose.msra.mxu0 0.0
        %4983 = vmatpush.xpose.msra.mxu0 0.0
        %4984 = vmatpush.xpose.msra.mxu0 0.0
        %4985 = vmatpush.xpose.msra.mxu0 0.0
        %4986 = vmatpush.xpose.msra.mxu0 0.0
        %4987 = vmatpush.xpose.msra.mxu0 0.0
        %4988 = vmatpush.xpose.msra.mxu0 0.0
        %4989 = vmatpush.xpose.msra.mxu0 0.0
        %v4990 = vand.u32 %v4939, 4294901760
        %v4991 = vsub.f32 %v4939, %v4990
        %v4992 = vand.u32 %v4991, 4294901760
        %v4993 = vsub.f32 %v4991, %v4992
        %v4994 = vand.u32 %v4993, 4294901760
        %4995 = vmatpush.xpose.msra.mxu0 %v4994
        %v4996 = vand.u32 %v4937, 4294901760
        %v4997 = vsub.f32 %v4937, %v4996
        %v4998 = vand.u32 %v4997, 4294901760
        %v4999 = vsub.f32 %v4997, %v4998
        %v5000 = vand.u32 %v4999, 4294901760
        %5001 = vmatpush.xpose.msra.mxu0 %v5000
        %v5002 = vand.u32 %v4933, 4294901760
        %5003 = vmatmul.f32.gmra.mxu0 %v5002
        %v5004 = vpop.f32.mrf.mxu0
        %v5005 = vadd.f32 %v4966, %v5004
        %v5006 = vand.u32 %v4935, 4294901760
        %5007 = vmatmul.f32.gmra.mxu0 %v5006
        %v5008 = vpop.f32.mrf.mxu0
        %v5009 = vadd.f32 %v4974, %v5008
        %5010 = vdwg.mxu0
        %5011 = vmatpush.xpose.msra.mxu0 0.0
        %5012 = vmatpush.xpose.msra.mxu0 0.0
        %5013 = vmatpush.xpose.msra.mxu0 0.0
        %5014 = vmatpush.xpose.msra.mxu0 0.0
        %5015 = vmatpush.xpose.msra.mxu0 0.0
        %5016 = vmatpush.xpose.msra.mxu0 0.0
        %5017 = vmatpush.xpose.msra.mxu0 0.0
        %5018 = vmatpush.xpose.msra.mxu0 0.0
        %5019 = vmatpush.xpose.msra.mxu0 0.0
        %5020 = vmatpush.xpose.msra.mxu0 0.0
        %5021 = vmatpush.xpose.msra.mxu0 0.0
        %5022 = vmatpush.xpose.msra.mxu0 0.0
        %5023 = vmatpush.xpose.msra.mxu0 0.0
        %5024 = vmatpush.xpose.msra.mxu0 0.0
        %v5025 = vand.u32 %v4939, 4294901760
        %v5026 = vsub.f32 %v4939, %v5025
        %5027 = vmatpush.xpose.msra.mxu0 %v5026
        %v5028 = vand.u32 %v4937, 4294901760
        %v5029 = vsub.f32 %v4937, %v5028
        %5030 = vmatpush.xpose.msra.mxu0 %v5029
        %v5031 = vand.u32 %v4933, 4294901760
        %v5032 = vsub.f32 %v4933, %v5031
        %5033 = vmatmul.f32.gmra.mxu0 %v5032
        %v5034 = vpop.f32.mrf.mxu0
        %v5035 = vadd.f32 %v5005, %v5034
        %v5036 = vand.u32 %v4935, 4294901760
        %v5037 = vsub.f32 %v4935, %v5036
        %5038 = vmatmul.f32.gmra.mxu0 %v5037
        %v5039 = vpop.f32.mrf.mxu0
        %v5040 = vadd.f32 %v5009, %v5039
        %5041 = vdwg.mxu0
        %5042 = vmatpush.xpose.msra.mxu0 0.0
        %5043 = vmatpush.xpose.msra.mxu0 0.0
        %5044 = vmatpush.xpose.msra.mxu0 0.0
        %5045 = vmatpush.xpose.msra.mxu0 0.0
        %5046 = vmatpush.xpose.msra.mxu0 0.0
        %5047 = vmatpush.xpose.msra.mxu0 0.0
        %5048 = vmatpush.xpose.msra.mxu0 0.0
        %5049 = vmatpush.xpose.msra.mxu0 0.0
        %5050 = vmatpush.xpose.msra.mxu0 0.0
        %5051 = vmatpush.xpose.msra.mxu0 0.0
        %5052 = vmatpush.xpose.msra.mxu0 0.0
        %5053 = vmatpush.xpose.msra.mxu0 0.0
        %5054 = vmatpush.xpose.msra.mxu0 0.0
        %5055 = vmatpush.xpose.msra.mxu0 0.0
        %v5056 = vand.u32 %v4939, 4294901760
        %5057 = vmatpush.xpose.msra.mxu0 %v5056
        %v5058 = vand.u32 %v4937, 4294901760
        %5059 = vmatpush.xpose.msra.mxu0 %v5058
        %v5060 = vand.u32 %v4933, 4294901760
        %v5061 = vsub.f32 %v4933, %v5060
        %v5062 = vand.u32 %v5061, 4294901760
        %5063 = vmatmul.f32.gmra.mxu0 %v5062
        %v5064 = vpop.f32.mrf.mxu0
        %v5065 = vadd.f32 %v5035, %v5064
        %v5066 = vand.u32 %v4935, 4294901760
        %v5067 = vsub.f32 %v4935, %v5066
        %v5068 = vand.u32 %v5067, 4294901760
        %5069 = vmatmul.f32.gmra.mxu0 %v5068
        %v5070 = vpop.f32.mrf.mxu0
        %v5071 = vadd.f32 %v5040, %v5070
        %5072 = vdwg.mxu0
        %5073 = vmatpush.xpose.msra.mxu0 0.0
        %5074 = vmatpush.xpose.msra.mxu0 0.0
        %5075 = vmatpush.xpose.msra.mxu0 0.0
        %5076 = vmatpush.xpose.msra.mxu0 0.0
        %5077 = vmatpush.xpose.msra.mxu0 0.0
        %5078 = vmatpush.xpose.msra.mxu0 0.0
        %5079 = vmatpush.xpose.msra.mxu0 0.0
        %5080 = vmatpush.xpose.msra.mxu0 0.0
        %5081 = vmatpush.xpose.msra.mxu0 0.0
        %5082 = vmatpush.xpose.msra.mxu0 0.0
        %5083 = vmatpush.xpose.msra.mxu0 0.0
        %5084 = vmatpush.xpose.msra.mxu0 0.0
        %5085 = vmatpush.xpose.msra.mxu0 0.0
        %5086 = vmatpush.xpose.msra.mxu0 0.0
        %v5087 = vand.u32 %v4939, 4294901760
        %v5088 = vsub.f32 %v4939, %v5087
        %v5089 = vand.u32 %v5088, 4294901760
        %5090 = vmatpush.xpose.msra.mxu0 %v5089
        %v5091 = vand.u32 %v4937, 4294901760
        %v5092 = vsub.f32 %v4937, %v5091
        %v5093 = vand.u32 %v5092, 4294901760
        %5094 = vmatpush.xpose.msra.mxu0 %v5093
        %v5095 = vand.u32 %v4933, 4294901760
        %5096 = vmatmul.f32.gmra.mxu0 %v5095
        %v5097 = vpop.f32.mrf.mxu0
        %v5098 = vadd.f32 %v5065, %v5097
        %v5099 = vand.u32 %v4935, 4294901760
        %5100 = vmatmul.f32.gmra.mxu0 %v5099
        %v5101 = vpop.f32.mrf.mxu0
        %v5102 = vadd.f32 %v5071, %v5101
        %5103 = vdwg.mxu0
        %5104 = vmatpush.xpose.msra.mxu0 0.0
        %5105 = vmatpush.xpose.msra.mxu0 0.0
        %5106 = vmatpush.xpose.msra.mxu0 0.0
        %5107 = vmatpush.xpose.msra.mxu0 0.0
        %5108 = vmatpush.xpose.msra.mxu0 0.0
        %5109 = vmatpush.xpose.msra.mxu0 0.0
        %5110 = vmatpush.xpose.msra.mxu0 0.0
        %5111 = vmatpush.xpose.msra.mxu0 0.0
        %5112 = vmatpush.xpose.msra.mxu0 0.0
        %5113 = vmatpush.xpose.msra.mxu0 0.0
        %5114 = vmatpush.xpose.msra.mxu0 0.0
        %5115 = vmatpush.xpose.msra.mxu0 0.0
        %5116 = vmatpush.xpose.msra.mxu0 0.0
        %5117 = vmatpush.xpose.msra.mxu0 0.0
        %v5118 = vand.u32 %v4939, 4294901760
        %5119 = vmatpush.xpose.msra.mxu0 %v5118
        %v5120 = vand.u32 %v4937, 4294901760
        %5121 = vmatpush.xpose.msra.mxu0 %v5120
        %v5122 = vand.u32 %v4933, 4294901760
        %5123 = vmatmul.f32.gmra.mxu0 %v5122
        %v5124 = vpop.f32.mrf.mxu0
        %v5125 = vadd.f32 %v5098, %v5124
        %v5126 = vand.u32 %v4935, 4294901760
        %5127 = vmatmul.f32.gmra.mxu0 %v5126
        %v5128 = vpop.f32.mrf.mxu0
        %v5129 = vadd.f32 %v5102, %v5128
        %5130 = vdwg.mxu0
        %5131 = vrot.lane.b32.xlu0 %v2197, 32
        %v5132 = vpop.permute.xlu0 %5131
        %5133 = vrot.lane.b32.xlu0 %v2201, 32
        %v5134 = vpop.permute.xlu0 %5133
        %5135 = vrot.lane.b32.xlu0 %v1313, 32
        %v5136 = vpop.permute.xlu0 %5135
        %5137 = vrot.lane.b32.xlu0 %v1317, 32
        %v5138 = vpop.permute.xlu0 %5137
        %v5139 = vsel %vm2203, %v5132, 0
        %v5141 = vsel %vm2203, %v5134, 0
        %v5143 = vsel %vm2203, %v5136, 0
        %v5145 = vsel %vm2203, %v5138, 0
        %5147 = vmatpush.xpose.msra.mxu0 0.0
        %5148 = vmatpush.xpose.msra.mxu0 0.0
        %5149 = vmatpush.xpose.msra.mxu0 0.0
        %5150 = vmatpush.xpose.msra.mxu0 0.0
        %5151 = vmatpush.xpose.msra.mxu0 0.0
        %5152 = vmatpush.xpose.msra.mxu0 0.0
        %5153 = vmatpush.xpose.msra.mxu0 0.0
        %5154 = vmatpush.xpose.msra.mxu0 0.0
        %5155 = vmatpush.xpose.msra.mxu0 0.0
        %5156 = vmatpush.xpose.msra.mxu0 0.0
        %5157 = vmatpush.xpose.msra.mxu0 0.0
        %5158 = vmatpush.xpose.msra.mxu0 0.0
        %5159 = vmatpush.xpose.msra.mxu0 0.0
        %5160 = vmatpush.xpose.msra.mxu0 0.0
        %v5161 = vand.u32 %v5145, 4294901760
        %5162 = vmatpush.xpose.msra.mxu0 %v5161
        %v5163 = vand.u32 %v5143, 4294901760
        %5164 = vmatpush.xpose.msra.mxu0 %v5163
        %v5165 = vand.u32 %v5139, 4294901760
        %v5166 = vsub.f32 %v5139, %v5165
        %v5167 = vand.u32 %v5166, 4294901760
        %v5168 = vsub.f32 %v5166, %v5167
        %v5169 = vand.u32 %v5168, 4294901760
        %5170 = vmatmul.f32.gmra.mxu0 %v5169
        %v5171 = vpop.f32.mrf.mxu0
        %v5172 = vadd.f32 0.0, %v5171
        %v5173 = vand.u32 %v5141, 4294901760
        %v5174 = vsub.f32 %v5141, %v5173
        %v5175 = vand.u32 %v5174, 4294901760
        %v5176 = vsub.f32 %v5174, %v5175
        %v5177 = vand.u32 %v5176, 4294901760
        %5178 = vmatmul.f32.gmra.mxu0 %v5177
        %v5179 = vpop.f32.mrf.mxu0
        %v5180 = vadd.f32 0.0, %v5179
        %5181 = vdwg.mxu0
        %5182 = vmatpush.xpose.msra.mxu0 0.0
        %5183 = vmatpush.xpose.msra.mxu0 0.0
        %5184 = vmatpush.xpose.msra.mxu0 0.0
        %5185 = vmatpush.xpose.msra.mxu0 0.0
        %5186 = vmatpush.xpose.msra.mxu0 0.0
        %5187 = vmatpush.xpose.msra.mxu0 0.0
        %5188 = vmatpush.xpose.msra.mxu0 0.0
        %5189 = vmatpush.xpose.msra.mxu0 0.0
        %5190 = vmatpush.xpose.msra.mxu0 0.0
        %5191 = vmatpush.xpose.msra.mxu0 0.0
        %5192 = vmatpush.xpose.msra.mxu0 0.0
        %5193 = vmatpush.xpose.msra.mxu0 0.0
        %5194 = vmatpush.xpose.msra.mxu0 0.0
        %5195 = vmatpush.xpose.msra.mxu0 0.0
        %v5196 = vand.u32 %v5145, 4294901760
        %v5197 = vsub.f32 %v5145, %v5196
        %v5198 = vand.u32 %v5197, 4294901760
        %v5199 = vsub.f32 %v5197, %v5198
        %v5200 = vand.u32 %v5199, 4294901760
        %5201 = vmatpush.xpose.msra.mxu0 %v5200
        %v5202 = vand.u32 %v5143, 4294901760
        %v5203 = vsub.f32 %v5143, %v5202
        %v5204 = vand.u32 %v5203, 4294901760
        %v5205 = vsub.f32 %v5203, %v5204
        %v5206 = vand.u32 %v5205, 4294901760
        %5207 = vmatpush.xpose.msra.mxu0 %v5206
        %v5208 = vand.u32 %v5139, 4294901760
        %5209 = vmatmul.f32.gmra.mxu0 %v5208
        %v5210 = vpop.f32.mrf.mxu0
        %v5211 = vadd.f32 %v5172, %v5210
        %v5212 = vand.u32 %v5141, 4294901760
        %5213 = vmatmul.f32.gmra.mxu0 %v5212
        %v5214 = vpop.f32.mrf.mxu0
        %v5215 = vadd.f32 %v5180, %v5214
        %5216 = vdwg.mxu0
        %5217 = vmatpush.xpose.msra.mxu0 0.0
        %5218 = vmatpush.xpose.msra.mxu0 0.0
        %5219 = vmatpush.xpose.msra.mxu0 0.0
        %5220 = vmatpush.xpose.msra.mxu0 0.0
        %5221 = vmatpush.xpose.msra.mxu0 0.0
        %5222 = vmatpush.xpose.msra.mxu0 0.0
        %5223 = vmatpush.xpose.msra.mxu0 0.0
        %5224 = vmatpush.xpose.msra.mxu0 0.0
        %5225 = vmatpush.xpose.msra.mxu0 0.0
        %5226 = vmatpush.xpose.msra.mxu0 0.0
        %5227 = vmatpush.xpose.msra.mxu0 0.0
        %5228 = vmatpush.xpose.msra.mxu0 0.0
        %5229 = vmatpush.xpose.msra.mxu0 0.0
        %5230 = vmatpush.xpose.msra.mxu0 0.0
        %v5231 = vand.u32 %v5145, 4294901760
        %v5232 = vsub.f32 %v5145, %v5231
        %5233 = vmatpush.xpose.msra.mxu0 %v5232
        %v5234 = vand.u32 %v5143, 4294901760
        %v5235 = vsub.f32 %v5143, %v5234
        %5236 = vmatpush.xpose.msra.mxu0 %v5235
        %v5237 = vand.u32 %v5139, 4294901760
        %v5238 = vsub.f32 %v5139, %v5237
        %5239 = vmatmul.f32.gmra.mxu0 %v5238
        %v5240 = vpop.f32.mrf.mxu0
        %v5241 = vadd.f32 %v5211, %v5240
        %v5242 = vand.u32 %v5141, 4294901760
        %v5243 = vsub.f32 %v5141, %v5242
        %5244 = vmatmul.f32.gmra.mxu0 %v5243
        %v5245 = vpop.f32.mrf.mxu0
        %v5246 = vadd.f32 %v5215, %v5245
        %5247 = vdwg.mxu0
        %5248 = vmatpush.xpose.msra.mxu0 0.0
        %5249 = vmatpush.xpose.msra.mxu0 0.0
        %5250 = vmatpush.xpose.msra.mxu0 0.0
        %5251 = vmatpush.xpose.msra.mxu0 0.0
        %5252 = vmatpush.xpose.msra.mxu0 0.0
        %5253 = vmatpush.xpose.msra.mxu0 0.0
        %5254 = vmatpush.xpose.msra.mxu0 0.0
        %5255 = vmatpush.xpose.msra.mxu0 0.0
        %5256 = vmatpush.xpose.msra.mxu0 0.0
        %5257 = vmatpush.xpose.msra.mxu0 0.0
        %5258 = vmatpush.xpose.msra.mxu0 0.0
        %5259 = vmatpush.xpose.msra.mxu0 0.0
        %5260 = vmatpush.xpose.msra.mxu0 0.0
        %5261 = vmatpush.xpose.msra.mxu0 0.0
        %v5262 = vand.u32 %v5145, 4294901760
        %5263 = vmatpush.xpose.msra.mxu0 %v5262
        %v5264 = vand.u32 %v5143, 4294901760
        %5265 = vmatpush.xpose.msra.mxu0 %v5264
        %v5266 = vand.u32 %v5139, 4294901760
        %v5267 = vsub.f32 %v5139, %v5266
        %v5268 = vand.u32 %v5267, 4294901760
        %5269 = vmatmul.f32.gmra.mxu0 %v5268
        %v5270 = vpop.f32.mrf.mxu0
        %v5271 = vadd.f32 %v5241, %v5270
        %v5272 = vand.u32 %v5141, 4294901760
        %v5273 = vsub.f32 %v5141, %v5272
        %v5274 = vand.u32 %v5273, 4294901760
        %5275 = vmatmul.f32.gmra.mxu0 %v5274
        %v5276 = vpop.f32.mrf.mxu0
        %v5277 = vadd.f32 %v5246, %v5276
        %5278 = vdwg.mxu0
        %5279 = vmatpush.xpose.msra.mxu0 0.0
        %5280 = vmatpush.xpose.msra.mxu0 0.0
        %5281 = vmatpush.xpose.msra.mxu0 0.0
        %5282 = vmatpush.xpose.msra.mxu0 0.0
        %5283 = vmatpush.xpose.msra.mxu0 0.0
        %5284 = vmatpush.xpose.msra.mxu0 0.0
        %5285 = vmatpush.xpose.msra.mxu0 0.0
        %5286 = vmatpush.xpose.msra.mxu0 0.0
        %5287 = vmatpush.xpose.msra.mxu0 0.0
        %5288 = vmatpush.xpose.msra.mxu0 0.0
        %5289 = vmatpush.xpose.msra.mxu0 0.0
        %5290 = vmatpush.xpose.msra.mxu0 0.0
        %5291 = vmatpush.xpose.msra.mxu0 0.0
        %5292 = vmatpush.xpose.msra.mxu0 0.0
        %v5293 = vand.u32 %v5145, 4294901760
        %v5294 = vsub.f32 %v5145, %v5293
        %v5295 = vand.u32 %v5294, 4294901760
        %5296 = vmatpush.xpose.msra.mxu0 %v5295
        %v5297 = vand.u32 %v5143, 4294901760
        %v5298 = vsub.f32 %v5143, %v5297
        %v5299 = vand.u32 %v5298, 4294901760
        %5300 = vmatpush.xpose.msra.mxu0 %v5299
        %v5301 = vand.u32 %v5139, 4294901760
        %5302 = vmatmul.f32.gmra.mxu0 %v5301
        %v5303 = vpop.f32.mrf.mxu0
        %v5304 = vadd.f32 %v5271, %v5303
        %v5305 = vand.u32 %v5141, 4294901760
        %5306 = vmatmul.f32.gmra.mxu0 %v5305
        %v5307 = vpop.f32.mrf.mxu0
        %v5308 = vadd.f32 %v5277, %v5307
        %5309 = vdwg.mxu0
        %5310 = vmatpush.xpose.msra.mxu0 0.0
        %5311 = vmatpush.xpose.msra.mxu0 0.0
        %5312 = vmatpush.xpose.msra.mxu0 0.0
        %5313 = vmatpush.xpose.msra.mxu0 0.0
        %5314 = vmatpush.xpose.msra.mxu0 0.0
        %5315 = vmatpush.xpose.msra.mxu0 0.0
        %5316 = vmatpush.xpose.msra.mxu0 0.0
        %5317 = vmatpush.xpose.msra.mxu0 0.0
        %5318 = vmatpush.xpose.msra.mxu0 0.0
        %5319 = vmatpush.xpose.msra.mxu0 0.0
        %5320 = vmatpush.xpose.msra.mxu0 0.0
        %5321 = vmatpush.xpose.msra.mxu0 0.0
        %5322 = vmatpush.xpose.msra.mxu0 0.0
        %5323 = vmatpush.xpose.msra.mxu0 0.0
        %v5324 = vand.u32 %v5145, 4294901760
        %5325 = vmatpush.xpose.msra.mxu0 %v5324
        %v5326 = vand.u32 %v5143, 4294901760
        %5327 = vmatpush.xpose.msra.mxu0 %v5326
        %v5328 = vand.u32 %v5139, 4294901760
        %5329 = vmatmul.f32.gmra.mxu0 %v5328
        %v5330 = vpop.f32.mrf.mxu0
        %v5331 = vadd.f32 %v5304, %v5330
        %v5332 = vand.u32 %v5141, 4294901760
        %5333 = vmatmul.f32.gmra.mxu0 %v5332
        %v5334 = vpop.f32.mrf.mxu0
        %v5335 = vadd.f32 %v5308, %v5334
        %5336 = vdwg.mxu0
        %v5337 = vsel %vm2608, %v5125, -inf
        %5338 = vmax.xlane.f32.xlu0 %v5337
        %v5339 = vpop.xlane.xlu0 %5338
        %v5340 = vsel %vm2608, %v5129, -inf
        %5341 = vmax.xlane.f32.xlu0 %v5340
        %v5342 = vpop.xlane.xlu0 %5341
        %v5343 = vsel %vm2608, %v5331, -inf
        %5344 = vmax.xlane.f32.xlu0 %v5343
        %v5345 = vpop.xlane.xlu0 %5344
        %v5346 = vsel %vm2608, %v5335, -inf
        %5347 = vmax.xlane.f32.xlu0 %v5346
        %v5348 = vpop.xlane.xlu0 %5347
        %v5349 = vsub.f32 %v5125, %v5339
        %v5350 = vsub.f32 %v5129, %v5342
        %v5351 = vsub.f32 %v5331, %v5345
        %v5352 = vsub.f32 %v5335, %v5348
        %v5353 = vmul.f32 %v5349, 1.442695
        %v5354 = vpow.pop %v5353
        %v5355 = vmul.f32 %v5350, 1.442695
        %v5356 = vpow.pop %v5355
        %v5357 = vmul.f32 %v5351, 1.442695
        %v5358 = vpow.pop %v5357
        %v5359 = vmul.f32 %v5352, 1.442695
        %v5360 = vpow.pop %v5359
        %v5361 = vsel %vm2608, %v5354, 0.0
        %5362 = vadd.xlane.f32.xlu0 %v5361
        %v5363 = vpop.xlane.xlu0 %5362
        %v5364 = vsel %vm2608, %v5356, 0.0
        %5365 = vadd.xlane.f32.xlu0 %v5364
        %v5366 = vpop.xlane.xlu0 %5365
        %v5367 = vsel %vm2608, %v5358, 0.0
        %5368 = vadd.xlane.f32.xlu0 %v5367
        %v5369 = vpop.xlane.xlu0 %5368
        %v5370 = vsel %vm2608, %v5360, 0.0
        %5371 = vadd.xlane.f32.xlu0 %v5370
        %v5372 = vpop.xlane.xlu0 %5371
        %v5373 = vrcp.pop %v5363
        %v5374 = vmul.f32 %v5363, %v5373
        %v5375 = vsub.f32 1.0, %v5374
        %v5376 = vmul.f32 %v5373, %v5375
        %v5377 = vadd.f32 %v5373, %v5376
        %vm5378 = vweird.f32 %v5363
        %vm5379 = vweird.f32 %v5373
        %vm5380 = vmor %vm5378, %vm5379
        %v5381 = vsel %vm5380, %v5373, %v5377
        %v5382 = vand.u32 2147483647, %v5363
        %vm5383 = vcmp.eq.f32.partialorder %v5382, 8.507059e+37
        %v5384 = vand.u32 %v5363, 2147483648
        %v5385 = vor.u32 1.1754944e-38, %v5384
        %v5386 = vsel %vm5383, %v5385, %v5381
        %v5387 = vmul.f32 %v5354, %v5386
        %v5388 = vrcp.pop %v5366
        %v5389 = vmul.f32 %v5366, %v5388
        %v5390 = vsub.f32 1.0, %v5389
        %v5391 = vmul.f32 %v5388, %v5390
        %v5392 = vadd.f32 %v5388, %v5391
        %vm5393 = vweird.f32 %v5366
        %vm5394 = vweird.f32 %v5388
        %vm5395 = vmor %vm5393, %vm5394
        %v5396 = vsel %vm5395, %v5388, %v5392
        %v5397 = vand.u32 2147483647, %v5366
        %vm5398 = vcmp.eq.f32.partialorder %v5397, 8.507059e+37
        %v5399 = vand.u32 %v5366, 2147483648
        %v5400 = vor.u32 1.1754944e-38, %v5399
        %v5401 = vsel %vm5398, %v5400, %v5396
        %v5402 = vmul.f32 %v5356, %v5401
        %v5403 = vrcp.pop %v5369
        %v5404 = vmul.f32 %v5369, %v5403
        %v5405 = vsub.f32 1.0, %v5404
        %v5406 = vmul.f32 %v5403, %v5405
        %v5407 = vadd.f32 %v5403, %v5406
        %vm5408 = vweird.f32 %v5369
        %vm5409 = vweird.f32 %v5403
        %vm5410 = vmor %vm5408, %vm5409
        %v5411 = vsel %vm5410, %v5403, %v5407
        %v5412 = vand.u32 2147483647, %v5369
        %vm5413 = vcmp.eq.f32.partialorder %v5412, 8.507059e+37
        %v5414 = vand.u32 %v5369, 2147483648
        %v5415 = vor.u32 1.1754944e-38, %v5414
        %v5416 = vsel %vm5413, %v5415, %v5411
        %v5417 = vmul.f32 %v5358, %v5416
        %v5418 = vrcp.pop %v5372
        %v5419 = vmul.f32 %v5372, %v5418
        %v5420 = vsub.f32 1.0, %v5419
        %v5421 = vmul.f32 %v5418, %v5420
        %v5422 = vadd.f32 %v5418, %v5421
        %vm5423 = vweird.f32 %v5372
        %vm5424 = vweird.f32 %v5418
        %vm5425 = vmor %vm5423, %vm5424
        %v5426 = vsel %vm5425, %v5418, %v5422
        %v5427 = vand.u32 2147483647, %v5372
        %vm5428 = vcmp.eq.f32.partialorder %v5427, 8.507059e+37
        %v5429 = vand.u32 %v5372, 2147483648
        %v5430 = vor.u32 1.1754944e-38, %v5429
        %v5431 = vsel %vm5428, %v5430, %v5426
        %v5432 = vmul.f32 %v5360, %v5431
        %5433 = vrot.lane.b32.xlu0 %v1739, 32
        %v5434 = vpop.permute.xlu0 %5433
        %5435 = vrot.lane.b32.xlu0 %v1743, 32
        %v5436 = vpop.permute.xlu0 %5435
        %v5440 = vsel %vm2608, %v5387, 0
        %v5443 = vsel %vm2608, %v5402, 0
        %5445 = vmatpush.msra.mxu0 0.0
        %5446 = vmatpush.msra.mxu0 0.0
        %5447 = vmatpush.msra.mxu0 0.0
        %5448 = vmatpush.msra.mxu0 0.0
        %5449 = vmatpush.msra.mxu0 0.0
        %5450 = vmatpush.msra.mxu0 0.0
        %5451 = vmatpush.msra.mxu0 0.0
        %5452 = vmatpush.msra.mxu0 0.0
        %5453 = vmatpush.msra.mxu0 0.0
        %5454 = vmatpush.msra.mxu0 0.0
        %5455 = vmatpush.msra.mxu0 0.0
        %5456 = vmatpush.msra.mxu0 0.0
        %5457 = vmatpush.msra.mxu0 0.0
        %5458 = vmatpush.msra.mxu0 0.0
        %v5459 = vand.u32 %v5436, 4294901760
        %5460 = vmatpush.msra.mxu0 %v5459
        %v5461 = vand.u32 %v5434, 4294901760
        %5462 = vmatpush.msra.mxu0 %v5461
        %v5463 = vand.u32 %v5440, 4294901760
        %v5464 = vsub.f32 %v5440, %v5463
        %v5465 = vand.u32 %v5464, 4294901760
        %v5466 = vsub.f32 %v5464, %v5465
        %v5467 = vand.u32 %v5466, 4294901760
        %5468 = vmatmul.f32.gmra.mxu0 %v5467
        %v5469 = vpop.f32.mrf.mxu0
        %v5470 = vadd.f32 0.0, %v5469
        %v5471 = vand.u32 %v5443, 4294901760
        %v5472 = vsub.f32 %v5443, %v5471
        %v5473 = vand.u32 %v5472, 4294901760
        %v5474 = vsub.f32 %v5472, %v5473
        %v5475 = vand.u32 %v5474, 4294901760
        %5476 = vmatmul.f32.gmra.mxu0 %v5475
        %v5477 = vpop.f32.mrf.mxu0
        %v5478 = vadd.f32 0.0, %v5477
        %5479 = vdwg.mxu0
        %5480 = vmatpush.msra.mxu0 0.0
        %5481 = vmatpush.msra.mxu0 0.0
        %5482 = vmatpush.msra.mxu0 0.0
        %5483 = vmatpush.msra.mxu0 0.0
        %5484 = vmatpush.msra.mxu0 0.0
        %5485 = vmatpush.msra.mxu0 0.0
        %5486 = vmatpush.msra.mxu0 0.0
        %5487 = vmatpush.msra.mxu0 0.0
        %5488 = vmatpush.msra.mxu0 0.0
        %5489 = vmatpush.msra.mxu0 0.0
        %5490 = vmatpush.msra.mxu0 0.0
        %5491 = vmatpush.msra.mxu0 0.0
        %5492 = vmatpush.msra.mxu0 0.0
        %5493 = vmatpush.msra.mxu0 0.0
        %v5494 = vand.u32 %v5436, 4294901760
        %v5495 = vsub.f32 %v5436, %v5494
        %v5496 = vand.u32 %v5495, 4294901760
        %v5497 = vsub.f32 %v5495, %v5496
        %v5498 = vand.u32 %v5497, 4294901760
        %5499 = vmatpush.msra.mxu0 %v5498
        %v5500 = vand.u32 %v5434, 4294901760
        %v5501 = vsub.f32 %v5434, %v5500
        %v5502 = vand.u32 %v5501, 4294901760
        %v5503 = vsub.f32 %v5501, %v5502
        %v5504 = vand.u32 %v5503, 4294901760
        %5505 = vmatpush.msra.mxu0 %v5504
        %v5506 = vand.u32 %v5440, 4294901760
        %5507 = vmatmul.f32.gmra.mxu0 %v5506
        %v5508 = vpop.f32.mrf.mxu0
        %v5509 = vadd.f32 %v5470, %v5508
        %v5510 = vand.u32 %v5443, 4294901760
        %5511 = vmatmul.f32.gmra.mxu0 %v5510
        %v5512 = vpop.f32.mrf.mxu0
        %v5513 = vadd.f32 %v5478, %v5512
        %5514 = vdwg.mxu0
        %5515 = vmatpush.msra.mxu0 0.0
        %5516 = vmatpush.msra.mxu0 0.0
        %5517 = vmatpush.msra.mxu0 0.0
        %5518 = vmatpush.msra.mxu0 0.0
        %5519 = vmatpush.msra.mxu0 0.0
        %5520 = vmatpush.msra.mxu0 0.0
        %5521 = vmatpush.msra.mxu0 0.0
        %5522 = vmatpush.msra.mxu0 0.0
        %5523 = vmatpush.msra.mxu0 0.0
        %5524 = vmatpush.msra.mxu0 0.0
        %5525 = vmatpush.msra.mxu0 0.0
        %5526 = vmatpush.msra.mxu0 0.0
        %5527 = vmatpush.msra.mxu0 0.0
        %5528 = vmatpush.msra.mxu0 0.0
        %v5529 = vand.u32 %v5436, 4294901760
        %v5530 = vsub.f32 %v5436, %v5529
        %5531 = vmatpush.msra.mxu0 %v5530
        %v5532 = vand.u32 %v5434, 4294901760
        %v5533 = vsub.f32 %v5434, %v5532
        %5534 = vmatpush.msra.mxu0 %v5533
        %v5535 = vand.u32 %v5440, 4294901760
        %v5536 = vsub.f32 %v5440, %v5535
        %5537 = vmatmul.f32.gmra.mxu0 %v5536
        %v5538 = vpop.f32.mrf.mxu0
        %v5539 = vadd.f32 %v5509, %v5538
        %v5540 = vand.u32 %v5443, 4294901760
        %v5541 = vsub.f32 %v5443, %v5540
        %5542 = vmatmul.f32.gmra.mxu0 %v5541
        %v5543 = vpop.f32.mrf.mxu0
        %v5544 = vadd.f32 %v5513, %v5543
        %5545 = vdwg.mxu0
        %5546 = vmatpush.msra.mxu0 0.0
        %5547 = vmatpush.msra.mxu0 0.0
        %5548 = vmatpush.msra.mxu0 0.0
        %5549 = vmatpush.msra.mxu0 0.0
        %5550 = vmatpush.msra.mxu0 0.0
        %5551 = vmatpush.msra.mxu0 0.0
        %5552 = vmatpush.msra.mxu0 0.0
        %5553 = vmatpush.msra.mxu0 0.0
        %5554 = vmatpush.msra.mxu0 0.0
        %5555 = vmatpush.msra.mxu0 0.0
        %5556 = vmatpush.msra.mxu0 0.0
        %5557 = vmatpush.msra.mxu0 0.0
        %5558 = vmatpush.msra.mxu0 0.0
        %5559 = vmatpush.msra.mxu0 0.0
        %v5560 = vand.u32 %v5436, 4294901760
        %5561 = vmatpush.msra.mxu0 %v5560
        %v5562 = vand.u32 %v5434, 4294901760
        %5563 = vmatpush.msra.mxu0 %v5562
        %v5564 = vand.u32 %v5440, 4294901760
        %v5565 = vsub.f32 %v5440, %v5564
        %v5566 = vand.u32 %v5565, 4294901760
        %5567 = vmatmul.f32.gmra.mxu0 %v5566
        %v5568 = vpop.f32.mrf.mxu0
        %v5569 = vadd.f32 %v5539, %v5568
        %v5570 = vand.u32 %v5443, 4294901760
        %v5571 = vsub.f32 %v5443, %v5570
        %v5572 = vand.u32 %v5571, 4294901760
        %5573 = vmatmul.f32.gmra.mxu0 %v5572
        %v5574 = vpop.f32.mrf.mxu0
        %v5575 = vadd.f32 %v5544, %v5574
        %5576 = vdwg.mxu0
        %5577 = vmatpush.msra.mxu0 0.0
        %5578 = vmatpush.msra.mxu0 0.0
        %5579 = vmatpush.msra.mxu0 0.0
        %5580 = vmatpush.msra.mxu0 0.0
        %5581 = vmatpush.msra.mxu0 0.0
        %5582 = vmatpush.msra.mxu0 0.0
        %5583 = vmatpush.msra.mxu0 0.0
        %5584 = vmatpush.msra.mxu0 0.0
        %5585 = vmatpush.msra.mxu0 0.0
        %5586 = vmatpush.msra.mxu0 0.0
        %5587 = vmatpush.msra.mxu0 0.0
        %5588 = vmatpush.msra.mxu0 0.0
        %5589 = vmatpush.msra.mxu0 0.0
        %5590 = vmatpush.msra.mxu0 0.0
        %v5591 = vand.u32 %v5436, 4294901760
        %v5592 = vsub.f32 %v5436, %v5591
        %v5593 = vand.u32 %v5592, 4294901760
        %5594 = vmatpush.msra.mxu0 %v5593
        %v5595 = vand.u32 %v5434, 4294901760
        %v5596 = vsub.f32 %v5434, %v5595
        %v5597 = vand.u32 %v5596, 4294901760
        %5598 = vmatpush.msra.mxu0 %v5597
        %v5599 = vand.u32 %v5440, 4294901760
        %5600 = vmatmul.f32.gmra.mxu0 %v5599
        %v5601 = vpop.f32.mrf.mxu0
        %v5602 = vadd.f32 %v5569, %v5601
        %v5603 = vand.u32 %v5443, 4294901760
        %5604 = vmatmul.f32.gmra.mxu0 %v5603
        %v5605 = vpop.f32.mrf.mxu0
        %v5606 = vadd.f32 %v5575, %v5605
        %5607 = vdwg.mxu0
        %5608 = vmatpush.msra.mxu0 0.0
        %5609 = vmatpush.msra.mxu0 0.0
        %5610 = vmatpush.msra.mxu0 0.0
        %5611 = vmatpush.msra.mxu0 0.0
        %5612 = vmatpush.msra.mxu0 0.0
        %5613 = vmatpush.msra.mxu0 0.0
        %5614 = vmatpush.msra.mxu0 0.0
        %5615 = vmatpush.msra.mxu0 0.0
        %5616 = vmatpush.msra.mxu0 0.0
        %5617 = vmatpush.msra.mxu0 0.0
        %5618 = vmatpush.msra.mxu0 0.0
        %5619 = vmatpush.msra.mxu0 0.0
        %5620 = vmatpush.msra.mxu0 0.0
        %5621 = vmatpush.msra.mxu0 0.0
        %v5622 = vand.u32 %v5436, 4294901760
        %5623 = vmatpush.msra.mxu0 %v5622
        %v5624 = vand.u32 %v5434, 4294901760
        %5625 = vmatpush.msra.mxu0 %v5624
        %v5626 = vand.u32 %v5440, 4294901760
        %5627 = vmatmul.f32.gmra.mxu0 %v5626
        %v5628 = vpop.f32.mrf.mxu0
        %v5629 = vadd.f32 %v5602, %v5628
        %v5630 = vand.u32 %v5443, 4294901760
        %5631 = vmatmul.f32.gmra.mxu0 %v5630
        %v5632 = vpop.f32.mrf.mxu0
        %v5633 = vadd.f32 %v5606, %v5632
        %5634 = vdwg.mxu0
        %5635 = vrot.lane.b32.xlu0 %v1747, 32
        %v5636 = vpop.permute.xlu0 %5635
        %5637 = vrot.lane.b32.xlu0 %v1751, 32
        %v5638 = vpop.permute.xlu0 %5637
        %v5642 = vsel %vm2608, %v5417, 0
        %v5645 = vsel %vm2608, %v5432, 0
        %5647 = vmatpush.msra.mxu0 0.0
        %5648 = vmatpush.msra.mxu0 0.0
        %5649 = vmatpush.msra.mxu0 0.0
        %5650 = vmatpush.msra.mxu0 0.0
        %5651 = vmatpush.msra.mxu0 0.0
        %5652 = vmatpush.msra.mxu0 0.0
        %5653 = vmatpush.msra.mxu0 0.0
        %5654 = vmatpush.msra.mxu0 0.0
        %5655 = vmatpush.msra.mxu0 0.0
        %5656 = vmatpush.msra.mxu0 0.0
        %5657 = vmatpush.msra.mxu0 0.0
        %5658 = vmatpush.msra.mxu0 0.0
        %5659 = vmatpush.msra.mxu0 0.0
        %5660 = vmatpush.msra.mxu0 0.0
        %v5661 = vand.u32 %v5638, 4294901760
        %5662 = vmatpush.msra.mxu0 %v5661
        %v5663 = vand.u32 %v5636, 4294901760
        %5664 = vmatpush.msra.mxu0 %v5663
        %v5665 = vand.u32 %v5642, 4294901760
        %v5666 = vsub.f32 %v5642, %v5665
        %v5667 = vand.u32 %v5666, 4294901760
        %v5668 = vsub.f32 %v5666, %v5667
        %v5669 = vand.u32 %v5668, 4294901760
        %5670 = vmatmul.f32.gmra.mxu0 %v5669
        %v5671 = vpop.f32.mrf.mxu0
        %v5672 = vadd.f32 0.0, %v5671
        %v5673 = vand.u32 %v5645, 4294901760
        %v5674 = vsub.f32 %v5645, %v5673
        %v5675 = vand.u32 %v5674, 4294901760
        %v5676 = vsub.f32 %v5674, %v5675
        %v5677 = vand.u32 %v5676, 4294901760
        %5678 = vmatmul.f32.gmra.mxu0 %v5677
        %v5679 = vpop.f32.mrf.mxu0
        %v5680 = vadd.f32 0.0, %v5679
        %5681 = vdwg.mxu0
        %5682 = vmatpush.msra.mxu0 0.0
        %5683 = vmatpush.msra.mxu0 0.0
        %5684 = vmatpush.msra.mxu0 0.0
        %5685 = vmatpush.msra.mxu0 0.0
        %5686 = vmatpush.msra.mxu0 0.0
        %5687 = vmatpush.msra.mxu0 0.0
        %5688 = vmatpush.msra.mxu0 0.0
        %5689 = vmatpush.msra.mxu0 0.0
        %5690 = vmatpush.msra.mxu0 0.0
        %5691 = vmatpush.msra.mxu0 0.0
        %5692 = vmatpush.msra.mxu0 0.0
        %5693 = vmatpush.msra.mxu0 0.0
        %5694 = vmatpush.msra.mxu0 0.0
        %5695 = vmatpush.msra.mxu0 0.0
        %v5696 = vand.u32 %v5638, 4294901760
        %v5697 = vsub.f32 %v5638, %v5696
        %v5698 = vand.u32 %v5697, 4294901760
        %v5699 = vsub.f32 %v5697, %v5698
        %v5700 = vand.u32 %v5699, 4294901760
        %5701 = vmatpush.msra.mxu0 %v5700
        %v5702 = vand.u32 %v5636, 4294901760
        %v5703 = vsub.f32 %v5636, %v5702
        %v5704 = vand.u32 %v5703, 4294901760
        %v5705 = vsub.f32 %v5703, %v5704
        %v5706 = vand.u32 %v5705, 4294901760
        %5707 = vmatpush.msra.mxu0 %v5706
        %v5708 = vand.u32 %v5642, 4294901760
        %5709 = vmatmul.f32.gmra.mxu0 %v5708
        %v5710 = vpop.f32.mrf.mxu0
        %v5711 = vadd.f32 %v5672, %v5710
        %v5712 = vand.u32 %v5645, 4294901760
        %5713 = vmatmul.f32.gmra.mxu0 %v5712
        %v5714 = vpop.f32.mrf.mxu0
        %v5715 = vadd.f32 %v5680, %v5714
        %5716 = vdwg.mxu0
        %5717 = vmatpush.msra.mxu0 0.0
        %5718 = vmatpush.msra.mxu0 0.0
        %5719 = vmatpush.msra.mxu0 0.0
        %5720 = vmatpush.msra.mxu0 0.0
        %5721 = vmatpush.msra.mxu0 0.0
        %5722 = vmatpush.msra.mxu0 0.0
        %5723 = vmatpush.msra.mxu0 0.0
        %5724 = vmatpush.msra.mxu0 0.0
        %5725 = vmatpush.msra.mxu0 0.0
        %5726 = vmatpush.msra.mxu0 0.0
        %5727 = vmatpush.msra.mxu0 0.0
        %5728 = vmatpush.msra.mxu0 0.0
        %5729 = vmatpush.msra.mxu0 0.0
        %5730 = vmatpush.msra.mxu0 0.0
        %v5731 = vand.u32 %v5638, 4294901760
        %v5732 = vsub.f32 %v5638, %v5731
        %5733 = vmatpush.msra.mxu0 %v5732
        %v5734 = vand.u32 %v5636, 4294901760
        %v5735 = vsub.f32 %v5636, %v5734
        %5736 = vmatpush.msra.mxu0 %v5735
        %v5737 = vand.u32 %v5642, 4294901760
        %v5738 = vsub.f32 %v5642, %v5737
        %5739 = vmatmul.f32.gmra.mxu0 %v5738
        %v5740 = vpop.f32.mrf.mxu0
        %v5741 = vadd.f32 %v5711, %v5740
        %v5742 = vand.u32 %v5645, 4294901760
        %v5743 = vsub.f32 %v5645, %v5742
        %5744 = vmatmul.f32.gmra.mxu0 %v5743
        %v5745 = vpop.f32.mrf.mxu0
        %v5746 = vadd.f32 %v5715, %v5745
        %5747 = vdwg.mxu0
        %5748 = vmatpush.msra.mxu0 0.0
        %5749 = vmatpush.msra.mxu0 0.0
        %5750 = vmatpush.msra.mxu0 0.0
        %5751 = vmatpush.msra.mxu0 0.0
        %5752 = vmatpush.msra.mxu0 0.0
        %5753 = vmatpush.msra.mxu0 0.0
        %5754 = vmatpush.msra.mxu0 0.0
        %5755 = vmatpush.msra.mxu0 0.0
        %5756 = vmatpush.msra.mxu0 0.0
        %5757 = vmatpush.msra.mxu0 0.0
        %5758 = vmatpush.msra.mxu0 0.0
        %5759 = vmatpush.msra.mxu0 0.0
        %5760 = vmatpush.msra.mxu0 0.0
        %5761 = vmatpush.msra.mxu0 0.0
        %v5762 = vand.u32 %v5638, 4294901760
        %5763 = vmatpush.msra.mxu0 %v5762
        %v5764 = vand.u32 %v5636, 4294901760
        %5765 = vmatpush.msra.mxu0 %v5764
        %v5766 = vand.u32 %v5642, 4294901760
        %v5767 = vsub.f32 %v5642, %v5766
        %v5768 = vand.u32 %v5767, 4294901760
        %5769 = vmatmul.f32.gmra.mxu0 %v5768
        %v5770 = vpop.f32.mrf.mxu0
        %v5771 = vadd.f32 %v5741, %v5770
        %v5772 = vand.u32 %v5645, 4294901760
        %v5773 = vsub.f32 %v5645, %v5772
        %v5774 = vand.u32 %v5773, 4294901760
        %5775 = vmatmul.f32.gmra.mxu0 %v5774
        %v5776 = vpop.f32.mrf.mxu0
        %v5777 = vadd.f32 %v5746, %v5776
        %5778 = vdwg.mxu0
        %5779 = vmatpush.msra.mxu0 0.0
        %5780 = vmatpush.msra.mxu0 0.0
        %5781 = vmatpush.msra.mxu0 0.0
        %5782 = vmatpush.msra.mxu0 0.0
        %5783 = vmatpush.msra.mxu0 0.0
        %5784 = vmatpush.msra.mxu0 0.0
        %5785 = vmatpush.msra.mxu0 0.0
        %5786 = vmatpush.msra.mxu0 0.0
        %5787 = vmatpush.msra.mxu0 0.0
        %5788 = vmatpush.msra.mxu0 0.0
        %5789 = vmatpush.msra.mxu0 0.0
        %5790 = vmatpush.msra.mxu0 0.0
        %5791 = vmatpush.msra.mxu0 0.0
        %5792 = vmatpush.msra.mxu0 0.0
        %v5793 = vand.u32 %v5638, 4294901760
        %v5794 = vsub.f32 %v5638, %v5793
        %v5795 = vand.u32 %v5794, 4294901760
        %5796 = vmatpush.msra.mxu0 %v5795
        %v5797 = vand.u32 %v5636, 4294901760
        %v5798 = vsub.f32 %v5636, %v5797
        %v5799 = vand.u32 %v5798, 4294901760
        %5800 = vmatpush.msra.mxu0 %v5799
        %v5801 = vand.u32 %v5642, 4294901760
        %5802 = vmatmul.f32.gmra.mxu0 %v5801
        %v5803 = vpop.f32.mrf.mxu0
        %v5804 = vadd.f32 %v5771, %v5803
        %v5805 = vand.u32 %v5645, 4294901760
        %5806 = vmatmul.f32.gmra.mxu0 %v5805
        %v5807 = vpop.f32.mrf.mxu0
        %v5808 = vadd.f32 %v5777, %v5807
        %5809 = vdwg.mxu0
        %5810 = vmatpush.msra.mxu0 0.0
        %5811 = vmatpush.msra.mxu0 0.0
        %5812 = vmatpush.msra.mxu0 0.0
        %5813 = vmatpush.msra.mxu0 0.0
        %5814 = vmatpush.msra.mxu0 0.0
        %5815 = vmatpush.msra.mxu0 0.0
        %5816 = vmatpush.msra.mxu0 0.0
        %5817 = vmatpush.msra.mxu0 0.0
        %5818 = vmatpush.msra.mxu0 0.0
        %5819 = vmatpush.msra.mxu0 0.0
        %5820 = vmatpush.msra.mxu0 0.0
        %5821 = vmatpush.msra.mxu0 0.0
        %5822 = vmatpush.msra.mxu0 0.0
        %5823 = vmatpush.msra.mxu0 0.0
        %v5824 = vand.u32 %v5638, 4294901760
        %5825 = vmatpush.msra.mxu0 %v5824
        %v5826 = vand.u32 %v5636, 4294901760
        %5827 = vmatpush.msra.mxu0 %v5826
        %v5828 = vand.u32 %v5642, 4294901760
        %5829 = vmatmul.f32.gmra.mxu0 %v5828
        %v5830 = vpop.f32.mrf.mxu0
        %v5831 = vadd.f32 %v5804, %v5830
        %v5832 = vand.u32 %v5645, 4294901760
        %5833 = vmatmul.f32.gmra.mxu0 %v5832
        %v5834 = vpop.f32.mrf.mxu0
        %v5835 = vadd.f32 %v5808, %v5834
        %5836 = vdwg.mxu0
        %5841 = vrot.lane.b32.xlu0 %v3803, 32
        %v5842 = vpop.permute.xlu0 %5841
        %5843 = vrot.lane.b32.xlu0 %v3807, 32
        %v5844 = vpop.permute.xlu0 %5843
        %5845 = vrot.lane.b32.xlu0 %v4007, 32
        %v5846 = vpop.permute.xlu0 %5845
        %5847 = vrot.lane.b32.xlu0 %v4011, 32
        %v5848 = vpop.permute.xlu0 %5847
        %5857 = vrot.lane.b32.xlu0 %v4717, 64
        %v5858 = vpop.permute.xlu0 %5857
        %5859 = vrot.lane.b32.xlu0 %v4721, 64
        %v5860 = vpop.permute.xlu0 %5859
        %5861 = vrot.lane.b32.xlu0 %v4919, 64
        %v5862 = vpop.permute.xlu0 %5861
        %5863 = vrot.lane.b32.xlu0 %v4923, 64
        %v5864 = vpop.permute.xlu0 %5863
        %5873 = vrot.lane.b32.xlu0 %v5629, 96
        %v5874 = vpop.permute.xlu0 %5873
        %5875 = vrot.lane.b32.xlu0 %v5633, 96
        %v5876 = vpop.permute.xlu0 %5875
        %5877 = vrot.lane.b32.xlu0 %v5831, 96
        %v5878 = vpop.permute.xlu0 %5877
        %5879 = vrot.lane.b32.xlu0 %v5835, 96
        %v5880 = vpop.permute.xlu0 %5879
        %v5885 = vsel %vm2203, %v2895, %v5842
        %v5886 = vsel %vm2203, %v2899, %v5844
        %v5887 = vsel %vm2203, %v3091, %v5846
        %v5888 = vsel %vm2203, %v3095, %v5848
        %vm5889 = vcmask 523264
        %v5890 = vsel %vm5889, %v5885, %v5858
        %v5891 = vsel %vm5889, %v5886, %v5860
        %v5892 = vsel %vm5889, %v5887, %v5862
        %v5893 = vsel %vm5889, %v5888, %v5864
        %vm5894 = vcmask 785408
        %v5895 = vsel %vm5894, %v5890, %v5874
        %v5896 = vsel %vm5894, %v5891, %v5876
        %v5897 = vsel %vm5894, %v5892, %v5878
        %v5898 = vsel %vm5894, %v5893, %v5880
        %v5899 = vld [vmem:[%s685] sm:$0xff]
        %v5900 = vld [vmem:[%s685 + $0x8] sm:$0xff]
        %v5901 = vld [vmem:[%s685 + $0x10] sm:$0xff]
        %v5902 = vld [vmem:[%s685 + $0x18] sm:$0xff]
        %v5903 = vld [vmem:[%s685 + $0x20] sm:$0xff]
        %v5904 = vld [vmem:[%s685 + $0x28] sm:$0xff]
        %v5905 = vld [vmem:[%s685 + $0x30] sm:$0xff]
        %v5906 = vld [vmem:[%s685 + $0x38] sm:$0xff]
        %v5907 = vld [vmem:[%s685 + $0x40] sm:$0xff]
        %v5908 = vld [vmem:[%s685 + $0x48] sm:$0xff]
        %v5909 = vld [vmem:[%s685 + $0x50] sm:$0xff]
        %v5910 = vld [vmem:[%s685 + $0x58] sm:$0xff]
        %v5911 = vld [vmem:[%s685 + $0x60] sm:$0xff]
        %v5912 = vld [vmem:[%s685 + $0x68] sm:$0xff]
        %v5913 = vld [vmem:[%s685 + $0x70] sm:$0xff]
        %v5914 = vld [vmem:[%s685 + $0x78] sm:$0xff]
        %v5915 = vand.u32 %v5914, 4294901760
        %5916 = vmatpush.msra.mxu0 %v5915
        %v5917 = vand.u32 %v5913, 4294901760
        %5918 = vmatpush.msra.mxu0 %v5917
        %v5919 = vand.u32 %v5912, 4294901760
        %5920 = vmatpush.msra.mxu0 %v5919
        %v5921 = vand.u32 %v5911, 4294901760
        %5922 = vmatpush.msra.mxu0 %v5921
        %v5923 = vand.u32 %v5910, 4294901760
        %5924 = vmatpush.msra.mxu0 %v5923
        %v5925 = vand.u32 %v5909, 4294901760
        %5926 = vmatpush.msra.mxu0 %v5925
        %v5927 = vand.u32 %v5908, 4294901760
        %5928 = vmatpush.msra.mxu0 %v5927
        %v5929 = vand.u32 %v5907, 4294901760
        %5930 = vmatpush.msra.mxu0 %v5929
        %v5931 = vand.u32 %v5906, 4294901760
        %5932 = vmatpush.msra.mxu0 %v5931
        %v5933 = vand.u32 %v5905, 4294901760
        %5934 = vmatpush.msra.mxu0 %v5933
        %v5935 = vand.u32 %v5904, 4294901760
        %5936 = vmatpush.msra.mxu0 %v5935
        %v5937 = vand.u32 %v5903, 4294901760
        %5938 = vmatpush.msra.mxu0 %v5937
        %v5939 = vand.u32 %v5902, 4294901760
        %5940 = vmatpush.msra.mxu0 %v5939
        %v5941 = vand.u32 %v5901, 4294901760
        %5942 = vmatpush.msra.mxu0 %v5941
        %v5943 = vand.u32 %v5900, 4294901760
        %5944 = vmatpush.msra.mxu0 %v5943
        %v5945 = vand.u32 %v5899, 4294901760
        %5946 = vmatpush.msra.mxu0 %v5945
        %v5947 = vand.u32 %v5895, 4294901760
        %v5948 = vsub.f32 %v5895, %v5947
        %v5949 = vand.u32 %v5948, 4294901760
        %v5950 = vsub.f32 %v5948, %v5949
        %v5951 = vand.u32 %v5950, 4294901760
        %5952 = vmatmul.f32.gmra.mxu0 %v5951
        %v5953 = vpop.f32.mrf.mxu0
        %v5954 = vadd.f32 0.0, %v5953
        %v5955 = vand.u32 %v5896, 4294901760
        %v5956 = vsub.f32 %v5896, %v5955
        %v5957 = vand.u32 %v5956, 4294901760
        %v5958 = vsub.f32 %v5956, %v5957
        %v5959 = vand.u32 %v5958, 4294901760
        %5960 = vmatmul.f32.gmra.mxu0 %v5959
        %v5961 = vpop.f32.mrf.mxu0
        %v5962 = vadd.f32 0.0, %v5961
        %v5963 = vand.u32 %v5897, 4294901760
        %v5964 = vsub.f32 %v5897, %v5963
        %v5965 = vand.u32 %v5964, 4294901760
        %v5966 = vsub.f32 %v5964, %v5965
        %v5967 = vand.u32 %v5966, 4294901760
        %5968 = vmatmul.f32.gmra.mxu0 %v5967
        %v5969 = vpop.f32.mrf.mxu0
        %v5970 = vadd.f32 0.0, %v5969
        %v5971 = vand.u32 %v5898, 4294901760
        %v5972 = vsub.f32 %v5898, %v5971
        %v5973 = vand.u32 %v5972, 4294901760
        %v5974 = vsub.f32 %v5972, %v5973
        %v5975 = vand.u32 %v5974, 4294901760
        %5976 = vmatmul.f32.gmra.mxu0 %v5975
        %v5977 = vpop.f32.mrf.mxu0
        %v5978 = vadd.f32 0.0, %v5977
        %5979 = vdwg.mxu0
        %v5980 = vand.u32 %v5914, 4294901760
        %v5981 = vsub.f32 %v5914, %v5980
        %v5982 = vand.u32 %v5981, 4294901760
        %v5983 = vsub.f32 %v5981, %v5982
        %v5984 = vand.u32 %v5983, 4294901760
        %5985 = vmatpush.msra.mxu0 %v5984
        %v5986 = vand.u32 %v5913, 4294901760
        %v5987 = vsub.f32 %v5913, %v5986
        %v5988 = vand.u32 %v5987, 4294901760
        %v5989 = vsub.f32 %v5987, %v5988
        %v5990 = vand.u32 %v5989, 4294901760
        %5991 = vmatpush.msra.mxu0 %v5990
        %v5992 = vand.u32 %v5912, 4294901760
        %v5993 = vsub.f32 %v5912, %v5992
        %v5994 = vand.u32 %v5993, 4294901760
        %v5995 = vsub.f32 %v5993, %v5994
        %v5996 = vand.u32 %v5995, 4294901760
        %5997 = vmatpush.msra.mxu0 %v5996
        %v5998 = vand.u32 %v5911, 4294901760
        %v5999 = vsub.f32 %v5911, %v5998
        %v6000 = vand.u32 %v5999, 4294901760
        %v6001 = vsub.f32 %v5999, %v6000
        %v6002 = vand.u32 %v6001, 4294901760
        %6003 = vmatpush.msra.mxu0 %v6002
        %v6004 = vand.u32 %v5910, 4294901760
        %v6005 = vsub.f32 %v5910, %v6004
        %v6006 = vand.u32 %v6005, 4294901760
        %v6007 = vsub.f32 %v6005, %v6006
        %v6008 = vand.u32 %v6007, 4294901760
        %6009 = vmatpush.msra.mxu0 %v6008
        %v6010 = vand.u32 %v5909, 4294901760
        %v6011 = vsub.f32 %v5909, %v6010
        %v6012 = vand.u32 %v6011, 4294901760
        %v6013 = vsub.f32 %v6011, %v6012
        %v6014 = vand.u32 %v6013, 4294901760
        %6015 = vmatpush.msra.mxu0 %v6014
        %v6016 = vand.u32 %v5908, 4294901760
        %v6017 = vsub.f32 %v5908, %v6016
        %v6018 = vand.u32 %v6017, 4294901760
        %v6019 = vsub.f32 %v6017, %v6018
        %v6020 = vand.u32 %v6019, 4294901760
        %6021 = vmatpush.msra.mxu0 %v6020
        %v6022 = vand.u32 %v5907, 4294901760
        %v6023 = vsub.f32 %v5907, %v6022
        %v6024 = vand.u32 %v6023, 4294901760
        %v6025 = vsub.f32 %v6023, %v6024
        %v6026 = vand.u32 %v6025, 4294901760
        %6027 = vmatpush.msra.mxu0 %v6026
        %v6028 = vand.u32 %v5906, 4294901760
        %v6029 = vsub.f32 %v5906, %v6028
        %v6030 = vand.u32 %v6029, 4294901760
        %v6031 = vsub.f32 %v6029, %v6030
        %v6032 = vand.u32 %v6031, 4294901760
        %6033 = vmatpush.msra.mxu0 %v6032
        %v6034 = vand.u32 %v5905, 4294901760
        %v6035 = vsub.f32 %v5905, %v6034
        %v6036 = vand.u32 %v6035, 4294901760
        %v6037 = vsub.f32 %v6035, %v6036
        %v6038 = vand.u32 %v6037, 4294901760
        %6039 = vmatpush.msra.mxu0 %v6038
        %v6040 = vand.u32 %v5904, 4294901760
        %v6041 = vsub.f32 %v5904, %v6040
        %v6042 = vand.u32 %v6041, 4294901760
        %v6043 = vsub.f32 %v6041, %v6042
        %v6044 = vand.u32 %v6043, 4294901760
        %6045 = vmatpush.msra.mxu0 %v6044
        %v6046 = vand.u32 %v5903, 4294901760
        %v6047 = vsub.f32 %v5903, %v6046
        %v6048 = vand.u32 %v6047, 4294901760
        %v6049 = vsub.f32 %v6047, %v6048
        %v6050 = vand.u32 %v6049, 4294901760
        %6051 = vmatpush.msra.mxu0 %v6050
        %v6052 = vand.u32 %v5902, 4294901760
        %v6053 = vsub.f32 %v5902, %v6052
        %v6054 = vand.u32 %v6053, 4294901760
        %v6055 = vsub.f32 %v6053, %v6054
        %v6056 = vand.u32 %v6055, 4294901760
        %6057 = vmatpush.msra.mxu0 %v6056
        %v6058 = vand.u32 %v5901, 4294901760
        %v6059 = vsub.f32 %v5901, %v6058
        %v6060 = vand.u32 %v6059, 4294901760
        %v6061 = vsub.f32 %v6059, %v6060
        %v6062 = vand.u32 %v6061, 4294901760
        %6063 = vmatpush.msra.mxu0 %v6062
        %v6064 = vand.u32 %v5900, 4294901760
        %v6065 = vsub.f32 %v5900, %v6064
        %v6066 = vand.u32 %v6065, 4294901760
        %v6067 = vsub.f32 %v6065, %v6066
        %v6068 = vand.u32 %v6067, 4294901760
        %6069 = vmatpush.msra.mxu0 %v6068
        %v6070 = vand.u32 %v5899, 4294901760
        %v6071 = vsub.f32 %v5899, %v6070
        %v6072 = vand.u32 %v6071, 4294901760
        %v6073 = vsub.f32 %v6071, %v6072
        %v6074 = vand.u32 %v6073, 4294901760
        %6075 = vmatpush.msra.mxu0 %v6074
        %v6076 = vand.u32 %v5895, 4294901760
        %6077 = vmatmul.f32.gmra.mxu0 %v6076
        %v6078 = vpop.f32.mrf.mxu0
        %v6079 = vadd.f32 %v5954, %v6078
        %v6080 = vand.u32 %v5896, 4294901760
        %6081 = vmatmul.f32.gmra.mxu0 %v6080
        %v6082 = vpop.f32.mrf.mxu0
        %v6083 = vadd.f32 %v5962, %v6082
        %v6084 = vand.u32 %v5897, 4294901760
        %6085 = vmatmul.f32.gmra.mxu0 %v6084
        %v6086 = vpop.f32.mrf.mxu0
        %v6087 = vadd.f32 %v5970, %v6086
        %v6088 = vand.u32 %v5898, 4294901760
        %6089 = vmatmul.f32.gmra.mxu0 %v6088
        %v6090 = vpop.f32.mrf.mxu0
        %v6091 = vadd.f32 %v5978, %v6090
        %6092 = vdwg.mxu0
        %v6093 = vand.u32 %v5914, 4294901760
        %v6094 = vsub.f32 %v5914, %v6093
        %6095 = vmatpush.msra.mxu0 %v6094
        %v6096 = vand.u32 %v5913, 4294901760
        %v6097 = vsub.f32 %v5913, %v6096
        %6098 = vmatpush.msra.mxu0 %v6097
        %v6099 = vand.u32 %v5912, 4294901760
        %v6100 = vsub.f32 %v5912, %v6099
        %6101 = vmatpush.msra.mxu0 %v6100
        %v6102 = vand.u32 %v5911, 4294901760
        %v6103 = vsub.f32 %v5911, %v6102
        %6104 = vmatpush.msra.mxu0 %v6103
        %v6105 = vand.u32 %v5910, 4294901760
        %v6106 = vsub.f32 %v5910, %v6105
        %6107 = vmatpush.msra.mxu0 %v6106
        %v6108 = vand.u32 %v5909, 4294901760
        %v6109 = vsub.f32 %v5909, %v6108
        %6110 = vmatpush.msra.mxu0 %v6109
        %v6111 = vand.u32 %v5908, 4294901760
        %v6112 = vsub.f32 %v5908, %v6111
        %6113 = vmatpush.msra.mxu0 %v6112
        %v6114 = vand.u32 %v5907, 4294901760
        %v6115 = vsub.f32 %v5907, %v6114
        %6116 = vmatpush.msra.mxu0 %v6115
        %v6117 = vand.u32 %v5906, 4294901760
        %v6118 = vsub.f32 %v5906, %v6117
        %6119 = vmatpush.msra.mxu0 %v6118
        %v6120 = vand.u32 %v5905, 4294901760
        %v6121 = vsub.f32 %v5905, %v6120
        %6122 = vmatpush.msra.mxu0 %v6121
        %v6123 = vand.u32 %v5904, 4294901760
        %v6124 = vsub.f32 %v5904, %v6123
        %6125 = vmatpush.msra.mxu0 %v6124
        %v6126 = vand.u32 %v5903, 4294901760
        %v6127 = vsub.f32 %v5903, %v6126
        %6128 = vmatpush.msra.mxu0 %v6127
        %v6129 = vand.u32 %v5902, 4294901760
        %v6130 = vsub.f32 %v5902, %v6129
        %6131 = vmatpush.msra.mxu0 %v6130
        %v6132 = vand.u32 %v5901, 4294901760
        %v6133 = vsub.f32 %v5901, %v6132
        %6134 = vmatpush.msra.mxu0 %v6133
        %v6135 = vand.u32 %v5900, 4294901760
        %v6136 = vsub.f32 %v5900, %v6135
        %6137 = vmatpush.msra.mxu0 %v6136
        %v6138 = vand.u32 %v5899, 4294901760
        %v6139 = vsub.f32 %v5899, %v6138
        %6140 = vmatpush.msra.mxu0 %v6139
        %v6141 = vand.u32 %v5895, 4294901760
        %v6142 = vsub.f32 %v5895, %v6141
        %6143 = vmatmul.f32.gmra.mxu0 %v6142
        %v6144 = vpop.f32.mrf.mxu0
        %v6145 = vadd.f32 %v6079, %v6144
        %v6146 = vand.u32 %v5896, 4294901760
        %v6147 = vsub.f32 %v5896, %v6146
        %6148 = vmatmul.f32.gmra.mxu0 %v6147
        %v6149 = vpop.f32.mrf.mxu0
        %v6150 = vadd.f32 %v6083, %v6149
        %v6151 = vand.u32 %v5897, 4294901760
        %v6152 = vsub.f32 %v5897, %v6151
        %6153 = vmatmul.f32.gmra.mxu0 %v6152
        %v6154 = vpop.f32.mrf.mxu0
        %v6155 = vadd.f32 %v6087, %v6154
        %v6156 = vand.u32 %v5898, 4294901760
        %v6157 = vsub.f32 %v5898, %v6156
        %6158 = vmatmul.f32.gmra.mxu0 %v6157
        %v6159 = vpop.f32.mrf.mxu0
        %v6160 = vadd.f32 %v6091, %v6159
        %6161 = vdwg.mxu0
        %v6162 = vand.u32 %v5914, 4294901760
        %6163 = vmatpush.msra.mxu0 %v6162
        %v6164 = vand.u32 %v5913, 4294901760
        %6165 = vmatpush.msra.mxu0 %v6164
        %v6166 = vand.u32 %v5912, 4294901760
        %6167 = vmatpush.msra.mxu0 %v6166
        %v6168 = vand.u32 %v5911, 4294901760
        %6169 = vmatpush.msra.mxu0 %v6168
        %v6170 = vand.u32 %v5910, 4294901760
        %6171 = vmatpush.msra.mxu0 %v6170
        %v6172 = vand.u32 %v5909, 4294901760
        %6173 = vmatpush.msra.mxu0 %v6172
        %v6174 = vand.u32 %v5908, 4294901760
        %6175 = vmatpush.msra.mxu0 %v6174
        %v6176 = vand.u32 %v5907, 4294901760
        %6177 = vmatpush.msra.mxu0 %v6176
        %v6178 = vand.u32 %v5906, 4294901760
        %6179 = vmatpush.msra.mxu0 %v6178
        %v6180 = vand.u32 %v5905, 4294901760
        %6181 = vmatpush.msra.mxu0 %v6180
        %v6182 = vand.u32 %v5904, 4294901760
        %6183 = vmatpush.msra.mxu0 %v6182
        %v6184 = vand.u32 %v5903, 4294901760
        %6185 = vmatpush.msra.mxu0 %v6184
        %v6186 = vand.u32 %v5902, 4294901760
        %6187 = vmatpush.msra.mxu0 %v6186
        %v6188 = vand.u32 %v5901, 4294901760
        %6189 = vmatpush.msra.mxu0 %v6188
        %v6190 = vand.u32 %v5900, 4294901760
        %6191 = vmatpush.msra.mxu0 %v6190
        %v6192 = vand.u32 %v5899, 4294901760
        %6193 = vmatpush.msra.mxu0 %v6192
        %v6194 = vand.u32 %v5895, 4294901760
        %v6195 = vsub.f32 %v5895, %v6194
        %v6196 = vand.u32 %v6195, 4294901760
        %6197 = vmatmul.f32.gmra.mxu0 %v6196
        %v6198 = vpop.f32.mrf.mxu0
        %v6199 = vadd.f32 %v6145, %v6198
        %v6200 = vand.u32 %v5896, 4294901760
        %v6201 = vsub.f32 %v5896, %v6200
        %v6202 = vand.u32 %v6201, 4294901760
        %6203 = vmatmul.f32.gmra.mxu0 %v6202
        %v6204 = vpop.f32.mrf.mxu0
        %v6205 = vadd.f32 %v6150, %v6204
        %v6206 = vand.u32 %v5897, 4294901760
        %v6207 = vsub.f32 %v5897, %v6206
        %v6208 = vand.u32 %v6207, 4294901760
        %6209 = vmatmul.f32.gmra.mxu0 %v6208
        %v6210 = vpop.f32.mrf.mxu0
        %v6211 = vadd.f32 %v6155, %v6210
        %v6212 = vand.u32 %v5898, 4294901760
        %v6213 = vsub.f32 %v5898, %v6212
        %v6214 = vand.u32 %v6213, 4294901760
        %6215 = vmatmul.f32.gmra.mxu0 %v6214
        %v6216 = vpop.f32.mrf.mxu0
        %v6217 = vadd.f32 %v6160, %v6216
        %6218 = vdwg.mxu0
        %v6219 = vand.u32 %v5914, 4294901760
        %v6220 = vsub.f32 %v5914, %v6219
        %v6221 = vand.u32 %v6220, 4294901760
        %6222 = vmatpush.msra.mxu0 %v6221
        %v6223 = vand.u32 %v5913, 4294901760
        %v6224 = vsub.f32 %v5913, %v6223
        %v6225 = vand.u32 %v6224, 4294901760
        %6226 = vmatpush.msra.mxu0 %v6225
        %v6227 = vand.u32 %v5912, 4294901760
        %v6228 = vsub.f32 %v5912, %v6227
        %v6229 = vand.u32 %v6228, 4294901760
        %6230 = vmatpush.msra.mxu0 %v6229
        %v6231 = vand.u32 %v5911, 4294901760
        %v6232 = vsub.f32 %v5911, %v6231
        %v6233 = vand.u32 %v6232, 4294901760
        %6234 = vmatpush.msra.mxu0 %v6233
        %v6235 = vand.u32 %v5910, 4294901760
        %v6236 = vsub.f32 %v5910, %v6235
        %v6237 = vand.u32 %v6236, 4294901760
        %6238 = vmatpush.msra.mxu0 %v6237
        %v6239 = vand.u32 %v5909, 4294901760
        %v6240 = vsub.f32 %v5909, %v6239
        %v6241 = vand.u32 %v6240, 4294901760
        %6242 = vmatpush.msra.mxu0 %v6241
        %v6243 = vand.u32 %v5908, 4294901760
        %v6244 = vsub.f32 %v5908, %v6243
        %v6245 = vand.u32 %v6244, 4294901760
        %6246 = vmatpush.msra.mxu0 %v6245
        %v6247 = vand.u32 %v5907, 4294901760
        %v6248 = vsub.f32 %v5907, %v6247
        %v6249 = vand.u32 %v6248, 4294901760
        %6250 = vmatpush.msra.mxu0 %v6249
        %v6251 = vand.u32 %v5906, 4294901760
        %v6252 = vsub.f32 %v5906, %v6251
        %v6253 = vand.u32 %v6252, 4294901760
        %6254 = vmatpush.msra.mxu0 %v6253
        %v6255 = vand.u32 %v5905, 4294901760
        %v6256 = vsub.f32 %v5905, %v6255
        %v6257 = vand.u32 %v6256, 4294901760
        %6258 = vmatpush.msra.mxu0 %v6257
        %v6259 = vand.u32 %v5904, 4294901760
        %v6260 = vsub.f32 %v5904, %v6259
        %v6261 = vand.u32 %v6260, 4294901760
        %6262 = vmatpush.msra.mxu0 %v6261
        %v6263 = vand.u32 %v5903, 4294901760
        %v6264 = vsub.f32 %v5903, %v6263
        %v6265 = vand.u32 %v6264, 4294901760
        %6266 = vmatpush.msra.mxu0 %v6265
        %v6267 = vand.u32 %v5902, 4294901760
        %v6268 = vsub.f32 %v5902, %v6267
        %v6269 = vand.u32 %v6268, 4294901760
        %6270 = vmatpush.msra.mxu0 %v6269
        %v6271 = vand.u32 %v5901, 4294901760
        %v6272 = vsub.f32 %v5901, %v6271
        %v6273 = vand.u32 %v6272, 4294901760
        %6274 = vmatpush.msra.mxu0 %v6273
        %v6275 = vand.u32 %v5900, 4294901760
        %v6276 = vsub.f32 %v5900, %v6275
        %v6277 = vand.u32 %v6276, 4294901760
        %6278 = vmatpush.msra.mxu0 %v6277
        %v6279 = vand.u32 %v5899, 4294901760
        %v6280 = vsub.f32 %v5899, %v6279
        %v6281 = vand.u32 %v6280, 4294901760
        %6282 = vmatpush.msra.mxu0 %v6281
        %v6283 = vand.u32 %v5895, 4294901760
        %6284 = vmatmul.f32.gmra.mxu0 %v6283
        %v6285 = vpop.f32.mrf.mxu0
        %v6286 = vadd.f32 %v6199, %v6285
        %v6287 = vand.u32 %v5896, 4294901760
        %6288 = vmatmul.f32.gmra.mxu0 %v6287
        %v6289 = vpop.f32.mrf.mxu0
        %v6290 = vadd.f32 %v6205, %v6289
        %v6291 = vand.u32 %v5897, 4294901760
        %6292 = vmatmul.f32.gmra.mxu0 %v6291
        %v6293 = vpop.f32.mrf.mxu0
        %v6294 = vadd.f32 %v6211, %v6293
        %v6295 = vand.u32 %v5898, 4294901760
        %6296 = vmatmul.f32.gmra.mxu0 %v6295
        %v6297 = vpop.f32.mrf.mxu0
        %v6298 = vadd.f32 %v6217, %v6297
        %6299 = vdwg.mxu0
        %v6300 = vand.u32 %v5914, 4294901760
        %6301 = vmatpush.msra.mxu0 %v6300
        %v6302 = vand.u32 %v5913, 4294901760
        %6303 = vmatpush.msra.mxu0 %v6302
        %v6304 = vand.u32 %v5912, 4294901760
        %6305 = vmatpush.msra.mxu0 %v6304
        %v6306 = vand.u32 %v5911, 4294901760
        %6307 = vmatpush.msra.mxu0 %v6306
        %v6308 = vand.u32 %v5910, 4294901760
        %6309 = vmatpush.msra.mxu0 %v6308
        %v6310 = vand.u32 %v5909, 4294901760
        %6311 = vmatpush.msra.mxu0 %v6310
        %v6312 = vand.u32 %v5908, 4294901760
        %6313 = vmatpush.msra.mxu0 %v6312
        %v6314 = vand.u32 %v5907, 4294901760
        %6315 = vmatpush.msra.mxu0 %v6314
        %v6316 = vand.u32 %v5906, 4294901760
        %6317 = vmatpush.msra.mxu0 %v6316
        %v6318 = vand.u32 %v5905, 4294901760
        %6319 = vmatpush.msra.mxu0 %v6318
        %v6320 = vand.u32 %v5904, 4294901760
        %6321 = vmatpush.msra.mxu0 %v6320
        %v6322 = vand.u32 %v5903, 4294901760
        %6323 = vmatpush.msra.mxu0 %v6322
        %v6324 = vand.u32 %v5902, 4294901760
        %6325 = vmatpush.msra.mxu0 %v6324
        %v6326 = vand.u32 %v5901, 4294901760
        %6327 = vmatpush.msra.mxu0 %v6326
        %v6328 = vand.u32 %v5900, 4294901760
        %6329 = vmatpush.msra.mxu0 %v6328
        %v6330 = vand.u32 %v5899, 4294901760
        %6331 = vmatpush.msra.mxu0 %v6330
        %v6332 = vand.u32 %v5895, 4294901760
        %6333 = vmatmul.f32.gmra.mxu0 %v6332
        %v6334 = vpop.f32.mrf.mxu0
        %v6335 = vadd.f32 %v6286, %v6334
        %v6336 = vand.u32 %v5896, 4294901760
        %6337 = vmatmul.f32.gmra.mxu0 %v6336
        %v6338 = vpop.f32.mrf.mxu0
        %v6339 = vadd.f32 %v6290, %v6338
        %v6340 = vand.u32 %v5897, 4294901760
        %6341 = vmatmul.f32.gmra.mxu0 %v6340
        %v6342 = vpop.f32.mrf.mxu0
        %v6343 = vadd.f32 %v6294, %v6342
        %v6344 = vand.u32 %v5898, 4294901760
        %6345 = vmatmul.f32.gmra.mxu0 %v6344
        %v6346 = vpop.f32.mrf.mxu0
        %v6347 = vadd.f32 %v6298, %v6346
        %6348 = vdwg.mxu0
        %v6349 = vadd.f32 %v845, %v6335
        %v6350 = vadd.f32 %v846, %v6339
        %v6351 = vadd.f32 %v847, %v6343
        %v6352 = vadd.f32 %v848, %v6347
        %v6353 = vld [vmem:[%s694] sm:$0x1]
        %v6354 = vld [vmem:[%s703] sm:$0x1]
        %6355 = vadd.xlane.f32.xlu0 %v6349
        %v6356 = vpop.xlane.xlu0 %6355
        %6357 = vadd.xlane.f32.xlu0 %v6350
        %v6358 = vpop.xlane.xlu0 %6357
        %6359 = vadd.xlane.f32.xlu0 %v6351
        %v6360 = vpop.xlane.xlu0 %6359
        %6361 = vadd.xlane.f32.xlu0 %v6352
        %v6362 = vpop.xlane.xlu0 %6361
        %v6363 = vrcp.pop 128.0
        %v6364 = vmul.f32 128.0, %v6363
        %v6365 = vsub.f32 1.0, %v6364
        %v6366 = vmul.f32 %v6363, %v6365
        %v6367 = vadd.f32 %v6363, %v6366
        %vm6368 = vweird.f32 %v6363
        %v6369 = vsel %vm6368, %v6363, %v6367
        %v6370 = vmul.f32 %v6356, %v6369
        %v6371 = vmul.f32 %v6358, %v6369
        %v6372 = vmul.f32 %v6360, %v6369
        %v6373 = vmul.f32 %v6362, %v6369
        %v6374 = vsub.f32 %v6349, %v6370
        %v6375 = vsub.f32 %v6350, %v6371
        %v6376 = vsub.f32 %v6351, %v6372
        %v6377 = vsub.f32 %v6352, %v6373
        %v6378 = vmul.f32 %v6374, %v6374
        %v6379 = vmul.f32 %v6375, %v6375
        %v6380 = vmul.f32 %v6376, %v6376
        %v6381 = vmul.f32 %v6377, %v6377
        %6382 = vadd.xlane.f32.xlu0 %v6378
        %v6383 = vpop.xlane.xlu0 %6382
        %6384 = vadd.xlane.f32.xlu0 %v6379
        %v6385 = vpop.xlane.xlu0 %6384
        %6386 = vadd.xlane.f32.xlu0 %v6380
        %v6387 = vpop.xlane.xlu0 %6386
        %6388 = vadd.xlane.f32.xlu0 %v6381
        %v6389 = vpop.xlane.xlu0 %6388
        %v6390 = vmul.f32 %v6383, %v6369
        %v6391 = vmul.f32 %v6385, %v6369
        %v6392 = vmul.f32 %v6387, %v6369
        %v6393 = vmul.f32 %v6389, %v6369
        %v6394 = vadd.f32 %v6390, 1e-05
        %v6395 = vadd.f32 %v6391, 1e-05
        %v6396 = vadd.f32 %v6392, 1e-05
        %v6397 = vadd.f32 %v6393, 1e-05
        %v6398 = vrsqrt.pop %v6394
        %v6399 = vmul.f32 %v6398, %v6394
        %v6400 = vmul.f32 %v6399, %v6398
        %v6401 = vmul.f32 0.5, %v6400
        %v6402 = vsub.f32 1.5, %v6401
        %v6403 = vmul.f32 %v6398, %v6402
        %vm6404 = vweird.f32 %v6394
        %vm6405 = vweird.f32 %v6398
        %vm6406 = vmor %vm6404, %vm6405
        %v6407 = vsel %vm6406, %v6398, %v6403
        %v6408 = vrsqrt.pop %v6395
        %v6409 = vmul.f32 %v6408, %v6395
        %v6410 = vmul.f32 %v6409, %v6408
        %v6411 = vmul.f32 0.5, %v6410
        %v6412 = vsub.f32 1.5, %v6411
        %v6413 = vmul.f32 %v6408, %v6412
        %vm6414 = vweird.f32 %v6395
        %vm6415 = vweird.f32 %v6408
        %vm6416 = vmor %vm6414, %vm6415
        %v6417 = vsel %vm6416, %v6408, %v6413
        %v6418 = vrsqrt.pop %v6396
        %v6419 = vmul.f32 %v6418, %v6396
        %v6420 = vmul.f32 %v6419, %v6418
        %v6421 = vmul.f32 0.5, %v6420
        %v6422 = vsub.f32 1.5, %v6421
        %v6423 = vmul.f32 %v6418, %v6422
        %vm6424 = vweird.f32 %v6396
        %vm6425 = vweird.f32 %v6418
        %vm6426 = vmor %vm6424, %vm6425
        %v6427 = vsel %vm6426, %v6418, %v6423
        %v6428 = vrsqrt.pop %v6397
        %v6429 = vmul.f32 %v6428, %v6397
        %v6430 = vmul.f32 %v6429, %v6428
        %v6431 = vmul.f32 0.5, %v6430
        %v6432 = vsub.f32 1.5, %v6431
        %v6433 = vmul.f32 %v6428, %v6432
        %vm6434 = vweird.f32 %v6397
        %vm6435 = vweird.f32 %v6428
        %vm6436 = vmor %vm6434, %vm6435
        %v6437 = vsel %vm6436, %v6428, %v6433
        %v6438 = vmul.f32 %v6374, %v6407
        %v6439 = vmul.f32 %v6375, %v6417
        %v6440 = vmul.f32 %v6376, %v6427
        %v6441 = vmul.f32 %v6377, %v6437
        %v6443 = vperm.slane %v6353, 0
        %v6445 = vmul.f32 %v6438, %v6443
        %v6446 = vmul.f32 %v6439, %v6443
        %v6447 = vmul.f32 %v6440, %v6443
        %v6448 = vmul.f32 %v6441, %v6443
        %v6450 = vperm.slane %v6354, 0
        %v6452 = vadd.f32 %v6445, %v6450
        %v6453 = vadd.f32 %v6446, %v6450
        %v6454 = vadd.f32 %v6447, %v6450
        %v6455 = vadd.f32 %v6448, %v6450
        %v6456 = vld [vmem:[%s713] sm:$0xff]
        %v6457 = vld [vmem:[%s713 + $0x8] sm:$0xff]
        %v6458 = vld [vmem:[%s713 + $0x10] sm:$0xff]
        %v6459 = vld [vmem:[%s713 + $0x18] sm:$0xff]
        %v6460 = vld [vmem:[%s713 + $0x20] sm:$0xff]
        %v6461 = vld [vmem:[%s713 + $0x28] sm:$0xff]
        %v6462 = vld [vmem:[%s713 + $0x30] sm:$0xff]
        %v6463 = vld [vmem:[%s713 + $0x38] sm:$0xff]
        %v6464 = vld [vmem:[%s713 + $0x40] sm:$0xff]
        %v6465 = vld [vmem:[%s713 + $0x48] sm:$0xff]
        %v6466 = vld [vmem:[%s713 + $0x50] sm:$0xff]
        %v6467 = vld [vmem:[%s713 + $0x58] sm:$0xff]
        %v6468 = vld [vmem:[%s713 + $0x60] sm:$0xff]
        %v6469 = vld [vmem:[%s713 + $0x68] sm:$0xff]
        %v6470 = vld [vmem:[%s713 + $0x70] sm:$0xff]
        %v6471 = vld [vmem:[%s713 + $0x78] sm:$0xff]
        %v6472 = vld [vmem:[%s713 + $0x80] sm:$0xff]
        %v6473 = vld [vmem:[%s713 + $0x88] sm:$0xff]
        %v6474 = vld [vmem:[%s713 + $0x90] sm:$0xff]
        %v6475 = vld [vmem:[%s713 + $0x98] sm:$0xff]
        %v6476 = vld [vmem:[%s713 + $0xa0] sm:$0xff]
        %v6477 = vld [vmem:[%s713 + $0xa8] sm:$0xff]
        %v6478 = vld [vmem:[%s713 + $0xb0] sm:$0xff]
        %v6479 = vld [vmem:[%s713 + $0xb8] sm:$0xff]
        %v6480 = vld [vmem:[%s713 + $0xc0] sm:$0xff]
        %v6481 = vld [vmem:[%s713 + $0xc8] sm:$0xff]
        %v6482 = vld [vmem:[%s713 + $0xd0] sm:$0xff]
        %v6483 = vld [vmem:[%s713 + $0xd8] sm:$0xff]
        %v6484 = vld [vmem:[%s713 + $0xe0] sm:$0xff]
        %v6485 = vld [vmem:[%s713 + $0xe8] sm:$0xff]
        %v6486 = vld [vmem:[%s713 + $0xf0] sm:$0xff]
        %v6487 = vld [vmem:[%s713 + $0xf8] sm:$0xff]
        %v6488 = vld [vmem:[%s828] sm:$0x3]
        %v6490 = vperm.slane %v6488, 0
        %v6491 = vperm.slane %v6488, 1
        %v6494 = vand.u32 %v6486, 4294901760
        %6495 = vmatpush.msra.mxu0 %v6494
        %v6496 = vand.u32 %v6484, 4294901760
        %6497 = vmatpush.msra.mxu0 %v6496
        %v6498 = vand.u32 %v6482, 4294901760
        %6499 = vmatpush.msra.mxu0 %v6498
        %v6500 = vand.u32 %v6480, 4294901760
        %6501 = vmatpush.msra.mxu0 %v6500
        %v6502 = vand.u32 %v6478, 4294901760
        %6503 = vmatpush.msra.mxu0 %v6502
        %v6504 = vand.u32 %v6476, 4294901760
        %6505 = vmatpush.msra.mxu0 %v6504
        %v6506 = vand.u32 %v6474, 4294901760
        %6507 = vmatpush.msra.mxu0 %v6506
        %v6508 = vand.u32 %v6472, 4294901760
        %6509 = vmatpush.msra.mxu0 %v6508
        %v6510 = vand.u32 %v6470, 4294901760
        %6511 = vmatpush.msra.mxu0 %v6510
        %v6512 = vand.u32 %v6468, 4294901760
        %6513 = vmatpush.msra.mxu0 %v6512
        %v6514 = vand.u32 %v6466, 4294901760
        %6515 = vmatpush.msra.mxu0 %v6514
        %v6516 = vand.u32 %v6464, 4294901760
        %6517 = vmatpush.msra.mxu0 %v6516
        %v6518 = vand.u32 %v6462, 4294901760
        %6519 = vmatpush.msra.mxu0 %v6518
        %v6520 = vand.u32 %v6460, 4294901760
        %6521 = vmatpush.msra.mxu0 %v6520
        %v6522 = vand.u32 %v6458, 4294901760
        %6523 = vmatpush.msra.mxu0 %v6522
        %v6524 = vand.u32 %v6456, 4294901760
        %6525 = vmatpush.msra.mxu0 %v6524
        %v6526 = vand.u32 %v6452, 4294901760
        %v6527 = vsub.f32 %v6452, %v6526
        %v6528 = vand.u32 %v6527, 4294901760
        %v6529 = vsub.f32 %v6527, %v6528
        %v6530 = vand.u32 %v6529, 4294901760
        %6531 = vmatmul.f32.gmra.mxu0 %v6530
        %v6532 = vpop.f32.mrf.mxu0
        %v6533 = vadd.f32 %v6490, %v6532
        %v6534 = vand.u32 %v6453, 4294901760
        %v6535 = vsub.f32 %v6453, %v6534
        %v6536 = vand.u32 %v6535, 4294901760
        %v6537 = vsub.f32 %v6535, %v6536
        %v6538 = vand.u32 %v6537, 4294901760
        %6539 = vmatmul.f32.gmra.mxu0 %v6538
        %v6540 = vpop.f32.mrf.mxu0
        %v6541 = vadd.f32 %v6490, %v6540
        %v6542 = vand.u32 %v6454, 4294901760
        %v6543 = vsub.f32 %v6454, %v6542
        %v6544 = vand.u32 %v6543, 4294901760
        %v6545 = vsub.f32 %v6543, %v6544
        %v6546 = vand.u32 %v6545, 4294901760
        %6547 = vmatmul.f32.gmra.mxu0 %v6546
        %v6548 = vpop.f32.mrf.mxu0
        %v6549 = vadd.f32 %v6490, %v6548
        %v6550 = vand.u32 %v6455, 4294901760
        %v6551 = vsub.f32 %v6455, %v6550
        %v6552 = vand.u32 %v6551, 4294901760
        %v6553 = vsub.f32 %v6551, %v6552
        %v6554 = vand.u32 %v6553, 4294901760
        %6555 = vmatmul.f32.gmra.mxu0 %v6554
        %v6556 = vpop.f32.mrf.mxu0
        %v6557 = vadd.f32 %v6490, %v6556
        %6558 = vdwg.mxu0
        %v6559 = vand.u32 %v6486, 4294901760
        %v6560 = vsub.f32 %v6486, %v6559
        %v6561 = vand.u32 %v6560, 4294901760
        %v6562 = vsub.f32 %v6560, %v6561
        %v6563 = vand.u32 %v6562, 4294901760
        %6564 = vmatpush.msra.mxu0 %v6563
        %v6565 = vand.u32 %v6484, 4294901760
        %v6566 = vsub.f32 %v6484, %v6565
        %v6567 = vand.u32 %v6566, 4294901760
        %v6568 = vsub.f32 %v6566, %v6567
        %v6569 = vand.u32 %v6568, 4294901760
        %6570 = vmatpush.msra.mxu0 %v6569
        %v6571 = vand.u32 %v6482, 4294901760
        %v6572 = vsub.f32 %v6482, %v6571
        %v6573 = vand.u32 %v6572, 4294901760
        %v6574 = vsub.f32 %v6572, %v6573
        %v6575 = vand.u32 %v6574, 4294901760
        %6576 = vmatpush.msra.mxu0 %v6575
        %v6577 = vand.u32 %v6480, 4294901760
        %v6578 = vsub.f32 %v6480, %v6577
        %v6579 = vand.u32 %v6578, 4294901760
        %v6580 = vsub.f32 %v6578, %v6579
        %v6581 = vand.u32 %v6580, 4294901760
        %6582 = vmatpush.msra.mxu0 %v6581
        %v6583 = vand.u32 %v6478, 4294901760
        %v6584 = vsub.f32 %v6478, %v6583
        %v6585 = vand.u32 %v6584, 4294901760
        %v6586 = vsub.f32 %v6584, %v6585
        %v6587 = vand.u32 %v6586, 4294901760
        %6588 = vmatpush.msra.mxu0 %v6587
        %v6589 = vand.u32 %v6476, 4294901760
        %v6590 = vsub.f32 %v6476, %v6589
        %v6591 = vand.u32 %v6590, 4294901760
        %v6592 = vsub.f32 %v6590, %v6591
        %v6593 = vand.u32 %v6592, 4294901760
        %6594 = vmatpush.msra.mxu0 %v6593
        %v6595 = vand.u32 %v6474, 4294901760
        %v6596 = vsub.f32 %v6474, %v6595
        %v6597 = vand.u32 %v6596, 4294901760
        %v6598 = vsub.f32 %v6596, %v6597
        %v6599 = vand.u32 %v6598, 4294901760
        %6600 = vmatpush.msra.mxu0 %v6599
        %v6601 = vand.u32 %v6472, 4294901760
        %v6602 = vsub.f32 %v6472, %v6601
        %v6603 = vand.u32 %v6602, 4294901760
        %v6604 = vsub.f32 %v6602, %v6603
        %v6605 = vand.u32 %v6604, 4294901760
        %6606 = vmatpush.msra.mxu0 %v6605
        %v6607 = vand.u32 %v6470, 4294901760
        %v6608 = vsub.f32 %v6470, %v6607
        %v6609 = vand.u32 %v6608, 4294901760
        %v6610 = vsub.f32 %v6608, %v6609
        %v6611 = vand.u32 %v6610, 4294901760
        %6612 = vmatpush.msra.mxu0 %v6611
        %v6613 = vand.u32 %v6468, 4294901760
        %v6614 = vsub.f32 %v6468, %v6613
        %v6615 = vand.u32 %v6614, 4294901760
        %v6616 = vsub.f32 %v6614, %v6615
        %v6617 = vand.u32 %v6616, 4294901760
        %6618 = vmatpush.msra.mxu0 %v6617
        %v6619 = vand.u32 %v6466, 4294901760
        %v6620 = vsub.f32 %v6466, %v6619
        %v6621 = vand.u32 %v6620, 4294901760
        %v6622 = vsub.f32 %v6620, %v6621
        %v6623 = vand.u32 %v6622, 4294901760
        %6624 = vmatpush.msra.mxu0 %v6623
        %v6625 = vand.u32 %v6464, 4294901760
        %v6626 = vsub.f32 %v6464, %v6625
        %v6627 = vand.u32 %v6626, 4294901760
        %v6628 = vsub.f32 %v6626, %v6627
        %v6629 = vand.u32 %v6628, 4294901760
        %6630 = vmatpush.msra.mxu0 %v6629
        %v6631 = vand.u32 %v6462, 4294901760
        %v6632 = vsub.f32 %v6462, %v6631
        %v6633 = vand.u32 %v6632, 4294901760
        %v6634 = vsub.f32 %v6632, %v6633
        %v6635 = vand.u32 %v6634, 4294901760
        %6636 = vmatpush.msra.mxu0 %v6635
        %v6637 = vand.u32 %v6460, 4294901760
        %v6638 = vsub.f32 %v6460, %v6637
        %v6639 = vand.u32 %v6638, 4294901760
        %v6640 = vsub.f32 %v6638, %v6639
        %v6641 = vand.u32 %v6640, 4294901760
        %6642 = vmatpush.msra.mxu0 %v6641
        %v6643 = vand.u32 %v6458, 4294901760
        %v6644 = vsub.f32 %v6458, %v6643
        %v6645 = vand.u32 %v6644, 4294901760
        %v6646 = vsub.f32 %v6644, %v6645
        %v6647 = vand.u32 %v6646, 4294901760
        %6648 = vmatpush.msra.mxu0 %v6647
        %v6649 = vand.u32 %v6456, 4294901760
        %v6650 = vsub.f32 %v6456, %v6649
        %v6651 = vand.u32 %v6650, 4294901760
        %v6652 = vsub.f32 %v6650, %v6651
        %v6653 = vand.u32 %v6652, 4294901760
        %6654 = vmatpush.msra.mxu0 %v6653
        %v6655 = vand.u32 %v6452, 4294901760
        %6656 = vmatmul.f32.gmra.mxu0 %v6655
        %v6657 = vpop.f32.mrf.mxu0
        %v6658 = vadd.f32 %v6533, %v6657
        %v6659 = vand.u32 %v6453, 4294901760
        %6660 = vmatmul.f32.gmra.mxu0 %v6659
        %v6661 = vpop.f32.mrf.mxu0
        %v6662 = vadd.f32 %v6541, %v6661
        %v6663 = vand.u32 %v6454, 4294901760
        %6664 = vmatmul.f32.gmra.mxu0 %v6663
        %v6665 = vpop.f32.mrf.mxu0
        %v6666 = vadd.f32 %v6549, %v6665
        %v6667 = vand.u32 %v6455, 4294901760
        %6668 = vmatmul.f32.gmra.mxu0 %v6667
        %v6669 = vpop.f32.mrf.mxu0
        %v6670 = vadd.f32 %v6557, %v6669
        %6671 = vdwg.mxu0
        %v6672 = vand.u32 %v6486, 4294901760
        %v6673 = vsub.f32 %v6486, %v6672
        %6674 = vmatpush.msra.mxu0 %v6673
        %v6675 = vand.u32 %v6484, 4294901760
        %v6676 = vsub.f32 %v6484, %v6675
        %6677 = vmatpush.msra.mxu0 %v6676
        %v6678 = vand.u32 %v6482, 4294901760
        %v6679 = vsub.f32 %v6482, %v6678
        %6680 = vmatpush.msra.mxu0 %v6679
        %v6681 = vand.u32 %v6480, 4294901760
        %v6682 = vsub.f32 %v6480, %v6681
        %6683 = vmatpush.msra.mxu0 %v6682
        %v6684 = vand.u32 %v6478, 4294901760
        %v6685 = vsub.f32 %v6478, %v6684
        %6686 = vmatpush.msra.mxu0 %v6685
        %v6687 = vand.u32 %v6476, 4294901760
        %v6688 = vsub.f32 %v6476, %v6687
        %6689 = vmatpush.msra.mxu0 %v6688
        %v6690 = vand.u32 %v6474, 4294901760
        %v6691 = vsub.f32 %v6474, %v6690
        %6692 = vmatpush.msra.mxu0 %v6691
        %v6693 = vand.u32 %v6472, 4294901760
        %v6694 = vsub.f32 %v6472, %v6693
        %6695 = vmatpush.msra.mxu0 %v6694
        %v6696 = vand.u32 %v6470, 4294901760
        %v6697 = vsub.f32 %v6470, %v6696
        %6698 = vmatpush.msra.mxu0 %v6697
        %v6699 = vand.u32 %v6468, 4294901760
        %v6700 = vsub.f32 %v6468, %v6699
        %6701 = vmatpush.msra.mxu0 %v6700
        %v6702 = vand.u32 %v6466, 4294901760
        %v6703 = vsub.f32 %v6466, %v6702
        %6704 = vmatpush.msra.mxu0 %v6703
        %v6705 = vand.u32 %v6464, 4294901760
        %v6706 = vsub.f32 %v6464, %v6705
        %6707 = vmatpush.msra.mxu0 %v6706
        %v6708 = vand.u32 %v6462, 4294901760
        %v6709 = vsub.f32 %v6462, %v6708
        %6710 = vmatpush.msra.mxu0 %v6709
        %v6711 = vand.u32 %v6460, 4294901760
        %v6712 = vsub.f32 %v6460, %v6711
        %6713 = vmatpush.msra.mxu0 %v6712
        %v6714 = vand.u32 %v6458, 4294901760
        %v6715 = vsub.f32 %v6458, %v6714
        %6716 = vmatpush.msra.mxu0 %v6715
        %v6717 = vand.u32 %v6456, 4294901760
        %v6718 = vsub.f32 %v6456, %v6717
        %6719 = vmatpush.msra.mxu0 %v6718
        %v6720 = vand.u32 %v6452, 4294901760
        %v6721 = vsub.f32 %v6452, %v6720
        %6722 = vmatmul.f32.gmra.mxu0 %v6721
        %v6723 = vpop.f32.mrf.mxu0
        %v6724 = vadd.f32 %v6658, %v6723
        %v6725 = vand.u32 %v6453, 4294901760
        %v6726 = vsub.f32 %v6453, %v6725
        %6727 = vmatmul.f32.gmra.mxu0 %v6726
        %v6728 = vpop.f32.mrf.mxu0
        %v6729 = vadd.f32 %v6662, %v6728
        %v6730 = vand.u32 %v6454, 4294901760
        %v6731 = vsub.f32 %v6454, %v6730
        %6732 = vmatmul.f32.gmra.mxu0 %v6731
        %v6733 = vpop.f32.mrf.mxu0
        %v6734 = vadd.f32 %v6666, %v6733
        %v6735 = vand.u32 %v6455, 4294901760
        %v6736 = vsub.f32 %v6455, %v6735
        %6737 = vmatmul.f32.gmra.mxu0 %v6736
        %v6738 = vpop.f32.mrf.mxu0
        %v6739 = vadd.f32 %v6670, %v6738
        %6740 = vdwg.mxu0
        %v6741 = vand.u32 %v6486, 4294901760
        %6742 = vmatpush.msra.mxu0 %v6741
        %v6743 = vand.u32 %v6484, 4294901760
        %6744 = vmatpush.msra.mxu0 %v6743
        %v6745 = vand.u32 %v6482, 4294901760
        %6746 = vmatpush.msra.mxu0 %v6745
        %v6747 = vand.u32 %v6480, 4294901760
        %6748 = vmatpush.msra.mxu0 %v6747
        %v6749 = vand.u32 %v6478, 4294901760
        %6750 = vmatpush.msra.mxu0 %v6749
        %v6751 = vand.u32 %v6476, 4294901760
        %6752 = vmatpush.msra.mxu0 %v6751
        %v6753 = vand.u32 %v6474, 4294901760
        %6754 = vmatpush.msra.mxu0 %v6753
        %v6755 = vand.u32 %v6472, 4294901760
        %6756 = vmatpush.msra.mxu0 %v6755
        %v6757 = vand.u32 %v6470, 4294901760
        %6758 = vmatpush.msra.mxu0 %v6757
        %v6759 = vand.u32 %v6468, 4294901760
        %6760 = vmatpush.msra.mxu0 %v6759
        %v6761 = vand.u32 %v6466, 4294901760
        %6762 = vmatpush.msra.mxu0 %v6761
        %v6763 = vand.u32 %v6464, 4294901760
        %6764 = vmatpush.msra.mxu0 %v6763
        %v6765 = vand.u32 %v6462, 4294901760
        %6766 = vmatpush.msra.mxu0 %v6765
        %v6767 = vand.u32 %v6460, 4294901760
        %6768 = vmatpush.msra.mxu0 %v6767
        %v6769 = vand.u32 %v6458, 4294901760
        %6770 = vmatpush.msra.mxu0 %v6769
        %v6771 = vand.u32 %v6456, 4294901760
        %6772 = vmatpush.msra.mxu0 %v6771
        %v6773 = vand.u32 %v6452, 4294901760
        %v6774 = vsub.f32 %v6452, %v6773
        %v6775 = vand.u32 %v6774, 4294901760
        %6776 = vmatmul.f32.gmra.mxu0 %v6775
        %v6777 = vpop.f32.mrf.mxu0
        %v6778 = vadd.f32 %v6724, %v6777
        %v6779 = vand.u32 %v6453, 4294901760
        %v6780 = vsub.f32 %v6453, %v6779
        %v6781 = vand.u32 %v6780, 4294901760
        %6782 = vmatmul.f32.gmra.mxu0 %v6781
        %v6783 = vpop.f32.mrf.mxu0
        %v6784 = vadd.f32 %v6729, %v6783
        %v6785 = vand.u32 %v6454, 4294901760
        %v6786 = vsub.f32 %v6454, %v6785
        %v6787 = vand.u32 %v6786, 4294901760
        %6788 = vmatmul.f32.gmra.mxu0 %v6787
        %v6789 = vpop.f32.mrf.mxu0
        %v6790 = vadd.f32 %v6734, %v6789
        %v6791 = vand.u32 %v6455, 4294901760
        %v6792 = vsub.f32 %v6455, %v6791
        %v6793 = vand.u32 %v6792, 4294901760
        %6794 = vmatmul.f32.gmra.mxu0 %v6793
        %v6795 = vpop.f32.mrf.mxu0
        %v6796 = vadd.f32 %v6739, %v6795
        %6797 = vdwg.mxu0
        %v6798 = vand.u32 %v6486, 4294901760
        %v6799 = vsub.f32 %v6486, %v6798
        %v6800 = vand.u32 %v6799, 4294901760
        %6801 = vmatpush.msra.mxu0 %v6800
        %v6802 = vand.u32 %v6484, 4294901760
        %v6803 = vsub.f32 %v6484, %v6802
        %v6804 = vand.u32 %v6803, 4294901760
        %6805 = vmatpush.msra.mxu0 %v6804
        %v6806 = vand.u32 %v6482, 4294901760
        %v6807 = vsub.f32 %v6482, %v6806
        %v6808 = vand.u32 %v6807, 4294901760
        %6809 = vmatpush.msra.mxu0 %v6808
        %v6810 = vand.u32 %v6480, 4294901760
        %v6811 = vsub.f32 %v6480, %v6810
        %v6812 = vand.u32 %v6811, 4294901760
        %6813 = vmatpush.msra.mxu0 %v6812
        %v6814 = vand.u32 %v6478, 4294901760
        %v6815 = vsub.f32 %v6478, %v6814
        %v6816 = vand.u32 %v6815, 4294901760
        %6817 = vmatpush.msra.mxu0 %v6816
        %v6818 = vand.u32 %v6476, 4294901760
        %v6819 = vsub.f32 %v6476, %v6818
        %v6820 = vand.u32 %v6819, 4294901760
        %6821 = vmatpush.msra.mxu0 %v6820
        %v6822 = vand.u32 %v6474, 4294901760
        %v6823 = vsub.f32 %v6474, %v6822
        %v6824 = vand.u32 %v6823, 4294901760
        %6825 = vmatpush.msra.mxu0 %v6824
        %v6826 = vand.u32 %v6472, 4294901760
        %v6827 = vsub.f32 %v6472, %v6826
        %v6828 = vand.u32 %v6827, 4294901760
        %6829 = vmatpush.msra.mxu0 %v6828
        %v6830 = vand.u32 %v6470, 4294901760
        %v6831 = vsub.f32 %v6470, %v6830
        %v6832 = vand.u32 %v6831, 4294901760
        %6833 = vmatpush.msra.mxu0 %v6832
        %v6834 = vand.u32 %v6468, 4294901760
        %v6835 = vsub.f32 %v6468, %v6834
        %v6836 = vand.u32 %v6835, 4294901760
        %6837 = vmatpush.msra.mxu0 %v6836
        %v6838 = vand.u32 %v6466, 4294901760
        %v6839 = vsub.f32 %v6466, %v6838
        %v6840 = vand.u32 %v6839, 4294901760
        %6841 = vmatpush.msra.mxu0 %v6840
        %v6842 = vand.u32 %v6464, 4294901760
        %v6843 = vsub.f32 %v6464, %v6842
        %v6844 = vand.u32 %v6843, 4294901760
        %6845 = vmatpush.msra.mxu0 %v6844
        %v6846 = vand.u32 %v6462, 4294901760
        %v6847 = vsub.f32 %v6462, %v6846
        %v6848 = vand.u32 %v6847, 4294901760
        %6849 = vmatpush.msra.mxu0 %v6848
        %v6850 = vand.u32 %v6460, 4294901760
        %v6851 = vsub.f32 %v6460, %v6850
        %v6852 = vand.u32 %v6851, 4294901760
        %6853 = vmatpush.msra.mxu0 %v6852
        %v6854 = vand.u32 %v6458, 4294901760
        %v6855 = vsub.f32 %v6458, %v6854
        %v6856 = vand.u32 %v6855, 4294901760
        %6857 = vmatpush.msra.mxu0 %v6856
        %v6858 = vand.u32 %v6456, 4294901760
        %v6859 = vsub.f32 %v6456, %v6858
        %v6860 = vand.u32 %v6859, 4294901760
        %6861 = vmatpush.msra.mxu0 %v6860
        %v6862 = vand.u32 %v6452, 4294901760
        %6863 = vmatmul.f32.gmra.mxu0 %v6862
        %v6864 = vpop.f32.mrf.mxu0
        %v6865 = vadd.f32 %v6778, %v6864
        %v6866 = vand.u32 %v6453, 4294901760
        %6867 = vmatmul.f32.gmra.mxu0 %v6866
        %v6868 = vpop.f32.mrf.mxu0
        %v6869 = vadd.f32 %v6784, %v6868
        %v6870 = vand.u32 %v6454, 4294901760
        %6871 = vmatmul.f32.gmra.mxu0 %v6870
        %v6872 = vpop.f32.mrf.mxu0
        %v6873 = vadd.f32 %v6790, %v6872
        %v6874 = vand.u32 %v6455, 4294901760
        %6875 = vmatmul.f32.gmra.mxu0 %v6874
        %v6876 = vpop.f32.mrf.mxu0
        %v6877 = vadd.f32 %v6796, %v6876
        %6878 = vdwg.mxu0
        %v6879 = vand.u32 %v6486, 4294901760
        %6880 = vmatpush.msra.mxu0 %v6879
        %v6881 = vand.u32 %v6484, 4294901760
        %6882 = vmatpush.msra.mxu0 %v6881
        %v6883 = vand.u32 %v6482, 4294901760
        %6884 = vmatpush.msra.mxu0 %v6883
        %v6885 = vand.u32 %v6480, 4294901760
        %6886 = vmatpush.msra.mxu0 %v6885
        %v6887 = vand.u32 %v6478, 4294901760
        %6888 = vmatpush.msra.mxu0 %v6887
        %v6889 = vand.u32 %v6476, 4294901760
        %6890 = vmatpush.msra.mxu0 %v6889
        %v6891 = vand.u32 %v6474, 4294901760
        %6892 = vmatpush.msra.mxu0 %v6891
        %v6893 = vand.u32 %v6472, 4294901760
        %6894 = vmatpush.msra.mxu0 %v6893
        %v6895 = vand.u32 %v6470, 4294901760
        %6896 = vmatpush.msra.mxu0 %v6895
        %v6897 = vand.u32 %v6468, 4294901760
        %6898 = vmatpush.msra.mxu0 %v6897
        %v6899 = vand.u32 %v6466, 4294901760
        %6900 = vmatpush.msra.mxu0 %v6899
        %v6901 = vand.u32 %v6464, 4294901760
        %6902 = vmatpush.msra.mxu0 %v6901
        %v6903 = vand.u32 %v6462, 4294901760
        %6904 = vmatpush.msra.mxu0 %v6903
        %v6905 = vand.u32 %v6460, 4294901760
        %6906 = vmatpush.msra.mxu0 %v6905
        %v6907 = vand.u32 %v6458, 4294901760
        %6908 = vmatpush.msra.mxu0 %v6907
        %v6909 = vand.u32 %v6456, 4294901760
        %6910 = vmatpush.msra.mxu0 %v6909
        %v6911 = vand.u32 %v6452, 4294901760
        %6912 = vmatmul.f32.gmra.mxu0 %v6911
        %v6913 = vpop.f32.mrf.mxu0
        %v6914 = vadd.f32 %v6865, %v6913
        %v6915 = vand.u32 %v6453, 4294901760
        %6916 = vmatmul.f32.gmra.mxu0 %v6915
        %v6917 = vpop.f32.mrf.mxu0
        %v6918 = vadd.f32 %v6869, %v6917
        %v6919 = vand.u32 %v6454, 4294901760
        %6920 = vmatmul.f32.gmra.mxu0 %v6919
        %v6921 = vpop.f32.mrf.mxu0
        %v6922 = vadd.f32 %v6873, %v6921
        %v6923 = vand.u32 %v6455, 4294901760
        %6924 = vmatmul.f32.gmra.mxu0 %v6923
        %v6925 = vpop.f32.mrf.mxu0
        %v6926 = vadd.f32 %v6877, %v6925
        %6927 = vdwg.mxu0
        %v6928 = vand.u32 %v6487, 4294901760
        %6929 = vmatpush.msra.mxu0 %v6928
        %v6930 = vand.u32 %v6485, 4294901760
        %6931 = vmatpush.msra.mxu0 %v6930
        %v6932 = vand.u32 %v6483, 4294901760
        %6933 = vmatpush.msra.mxu0 %v6932
        %v6934 = vand.u32 %v6481, 4294901760
        %6935 = vmatpush.msra.mxu0 %v6934
        %v6936 = vand.u32 %v6479, 4294901760
        %6937 = vmatpush.msra.mxu0 %v6936
        %v6938 = vand.u32 %v6477, 4294901760
        %6939 = vmatpush.msra.mxu0 %v6938
        %v6940 = vand.u32 %v6475, 4294901760
        %6941 = vmatpush.msra.mxu0 %v6940
        %v6942 = vand.u32 %v6473, 4294901760
        %6943 = vmatpush.msra.mxu0 %v6942
        %v6944 = vand.u32 %v6471, 4294901760
        %6945 = vmatpush.msra.mxu0 %v6944
        %v6946 = vand.u32 %v6469, 4294901760
        %6947 = vmatpush.msra.mxu0 %v6946
        %v6948 = vand.u32 %v6467, 4294901760
        %6949 = vmatpush.msra.mxu0 %v6948
        %v6950 = vand.u32 %v6465, 4294901760
        %6951 = vmatpush.msra.mxu0 %v6950
        %v6952 = vand.u32 %v6463, 4294901760
        %6953 = vmatpush.msra.mxu0 %v6952
        %v6954 = vand.u32 %v6461, 4294901760
        %6955 = vmatpush.msra.mxu0 %v6954
        %v6956 = vand.u32 %v6459, 4294901760
        %6957 = vmatpush.msra.mxu0 %v6956
        %v6958 = vand.u32 %v6457, 4294901760
        %6959 = vmatpush.msra.mxu0 %v6958
        %v6960 = vand.u32 %v6452, 4294901760
        %v6961 = vsub.f32 %v6452, %v6960
        %v6962 = vand.u32 %v6961, 4294901760
        %v6963 = vsub.f32 %v6961, %v6962
        %v6964 = vand.u32 %v6963, 4294901760
        %6965 = vmatmul.f32.gmra.mxu0 %v6964
        %v6966 = vpop.f32.mrf.mxu0
        %v6967 = vadd.f32 %v6491, %v6966
        %v6968 = vand.u32 %v6453, 4294901760
        %v6969 = vsub.f32 %v6453, %v6968
        %v6970 = vand.u32 %v6969, 4294901760
        %v6971 = vsub.f32 %v6969, %v6970
        %v6972 = vand.u32 %v6971, 4294901760
        %6973 = vmatmul.f32.gmra.mxu0 %v6972
        %v6974 = vpop.f32.mrf.mxu0
        %v6975 = vadd.f32 %v6491, %v6974
        %v6976 = vand.u32 %v6454, 4294901760
        %v6977 = vsub.f32 %v6454, %v6976
        %v6978 = vand.u32 %v6977, 4294901760
        %v6979 = vsub.f32 %v6977, %v6978
        %v6980 = vand.u32 %v6979, 4294901760
        %6981 = vmatmul.f32.gmra.mxu0 %v6980
        %v6982 = vpop.f32.mrf.mxu0
        %v6983 = vadd.f32 %v6491, %v6982
        %v6984 = vand.u32 %v6455, 4294901760
        %v6985 = vsub.f32 %v6455, %v6984
        %v6986 = vand.u32 %v6985, 4294901760
        %v6987 = vsub.f32 %v6985, %v6986
        %v6988 = vand.u32 %v6987, 4294901760
        %6989 = vmatmul.f32.gmra.mxu0 %v6988
        %v6990 = vpop.f32.mrf.mxu0
        %v6991 = vadd.f32 %v6491, %v6990
        %6992 = vdwg.mxu0
        %v6993 = vand.u32 %v6487, 4294901760
        %v6994 = vsub.f32 %v6487, %v6993
        %v6995 = vand.u32 %v6994, 4294901760
        %v6996 = vsub.f32 %v6994, %v6995
        %v6997 = vand.u32 %v6996, 4294901760
        %6998 = vmatpush.msra.mxu0 %v6997
        %v6999 = vand.u32 %v6485, 4294901760
        %v7000 = vsub.f32 %v6485, %v6999
        %v7001 = vand.u32 %v7000, 4294901760
        %v7002 = vsub.f32 %v7000, %v7001
        %v7003 = vand.u32 %v7002, 4294901760
        %7004 = vmatpush.msra.mxu0 %v7003
        %v7005 = vand.u32 %v6483, 4294901760
        %v7006 = vsub.f32 %v6483, %v7005
        %v7007 = vand.u32 %v7006, 4294901760
        %v7008 = vsub.f32 %v7006, %v7007
        %v7009 = vand.u32 %v7008, 4294901760
        %7010 = vmatpush.msra.mxu0 %v7009
        %v7011 = vand.u32 %v6481, 4294901760
        %v7012 = vsub.f32 %v6481, %v7011
        %v7013 = vand.u32 %v7012, 4294901760
        %v7014 = vsub.f32 %v7012, %v7013
        %v7015 = vand.u32 %v7014, 4294901760
        %7016 = vmatpush.msra.mxu0 %v7015
        %v7017 = vand.u32 %v6479, 4294901760
        %v7018 = vsub.f32 %v6479, %v7017
        %v7019 = vand.u32 %v7018, 4294901760
        %v7020 = vsub.f32 %v7018, %v7019
        %v7021 = vand.u32 %v7020, 4294901760
        %7022 = vmatpush.msra.mxu0 %v7021
        %v7023 = vand.u32 %v6477, 4294901760
        %v7024 = vsub.f32 %v6477, %v7023
        %v7025 = vand.u32 %v7024, 4294901760
        %v7026 = vsub.f32 %v7024, %v7025
        %v7027 = vand.u32 %v7026, 4294901760
        %7028 = vmatpush.msra.mxu0 %v7027
        %v7029 = vand.u32 %v6475, 4294901760
        %v7030 = vsub.f32 %v6475, %v7029
        %v7031 = vand.u32 %v7030, 4294901760
        %v7032 = vsub.f32 %v7030, %v7031
        %v7033 = vand.u32 %v7032, 4294901760
        %7034 = vmatpush.msra.mxu0 %v7033
        %v7035 = vand.u32 %v6473, 4294901760
        %v7036 = vsub.f32 %v6473, %v7035
        %v7037 = vand.u32 %v7036, 4294901760
        %v7038 = vsub.f32 %v7036, %v7037
        %v7039 = vand.u32 %v7038, 4294901760
        %7040 = vmatpush.msra.mxu0 %v7039
        %v7041 = vand.u32 %v6471, 4294901760
        %v7042 = vsub.f32 %v6471, %v7041
        %v7043 = vand.u32 %v7042, 4294901760
        %v7044 = vsub.f32 %v7042, %v7043
        %v7045 = vand.u32 %v7044, 4294901760
        %7046 = vmatpush.msra.mxu0 %v7045
        %v7047 = vand.u32 %v6469, 4294901760
        %v7048 = vsub.f32 %v6469, %v7047
        %v7049 = vand.u32 %v7048, 4294901760
        %v7050 = vsub.f32 %v7048, %v7049
        %v7051 = vand.u32 %v7050, 4294901760
        %7052 = vmatpush.msra.mxu0 %v7051
        %v7053 = vand.u32 %v6467, 4294901760
        %v7054 = vsub.f32 %v6467, %v7053
        %v7055 = vand.u32 %v7054, 4294901760
        %v7056 = vsub.f32 %v7054, %v7055
        %v7057 = vand.u32 %v7056, 4294901760
        %7058 = vmatpush.msra.mxu0 %v7057
        %v7059 = vand.u32 %v6465, 4294901760
        %v7060 = vsub.f32 %v6465, %v7059
        %v7061 = vand.u32 %v7060, 4294901760
        %v7062 = vsub.f32 %v7060, %v7061
        %v7063 = vand.u32 %v7062, 4294901760
        %7064 = vmatpush.msra.mxu0 %v7063
        %v7065 = vand.u32 %v6463, 4294901760
        %v7066 = vsub.f32 %v6463, %v7065
        %v7067 = vand.u32 %v7066, 4294901760
        %v7068 = vsub.f32 %v7066, %v7067
        %v7069 = vand.u32 %v7068, 4294901760
        %7070 = vmatpush.msra.mxu0 %v7069
        %v7071 = vand.u32 %v6461, 4294901760
        %v7072 = vsub.f32 %v6461, %v7071
        %v7073 = vand.u32 %v7072, 4294901760
        %v7074 = vsub.f32 %v7072, %v7073
        %v7075 = vand.u32 %v7074, 4294901760
        %7076 = vmatpush.msra.mxu0 %v7075
        %v7077 = vand.u32 %v6459, 4294901760
        %v7078 = vsub.f32 %v6459, %v7077
        %v7079 = vand.u32 %v7078, 4294901760
        %v7080 = vsub.f32 %v7078, %v7079
        %v7081 = vand.u32 %v7080, 4294901760
        %7082 = vmatpush.msra.mxu0 %v7081
        %v7083 = vand.u32 %v6457, 4294901760
        %v7084 = vsub.f32 %v6457, %v7083
        %v7085 = vand.u32 %v7084, 4294901760
        %v7086 = vsub.f32 %v7084, %v7085
        %v7087 = vand.u32 %v7086, 4294901760
        %7088 = vmatpush.msra.mxu0 %v7087
        %v7089 = vand.u32 %v6452, 4294901760
        %7090 = vmatmul.f32.gmra.mxu0 %v7089
        %v7091 = vpop.f32.mrf.mxu0
        %v7092 = vadd.f32 %v6967, %v7091
        %v7093 = vand.u32 %v6453, 4294901760
        %7094 = vmatmul.f32.gmra.mxu0 %v7093
        %v7095 = vpop.f32.mrf.mxu0
        %v7096 = vadd.f32 %v6975, %v7095
        %v7097 = vand.u32 %v6454, 4294901760
        %7098 = vmatmul.f32.gmra.mxu0 %v7097
        %v7099 = vpop.f32.mrf.mxu0
        %v7100 = vadd.f32 %v6983, %v7099
        %v7101 = vand.u32 %v6455, 4294901760
        %7102 = vmatmul.f32.gmra.mxu0 %v7101
        %v7103 = vpop.f32.mrf.mxu0
        %v7104 = vadd.f32 %v6991, %v7103
        %7105 = vdwg.mxu0
        %v7106 = vand.u32 %v6487, 4294901760
        %v7107 = vsub.f32 %v6487, %v7106
        %7108 = vmatpush.msra.mxu0 %v7107
        %v7109 = vand.u32 %v6485, 4294901760
        %v7110 = vsub.f32 %v6485, %v7109
        %7111 = vmatpush.msra.mxu0 %v7110
        %v7112 = vand.u32 %v6483, 4294901760
        %v7113 = vsub.f32 %v6483, %v7112
        %7114 = vmatpush.msra.mxu0 %v7113
        %v7115 = vand.u32 %v6481, 4294901760
        %v7116 = vsub.f32 %v6481, %v7115
        %7117 = vmatpush.msra.mxu0 %v7116
        %v7118 = vand.u32 %v6479, 4294901760
        %v7119 = vsub.f32 %v6479, %v7118
        %7120 = vmatpush.msra.mxu0 %v7119
        %v7121 = vand.u32 %v6477, 4294901760
        %v7122 = vsub.f32 %v6477, %v7121
        %7123 = vmatpush.msra.mxu0 %v7122
        %v7124 = vand.u32 %v6475, 4294901760
        %v7125 = vsub.f32 %v6475, %v7124
        %7126 = vmatpush.msra.mxu0 %v7125
        %v7127 = vand.u32 %v6473, 4294901760
        %v7128 = vsub.f32 %v6473, %v7127
        %7129 = vmatpush.msra.mxu0 %v7128
        %v7130 = vand.u32 %v6471, 4294901760
        %v7131 = vsub.f32 %v6471, %v7130
        %7132 = vmatpush.msra.mxu0 %v7131
        %v7133 = vand.u32 %v6469, 4294901760
        %v7134 = vsub.f32 %v6469, %v7133
        %7135 = vmatpush.msra.mxu0 %v7134
        %v7136 = vand.u32 %v6467, 4294901760
        %v7137 = vsub.f32 %v6467, %v7136
        %7138 = vmatpush.msra.mxu0 %v7137
        %v7139 = vand.u32 %v6465, 4294901760
        %v7140 = vsub.f32 %v6465, %v7139
        %7141 = vmatpush.msra.mxu0 %v7140
        %v7142 = vand.u32 %v6463, 4294901760
        %v7143 = vsub.f32 %v6463, %v7142
        %7144 = vmatpush.msra.mxu0 %v7143
        %v7145 = vand.u32 %v6461, 4294901760
        %v7146 = vsub.f32 %v6461, %v7145
        %7147 = vmatpush.msra.mxu0 %v7146
        %v7148 = vand.u32 %v6459, 4294901760
        %v7149 = vsub.f32 %v6459, %v7148
        %7150 = vmatpush.msra.mxu0 %v7149
        %v7151 = vand.u32 %v6457, 4294901760
        %v7152 = vsub.f32 %v6457, %v7151
        %7153 = vmatpush.msra.mxu0 %v7152
        %v7154 = vand.u32 %v6452, 4294901760
        %v7155 = vsub.f32 %v6452, %v7154
        %7156 = vmatmul.f32.gmra.mxu0 %v7155
        %v7157 = vpop.f32.mrf.mxu0
        %v7158 = vadd.f32 %v7092, %v7157
        %v7159 = vand.u32 %v6453, 4294901760
        %v7160 = vsub.f32 %v6453, %v7159
        %7161 = vmatmul.f32.gmra.mxu0 %v7160
        %v7162 = vpop.f32.mrf.mxu0
        %v7163 = vadd.f32 %v7096, %v7162
        %v7164 = vand.u32 %v6454, 4294901760
        %v7165 = vsub.f32 %v6454, %v7164
        %7166 = vmatmul.f32.gmra.mxu0 %v7165
        %v7167 = vpop.f32.mrf.mxu0
        %v7168 = vadd.f32 %v7100, %v7167
        %v7169 = vand.u32 %v6455, 4294901760
        %v7170 = vsub.f32 %v6455, %v7169
        %7171 = vmatmul.f32.gmra.mxu0 %v7170
        %v7172 = vpop.f32.mrf.mxu0
        %v7173 = vadd.f32 %v7104, %v7172
        %7174 = vdwg.mxu0
        %v7175 = vand.u32 %v6487, 4294901760
        %7176 = vmatpush.msra.mxu0 %v7175
        %v7177 = vand.u32 %v6485, 4294901760
        %7178 = vmatpush.msra.mxu0 %v7177
        %v7179 = vand.u32 %v6483, 4294901760
        %7180 = vmatpush.msra.mxu0 %v7179
        %v7181 = vand.u32 %v6481, 4294901760
        %7182 = vmatpush.msra.mxu0 %v7181
        %v7183 = vand.u32 %v6479, 4294901760
        %7184 = vmatpush.msra.mxu0 %v7183
        %v7185 = vand.u32 %v6477, 4294901760
        %7186 = vmatpush.msra.mxu0 %v7185
        %v7187 = vand.u32 %v6475, 4294901760
        %7188 = vmatpush.msra.mxu0 %v7187
        %v7189 = vand.u32 %v6473, 4294901760
        %7190 = vmatpush.msra.mxu0 %v7189
        %v7191 = vand.u32 %v6471, 4294901760
        %7192 = vmatpush.msra.mxu0 %v7191
        %v7193 = vand.u32 %v6469, 4294901760
        %7194 = vmatpush.msra.mxu0 %v7193
        %v7195 = vand.u32 %v6467, 4294901760
        %7196 = vmatpush.msra.mxu0 %v7195
        %v7197 = vand.u32 %v6465, 4294901760
        %7198 = vmatpush.msra.mxu0 %v7197
        %v7199 = vand.u32 %v6463, 4294901760
        %7200 = vmatpush.msra.mxu0 %v7199
        %v7201 = vand.u32 %v6461, 4294901760
        %7202 = vmatpush.msra.mxu0 %v7201
        %v7203 = vand.u32 %v6459, 4294901760
        %7204 = vmatpush.msra.mxu0 %v7203
        %v7205 = vand.u32 %v6457, 4294901760
        %7206 = vmatpush.msra.mxu0 %v7205
        %v7207 = vand.u32 %v6452, 4294901760
        %v7208 = vsub.f32 %v6452, %v7207
        %v7209 = vand.u32 %v7208, 4294901760
        %7210 = vmatmul.f32.gmra.mxu0 %v7209
        %v7211 = vpop.f32.mrf.mxu0
        %v7212 = vadd.f32 %v7158, %v7211
        %v7213 = vand.u32 %v6453, 4294901760
        %v7214 = vsub.f32 %v6453, %v7213
        %v7215 = vand.u32 %v7214, 4294901760
        %7216 = vmatmul.f32.gmra.mxu0 %v7215
        %v7217 = vpop.f32.mrf.mxu0
        %v7218 = vadd.f32 %v7163, %v7217
        %v7219 = vand.u32 %v6454, 4294901760
        %v7220 = vsub.f32 %v6454, %v7219
        %v7221 = vand.u32 %v7220, 4294901760
        %7222 = vmatmul.f32.gmra.mxu0 %v7221
        %v7223 = vpop.f32.mrf.mxu0
        %v7224 = vadd.f32 %v7168, %v7223
        %v7225 = vand.u32 %v6455, 4294901760
        %v7226 = vsub.f32 %v6455, %v7225
        %v7227 = vand.u32 %v7226, 4294901760
        %7228 = vmatmul.f32.gmra.mxu0 %v7227
        %v7229 = vpop.f32.mrf.mxu0
        %v7230 = vadd.f32 %v7173, %v7229
        %7231 = vdwg.mxu0
        %v7232 = vand.u32 %v6487, 4294901760
        %v7233 = vsub.f32 %v6487, %v7232
        %v7234 = vand.u32 %v7233, 4294901760
        %7235 = vmatpush.msra.mxu0 %v7234
        %v7236 = vand.u32 %v6485, 4294901760
        %v7237 = vsub.f32 %v6485, %v7236
        %v7238 = vand.u32 %v7237, 4294901760
        %7239 = vmatpush.msra.mxu0 %v7238
        %v7240 = vand.u32 %v6483, 4294901760
        %v7241 = vsub.f32 %v6483, %v7240
        %v7242 = vand.u32 %v7241, 4294901760
        %7243 = vmatpush.msra.mxu0 %v7242
        %v7244 = vand.u32 %v6481, 4294901760
        %v7245 = vsub.f32 %v6481, %v7244
        %v7246 = vand.u32 %v7245, 4294901760
        %7247 = vmatpush.msra.mxu0 %v7246
        %v7248 = vand.u32 %v6479, 4294901760
        %v7249 = vsub.f32 %v6479, %v7248
        %v7250 = vand.u32 %v7249, 4294901760
        %7251 = vmatpush.msra.mxu0 %v7250
        %v7252 = vand.u32 %v6477, 4294901760
        %v7253 = vsub.f32 %v6477, %v7252
        %v7254 = vand.u32 %v7253, 4294901760
        %7255 = vmatpush.msra.mxu0 %v7254
        %v7256 = vand.u32 %v6475, 4294901760
        %v7257 = vsub.f32 %v6475, %v7256
        %v7258 = vand.u32 %v7257, 4294901760
        %7259 = vmatpush.msra.mxu0 %v7258
        %v7260 = vand.u32 %v6473, 4294901760
        %v7261 = vsub.f32 %v6473, %v7260
        %v7262 = vand.u32 %v7261, 4294901760
        %7263 = vmatpush.msra.mxu0 %v7262
        %v7264 = vand.u32 %v6471, 4294901760
        %v7265 = vsub.f32 %v6471, %v7264
        %v7266 = vand.u32 %v7265, 4294901760
        %7267 = vmatpush.msra.mxu0 %v7266
        %v7268 = vand.u32 %v6469, 4294901760
        %v7269 = vsub.f32 %v6469, %v7268
        %v7270 = vand.u32 %v7269, 4294901760
        %7271 = vmatpush.msra.mxu0 %v7270
        %v7272 = vand.u32 %v6467, 4294901760
        %v7273 = vsub.f32 %v6467, %v7272
        %v7274 = vand.u32 %v7273, 4294901760
        %7275 = vmatpush.msra.mxu0 %v7274
        %v7276 = vand.u32 %v6465, 4294901760
        %v7277 = vsub.f32 %v6465, %v7276
        %v7278 = vand.u32 %v7277, 4294901760
        %7279 = vmatpush.msra.mxu0 %v7278
        %v7280 = vand.u32 %v6463, 4294901760
        %v7281 = vsub.f32 %v6463, %v7280
        %v7282 = vand.u32 %v7281, 4294901760
        %7283 = vmatpush.msra.mxu0 %v7282
        %v7284 = vand.u32 %v6461, 4294901760
        %v7285 = vsub.f32 %v6461, %v7284
        %v7286 = vand.u32 %v7285, 4294901760
        %7287 = vmatpush.msra.mxu0 %v7286
        %v7288 = vand.u32 %v6459, 4294901760
        %v7289 = vsub.f32 %v6459, %v7288
        %v7290 = vand.u32 %v7289, 4294901760
        %7291 = vmatpush.msra.mxu0 %v7290
        %v7292 = vand.u32 %v6457, 4294901760
        %v7293 = vsub.f32 %v6457, %v7292
        %v7294 = vand.u32 %v7293, 4294901760
        %7295 = vmatpush.msra.mxu0 %v7294
        %v7296 = vand.u32 %v6452, 4294901760
        %7297 = vmatmul.f32.gmra.mxu0 %v7296
        %v7298 = vpop.f32.mrf.mxu0
        %v7299 = vadd.f32 %v7212, %v7298
        %v7300 = vand.u32 %v6453, 4294901760
        %7301 = vmatmul.f32.gmra.mxu0 %v7300
        %v7302 = vpop.f32.mrf.mxu0
        %v7303 = vadd.f32 %v7218, %v7302
        %v7304 = vand.u32 %v6454, 4294901760
        %7305 = vmatmul.f32.gmra.mxu0 %v7304
        %v7306 = vpop.f32.mrf.mxu0
        %v7307 = vadd.f32 %v7224, %v7306
        %v7308 = vand.u32 %v6455, 4294901760
        %7309 = vmatmul.f32.gmra.mxu0 %v7308
        %v7310 = vpop.f32.mrf.mxu0
        %v7311 = vadd.f32 %v7230, %v7310
        %7312 = vdwg.mxu0
        %v7313 = vand.u32 %v6487, 4294901760
        %7314 = vmatpush.msra.mxu0 %v7313
        %v7315 = vand.u32 %v6485, 4294901760
        %7316 = vmatpush.msra.mxu0 %v7315
        %v7317 = vand.u32 %v6483, 4294901760
        %7318 = vmatpush.msra.mxu0 %v7317
        %v7319 = vand.u32 %v6481, 4294901760
        %7320 = vmatpush.msra.mxu0 %v7319
        %v7321 = vand.u32 %v6479, 4294901760
        %7322 = vmatpush.msra.mxu0 %v7321
        %v7323 = vand.u32 %v6477, 4294901760
        %7324 = vmatpush.msra.mxu0 %v7323
        %v7325 = vand.u32 %v6475, 4294901760
        %7326 = vmatpush.msra.mxu0 %v7325
        %v7327 = vand.u32 %v6473, 4294901760
        %7328 = vmatpush.msra.mxu0 %v7327
        %v7329 = vand.u32 %v6471, 4294901760
        %7330 = vmatpush.msra.mxu0 %v7329
        %v7331 = vand.u32 %v6469, 4294901760
        %7332 = vmatpush.msra.mxu0 %v7331
        %v7333 = vand.u32 %v6467, 4294901760
        %7334 = vmatpush.msra.mxu0 %v7333
        %v7335 = vand.u32 %v6465, 4294901760
        %7336 = vmatpush.msra.mxu0 %v7335
        %v7337 = vand.u32 %v6463, 4294901760
        %7338 = vmatpush.msra.mxu0 %v7337
        %v7339 = vand.u32 %v6461, 4294901760
        %7340 = vmatpush.msra.mxu0 %v7339
        %v7341 = vand.u32 %v6459, 4294901760
        %7342 = vmatpush.msra.mxu0 %v7341
        %v7343 = vand.u32 %v6457, 4294901760
        %7344 = vmatpush.msra.mxu0 %v7343
        %v7345 = vand.u32 %v6452, 4294901760
        %7346 = vmatmul.f32.gmra.mxu0 %v7345
        %v7347 = vpop.f32.mrf.mxu0
        %v7348 = vadd.f32 %v7299, %v7347
        %v7349 = vand.u32 %v6453, 4294901760
        %7350 = vmatmul.f32.gmra.mxu0 %v7349
        %v7351 = vpop.f32.mrf.mxu0
        %v7352 = vadd.f32 %v7303, %v7351
        %v7353 = vand.u32 %v6454, 4294901760
        %7354 = vmatmul.f32.gmra.mxu0 %v7353
        %v7355 = vpop.f32.mrf.mxu0
        %v7356 = vadd.f32 %v7307, %v7355
        %v7357 = vand.u32 %v6455, 4294901760
        %7358 = vmatmul.f32.gmra.mxu0 %v7357
        %v7359 = vpop.f32.mrf.mxu0
        %v7360 = vadd.f32 %v7311, %v7359
        %7361 = vdwg.mxu0
        %v7362 = vmul.f32 %v6914, 0.5
        %v7363 = vmul.f32 %v7348, 0.5
        %v7364 = vmul.f32 %v6918, 0.5
        %v7365 = vmul.f32 %v7352, 0.5
        %v7366 = vmul.f32 %v6922, 0.5
        %v7367 = vmul.f32 %v7356, 0.5
        %v7368 = vmul.f32 %v6926, 0.5
        %v7369 = vmul.f32 %v7360, 0.5
        %v7370 = vmul.f32 %v6914, 0.70710677
        %v7371 = vmul.f32 %v7348, 0.70710677
        %v7372 = vmul.f32 %v6918, 0.70710677
        %v7373 = vmul.f32 %v7352, 0.70710677
        %v7374 = vmul.f32 %v6922, 0.70710677
        %v7375 = vmul.f32 %v7356, 0.70710677
        %v7376 = vmul.f32 %v6926, 0.70710677
        %v7377 = vmul.f32 %v7360, 0.70710677
        %v7378 = vand.u32 2147483647, %v7370
        %v7379 = vand.u32 2147483647, %v7371
        %v7380 = vand.u32 2147483647, %v7372
        %v7381 = vand.u32 2147483647, %v7373
        %v7382 = vand.u32 2147483647, %v7374
        %v7383 = vand.u32 2147483647, %v7375
        %v7384 = vand.u32 2147483647, %v7376
        %v7385 = vand.u32 2147483647, %v7377
        %v7386 = vmul.f32 %v7378, 0.3275911
        %v7387 = vmul.f32 %v7379, 0.3275911
        %v7388 = vmul.f32 %v7380, 0.3275911
        %v7389 = vmul.f32 %v7381, 0.3275911
        %v7390 = vmul.f32 %v7382, 0.3275911
        %v7391 = vmul.f32 %v7383, 0.3275911
        %v7392 = vmul.f32 %v7384, 0.3275911
        %v7393 = vmul.f32 %v7385, 0.3275911
        %v7394 = vadd.f32 %v7386, 1.0
        %v7395 = vadd.f32 %v7387, 1.0
        %v7396 = vadd.f32 %v7388, 1.0
        %v7397 = vadd.f32 %v7389, 1.0
        %v7398 = vadd.f32 %v7390, 1.0
        %v7399 = vadd.f32 %v7391, 1.0
        %v7400 = vadd.f32 %v7392, 1.0
        %v7401 = vadd.f32 %v7393, 1.0
        %v7402 = vrcp.pop %v7394
        %v7403 = vmul.f32 %v7394, %v7402
        %v7404 = vsub.f32 1.0, %v7403
        %v7405 = vmul.f32 %v7402, %v7404
        %v7406 = vadd.f32 %v7402, %v7405
        %vm7407 = vweird.f32 %v7394
        %vm7408 = vweird.f32 %v7402
        %vm7409 = vmor %vm7407, %vm7408
        %v7410 = vsel %vm7409, %v7402, %v7406
        %v7411 = vand.u32 2147483647, %v7394
        %vm7412 = vcmp.eq.f32.partialorder %v7411, 8.507059e+37
        %v7413 = vand.u32 %v7394, 2147483648
        %v7414 = vor.u32 1.1754944e-38, %v7413
        %v7415 = vsel %vm7412, %v7414, %v7410
        %v7416 = vmul.f32 1.0, %v7415
        %v7417 = vrcp.pop %v7395
        %v7418 = vmul.f32 %v7395, %v7417
        %v7419 = vsub.f32 1.0, %v7418
        %v7420 = vmul.f32 %v7417, %v7419
        %v7421 = vadd.f32 %v7417, %v7420
        %vm7422 = vweird.f32 %v7395
        %vm7423 = vweird.f32 %v7417
        %vm7424 = vmor %vm7422, %vm7423
        %v7425 = vsel %vm7424, %v7417, %v7421
        %v7426 = vand.u32 2147483647, %v7395
        %vm7427 = vcmp.eq.f32.partialorder %v7426, 8.507059e+37
        %v7428 = vand.u32 %v7395, 2147483648
        %v7429 = vor.u32 1.1754944e-38, %v7428
        %v7430 = vsel %vm7427, %v7429, %v7425
        %v7431 = vmul.f32 1.0, %v7430
        %v7432 = vrcp.pop %v7396
        %v7433 = vmul.f32 %v7396, %v7432
        %v7434 = vsub.f32 1.0, %v7433
        %v7435 = vmul.f32 %v7432, %v7434
        %v7436 = vadd.f32 %v7432, %v7435
        %vm7437 = vweird.f32 %v7396
        %vm7438 = vweird.f32 %v7432
        %vm7439 = vmor %vm7437, %vm7438
        %v7440 = vsel %vm7439, %v7432, %v7436
        %v7441 = vand.u32 2147483647, %v7396
        %vm7442 = vcmp.eq.f32.partialorder %v7441, 8.507059e+37
        %v7443 = vand.u32 %v7396, 2147483648
        %v7444 = vor.u32 1.1754944e-38, %v7443
        %v7445 = vsel %vm7442, %v7444, %v7440
        %v7446 = vmul.f32 1.0, %v7445
        %v7447 = vrcp.pop %v7397
        %v7448 = vmul.f32 %v7397, %v7447
        %v7449 = vsub.f32 1.0, %v7448
        %v7450 = vmul.f32 %v7447, %v7449
        %v7451 = vadd.f32 %v7447, %v7450
        %vm7452 = vweird.f32 %v7397
        %vm7453 = vweird.f32 %v7447
        %vm7454 = vmor %vm7452, %vm7453
        %v7455 = vsel %vm7454, %v7447, %v7451
        %v7456 = vand.u32 2147483647, %v7397
        %vm7457 = vcmp.eq.f32.partialorder %v7456, 8.507059e+37
        %v7458 = vand.u32 %v7397, 2147483648
        %v7459 = vor.u32 1.1754944e-38, %v7458
        %v7460 = vsel %vm7457, %v7459, %v7455
        %v7461 = vmul.f32 1.0, %v7460
        %v7462 = vrcp.pop %v7398
        %v7463 = vmul.f32 %v7398, %v7462
        %v7464 = vsub.f32 1.0, %v7463
        %v7465 = vmul.f32 %v7462, %v7464
        %v7466 = vadd.f32 %v7462, %v7465
        %vm7467 = vweird.f32 %v7398
        %vm7468 = vweird.f32 %v7462
        %vm7469 = vmor %vm7467, %vm7468
        %v7470 = vsel %vm7469, %v7462, %v7466
        %v7471 = vand.u32 2147483647, %v7398
        %vm7472 = vcmp.eq.f32.partialorder %v7471, 8.507059e+37
        %v7473 = vand.u32 %v7398, 2147483648
        %v7474 = vor.u32 1.1754944e-38, %v7473
        %v7475 = vsel %vm7472, %v7474, %v7470
        %v7476 = vmul.f32 1.0, %v7475
        %v7477 = vrcp.pop %v7399
        %v7478 = vmul.f32 %v7399, %v7477
        %v7479 = vsub.f32 1.0, %v7478
        %v7480 = vmul.f32 %v7477, %v7479
        %v7481 = vadd.f32 %v7477, %v7480
        %vm7482 = vweird.f32 %v7399
        %vm7483 = vweird.f32 %v7477
        %vm7484 = vmor %vm7482, %vm7483
        %v7485 = vsel %vm7484, %v7477, %v7481
        %v7486 = vand.u32 2147483647, %v7399
        %vm7487 = vcmp.eq.f32.partialorder %v7486, 8.507059e+37
        %v7488 = vand.u32 %v7399, 2147483648
        %v7489 = vor.u32 1.1754944e-38, %v7488
        %v7490 = vsel %vm7487, %v7489, %v7485
        %v7491 = vmul.f32 1.0, %v7490
        %v7492 = vrcp.pop %v7400
        %v7493 = vmul.f32 %v7400, %v7492
        %v7494 = vsub.f32 1.0, %v7493
        %v7495 = vmul.f32 %v7492, %v7494
        %v7496 = vadd.f32 %v7492, %v7495
        %vm7497 = vweird.f32 %v7400
        %vm7498 = vweird.f32 %v7492
        %vm7499 = vmor %vm7497, %vm7498
        %v7500 = vsel %vm7499, %v7492, %v7496
        %v7501 = vand.u32 2147483647, %v7400
        %vm7502 = vcmp.eq.f32.partialorder %v7501, 8.507059e+37
        %v7503 = vand.u32 %v7400, 2147483648
        %v7504 = vor.u32 1.1754944e-38, %v7503
        %v7505 = vsel %vm7502, %v7504, %v7500
        %v7506 = vmul.f32 1.0, %v7505
        %v7507 = vrcp.pop %v7401
        %v7508 = vmul.f32 %v7401, %v7507
        %v7509 = vsub.f32 1.0, %v7508
        %v7510 = vmul.f32 %v7507, %v7509
        %v7511 = vadd.f32 %v7507, %v7510
        %vm7512 = vweird.f32 %v7401
        %vm7513 = vweird.f32 %v7507
        %vm7514 = vmor %vm7512, %vm7513
        %v7515 = vsel %vm7514, %v7507, %v7511
        %v7516 = vand.u32 2147483647, %v7401
        %vm7517 = vcmp.eq.f32.partialorder %v7516, 8.507059e+37
        %v7518 = vand.u32 %v7401, 2147483648
        %v7519 = vor.u32 1.1754944e-38, %v7518
        %v7520 = vsel %vm7517, %v7519, %v7515
        %v7521 = vmul.f32 1.0, %v7520
        %v7522 = vmul.f32 %v7416, 1.0614054
        %v7523 = vmul.f32 %v7431, 1.0614054
        %v7524 = vmul.f32 %v7446, 1.0614054
        %v7525 = vmul.f32 %v7461, 1.0614054
        %v7526 = vmul.f32 %v7476, 1.0614054
        %v7527 = vmul.f32 %v7491, 1.0614054
        %v7528 = vmul.f32 %v7506, 1.0614054
        %v7529 = vmul.f32 %v7521, 1.0614054
        %v7530 = vadd.f32 %v7522, -1.4531521
        %v7531 = vadd.f32 %v7523, -1.4531521
        %v7532 = vadd.f32 %v7524, -1.4531521
        %v7533 = vadd.f32 %v7525, -1.4531521
        %v7534 = vadd.f32 %v7526, -1.4531521
        %v7535 = vadd.f32 %v7527, -1.4531521
        %v7536 = vadd.f32 %v7528, -1.4531521
        %v7537 = vadd.f32 %v7529, -1.4531521
        %v7538 = vmul.f32 %v7530, %v7416
        %v7539 = vmul.f32 %v7531, %v7431
        %v7540 = vmul.f32 %v7532, %v7446
        %v7541 = vmul.f32 %v7533, %v7461
        %v7542 = vmul.f32 %v7534, %v7476
        %v7543 = vmul.f32 %v7535, %v7491
        %v7544 = vmul.f32 %v7536, %v7506
        %v7545 = vmul.f32 %v7537, %v7521
        %v7546 = vadd.f32 %v7538, 1.4214138
        %v7547 = vadd.f32 %v7539, 1.4214138
        %v7548 = vadd.f32 %v7540, 1.4214138
        %v7549 = vadd.f32 %v7541, 1.4214138
        %v7550 = vadd.f32 %v7542, 1.4214138
        %v7551 = vadd.f32 %v7543, 1.4214138
        %v7552 = vadd.f32 %v7544, 1.4214138
        %v7553 = vadd.f32 %v7545, 1.4214138
        %v7554 = vmul.f32 %v7546, %v7416
        %v7555 = vmul.f32 %v7547, %v7431
        %v7556 = vmul.f32 %v7548, %v7446
        %v7557 = vmul.f32 %v7549, %v7461
        %v7558 = vmul.f32 %v7550, %v7476
        %v7559 = vmul.f32 %v7551, %v7491
        %v7560 = vmul.f32 %v7552, %v7506
        %v7561 = vmul.f32 %v7553, %v7521
        %v7562 = vadd.f32 %v7554, -0.28449672
        %v7563 = vadd.f32 %v7555, -0.28449672
        %v7564 = vadd.f32 %v7556, -0.28449672
        %v7565 = vadd.f32 %v7557, -0.28449672
        %v7566 = vadd.f32 %v7558, -0.28449672
        %v7567 = vadd.f32 %v7559, -0.28449672
        %v7568 = vadd.f32 %v7560, -0.28449672
        %v7569 = vadd.f32 %v7561, -0.28449672
        %v7570 = vmul.f32 %v7562, %v7416
        %v7571 = vmul.f32 %v7563, %v7431
        %v7572 = vmul.f32 %v7564, %v7446
        %v7573 = vmul.f32 %v7565, %v7461
        %v7574 = vmul.f32 %v7566, %v7476
        %v7575 = vmul.f32 %v7567, %v7491
        %v7576 = vmul.f32 %v7568, %v7506
        %v7577 = vmul.f32 %v7569, %v7521
        %v7578 = vadd.f32 %v7570, 0.2548296
        %v7579 = vadd.f32 %v7571, 0.2548296
        %v7580 = vadd.f32 %v7572, 0.2548296
        %v7581 = vadd.f32 %v7573, 0.2548296
        %v7582 = vadd.f32 %v7574, 0.2548296
        %v7583 = vadd.f32 %v7575, 0.2548296
        %v7584 = vadd.f32 %v7576, 0.2548296
        %v7585 = vadd.f32 %v7577, 0.2548296
        %v7586 = vmul.f32 %v7578, %v7416
        %v7587 = vmul.f32 %v7579, %v7431
        %v7588 = vmul.f32 %v7580, %v7446
        %v7589 = vmul.f32 %v7581, %v7461
        %v7590 = vmul.f32 %v7582, %v7476
        %v7591 = vmul.f32 %v7583, %v7491
        %v7592 = vmul.f32 %v7584, %v7506
        %v7593 = vmul.f32 %v7585, %v7521
        %v7594 = vsub.f32 0.0, %v7378
        %v7595 = vsub.f32 0.0, %v7379
        %v7596 = vsub.f32 0.0, %v7380
        %v7597 = vsub.f32 0.0, %v7381
        %v7598 = vsub.f32 0.0, %v7382
        %v7599 = vsub.f32 0.0, %v7383
        %v7600 = vsub.f32 0.0, %v7384
        %v7601 = vsub.f32 0.0, %v7385
        %v7602 = vmul.f32 %v7594, %v7378
        %v7603 = vmul.f32 %v7595, %v7379
        %v7604 = vmul.f32 %v7596, %v7380
        %v7605 = vmul.f32 %v7597, %v7381
        %v7606 = vmul.f32 %v7598, %v7382
        %v7607 = vmul.f32 %v7599, %v7383
        %v7608 = vmul.f32 %v7600, %v7384
        %v7609 = vmul.f32 %v7601, %v7385
        %v7610 = vmul.f32 %v7602, 1.442695
        %v7611 = vpow.pop %v7610
        %v7612 = vmul.f32 %v7603, 1.442695
        %v7613 = vpow.pop %v7612
        %v7614 = vmul.f32 %v7604, 1.442695
        %v7615 = vpow.pop %v7614
        %v7616 = vmul.f32 %v7605, 1.442695
        %v7617 = vpow.pop %v7616
        %v7618 = vmul.f32 %v7606, 1.442695
        %v7619 = vpow.pop %v7618
        %v7620 = vmul.f32 %v7607, 1.442695
        %v7621 = vpow.pop %v7620
        %v7622 = vmul.f32 %v7608, 1.442695
        %v7623 = vpow.pop %v7622
        %v7624 = vmul.f32 %v7609, 1.442695
        %v7625 = vpow.pop %v7624
        %v7626 = vmul.f32 %v7586, %v7611
        %v7627 = vmul.f32 %v7587, %v7613
        %v7628 = vmul.f32 %v7588, %v7615
        %v7629 = vmul.f32 %v7589, %v7617
        %v7630 = vmul.f32 %v7590, %v7619
        %v7631 = vmul.f32 %v7591, %v7621
        %v7632 = vmul.f32 %v7592, %v7623
        %v7633 = vmul.f32 %v7593, %v7625
        %v7634 = vsub.f32 1.0, %v7626
        %v7635 = vsub.f32 1.0, %v7627
        %v7636 = vsub.f32 1.0, %v7628
        %v7637 = vsub.f32 1.0, %v7629
        %v7638 = vsub.f32 1.0, %v7630
        %v7639 = vsub.f32 1.0, %v7631
        %v7640 = vsub.f32 1.0, %v7632
        %v7641 = vsub.f32 1.0, %v7633
        %vm7642 = vcmp.ge.f32.partialorder %v7370, 0.0
        %vm7643 = vcmp.ge.f32.partialorder %v7371, 0.0
        %vm7644 = vcmp.ge.f32.partialorder %v7372, 0.0
        %vm7645 = vcmp.ge.f32.partialorder %v7373, 0.0
        %vm7646 = vcmp.ge.f32.partialorder %v7374, 0.0
        %vm7647 = vcmp.ge.f32.partialorder %v7375, 0.0
        %vm7648 = vcmp.ge.f32.partialorder %v7376, 0.0
        %vm7649 = vcmp.ge.f32.partialorder %v7377, 0.0
        %v7650 = vsub.f32 0.0, %v7634
        %v7651 = vsub.f32 0.0, %v7635
        %v7652 = vsub.f32 0.0, %v7636
        %v7653 = vsub.f32 0.0, %v7637
        %v7654 = vsub.f32 0.0, %v7638
        %v7655 = vsub.f32 0.0, %v7639
        %v7656 = vsub.f32 0.0, %v7640
        %v7657 = vsub.f32 0.0, %v7641
        %v7658 = vsel %vm7642, %v7634, %v7650
        %v7659 = vsel %vm7643, %v7635, %v7651
        %v7660 = vsel %vm7644, %v7636, %v7652
        %v7661 = vsel %vm7645, %v7637, %v7653
        %v7662 = vsel %vm7646, %v7638, %v7654
        %v7663 = vsel %vm7647, %v7639, %v7655
        %v7664 = vsel %vm7648, %v7640, %v7656
        %v7665 = vsel %vm7649, %v7641, %v7657
        %v7666 = vadd.f32 %v7658, 1.0
        %v7667 = vadd.f32 %v7659, 1.0
        %v7668 = vadd.f32 %v7660, 1.0
        %v7669 = vadd.f32 %v7661, 1.0
        %v7670 = vadd.f32 %v7662, 1.0
        %v7671 = vadd.f32 %v7663, 1.0
        %v7672 = vadd.f32 %v7664, 1.0
        %v7673 = vadd.f32 %v7665, 1.0
        %v7674 = vmul.f32 %v7362, %v7666
        %v7675 = vmul.f32 %v7363, %v7667
        %v7676 = vmul.f32 %v7364, %v7668
        %v7677 = vmul.f32 %v7365, %v7669
        %v7678 = vmul.f32 %v7366, %v7670
        %v7679 = vmul.f32 %v7367, %v7671
        %v7680 = vmul.f32 %v7368, %v7672
        %v7681 = vmul.f32 %v7369, %v7673
        %v7682 = vld [vmem:[%s723] sm:$0xff]
        %v7683 = vld [vmem:[%s723 + $0x8] sm:$0xff]
        %v7684 = vld [vmem:[%s723 + $0x10] sm:$0xff]
        %v7685 = vld [vmem:[%s723 + $0x18] sm:$0xff]
        %v7686 = vld [vmem:[%s723 + $0x20] sm:$0xff]
        %v7687 = vld [vmem:[%s723 + $0x28] sm:$0xff]
        %v7688 = vld [vmem:[%s723 + $0x30] sm:$0xff]
        %v7689 = vld [vmem:[%s723 + $0x38] sm:$0xff]
        %v7690 = vld [vmem:[%s723 + $0x40] sm:$0xff]
        %v7691 = vld [vmem:[%s723 + $0x48] sm:$0xff]
        %v7692 = vld [vmem:[%s723 + $0x50] sm:$0xff]
        %v7693 = vld [vmem:[%s723 + $0x58] sm:$0xff]
        %v7694 = vld [vmem:[%s723 + $0x60] sm:$0xff]
        %v7695 = vld [vmem:[%s723 + $0x68] sm:$0xff]
        %v7696 = vld [vmem:[%s723 + $0x70] sm:$0xff]
        %v7697 = vld [vmem:[%s723 + $0x78] sm:$0xff]
        %v7698 = vld [vmem:[%s723 + $0x80] sm:$0xff]
        %v7699 = vld [vmem:[%s723 + $0x88] sm:$0xff]
        %v7700 = vld [vmem:[%s723 + $0x90] sm:$0xff]
        %v7701 = vld [vmem:[%s723 + $0x98] sm:$0xff]
        %v7702 = vld [vmem:[%s723 + $0xa0] sm:$0xff]
        %v7703 = vld [vmem:[%s723 + $0xa8] sm:$0xff]
        %v7704 = vld [vmem:[%s723 + $0xb0] sm:$0xff]
        %v7705 = vld [vmem:[%s723 + $0xb8] sm:$0xff]
        %v7706 = vld [vmem:[%s723 + $0xc0] sm:$0xff]
        %v7707 = vld [vmem:[%s723 + $0xc8] sm:$0xff]
        %v7708 = vld [vmem:[%s723 + $0xd0] sm:$0xff]
        %v7709 = vld [vmem:[%s723 + $0xd8] sm:$0xff]
        %v7710 = vld [vmem:[%s723 + $0xe0] sm:$0xff]
        %v7711 = vld [vmem:[%s723 + $0xe8] sm:$0xff]
        %v7712 = vld [vmem:[%s723 + $0xf0] sm:$0xff]
        %v7713 = vld [vmem:[%s723 + $0xf8] sm:$0xff]
        %v7714 = vld [vmem:[%s831] sm:$0x1]
        %v7716 = vperm.slane %v7714, 0
        %v7718 = vand.u32 %v7697, 4294901760
        %7719 = vmatpush.msra.mxu0 %v7718
        %v7720 = vand.u32 %v7696, 4294901760
        %7721 = vmatpush.msra.mxu0 %v7720
        %v7722 = vand.u32 %v7695, 4294901760
        %7723 = vmatpush.msra.mxu0 %v7722
        %v7724 = vand.u32 %v7694, 4294901760
        %7725 = vmatpush.msra.mxu0 %v7724
        %v7726 = vand.u32 %v7693, 4294901760
        %7727 = vmatpush.msra.mxu0 %v7726
        %v7728 = vand.u32 %v7692, 4294901760
        %7729 = vmatpush.msra.mxu0 %v7728
        %v7730 = vand.u32 %v7691, 4294901760
        %7731 = vmatpush.msra.mxu0 %v7730
        %v7732 = vand.u32 %v7690, 4294901760
        %7733 = vmatpush.msra.mxu0 %v7732
        %v7734 = vand.u32 %v7689, 4294901760
        %7735 = vmatpush.msra.mxu0 %v7734
        %v7736 = vand.u32 %v7688, 4294901760
        %7737 = vmatpush.msra.mxu0 %v7736
        %v7738 = vand.u32 %v7687, 4294901760
        %7739 = vmatpush.msra.mxu0 %v7738
        %v7740 = vand.u32 %v7686, 4294901760
        %7741 = vmatpush.msra.mxu0 %v7740
        %v7742 = vand.u32 %v7685, 4294901760
        %7743 = vmatpush.msra.mxu0 %v7742
        %v7744 = vand.u32 %v7684, 4294901760
        %7745 = vmatpush.msra.mxu0 %v7744
        %v7746 = vand.u32 %v7683, 4294901760
        %7747 = vmatpush.msra.mxu0 %v7746
        %v7748 = vand.u32 %v7682, 4294901760
        %7749 = vmatpush.msra.mxu0 %v7748
        %v7750 = vand.u32 %v7674, 4294901760
        %v7751 = vsub.f32 %v7674, %v7750
        %v7752 = vand.u32 %v7751, 4294901760
        %v7753 = vsub.f32 %v7751, %v7752
        %v7754 = vand.u32 %v7753, 4294901760
        %7755 = vmatmul.f32.gmra.mxu0 %v7754
        %v7756 = vpop.f32.mrf.mxu0
        %v7757 = vadd.f32 %v7716, %v7756
        %v7758 = vand.u32 %v7676, 4294901760
        %v7759 = vsub.f32 %v7676, %v7758
        %v7760 = vand.u32 %v7759, 4294901760
        %v7761 = vsub.f32 %v7759, %v7760
        %v7762 = vand.u32 %v7761, 4294901760
        %7763 = vmatmul.f32.gmra.mxu0 %v7762
        %v7764 = vpop.f32.mrf.mxu0
        %v7765 = vadd.f32 %v7716, %v7764
        %v7766 = vand.u32 %v7678, 4294901760
        %v7767 = vsub.f32 %v7678, %v7766
        %v7768 = vand.u32 %v7767, 4294901760
        %v7769 = vsub.f32 %v7767, %v7768
        %v7770 = vand.u32 %v7769, 4294901760
        %7771 = vmatmul.f32.gmra.mxu0 %v7770
        %v7772 = vpop.f32.mrf.mxu0
        %v7773 = vadd.f32 %v7716, %v7772
        %v7774 = vand.u32 %v7680, 4294901760
        %v7775 = vsub.f32 %v7680, %v7774
        %v7776 = vand.u32 %v7775, 4294901760
        %v7777 = vsub.f32 %v7775, %v7776
        %v7778 = vand.u32 %v7777, 4294901760
        %7779 = vmatmul.f32.gmra.mxu0 %v7778
        %v7780 = vpop.f32.mrf.mxu0
        %v7781 = vadd.f32 %v7716, %v7780
        %7782 = vdwg.mxu0
        %v7783 = vand.u32 %v7697, 4294901760
        %v7784 = vsub.f32 %v7697, %v7783
        %v7785 = vand.u32 %v7784, 4294901760
        %v7786 = vsub.f32 %v7784, %v7785
        %v7787 = vand.u32 %v7786, 4294901760
        %7788 = vmatpush.msra.mxu0 %v7787
        %v7789 = vand.u32 %v7696, 4294901760
        %v7790 = vsub.f32 %v7696, %v7789
        %v7791 = vand.u32 %v7790, 4294901760
        %v7792 = vsub.f32 %v7790, %v7791
        %v7793 = vand.u32 %v7792, 4294901760
        %7794 = vmatpush.msra.mxu0 %v7793
        %v7795 = vand.u32 %v7695, 4294901760
        %v7796 = vsub.f32 %v7695, %v7795
        %v7797 = vand.u32 %v7796, 4294901760
        %v7798 = vsub.f32 %v7796, %v7797
        %v7799 = vand.u32 %v7798, 4294901760
        %7800 = vmatpush.msra.mxu0 %v7799
        %v7801 = vand.u32 %v7694, 4294901760
        %v7802 = vsub.f32 %v7694, %v7801
        %v7803 = vand.u32 %v7802, 4294901760
        %v7804 = vsub.f32 %v7802, %v7803
        %v7805 = vand.u32 %v7804, 4294901760
        %7806 = vmatpush.msra.mxu0 %v7805
        %v7807 = vand.u32 %v7693, 4294901760
        %v7808 = vsub.f32 %v7693, %v7807
        %v7809 = vand.u32 %v7808, 4294901760
        %v7810 = vsub.f32 %v7808, %v7809
        %v7811 = vand.u32 %v7810, 4294901760
        %7812 = vmatpush.msra.mxu0 %v7811
        %v7813 = vand.u32 %v7692, 4294901760
        %v7814 = vsub.f32 %v7692, %v7813
        %v7815 = vand.u32 %v7814, 4294901760
        %v7816 = vsub.f32 %v7814, %v7815
        %v7817 = vand.u32 %v7816, 4294901760
        %7818 = vmatpush.msra.mxu0 %v7817
        %v7819 = vand.u32 %v7691, 4294901760
        %v7820 = vsub.f32 %v7691, %v7819
        %v7821 = vand.u32 %v7820, 4294901760
        %v7822 = vsub.f32 %v7820, %v7821
        %v7823 = vand.u32 %v7822, 4294901760
        %7824 = vmatpush.msra.mxu0 %v7823
        %v7825 = vand.u32 %v7690, 4294901760
        %v7826 = vsub.f32 %v7690, %v7825
        %v7827 = vand.u32 %v7826, 4294901760
        %v7828 = vsub.f32 %v7826, %v7827
        %v7829 = vand.u32 %v7828, 4294901760
        %7830 = vmatpush.msra.mxu0 %v7829
        %v7831 = vand.u32 %v7689, 4294901760
        %v7832 = vsub.f32 %v7689, %v7831
        %v7833 = vand.u32 %v7832, 4294901760
        %v7834 = vsub.f32 %v7832, %v7833
        %v7835 = vand.u32 %v7834, 4294901760
        %7836 = vmatpush.msra.mxu0 %v7835
        %v7837 = vand.u32 %v7688, 4294901760
        %v7838 = vsub.f32 %v7688, %v7837
        %v7839 = vand.u32 %v7838, 4294901760
        %v7840 = vsub.f32 %v7838, %v7839
        %v7841 = vand.u32 %v7840, 4294901760
        %7842 = vmatpush.msra.mxu0 %v7841
        %v7843 = vand.u32 %v7687, 4294901760
        %v7844 = vsub.f32 %v7687, %v7843
        %v7845 = vand.u32 %v7844, 4294901760
        %v7846 = vsub.f32 %v7844, %v7845
        %v7847 = vand.u32 %v7846, 4294901760
        %7848 = vmatpush.msra.mxu0 %v7847
        %v7849 = vand.u32 %v7686, 4294901760
        %v7850 = vsub.f32 %v7686, %v7849
        %v7851 = vand.u32 %v7850, 4294901760
        %v7852 = vsub.f32 %v7850, %v7851
        %v7853 = vand.u32 %v7852, 4294901760
        %7854 = vmatpush.msra.mxu0 %v7853
        %v7855 = vand.u32 %v7685, 4294901760
        %v7856 = vsub.f32 %v7685, %v7855
        %v7857 = vand.u32 %v7856, 4294901760
        %v7858 = vsub.f32 %v7856, %v7857
        %v7859 = vand.u32 %v7858, 4294901760
        %7860 = vmatpush.msra.mxu0 %v7859
        %v7861 = vand.u32 %v7684, 4294901760
        %v7862 = vsub.f32 %v7684, %v7861
        %v7863 = vand.u32 %v7862, 4294901760
        %v7864 = vsub.f32 %v7862, %v7863
        %v7865 = vand.u32 %v7864, 4294901760
        %7866 = vmatpush.msra.mxu0 %v7865
        %v7867 = vand.u32 %v7683, 4294901760
        %v7868 = vsub.f32 %v7683, %v7867
        %v7869 = vand.u32 %v7868, 4294901760
        %v7870 = vsub.f32 %v7868, %v7869
        %v7871 = vand.u32 %v7870, 4294901760
        %7872 = vmatpush.msra.mxu0 %v7871
        %v7873 = vand.u32 %v7682, 4294901760
        %v7874 = vsub.f32 %v7682, %v7873
        %v7875 = vand.u32 %v7874, 4294901760
        %v7876 = vsub.f32 %v7874, %v7875
        %v7877 = vand.u32 %v7876, 4294901760
        %7878 = vmatpush.msra.mxu0 %v7877
        %v7879 = vand.u32 %v7674, 4294901760
        %7880 = vmatmul.f32.gmra.mxu0 %v7879
        %v7881 = vpop.f32.mrf.mxu0
        %v7882 = vadd.f32 %v7757, %v7881
        %v7883 = vand.u32 %v7676, 4294901760
        %7884 = vmatmul.f32.gmra.mxu0 %v7883
        %v7885 = vpop.f32.mrf.mxu0
        %v7886 = vadd.f32 %v7765, %v7885
        %v7887 = vand.u32 %v7678, 4294901760
        %7888 = vmatmul.f32.gmra.mxu0 %v7887
        %v7889 = vpop.f32.mrf.mxu0
        %v7890 = vadd.f32 %v7773, %v7889
        %v7891 = vand.u32 %v7680, 4294901760
        %7892 = vmatmul.f32.gmra.mxu0 %v7891
        %v7893 = vpop.f32.mrf.mxu0
        %v7894 = vadd.f32 %v7781, %v7893
        %7895 = vdwg.mxu0
        %v7896 = vand.u32 %v7697, 4294901760
        %v7897 = vsub.f32 %v7697, %v7896
        %7898 = vmatpush.msra.mxu0 %v7897
        %v7899 = vand.u32 %v7696, 4294901760
        %v7900 = vsub.f32 %v7696, %v7899
        %7901 = vmatpush.msra.mxu0 %v7900
        %v7902 = vand.u32 %v7695, 4294901760
        %v7903 = vsub.f32 %v7695, %v7902
        %7904 = vmatpush.msra.mxu0 %v7903
        %v7905 = vand.u32 %v7694, 4294901760
        %v7906 = vsub.f32 %v7694, %v7905
        %7907 = vmatpush.msra.mxu0 %v7906
        %v7908 = vand.u32 %v7693, 4294901760
        %v7909 = vsub.f32 %v7693, %v7908
        %7910 = vmatpush.msra.mxu0 %v7909
        %v7911 = vand.u32 %v7692, 4294901760
        %v7912 = vsub.f32 %v7692, %v7911
        %7913 = vmatpush.msra.mxu0 %v7912
        %v7914 = vand.u32 %v7691, 4294901760
        %v7915 = vsub.f32 %v7691, %v7914
        %7916 = vmatpush.msra.mxu0 %v7915
        %v7917 = vand.u32 %v7690, 4294901760
        %v7918 = vsub.f32 %v7690, %v7917
        %7919 = vmatpush.msra.mxu0 %v7918
        %v7920 = vand.u32 %v7689, 4294901760
        %v7921 = vsub.f32 %v7689, %v7920
        %7922 = vmatpush.msra.mxu0 %v7921
        %v7923 = vand.u32 %v7688, 4294901760
        %v7924 = vsub.f32 %v7688, %v7923
        %7925 = vmatpush.msra.mxu0 %v7924
        %v7926 = vand.u32 %v7687, 4294901760
        %v7927 = vsub.f32 %v7687, %v7926
        %7928 = vmatpush.msra.mxu0 %v7927
        %v7929 = vand.u32 %v7686, 4294901760
        %v7930 = vsub.f32 %v7686, %v7929
        %7931 = vmatpush.msra.mxu0 %v7930
        %v7932 = vand.u32 %v7685, 4294901760
        %v7933 = vsub.f32 %v7685, %v7932
        %7934 = vmatpush.msra.mxu0 %v7933
        %v7935 = vand.u32 %v7684, 4294901760
        %v7936 = vsub.f32 %v7684, %v7935
        %7937 = vmatpush.msra.mxu0 %v7936
        %v7938 = vand.u32 %v7683, 4294901760
        %v7939 = vsub.f32 %v7683, %v7938
        %7940 = vmatpush.msra.mxu0 %v7939
        %v7941 = vand.u32 %v7682, 4294901760
        %v7942 = vsub.f32 %v7682, %v7941
        %7943 = vmatpush.msra.mxu0 %v7942
        %v7944 = vand.u32 %v7674, 4294901760
        %v7945 = vsub.f32 %v7674, %v7944
        %7946 = vmatmul.f32.gmra.mxu0 %v7945
        %v7947 = vpop.f32.mrf.mxu0
        %v7948 = vadd.f32 %v7882, %v7947
        %v7949 = vand.u32 %v7676, 4294901760
        %v7950 = vsub.f32 %v7676, %v7949
        %7951 = vmatmul.f32.gmra.mxu0 %v7950
        %v7952 = vpop.f32.mrf.mxu0
        %v7953 = vadd.f32 %v7886, %v7952
        %v7954 = vand.u32 %v7678, 4294901760
        %v7955 = vsub.f32 %v7678, %v7954
        %7956 = vmatmul.f32.gmra.mxu0 %v7955
        %v7957 = vpop.f32.mrf.mxu0
        %v7958 = vadd.f32 %v7890, %v7957
        %v7959 = vand.u32 %v7680, 4294901760
        %v7960 = vsub.f32 %v7680, %v7959
        %7961 = vmatmul.f32.gmra.mxu0 %v7960
        %v7962 = vpop.f32.mrf.mxu0
        %v7963 = vadd.f32 %v7894, %v7962
        %7964 = vdwg.mxu0
        %v7965 = vand.u32 %v7697, 4294901760
        %7966 = vmatpush.msra.mxu0 %v7965
        %v7967 = vand.u32 %v7696, 4294901760
        %7968 = vmatpush.msra.mxu0 %v7967
        %v7969 = vand.u32 %v7695, 4294901760
        %7970 = vmatpush.msra.mxu0 %v7969
        %v7971 = vand.u32 %v7694, 4294901760
        %7972 = vmatpush.msra.mxu0 %v7971
        %v7973 = vand.u32 %v7693, 4294901760
        %7974 = vmatpush.msra.mxu0 %v7973
        %v7975 = vand.u32 %v7692, 4294901760
        %7976 = vmatpush.msra.mxu0 %v7975
        %v7977 = vand.u32 %v7691, 4294901760
        %7978 = vmatpush.msra.mxu0 %v7977
        %v7979 = vand.u32 %v7690, 4294901760
        %7980 = vmatpush.msra.mxu0 %v7979
        %v7981 = vand.u32 %v7689, 4294901760
        %7982 = vmatpush.msra.mxu0 %v7981
        %v7983 = vand.u32 %v7688, 4294901760
        %7984 = vmatpush.msra.mxu0 %v7983
        %v7985 = vand.u32 %v7687, 4294901760
        %7986 = vmatpush.msra.mxu0 %v7985
        %v7987 = vand.u32 %v7686, 4294901760
        %7988 = vmatpush.msra.mxu0 %v7987
        %v7989 = vand.u32 %v7685, 4294901760
        %7990 = vmatpush.msra.mxu0 %v7989
        %v7991 = vand.u32 %v7684, 4294901760
        %7992 = vmatpush.msra.mxu0 %v7991
        %v7993 = vand.u32 %v7683, 4294901760
        %7994 = vmatpush.msra.mxu0 %v7993
        %v7995 = vand.u32 %v7682, 4294901760
        %7996 = vmatpush.msra.mxu0 %v7995
        %v7997 = vand.u32 %v7674, 4294901760
        %v7998 = vsub.f32 %v7674, %v7997
        %v7999 = vand.u32 %v7998, 4294901760
        %8000 = vmatmul.f32.gmra.mxu0 %v7999
        %v8001 = vpop.f32.mrf.mxu0
        %v8002 = vadd.f32 %v7948, %v8001
        %v8003 = vand.u32 %v7676, 4294901760
        %v8004 = vsub.f32 %v7676, %v8003
        %v8005 = vand.u32 %v8004, 4294901760
        %8006 = vmatmul.f32.gmra.mxu0 %v8005
        %v8007 = vpop.f32.mrf.mxu0
        %v8008 = vadd.f32 %v7953, %v8007
        %v8009 = vand.u32 %v7678, 4294901760
        %v8010 = vsub.f32 %v7678, %v8009
        %v8011 = vand.u32 %v8010, 4294901760
        %8012 = vmatmul.f32.gmra.mxu0 %v8011
        %v8013 = vpop.f32.mrf.mxu0
        %v8014 = vadd.f32 %v7958, %v8013
        %v8015 = vand.u32 %v7680, 4294901760
        %v8016 = vsub.f32 %v7680, %v8015
        %v8017 = vand.u32 %v8016, 4294901760
        %8018 = vmatmul.f32.gmra.mxu0 %v8017
        %v8019 = vpop.f32.mrf.mxu0
        %v8020 = vadd.f32 %v7963, %v8019
        %8021 = vdwg.mxu0
        %v8022 = vand.u32 %v7697, 4294901760
        %v8023 = vsub.f32 %v7697, %v8022
        %v8024 = vand.u32 %v8023, 4294901760
        %8025 = vmatpush.msra.mxu0 %v8024
        %v8026 = vand.u32 %v7696, 4294901760
        %v8027 = vsub.f32 %v7696, %v8026
        %v8028 = vand.u32 %v8027, 4294901760
        %8029 = vmatpush.msra.mxu0 %v8028
        %v8030 = vand.u32 %v7695, 4294901760
        %v8031 = vsub.f32 %v7695, %v8030
        %v8032 = vand.u32 %v8031, 4294901760
        %8033 = vmatpush.msra.mxu0 %v8032
        %v8034 = vand.u32 %v7694, 4294901760
        %v8035 = vsub.f32 %v7694, %v8034
        %v8036 = vand.u32 %v8035, 4294901760
        %8037 = vmatpush.msra.mxu0 %v8036
        %v8038 = vand.u32 %v7693, 4294901760
        %v8039 = vsub.f32 %v7693, %v8038
        %v8040 = vand.u32 %v8039, 4294901760
        %8041 = vmatpush.msra.mxu0 %v8040
        %v8042 = vand.u32 %v7692, 4294901760
        %v8043 = vsub.f32 %v7692, %v8042
        %v8044 = vand.u32 %v8043, 4294901760
        %8045 = vmatpush.msra.mxu0 %v8044
        %v8046 = vand.u32 %v7691, 4294901760
        %v8047 = vsub.f32 %v7691, %v8046
        %v8048 = vand.u32 %v8047, 4294901760
        %8049 = vmatpush.msra.mxu0 %v8048
        %v8050 = vand.u32 %v7690, 4294901760
        %v8051 = vsub.f32 %v7690, %v8050
        %v8052 = vand.u32 %v8051, 4294901760
        %8053 = vmatpush.msra.mxu0 %v8052
        %v8054 = vand.u32 %v7689, 4294901760
        %v8055 = vsub.f32 %v7689, %v8054
        %v8056 = vand.u32 %v8055, 4294901760
        %8057 = vmatpush.msra.mxu0 %v8056
        %v8058 = vand.u32 %v7688, 4294901760
        %v8059 = vsub.f32 %v7688, %v8058
        %v8060 = vand.u32 %v8059, 4294901760
        %8061 = vmatpush.msra.mxu0 %v8060
        %v8062 = vand.u32 %v7687, 4294901760
        %v8063 = vsub.f32 %v7687, %v8062
        %v8064 = vand.u32 %v8063, 4294901760
        %8065 = vmatpush.msra.mxu0 %v8064
        %v8066 = vand.u32 %v7686, 4294901760
        %v8067 = vsub.f32 %v7686, %v8066
        %v8068 = vand.u32 %v8067, 4294901760
        %8069 = vmatpush.msra.mxu0 %v8068
        %v8070 = vand.u32 %v7685, 4294901760
        %v8071 = vsub.f32 %v7685, %v8070
        %v8072 = vand.u32 %v8071, 4294901760
        %8073 = vmatpush.msra.mxu0 %v8072
        %v8074 = vand.u32 %v7684, 4294901760
        %v8075 = vsub.f32 %v7684, %v8074
        %v8076 = vand.u32 %v8075, 4294901760
        %8077 = vmatpush.msra.mxu0 %v8076
        %v8078 = vand.u32 %v7683, 4294901760
        %v8079 = vsub.f32 %v7683, %v8078
        %v8080 = vand.u32 %v8079, 4294901760
        %8081 = vmatpush.msra.mxu0 %v8080
        %v8082 = vand.u32 %v7682, 4294901760
        %v8083 = vsub.f32 %v7682, %v8082
        %v8084 = vand.u32 %v8083, 4294901760
        %8085 = vmatpush.msra.mxu0 %v8084
        %v8086 = vand.u32 %v7674, 4294901760
        %8087 = vmatmul.f32.gmra.mxu0 %v8086
        %v8088 = vpop.f32.mrf.mxu0
        %v8089 = vadd.f32 %v8002, %v8088
        %v8090 = vand.u32 %v7676, 4294901760
        %8091 = vmatmul.f32.gmra.mxu0 %v8090
        %v8092 = vpop.f32.mrf.mxu0
        %v8093 = vadd.f32 %v8008, %v8092
        %v8094 = vand.u32 %v7678, 4294901760
        %8095 = vmatmul.f32.gmra.mxu0 %v8094
        %v8096 = vpop.f32.mrf.mxu0
        %v8097 = vadd.f32 %v8014, %v8096
        %v8098 = vand.u32 %v7680, 4294901760
        %8099 = vmatmul.f32.gmra.mxu0 %v8098
        %v8100 = vpop.f32.mrf.mxu0
        %v8101 = vadd.f32 %v8020, %v8100
        %8102 = vdwg.mxu0
        %v8103 = vand.u32 %v7697, 4294901760
        %8104 = vmatpush.msra.mxu0 %v8103
        %v8105 = vand.u32 %v7696, 4294901760
        %8106 = vmatpush.msra.mxu0 %v8105
        %v8107 = vand.u32 %v7695, 4294901760
        %8108 = vmatpush.msra.mxu0 %v8107
        %v8109 = vand.u32 %v7694, 4294901760
        %8110 = vmatpush.msra.mxu0 %v8109
        %v8111 = vand.u32 %v7693, 4294901760
        %8112 = vmatpush.msra.mxu0 %v8111
        %v8113 = vand.u32 %v7692, 4294901760
        %8114 = vmatpush.msra.mxu0 %v8113
        %v8115 = vand.u32 %v7691, 4294901760
        %8116 = vmatpush.msra.mxu0 %v8115
        %v8117 = vand.u32 %v7690, 4294901760
        %8118 = vmatpush.msra.mxu0 %v8117
        %v8119 = vand.u32 %v7689, 4294901760
        %8120 = vmatpush.msra.mxu0 %v8119
        %v8121 = vand.u32 %v7688, 4294901760
        %8122 = vmatpush.msra.mxu0 %v8121
        %v8123 = vand.u32 %v7687, 4294901760
        %8124 = vmatpush.msra.mxu0 %v8123
        %v8125 = vand.u32 %v7686, 4294901760
        %8126 = vmatpush.msra.mxu0 %v8125
        %v8127 = vand.u32 %v7685, 4294901760
        %8128 = vmatpush.msra.mxu0 %v8127
        %v8129 = vand.u32 %v7684, 4294901760
        %8130 = vmatpush.msra.mxu0 %v8129
        %v8131 = vand.u32 %v7683, 4294901760
        %8132 = vmatpush.msra.mxu0 %v8131
        %v8133 = vand.u32 %v7682, 4294901760
        %8134 = vmatpush.msra.mxu0 %v8133
        %v8135 = vand.u32 %v7674, 4294901760
        %8136 = vmatmul.f32.gmra.mxu0 %v8135
        %v8137 = vpop.f32.mrf.mxu0
        %v8138 = vadd.f32 %v8089, %v8137
        %v8139 = vand.u32 %v7676, 4294901760
        %8140 = vmatmul.f32.gmra.mxu0 %v8139
        %v8141 = vpop.f32.mrf.mxu0
        %v8142 = vadd.f32 %v8093, %v8141
        %v8143 = vand.u32 %v7678, 4294901760
        %8144 = vmatmul.f32.gmra.mxu0 %v8143
        %v8145 = vpop.f32.mrf.mxu0
        %v8146 = vadd.f32 %v8097, %v8145
        %v8147 = vand.u32 %v7680, 4294901760
        %8148 = vmatmul.f32.gmra.mxu0 %v8147
        %v8149 = vpop.f32.mrf.mxu0
        %v8150 = vadd.f32 %v8101, %v8149
        %8151 = vdwg.mxu0
        %v8152 = vand.u32 %v7713, 4294901760
        %8153 = vmatpush.msra.mxu0 %v8152
        %v8154 = vand.u32 %v7712, 4294901760
        %8155 = vmatpush.msra.mxu0 %v8154
        %v8156 = vand.u32 %v7711, 4294901760
        %8157 = vmatpush.msra.mxu0 %v8156
        %v8158 = vand.u32 %v7710, 4294901760
        %8159 = vmatpush.msra.mxu0 %v8158
        %v8160 = vand.u32 %v7709, 4294901760
        %8161 = vmatpush.msra.mxu0 %v8160
        %v8162 = vand.u32 %v7708, 4294901760
        %8163 = vmatpush.msra.mxu0 %v8162
        %v8164 = vand.u32 %v7707, 4294901760
        %8165 = vmatpush.msra.mxu0 %v8164
        %v8166 = vand.u32 %v7706, 4294901760
        %8167 = vmatpush.msra.mxu0 %v8166
        %v8168 = vand.u32 %v7705, 4294901760
        %8169 = vmatpush.msra.mxu0 %v8168
        %v8170 = vand.u32 %v7704, 4294901760
        %8171 = vmatpush.msra.mxu0 %v8170
        %v8172 = vand.u32 %v7703, 4294901760
        %8173 = vmatpush.msra.mxu0 %v8172
        %v8174 = vand.u32 %v7702, 4294901760
        %8175 = vmatpush.msra.mxu0 %v8174
        %v8176 = vand.u32 %v7701, 4294901760
        %8177 = vmatpush.msra.mxu0 %v8176
        %v8178 = vand.u32 %v7700, 4294901760
        %8179 = vmatpush.msra.mxu0 %v8178
        %v8180 = vand.u32 %v7699, 4294901760
        %8181 = vmatpush.msra.mxu0 %v8180
        %v8182 = vand.u32 %v7698, 4294901760
        %8183 = vmatpush.msra.mxu0 %v8182
        %v8184 = vand.u32 %v7675, 4294901760
        %v8185 = vsub.f32 %v7675, %v8184
        %v8186 = vand.u32 %v8185, 4294901760
        %v8187 = vsub.f32 %v8185, %v8186
        %v8188 = vand.u32 %v8187, 4294901760
        %8189 = vmatmul.f32.gmra.mxu0 %v8188
        %v8190 = vpop.f32.mrf.mxu0
        %v8191 = vadd.f32 %v8138, %v8190
        %v8192 = vand.u32 %v7677, 4294901760
        %v8193 = vsub.f32 %v7677, %v8192
        %v8194 = vand.u32 %v8193, 4294901760
        %v8195 = vsub.f32 %v8193, %v8194
        %v8196 = vand.u32 %v8195, 4294901760
        %8197 = vmatmul.f32.gmra.mxu0 %v8196
        %v8198 = vpop.f32.mrf.mxu0
        %v8199 = vadd.f32 %v8142, %v8198
        %v8200 = vand.u32 %v7679, 4294901760
        %v8201 = vsub.f32 %v7679, %v8200
        %v8202 = vand.u32 %v8201, 4294901760
        %v8203 = vsub.f32 %v8201, %v8202
        %v8204 = vand.u32 %v8203, 4294901760
        %8205 = vmatmul.f32.gmra.mxu0 %v8204
        %v8206 = vpop.f32.mrf.mxu0
        %v8207 = vadd.f32 %v8146, %v8206
        %v8208 = vand.u32 %v7681, 4294901760
        %v8209 = vsub.f32 %v7681, %v8208
        %v8210 = vand.u32 %v8209, 4294901760
        %v8211 = vsub.f32 %v8209, %v8210
        %v8212 = vand.u32 %v8211, 4294901760
        %8213 = vmatmul.f32.gmra.mxu0 %v8212
        %v8214 = vpop.f32.mrf.mxu0
        %v8215 = vadd.f32 %v8150, %v8214
        %8216 = vdwg.mxu0
        %v8217 = vand.u32 %v7713, 4294901760
        %v8218 = vsub.f32 %v7713, %v8217
        %v8219 = vand.u32 %v8218, 4294901760
        %v8220 = vsub.f32 %v8218, %v8219
        %v8221 = vand.u32 %v8220, 4294901760
        %8222 = vmatpush.msra.mxu0 %v8221
        %v8223 = vand.u32 %v7712, 4294901760
        %v8224 = vsub.f32 %v7712, %v8223
        %v8225 = vand.u32 %v8224, 4294901760
        %v8226 = vsub.f32 %v8224, %v8225
        %v8227 = vand.u32 %v8226, 4294901760
        %8228 = vmatpush.msra.mxu0 %v8227
        %v8229 = vand.u32 %v7711, 4294901760
        %v8230 = vsub.f32 %v7711, %v8229
        %v8231 = vand.u32 %v8230, 4294901760
        %v8232 = vsub.f32 %v8230, %v8231
        %v8233 = vand.u32 %v8232, 4294901760
        %8234 = vmatpush.msra.mxu0 %v8233
        %v8235 = vand.u32 %v7710, 4294901760
        %v8236 = vsub.f32 %v7710, %v8235
        %v8237 = vand.u32 %v8236, 4294901760
        %v8238 = vsub.f32 %v8236, %v8237
        %v8239 = vand.u32 %v8238, 4294901760
        %8240 = vmatpush.msra.mxu0 %v8239
        %v8241 = vand.u32 %v7709, 4294901760
        %v8242 = vsub.f32 %v7709, %v8241
        %v8243 = vand.u32 %v8242, 4294901760
        %v8244 = vsub.f32 %v8242, %v8243
        %v8245 = vand.u32 %v8244, 4294901760
        %8246 = vmatpush.msra.mxu0 %v8245
        %v8247 = vand.u32 %v7708, 4294901760
        %v8248 = vsub.f32 %v7708, %v8247
        %v8249 = vand.u32 %v8248, 4294901760
        %v8250 = vsub.f32 %v8248, %v8249
        %v8251 = vand.u32 %v8250, 4294901760
        %8252 = vmatpush.msra.mxu0 %v8251
        %v8253 = vand.u32 %v7707, 4294901760
        %v8254 = vsub.f32 %v7707, %v8253
        %v8255 = vand.u32 %v8254, 4294901760
        %v8256 = vsub.f32 %v8254, %v8255
        %v8257 = vand.u32 %v8256, 4294901760
        %8258 = vmatpush.msra.mxu0 %v8257
        %v8259 = vand.u32 %v7706, 4294901760
        %v8260 = vsub.f32 %v7706, %v8259
        %v8261 = vand.u32 %v8260, 4294901760
        %v8262 = vsub.f32 %v8260, %v8261
        %v8263 = vand.u32 %v8262, 4294901760
        %8264 = vmatpush.msra.mxu0 %v8263
        %v8265 = vand.u32 %v7705, 4294901760
        %v8266 = vsub.f32 %v7705, %v8265
        %v8267 = vand.u32 %v8266, 4294901760
        %v8268 = vsub.f32 %v8266, %v8267
        %v8269 = vand.u32 %v8268, 4294901760
        %8270 = vmatpush.msra.mxu0 %v8269
        %v8271 = vand.u32 %v7704, 4294901760
        %v8272 = vsub.f32 %v7704, %v8271
        %v8273 = vand.u32 %v8272, 4294901760
        %v8274 = vsub.f32 %v8272, %v8273
        %v8275 = vand.u32 %v8274, 4294901760
        %8276 = vmatpush.msra.mxu0 %v8275
        %v8277 = vand.u32 %v7703, 4294901760
        %v8278 = vsub.f32 %v7703, %v8277
        %v8279 = vand.u32 %v8278, 4294901760
        %v8280 = vsub.f32 %v8278, %v8279
        %v8281 = vand.u32 %v8280, 4294901760
        %8282 = vmatpush.msra.mxu0 %v8281
        %v8283 = vand.u32 %v7702, 4294901760
        %v8284 = vsub.f32 %v7702, %v8283
        %v8285 = vand.u32 %v8284, 4294901760
        %v8286 = vsub.f32 %v8284, %v8285
        %v8287 = vand.u32 %v8286, 4294901760
        %8288 = vmatpush.msra.mxu0 %v8287
        %v8289 = vand.u32 %v7701, 4294901760
        %v8290 = vsub.f32 %v7701, %v8289
        %v8291 = vand.u32 %v8290, 4294901760
        %v8292 = vsub.f32 %v8290, %v8291
        %v8293 = vand.u32 %v8292, 4294901760
        %8294 = vmatpush.msra.mxu0 %v8293
        %v8295 = vand.u32 %v7700, 4294901760
        %v8296 = vsub.f32 %v7700, %v8295
        %v8297 = vand.u32 %v8296, 4294901760
        %v8298 = vsub.f32 %v8296, %v8297
        %v8299 = vand.u32 %v8298, 4294901760
        %8300 = vmatpush.msra.mxu0 %v8299
        %v8301 = vand.u32 %v7699, 4294901760
        %v8302 = vsub.f32 %v7699, %v8301
        %v8303 = vand.u32 %v8302, 4294901760
        %v8304 = vsub.f32 %v8302, %v8303
        %v8305 = vand.u32 %v8304, 4294901760
        %8306 = vmatpush.msra.mxu0 %v8305
        %v8307 = vand.u32 %v7698, 4294901760
        %v8308 = vsub.f32 %v7698, %v8307
        %v8309 = vand.u32 %v8308, 4294901760
        %v8310 = vsub.f32 %v8308, %v8309
        %v8311 = vand.u32 %v8310, 4294901760
        %8312 = vmatpush.msra.mxu0 %v8311
        %v8313 = vand.u32 %v7675, 4294901760
        %8314 = vmatmul.f32.gmra.mxu0 %v8313
        %v8315 = vpop.f32.mrf.mxu0
        %v8316 = vadd.f32 %v8191, %v8315
        %v8317 = vand.u32 %v7677, 4294901760
        %8318 = vmatmul.f32.gmra.mxu0 %v8317
        %v8319 = vpop.f32.mrf.mxu0
        %v8320 = vadd.f32 %v8199, %v8319
        %v8321 = vand.u32 %v7679, 4294901760
        %8322 = vmatmul.f32.gmra.mxu0 %v8321
        %v8323 = vpop.f32.mrf.mxu0
        %v8324 = vadd.f32 %v8207, %v8323
        %v8325 = vand.u32 %v7681, 4294901760
        %8326 = vmatmul.f32.gmra.mxu0 %v8325
        %v8327 = vpop.f32.mrf.mxu0
        %v8328 = vadd.f32 %v8215, %v8327
        %8329 = vdwg.mxu0
        %v8330 = vand.u32 %v7713, 4294901760
        %v8331 = vsub.f32 %v7713, %v8330
        %8332 = vmatpush.msra.mxu0 %v8331
        %v8333 = vand.u32 %v7712, 4294901760
        %v8334 = vsub.f32 %v7712, %v8333
        %8335 = vmatpush.msra.mxu0 %v8334
        %v8336 = vand.u32 %v7711, 4294901760
        %v8337 = vsub.f32 %v7711, %v8336
        %8338 = vmatpush.msra.mxu0 %v8337
        %v8339 = vand.u32 %v7710, 4294901760
        %v8340 = vsub.f32 %v7710, %v8339
        %8341 = vmatpush.msra.mxu0 %v8340
        %v8342 = vand.u32 %v7709, 4294901760
        %v8343 = vsub.f32 %v7709, %v8342
        %8344 = vmatpush.msra.mxu0 %v8343
        %v8345 = vand.u32 %v7708, 4294901760
        %v8346 = vsub.f32 %v7708, %v8345
        %8347 = vmatpush.msra.mxu0 %v8346
        %v8348 = vand.u32 %v7707, 4294901760
        %v8349 = vsub.f32 %v7707, %v8348
        %8350 = vmatpush.msra.mxu0 %v8349
        %v8351 = vand.u32 %v7706, 4294901760
        %v8352 = vsub.f32 %v7706, %v8351
        %8353 = vmatpush.msra.mxu0 %v8352
        %v8354 = vand.u32 %v7705, 4294901760
        %v8355 = vsub.f32 %v7705, %v8354
        %8356 = vmatpush.msra.mxu0 %v8355
        %v8357 = vand.u32 %v7704, 4294901760
        %v8358 = vsub.f32 %v7704, %v8357
        %8359 = vmatpush.msra.mxu0 %v8358
        %v8360 = vand.u32 %v7703, 4294901760
        %v8361 = vsub.f32 %v7703, %v8360
        %8362 = vmatpush.msra.mxu0 %v8361
        %v8363 = vand.u32 %v7702, 4294901760
        %v8364 = vsub.f32 %v7702, %v8363
        %8365 = vmatpush.msra.mxu0 %v8364
        %v8366 = vand.u32 %v7701, 4294901760
        %v8367 = vsub.f32 %v7701, %v8366
        %8368 = vmatpush.msra.mxu0 %v8367
        %v8369 = vand.u32 %v7700, 4294901760
        %v8370 = vsub.f32 %v7700, %v8369
        %8371 = vmatpush.msra.mxu0 %v8370
        %v8372 = vand.u32 %v7699, 4294901760
        %v8373 = vsub.f32 %v7699, %v8372
        %8374 = vmatpush.msra.mxu0 %v8373
        %v8375 = vand.u32 %v7698, 4294901760
        %v8376 = vsub.f32 %v7698, %v8375
        %8377 = vmatpush.msra.mxu0 %v8376
        %v8378 = vand.u32 %v7675, 4294901760
        %v8379 = vsub.f32 %v7675, %v8378
        %8380 = vmatmul.f32.gmra.mxu0 %v8379
        %v8381 = vpop.f32.mrf.mxu0
        %v8382 = vadd.f32 %v8316, %v8381
        %v8383 = vand.u32 %v7677, 4294901760
        %v8384 = vsub.f32 %v7677, %v8383
        %8385 = vmatmul.f32.gmra.mxu0 %v8384
        %v8386 = vpop.f32.mrf.mxu0
        %v8387 = vadd.f32 %v8320, %v8386
        %v8388 = vand.u32 %v7679, 4294901760
        %v8389 = vsub.f32 %v7679, %v8388
        %8390 = vmatmul.f32.gmra.mxu0 %v8389
        %v8391 = vpop.f32.mrf.mxu0
        %v8392 = vadd.f32 %v8324, %v8391
        %v8393 = vand.u32 %v7681, 4294901760
        %v8394 = vsub.f32 %v7681, %v8393
        %8395 = vmatmul.f32.gmra.mxu0 %v8394
        %v8396 = vpop.f32.mrf.mxu0
        %v8397 = vadd.f32 %v8328, %v8396
        %8398 = vdwg.mxu0
        %v8399 = vand.u32 %v7713, 4294901760
        %8400 = vmatpush.msra.mxu0 %v8399
        %v8401 = vand.u32 %v7712, 4294901760
        %8402 = vmatpush.msra.mxu0 %v8401
        %v8403 = vand.u32 %v7711, 4294901760
        %8404 = vmatpush.msra.mxu0 %v8403
        %v8405 = vand.u32 %v7710, 4294901760
        %8406 = vmatpush.msra.mxu0 %v8405
        %v8407 = vand.u32 %v7709, 4294901760
        %8408 = vmatpush.msra.mxu0 %v8407
        %v8409 = vand.u32 %v7708, 4294901760
        %8410 = vmatpush.msra.mxu0 %v8409
        %v8411 = vand.u32 %v7707, 4294901760
        %8412 = vmatpush.msra.mxu0 %v8411
        %v8413 = vand.u32 %v7706, 4294901760
        %8414 = vmatpush.msra.mxu0 %v8413
        %v8415 = vand.u32 %v7705, 4294901760
        %8416 = vmatpush.msra.mxu0 %v8415
        %v8417 = vand.u32 %v7704, 4294901760
        %8418 = vmatpush.msra.mxu0 %v8417
        %v8419 = vand.u32 %v7703, 4294901760
        %8420 = vmatpush.msra.mxu0 %v8419
        %v8421 = vand.u32 %v7702, 4294901760
        %8422 = vmatpush.msra.mxu0 %v8421
        %v8423 = vand.u32 %v7701, 4294901760
        %8424 = vmatpush.msra.mxu0 %v8423
        %v8425 = vand.u32 %v7700, 4294901760
        %8426 = vmatpush.msra.mxu0 %v8425
        %v8427 = vand.u32 %v7699, 4294901760
        %8428 = vmatpush.msra.mxu0 %v8427
        %v8429 = vand.u32 %v7698, 4294901760
        %8430 = vmatpush.msra.mxu0 %v8429
        %v8431 = vand.u32 %v7675, 4294901760
        %v8432 = vsub.f32 %v7675, %v8431
        %v8433 = vand.u32 %v8432, 4294901760
        %8434 = vmatmul.f32.gmra.mxu0 %v8433
        %v8435 = vpop.f32.mrf.mxu0
        %v8436 = vadd.f32 %v8382, %v8435
        %v8437 = vand.u32 %v7677, 4294901760
        %v8438 = vsub.f32 %v7677, %v8437
        %v8439 = vand.u32 %v8438, 4294901760
        %8440 = vmatmul.f32.gmra.mxu0 %v8439
        %v8441 = vpop.f32.mrf.mxu0
        %v8442 = vadd.f32 %v8387, %v8441
        %v8443 = vand.u32 %v7679, 4294901760
        %v8444 = vsub.f32 %v7679, %v8443
        %v8445 = vand.u32 %v8444, 4294901760
        %8446 = vmatmul.f32.gmra.mxu0 %v8445
        %v8447 = vpop.f32.mrf.mxu0
        %v8448 = vadd.f32 %v8392, %v8447
        %v8449 = vand.u32 %v7681, 4294901760
        %v8450 = vsub.f32 %v7681, %v8449
        %v8451 = vand.u32 %v8450, 4294901760
        %8452 = vmatmul.f32.gmra.mxu0 %v8451
        %v8453 = vpop.f32.mrf.mxu0
        %v8454 = vadd.f32 %v8397, %v8453
        %8455 = vdwg.mxu0
        %v8456 = vand.u32 %v7713, 4294901760
        %v8457 = vsub.f32 %v7713, %v8456
        %v8458 = vand.u32 %v8457, 4294901760
        %8459 = vmatpush.msra.mxu0 %v8458
        %v8460 = vand.u32 %v7712, 4294901760
        %v8461 = vsub.f32 %v7712, %v8460
        %v8462 = vand.u32 %v8461, 4294901760
        %8463 = vmatpush.msra.mxu0 %v8462
        %v8464 = vand.u32 %v7711, 4294901760
        %v8465 = vsub.f32 %v7711, %v8464
        %v8466 = vand.u32 %v8465, 4294901760
        %8467 = vmatpush.msra.mxu0 %v8466
        %v8468 = vand.u32 %v7710, 4294901760
        %v8469 = vsub.f32 %v7710, %v8468
        %v8470 = vand.u32 %v8469, 4294901760
        %8471 = vmatpush.msra.mxu0 %v8470
        %v8472 = vand.u32 %v7709, 4294901760
        %v8473 = vsub.f32 %v7709, %v8472
        %v8474 = vand.u32 %v8473, 4294901760
        %8475 = vmatpush.msra.mxu0 %v8474
        %v8476 = vand.u32 %v7708, 4294901760
        %v8477 = vsub.f32 %v7708, %v8476
        %v8478 = vand.u32 %v8477, 4294901760
        %8479 = vmatpush.msra.mxu0 %v8478
        %v8480 = vand.u32 %v7707, 4294901760
        %v8481 = vsub.f32 %v7707, %v8480
        %v8482 = vand.u32 %v8481, 4294901760
        %8483 = vmatpush.msra.mxu0 %v8482
        %v8484 = vand.u32 %v7706, 4294901760
        %v8485 = vsub.f32 %v7706, %v8484
        %v8486 = vand.u32 %v8485, 4294901760
        %8487 = vmatpush.msra.mxu0 %v8486
        %v8488 = vand.u32 %v7705, 4294901760
        %v8489 = vsub.f32 %v7705, %v8488
        %v8490 = vand.u32 %v8489, 4294901760
        %8491 = vmatpush.msra.mxu0 %v8490
        %v8492 = vand.u32 %v7704, 4294901760
        %v8493 = vsub.f32 %v7704, %v8492
        %v8494 = vand.u32 %v8493, 4294901760
        %8495 = vmatpush.msra.mxu0 %v8494
        %v8496 = vand.u32 %v7703, 4294901760
        %v8497 = vsub.f32 %v7703, %v8496
        %v8498 = vand.u32 %v8497, 4294901760
        %8499 = vmatpush.msra.mxu0 %v8498
        %v8500 = vand.u32 %v7702, 4294901760
        %v8501 = vsub.f32 %v7702, %v8500
        %v8502 = vand.u32 %v8501, 4294901760
        %8503 = vmatpush.msra.mxu0 %v8502
        %v8504 = vand.u32 %v7701, 4294901760
        %v8505 = vsub.f32 %v7701, %v8504
        %v8506 = vand.u32 %v8505, 4294901760
        %8507 = vmatpush.msra.mxu0 %v8506
        %v8508 = vand.u32 %v7700, 4294901760
        %v8509 = vsub.f32 %v7700, %v8508
        %v8510 = vand.u32 %v8509, 4294901760
        %8511 = vmatpush.msra.mxu0 %v8510
        %v8512 = vand.u32 %v7699, 4294901760
        %v8513 = vsub.f32 %v7699, %v8512
        %v8514 = vand.u32 %v8513, 4294901760
        %8515 = vmatpush.msra.mxu0 %v8514
        %v8516 = vand.u32 %v7698, 4294901760
        %v8517 = vsub.f32 %v7698, %v8516
        %v8518 = vand.u32 %v8517, 4294901760
        %8519 = vmatpush.msra.mxu0 %v8518
        %v8520 = vand.u32 %v7675, 4294901760
        %8521 = vmatmul.f32.gmra.mxu0 %v8520
        %v8522 = vpop.f32.mrf.mxu0
        %v8523 = vadd.f32 %v8436, %v8522
        %v8524 = vand.u32 %v7677, 4294901760
        %8525 = vmatmul.f32.gmra.mxu0 %v8524
        %v8526 = vpop.f32.mrf.mxu0
        %v8527 = vadd.f32 %v8442, %v8526
        %v8528 = vand.u32 %v7679, 4294901760
        %8529 = vmatmul.f32.gmra.mxu0 %v8528
        %v8530 = vpop.f32.mrf.mxu0
        %v8531 = vadd.f32 %v8448, %v8530
        %v8532 = vand.u32 %v7681, 4294901760
        %8533 = vmatmul.f32.gmra.mxu0 %v8532
        %v8534 = vpop.f32.mrf.mxu0
        %v8535 = vadd.f32 %v8454, %v8534
        %8536 = vdwg.mxu0
        %v8537 = vand.u32 %v7713, 4294901760
        %8538 = vmatpush.msra.mxu0 %v8537
        %v8539 = vand.u32 %v7712, 4294901760
        %8540 = vmatpush.msra.mxu0 %v8539
        %v8541 = vand.u32 %v7711, 4294901760
        %8542 = vmatpush.msra.mxu0 %v8541
        %v8543 = vand.u32 %v7710, 4294901760
        %8544 = vmatpush.msra.mxu0 %v8543
        %v8545 = vand.u32 %v7709, 4294901760
        %8546 = vmatpush.msra.mxu0 %v8545
        %v8547 = vand.u32 %v7708, 4294901760
        %8548 = vmatpush.msra.mxu0 %v8547
        %v8549 = vand.u32 %v7707, 4294901760
        %8550 = vmatpush.msra.mxu0 %v8549
        %v8551 = vand.u32 %v7706, 4294901760
        %8552 = vmatpush.msra.mxu0 %v8551
        %v8553 = vand.u32 %v7705, 4294901760
        %8554 = vmatpush.msra.mxu0 %v8553
        %v8555 = vand.u32 %v7704, 4294901760
        %8556 = vmatpush.msra.mxu0 %v8555
        %v8557 = vand.u32 %v7703, 4294901760
        %8558 = vmatpush.msra.mxu0 %v8557
        %v8559 = vand.u32 %v7702, 4294901760
        %8560 = vmatpush.msra.mxu0 %v8559
        %v8561 = vand.u32 %v7701, 4294901760
        %8562 = vmatpush.msra.mxu0 %v8561
        %v8563 = vand.u32 %v7700, 4294901760
        %8564 = vmatpush.msra.mxu0 %v8563
        %v8565 = vand.u32 %v7699, 4294901760
        %8566 = vmatpush.msra.mxu0 %v8565
        %v8567 = vand.u32 %v7698, 4294901760
        %8568 = vmatpush.msra.mxu0 %v8567
        %v8569 = vand.u32 %v7675, 4294901760
        %8570 = vmatmul.f32.gmra.mxu0 %v8569
        %v8571 = vpop.f32.mrf.mxu0
        %v8572 = vadd.f32 %v8523, %v8571
        %v8573 = vand.u32 %v7677, 4294901760
        %8574 = vmatmul.f32.gmra.mxu0 %v8573
        %v8575 = vpop.f32.mrf.mxu0
        %v8576 = vadd.f32 %v8527, %v8575
        %v8577 = vand.u32 %v7679, 4294901760
        %8578 = vmatmul.f32.gmra.mxu0 %v8577
        %v8579 = vpop.f32.mrf.mxu0
        %v8580 = vadd.f32 %v8531, %v8579
        %v8581 = vand.u32 %v7681, 4294901760
        %8582 = vmatmul.f32.gmra.mxu0 %v8581
        %v8583 = vpop.f32.mrf.mxu0
        %v8584 = vadd.f32 %v8535, %v8583
        %8585 = vdwg.mxu0
        %v8586 = vadd.f32 %v6452, %v8572
        %v8587 = vadd.f32 %v6453, %v8576
        %v8588 = vadd.f32 %v6454, %v8580
        %v8589 = vadd.f32 %v6455, %v8584
        %v8590 = vld [vmem:[%s732] sm:$0x1]
        %v8591 = vld [vmem:[%s741] sm:$0x1]
        %8592 = vadd.xlane.f32.xlu0 %v8586
        %v8593 = vpop.xlane.xlu0 %8592
        %8594 = vadd.xlane.f32.xlu0 %v8587
        %v8595 = vpop.xlane.xlu0 %8594
        %8596 = vadd.xlane.f32.xlu0 %v8588
        %v8597 = vpop.xlane.xlu0 %8596
        %8598 = vadd.xlane.f32.xlu0 %v8589
        %v8599 = vpop.xlane.xlu0 %8598
        %v8600 = vmul.f32 %v8593, %v6369
        %v8601 = vmul.f32 %v8595, %v6369
        %v8602 = vmul.f32 %v8597, %v6369
        %v8603 = vmul.f32 %v8599, %v6369
        %v8604 = vsub.f32 %v8586, %v8600
        %v8605 = vsub.f32 %v8587, %v8601
        %v8606 = vsub.f32 %v8588, %v8602
        %v8607 = vsub.f32 %v8589, %v8603
        %v8608 = vmul.f32 %v8604, %v8604
        %v8609 = vmul.f32 %v8605, %v8605
        %v8610 = vmul.f32 %v8606, %v8606
        %v8611 = vmul.f32 %v8607, %v8607
        %8612 = vadd.xlane.f32.xlu0 %v8608
        %v8613 = vpop.xlane.xlu0 %8612
        %8614 = vadd.xlane.f32.xlu0 %v8609
        %v8615 = vpop.xlane.xlu0 %8614
        %8616 = vadd.xlane.f32.xlu0 %v8610
        %v8617 = vpop.xlane.xlu0 %8616
        %8618 = vadd.xlane.f32.xlu0 %v8611
        %v8619 = vpop.xlane.xlu0 %8618
        %v8620 = vmul.f32 %v8613, %v6369
        %v8621 = vmul.f32 %v8615, %v6369
        %v8622 = vmul.f32 %v8617, %v6369
        %v8623 = vmul.f32 %v8619, %v6369
        %v8624 = vadd.f32 %v8620, 1e-05
        %v8625 = vadd.f32 %v8621, 1e-05
        %v8626 = vadd.f32 %v8622, 1e-05
        %v8627 = vadd.f32 %v8623, 1e-05
        %v8628 = vrsqrt.pop %v8624
        %v8629 = vmul.f32 %v8628, %v8624
        %v8630 = vmul.f32 %v8629, %v8628
        %v8631 = vmul.f32 0.5, %v8630
        %v8632 = vsub.f32 1.5, %v8631
        %v8633 = vmul.f32 %v8628, %v8632
        %vm8634 = vweird.f32 %v8624
        %vm8635 = vweird.f32 %v8628
        %vm8636 = vmor %vm8634, %vm8635
        %v8637 = vsel %vm8636, %v8628, %v8633
        %v8638 = vrsqrt.pop %v8625
        %v8639 = vmul.f32 %v8638, %v8625
        %v8640 = vmul.f32 %v8639, %v8638
        %v8641 = vmul.f32 0.5, %v8640
        %v8642 = vsub.f32 1.5, %v8641
        %v8643 = vmul.f32 %v8638, %v8642
        %vm8644 = vweird.f32 %v8625
        %vm8645 = vweird.f32 %v8638
        %vm8646 = vmor %vm8644, %vm8645
        %v8647 = vsel %vm8646, %v8638, %v8643
        %v8648 = vrsqrt.pop %v8626
        %v8649 = vmul.f32 %v8648, %v8626
        %v8650 = vmul.f32 %v8649, %v8648
        %v8651 = vmul.f32 0.5, %v8650
        %v8652 = vsub.f32 1.5, %v8651
        %v8653 = vmul.f32 %v8648, %v8652
        %vm8654 = vweird.f32 %v8626
        %vm8655 = vweird.f32 %v8648
        %vm8656 = vmor %vm8654, %vm8655
        %v8657 = vsel %vm8656, %v8648, %v8653
        %v8658 = vrsqrt.pop %v8627
        %v8659 = vmul.f32 %v8658, %v8627
        %v8660 = vmul.f32 %v8659, %v8658
        %v8661 = vmul.f32 0.5, %v8660
        %v8662 = vsub.f32 1.5, %v8661
        %v8663 = vmul.f32 %v8658, %v8662
        %vm8664 = vweird.f32 %v8627
        %vm8665 = vweird.f32 %v8658
        %vm8666 = vmor %vm8664, %vm8665
        %v8667 = vsel %vm8666, %v8658, %v8663
        %v8668 = vmul.f32 %v8604, %v8637
        %v8669 = vmul.f32 %v8605, %v8647
        %v8670 = vmul.f32 %v8606, %v8657
        %v8671 = vmul.f32 %v8607, %v8667
        %v8673 = vperm.slane %v8590, 0
        %v8675 = vmul.f32 %v8668, %v8673
        %v8676 = vmul.f32 %v8669, %v8673
        %v8677 = vmul.f32 %v8670, %v8673
        %v8678 = vmul.f32 %v8671, %v8673
        %v8680 = vperm.slane %v8591, 0
        %v8682 = vadd.f32 %v8675, %v8680
        %v8683 = vadd.f32 %v8676, %v8680
        %v8684 = vadd.f32 %v8677, %v8680
        %v8685 = vadd.f32 %v8678, %v8680
        %8686 = vst [vmem:[#allocation16] sm:$0xff] %v8682
        %8687 = vst [vmem:[#allocation16 + $0x8] sm:$0xff] %v8683
        %8688 = vst [vmem:[#allocation16 + $0x10] sm:$0xff] %v8684
        %8689 = vst [vmem:[#allocation16 + $0x18] sm:$0xff] %v8685
        // Predicated region
        $region121: #{tpu_custom_call.1} parent=71 // pred_check
          %p8690 = pneg %p395
        $region122: #{tpu_custom_call.1} parent=71 // pred_check_branch
          %8692 = sbr.rel (%p8690) target = $region124
        $region123: #{tpu_custom_call.1} parent=71 // pred_region
          %s8693 = smul.u32 2, %s31
          %8695 = vsyncadd [#allocation4], 0
          %s8696 = smul.addr %s8693, 2
          %s8697 = smul.addr %s8696, 8
          %s8698 = scalar_lea.hbm %s13, %s8697
          %s8699 = sshll.u32 [#allocation16], 4
          %s8700 = int_to_ptr.vmem [resolvable:$true] %s8699
          %s8701 = sshll.u32 %s8698, 4
          %s8702 = int_to_ptr.hbm [resolvable:$true] %s8701
          %8707 = dma.vmem_to_hbm [thread:$0]  %s8700, 512, %s8702, [#allocation4], 128, 128, 8
        $region124: #{tpu_custom_call.1} parent=71 // pred_fallthru
          _
        // Predicated region
        $region125: #{tpu_custom_call.1} parent=71 // pred_check
          %p8708 = pneg %p395
        $region126: #{tpu_custom_call.1} parent=71 // pred_check_branch
          %8710 = sbr.rel (%p8708) target = $region128
        $region127: #{tpu_custom_call.1} parent=71 // pred_region
          %8712 = dma.done [#allocation4], 512
        $region128: #{tpu_custom_call.1} parent=71 // pred_fallthru
          _
      $region72: #{tpu_custom_call.1} parent=5 // pred_fallthru
        _
      %p8713 = scmp.le.s32.totalorder 2, %s22
      // Predicated region
      $region129: #{tpu_custom_call.1} parent=5 // pred_check
        %p8714 = pneg %p8713
      $region130: #{tpu_custom_call.1} parent=5 // pred_check_branch
        %8716 = sbr.rel (%p8714) target = $region132
      $region131: #{tpu_custom_call.1} parent=5 // pred_region
        %s8717 = ssub.s32 %s22, 2
      $region132: #{tpu_custom_call.1} parent=5 // pred_fallthru
        _
    $region6: #{tpu_custom_call.1} parent=1 // loop_footer
      %s26 = sadd.s32 1, %s22
    $region7: #{tpu_custom_call.1} parent=1 // loop_footer_branch
      %21 = sbr.rel target = $region3
    $region8: #{tpu_custom_call.1} parent=1 // loop_exit
      _
    %8718 = vsyncpa [#allocation3], 1
    %s8719 = scalar_lea.sflag [#allocation3], 1
    %8720 = vsyncpa %s8719, 1
    %8721 = vsyncpa [#allocation6], 1
    %8722 = vsyncpa [#allocation4], 1
    %s8723 = scalar_lea.sflag [#allocation4], 1
    %8724 = vsyncpa %s8723, 1

</llo_original>
